<compile_context>
chip_gen: v7x
topology: tpu7x:2x2x1
jax: 0.10.0
libtpu: 0.0.40
codegen_flags: <defaults>
</compile_context>

<pallas_src>
import jax
import jax.numpy as jnp
from jax.experimental import pallas as pl
from jax.experimental.pallas import tpu as pltpu

# ---- module hyper-parameters (defaults of the PyTorch NeRF module) ----
W = 256
D = 8
INPUT_CH = 3
INPUT_CH_VIEWS = 3
OUTPUT_CH = 4
SKIPS = (4,)
# TODO(synk): use_viewdirs=True branch (feature/alpha/view/rgb heads) not exercised by the
#             module defaults; only the output_linear path is implemented.

IN_PAD = 16       # padded pts feature width (one bf16 sublane tile)
OUT_PAD = 128     # padded output feature width (lane-dense stores)
ROW_ALIGN = 128   # row-tile alignment (keeps (8,128) layout happy, plenty for MXU M)


def nerf_kernel(x_ref, w0_ref, w5p_ref, wh_ref, b_ref, wout_ref, bout_ref, o_ref):
    # Whole-tile matmuls: each (W, W) weight is pushed to the MXU once per tile and
    # reused across all tm rows. Intermediates live in VMEM (compiler-managed), which
    # is not the bottleneck here.
    x = x_ref[...]                                                   # (tm, IN_PAD) bf16

    # layer 0: tiny-K (K=16) bf16 matmul, f32 accumulation
    pre = jnp.dot(x, w0_ref[...], preferred_element_type=jnp.float32) + b_ref[0]
    h = jnp.maximum(pre, 0.0).astype(jnp.bfloat16)                   # bf16 activation carry

    # layers 1 .. D-1 (statically unrolled); bf16 operands, f32 accumulation
    for li in range(1, D):
        pre = jnp.dot(h, wh_ref[li - 1],
                      preferred_element_type=jnp.float32) + b_ref[li]
        if (li - 1) in SKIPS:
            # this layer consumes torch.cat([pts, h_prev], -1); compute the pts part
            # lazily right here (rows for the padding lanes of w5p are zero)
            pre = pre + jnp.dot(x, w5p_ref[...], preferred_element_type=jnp.float32)
        h = jnp.maximum(pre, 0.0).astype(jnp.bfloat16)

    # output_linear (padded to 128 lanes -> unmasked lane-dense store), bf16 writeback
    out = jnp.dot(h, wout_ref[...], preferred_element_type=jnp.float32) + bout_ref[...]
    o_ref[...] = out.astype(o_ref.dtype)


def _round_up(v, m):
    return ((v + m - 1) // m) * m


def nerf_forward(x, padded, tm=2048):
    """x: (N, input_ch + input_ch_views) float32. Returns (N, OUTPUT_CH) float32."""
    N = x.shape[0]
    # Keep >= 2 parallel row tiles when N allows (v7x megacore), aligned to ROW_ALIGN,
    # while amortizing the ~0.35 us/grid-step overhead with as large a tile as possible.
    tm_eff = max(ROW_ALIGN, min(tm, _round_up(-(-N // 2), ROW_ALIGN)))
    n_tiles = pl.cdiv(N, tm_eff)
    Np = n_tiles * tm_eff

    # only pts are consumed (use_viewdirs=False); pad rows to a tile multiple, lanes to IN_PAD
    xp = jnp.zeros((Np, IN_PAD), jnp.bfloat16)
    xp = xp.at[:N, :INPUT_CH].set(x[:, :INPUT_CH].astype(jnp.bfloat16))

    # advisory cost estimate so XLA schedules the surrounding pad/slice around the kernel
    weight_bytes = sum(int(v.size) * v.dtype.itemsize for v in padded.values())
    flops_per_row = 2 * (IN_PAD * W            # layer 0
                         + IN_PAD * W          # skip pts matmul
                         + (D - 1) * W * W     # hidden layers
                         + W * OUT_PAD)        # output layer
    cost = pl.CostEstimate(
        flops=int(Np) * flops_per_row,
        transcendentals=0,
        bytes_accessed=int(Np) * (IN_PAD * 2 + OUT_PAD * 2) + weight_bytes,
    )

    out = pl.pallas_call(
        nerf_kernel,
        out_shape=jax.ShapeDtypeStruct((Np, OUT_PAD), jnp.bfloat16),
        grid_spec=pltpu.PrefetchScalarGridSpec(
            num_scalar_prefetch=0,
            grid=(n_tiles,),
            in_specs=[
                pl.BlockSpec((tm_eff, IN_PAD), lambda i: (i, 0)),     # pts tile (bf16)
                pl.BlockSpec((IN_PAD, W), lambda i: (0, 0)),          # w0 (bf16, padded rows zero)
                pl.BlockSpec((IN_PAD, W), lambda i: (0, 0)),          # w5 pts part (bf16)
                pl.BlockSpec((D - 1, W, W), lambda i: (0, 0, 0)),     # hidden weights (bf16)
                pl.BlockSpec((D, W), lambda i: (0, 0)),               # biases, layers 0..7 (f32)
                pl.BlockSpec((W, OUT_PAD), lambda i: (0, 0)),         # output weight (bf16, padded)
                pl.BlockSpec((1, OUT_PAD), lambda i: (0, 0)),         # output bias (f32, padded)
            ],
            out_specs=pl.BlockSpec((tm_eff, OUT_PAD), lambda i: (i, 0)),
        ),
        compiler_params=pltpu.CompilerParams(
            dimension_semantics=("parallel",),        # independent row tiles -> megacore on v7x
            vmem_limit_bytes=32 * 1024 * 1024,        # <= v7x 64 MiB physical
        ),
        cost_estimate=cost,
    )(xp, padded["w0"], padded["w5p"], padded["wh"], padded["b"],
      padded["wout"], padded["bout"])
    return out[:N, :OUTPUT_CH].astype(jnp.float32)


# ---------------- parameter init (deterministic, torch-Linear-style) ----------------
def _linear(key, fan_in, fan_out):
    bound = 1.0 / float(fan_in) ** 0.5
    kw, kb = jax.random.split(key)
    w = jax.random.uniform(kw, (fan_in, fan_out), jnp.float32, -bound, bound)
    b = jax.random.uniform(kb, (fan_out,), jnp.float32, -bound, bound)
    return w, b


def init_real_params(key):
    ks = jax.random.split(key, D + 1)
    pts_w, pts_b = [], []
    for i in range(D):
        if i == 0:
            fan_in = INPUT_CH
        elif (i - 1) in SKIPS:
            fan_in = W + INPUT_CH           # layer consuming the skip concat (pts rows first)
        else:
            fan_in = W
        w, b = _linear(ks[i], fan_in, W)
        pts_w.append(w)
        pts_b.append(b)
    wout, bout = _linear(ks[D], W, OUTPUT_CH)
    return {"pts_w": pts_w, "pts_b": pts_b, "wout": wout, "bout": bout}


def pad_params(real):
    # layer 0: (3, W) -> (IN_PAD, W), zero rows elsewhere (padding lanes contribute 0)
    w0 = jnp.zeros((IN_PAD, W), jnp.float32).at[:INPUT_CH, :].set(real["pts_w"][0])
    # hidden layers 1..7: stack the (W, W) parts; the skip layer is split into pts / h parts
    wh_list, w5p = [], jnp.zeros((IN_PAD, W), jnp.float32)
    for i in range(1, D):
        wi = real["pts_w"][i]
        if (i - 1) in SKIPS:
            w5p = w5p.at[:INPUT_CH, :].set(wi[:INPUT_CH, :])   # pts rows of the concat
            wh_list.append(wi[INPUT_CH:, :])                   # h rows of the concat
        else:
            wh_list.append(wi)
    wh = jnp.stack(wh_list, axis=0)                            # (D-1, W, W)
    b = jnp.stack(real["pts_b"], axis=0)                       # (D, W) f32
    wout = jnp.zeros((W, OUT_PAD), jnp.float32).at[:, :OUTPUT_CH].set(real["wout"])
    bout = jnp.zeros((1, OUT_PAD), jnp.float32).at[0, :OUTPUT_CH].set(real["bout"])
    return {
        "w0": w0.astype(jnp.bfloat16),
        "w5p": w5p.astype(jnp.bfloat16),
        "wh": wh.astype(jnp.bfloat16),
        "b": b,
        "wout": wout.astype(jnp.bfloat16),
        "bout": bout,
    }


# ------------- pure-JAX reference (mirrors the PyTorch forward, bf16 matmul operands) -------------
def nerf_ref_bf16(x, real):
    b16 = lambda a: a.astype(jnp.bfloat16)
    bd = lambda a, w: jnp.dot(b16(a), b16(w), preferred_element_type=jnp.float32)
    pts = x[:, :INPUT_CH]
    h = jnp.maximum(bd(pts, real["pts_w"][0]) + real["pts_b"][0], 0.0)
    for i in range(1, D):
        w = real["pts_w"][i]
        if (i - 1) in SKIPS:
            # torch: h = cat([pts, h_prev]); here split into the pts-part and h-part matmuls
            pre = bd(h, w[INPUT_CH:, :]) + bd(pts, w[:INPUT_CH, :]) + real["pts_b"][i]
        else:
            pre = bd(h, w) + real["pts_b"][i]
        h = jnp.maximum(pre, 0.0)
    return bd(h, real["wout"]) + real["bout"]


if __name__ == "__main__":
    key = jax.random.PRNGKey(0)
    k_x, k_p = jax.random.split(key)

    N = 1000  # deliberately not a multiple of the row tile: exercises cdiv + row padding
    x = jax.random.normal(k_x, (N, INPUT_CH + INPUT_CH_VIEWS), jnp.float32)

    real = init_real_params(k_p)
    padded = pad_params(real)

    out = nerf_forward(x, padded, tm=2048)
    out = jax.block_until_ready(out)

    ref = nerf_ref_bf16(x, real)
    assert out.shape == (N, OUTPUT_CH)
    # bf16 output store -> slightly relaxed tolerance vs. the f32-stored reference
    assert jnp.allclose(out, ref, rtol=1e-2, atol=1e-2), "kernel/reference mismatch"

    print("KERNEL_OK")
</pallas_src>

<mosaic_0001>
module attributes {stable_mosaic.version = 11 : i64} {
  func.func @nerf_kernel(%arg0: i32, %arg1: memref<512x16xbf16, #tpu.memory_space<vmem>>, %arg2: memref<16x256xbf16, #tpu.memory_space<vmem>>, %arg3: memref<16x256xbf16, #tpu.memory_space<vmem>>, %arg4: memref<7x256x256xbf16, #tpu.memory_space<vmem>>, %arg5: memref<8x256xf32, #tpu.memory_space<vmem>>, %arg6: memref<256x128xbf16, #tpu.memory_space<vmem>>, %arg7: memref<1x128xf32, #tpu.memory_space<vmem>>, %arg8: memref<512x128xbf16, #tpu.memory_space<vmem>>) attributes {dimension_semantics = [#tpu.dimension_semantics<parallel>], iteration_bounds = array<i64: 2>, scalar_prefetch = 0 : i64, scratch_operands = 0 : i64, tpu.core_type = #tpu.core_type<tc>, window_params = [{transform_indices = @transform_0, window_bounds = array<i64: 512, 16>}, {pipeline_mode = #tpu.pipeline_mode<synchronous>, transform_indices = @transform_1, window_bounds = array<i64: 16, 256>}, {pipeline_mode = #tpu.pipeline_mode<synchronous>, transform_indices = @transform_2, window_bounds = array<i64: 16, 256>}, {pipeline_mode = #tpu.pipeline_mode<synchronous>, transform_indices = @transform_3, window_bounds = array<i64: 7, 256, 256>}, {pipeline_mode = #tpu.pipeline_mode<synchronous>, transform_indices = @transform_4, window_bounds = array<i64: 8, 256>}, {pipeline_mode = #tpu.pipeline_mode<synchronous>, transform_indices = @transform_5, window_bounds = array<i64: 256, 128>}, {pipeline_mode = #tpu.pipeline_mode<synchronous>, transform_indices = @transform_6, window_bounds = array<i64: 1, 128>}, {transform_indices = @transform_7, window_bounds = array<i64: 512, 128>}]} {
    %c0 = arith.constant 0 : index
    %c0_0 = arith.constant 0 : index
    %0 = vector.load %arg1[%c0, %c0_0] : memref<512x16xbf16, #tpu.memory_space<vmem>>, vector<512x16xbf16>
    %c0_1 = arith.constant 0 : index
    %c0_2 = arith.constant 0 : index
    %1 = vector.load %arg2[%c0_1, %c0_2] : memref<16x256xbf16, #tpu.memory_space<vmem>>, vector<16x256xbf16>
    %cst = arith.constant dense<0.000000e+00> : vector<512x256xf32>
    %2 = tpu.matmul %0, %1, %cst {dimension_numbers = #tpu.dot_dimension_numbers<[1], [0], [0], [1], [0, 0, 1, 1], [], []>} : vector<512x16xbf16>, vector<16x256xbf16>, vector<512x256xf32> -> vector<512x256xf32>
    %c0_3 = arith.constant 0 : index
    %c0_4 = arith.constant 0 : index
    %3 = vector.load %arg5[%c0_3, %c0_4] : memref<8x256xf32, #tpu.memory_space<vmem>>, vector<1x256xf32>
    %4 = vector.shape_cast %3 : vector<1x256xf32> to vector<256xf32>
    %5 = vector.shape_cast %4 : vector<256xf32> to vector<1x256xf32>
    %6 = vector.broadcast %5 : vector<1x256xf32> to vector<512x256xf32>
    %7 = arith.addf %2, %6 : vector<512x256xf32>
    %cst_5 = arith.constant 0.000000e+00 : f32
    %8 = vector.broadcast %cst_5 : f32 to vector<512x256xf32>
    %9 = arith.maximumf %7, %8 : vector<512x256xf32>
    %10 = arith.truncf %9 : vector<512x256xf32> to vector<512x256xbf16>
    %c0_6 = arith.constant 0 : index
    %c0_7 = arith.constant 0 : index
    %c0_8 = arith.constant 0 : index
    %11 = vector.load %arg4[%c0_6, %c0_7, %c0_8] : memref<7x256x256xbf16, #tpu.memory_space<vmem>>, vector<1x256x256xbf16>
    %12 = vector.shape_cast %11 : vector<1x256x256xbf16> to vector<256x256xbf16>
    %cst_9 = arith.constant dense<0.000000e+00> : vector<512x256xf32>
    %13 = tpu.matmul %10, %12, %cst_9 {dimension_numbers = #tpu.dot_dimension_numbers<[1], [0], [0], [1], [0, 0, 1, 1], [], []>} : vector<512x256xbf16>, vector<256x256xbf16>, vector<512x256xf32> -> vector<512x256xf32>
    %c1 = arith.constant 1 : index
    %c0_10 = arith.constant 0 : index
    %14 = vector.load %arg5[%c1, %c0_10] : memref<8x256xf32, #tpu.memory_space<vmem>>, vector<1x256xf32>
    %15 = vector.shape_cast %14 : vector<1x256xf32> to vector<256xf32>
    %16 = vector.shape_cast %15 : vector<256xf32> to vector<1x256xf32>
    %17 = vector.broadcast %16 : vector<1x256xf32> to vector<512x256xf32>
    %18 = arith.addf %13, %17 : vector<512x256xf32>
    %cst_11 = arith.constant 0.000000e+00 : f32
    %19 = vector.broadcast %cst_11 : f32 to vector<512x256xf32>
    %20 = arith.maximumf %18, %19 : vector<512x256xf32>
    %21 = arith.truncf %20 : vector<512x256xf32> to vector<512x256xbf16>
    %c1_12 = arith.constant 1 : index
    %c0_13 = arith.constant 0 : index
    %c0_14 = arith.constant 0 : index
    %22 = vector.load %arg4[%c1_12, %c0_13, %c0_14] : memref<7x256x256xbf16, #tpu.memory_space<vmem>>, vector<1x256x256xbf16>
    %23 = vector.shape_cast %22 : vector<1x256x256xbf16> to vector<256x256xbf16>
    %cst_15 = arith.constant dense<0.000000e+00> : vector<512x256xf32>
    %24 = tpu.matmul %21, %23, %cst_15 {dimension_numbers = #tpu.dot_dimension_numbers<[1], [0], [0], [1], [0, 0, 1, 1], [], []>} : vector<512x256xbf16>, vector<256x256xbf16>, vector<512x256xf32> -> vector<512x256xf32>
    %c2 = arith.constant 2 : index
    %c0_16 = arith.constant 0 : index
    %25 = vector.load %arg5[%c2, %c0_16] : memref<8x256xf32, #tpu.memory_space<vmem>>, vector<1x256xf32>
    %26 = vector.shape_cast %25 : vector<1x256xf32> to vector<256xf32>
    %27 = vector.shape_cast %26 : vector<256xf32> to vector<1x256xf32>
    %28 = vector.broadcast %27 : vector<1x256xf32> to vector<512x256xf32>
    %29 = arith.addf %24, %28 : vector<512x256xf32>
    %cst_17 = arith.constant 0.000000e+00 : f32
    %30 = vector.broadcast %cst_17 : f32 to vector<512x256xf32>
    %31 = arith.maximumf %29, %30 : vector<512x256xf32>
    %32 = arith.truncf %31 : vector<512x256xf32> to vector<512x256xbf16>
    %c2_18 = arith.constant 2 : index
    %c0_19 = arith.constant 0 : index
    %c0_20 = arith.constant 0 : index
    %33 = vector.load %arg4[%c2_18, %c0_19, %c0_20] : memref<7x256x256xbf16, #tpu.memory_space<vmem>>, vector<1x256x256xbf16>
    %34 = vector.shape_cast %33 : vector<1x256x256xbf16> to vector<256x256xbf16>
    %cst_21 = arith.constant dense<0.000000e+00> : vector<512x256xf32>
    %35 = tpu.matmul %32, %34, %cst_21 {dimension_numbers = #tpu.dot_dimension_numbers<[1], [0], [0], [1], [0, 0, 1, 1], [], []>} : vector<512x256xbf16>, vector<256x256xbf16>, vector<512x256xf32> -> vector<512x256xf32>
    %c3 = arith.constant 3 : index
    %c0_22 = arith.constant 0 : index
    %36 = vector.load %arg5[%c3, %c0_22] : memref<8x256xf32, #tpu.memory_space<vmem>>, vector<1x256xf32>
    %37 = vector.shape_cast %36 : vector<1x256xf32> to vector<256xf32>
    %38 = vector.shape_cast %37 : vector<256xf32> to vector<1x256xf32>
    %39 = vector.broadcast %38 : vector<1x256xf32> to vector<512x256xf32>
    %40 = arith.addf %35, %39 : vector<512x256xf32>
    %cst_23 = arith.constant 0.000000e+00 : f32
    %41 = vector.broadcast %cst_23 : f32 to vector<512x256xf32>
    %42 = arith.maximumf %40, %41 : vector<512x256xf32>
    %43 = arith.truncf %42 : vector<512x256xf32> to vector<512x256xbf16>
    %c3_24 = arith.constant 3 : index
    %c0_25 = arith.constant 0 : index
    %c0_26 = arith.constant 0 : index
    %44 = vector.load %arg4[%c3_24, %c0_25, %c0_26] : memref<7x256x256xbf16, #tpu.memory_space<vmem>>, vector<1x256x256xbf16>
    %45 = vector.shape_cast %44 : vector<1x256x256xbf16> to vector<256x256xbf16>
    %cst_27 = arith.constant dense<0.000000e+00> : vector<512x256xf32>
    %46 = tpu.matmul %43, %45, %cst_27 {dimension_numbers = #tpu.dot_dimension_numbers<[1], [0], [0], [1], [0, 0, 1, 1], [], []>} : vector<512x256xbf16>, vector<256x256xbf16>, vector<512x256xf32> -> vector<512x256xf32>
    %c4 = arith.constant 4 : index
    %c0_28 = arith.constant 0 : index
    %47 = vector.load %arg5[%c4, %c0_28] : memref<8x256xf32, #tpu.memory_space<vmem>>, vector<1x256xf32>
    %48 = vector.shape_cast %47 : vector<1x256xf32> to vector<256xf32>
    %49 = vector.shape_cast %48 : vector<256xf32> to vector<1x256xf32>
    %50 = vector.broadcast %49 : vector<1x256xf32> to vector<512x256xf32>
    %51 = arith.addf %46, %50 : vector<512x256xf32>
    %cst_29 = arith.constant 0.000000e+00 : f32
    %52 = vector.broadcast %cst_29 : f32 to vector<512x256xf32>
    %53 = arith.maximumf %51, %52 : vector<512x256xf32>
    %54 = arith.truncf %53 : vector<512x256xf32> to vector<512x256xbf16>
    %c4_30 = arith.constant 4 : index
    %c0_31 = arith.constant 0 : index
    %c0_32 = arith.constant 0 : index
    %55 = vector.load %arg4[%c4_30, %c0_31, %c0_32] : memref<7x256x256xbf16, #tpu.memory_space<vmem>>, vector<1x256x256xbf16>
    %56 = vector.shape_cast %55 : vector<1x256x256xbf16> to vector<256x256xbf16>
    %cst_33 = arith.constant dense<0.000000e+00> : vector<512x256xf32>
    %57 = tpu.matmul %54, %56, %cst_33 {dimension_numbers = #tpu.dot_dimension_numbers<[1], [0], [0], [1], [0, 0, 1, 1], [], []>} : vector<512x256xbf16>, vector<256x256xbf16>, vector<512x256xf32> -> vector<512x256xf32>
    %c5 = arith.constant 5 : index
    %c0_34 = arith.constant 0 : index
    %58 = vector.load %arg5[%c5, %c0_34] : memref<8x256xf32, #tpu.memory_space<vmem>>, vector<1x256xf32>
    %59 = vector.shape_cast %58 : vector<1x256xf32> to vector<256xf32>
    %60 = vector.shape_cast %59 : vector<256xf32> to vector<1x256xf32>
    %61 = vector.broadcast %60 : vector<1x256xf32> to vector<512x256xf32>
    %62 = arith.addf %57, %61 : vector<512x256xf32>
    %c0_35 = arith.constant 0 : index
    %c0_36 = arith.constant 0 : index
    %63 = vector.load %arg3[%c0_35, %c0_36] : memref<16x256xbf16, #tpu.memory_space<vmem>>, vector<16x256xbf16>
    %cst_37 = arith.constant dense<0.000000e+00> : vector<512x256xf32>
    %64 = tpu.matmul %0, %63, %cst_37 {dimension_numbers = #tpu.dot_dimension_numbers<[1], [0], [0], [1], [0, 0, 1, 1], [], []>} : vector<512x16xbf16>, vector<16x256xbf16>, vector<512x256xf32> -> vector<512x256xf32>
    %65 = arith.addf %62, %64 : vector<512x256xf32>
    %cst_38 = arith.constant 0.000000e+00 : f32
    %66 = vector.broadcast %cst_38 : f32 to vector<512x256xf32>
    %67 = arith.maximumf %65, %66 : vector<512x256xf32>
    %68 = arith.truncf %67 : vector<512x256xf32> to vector<512x256xbf16>
    %c5_39 = arith.constant 5 : index
    %c0_40 = arith.constant 0 : index
    %c0_41 = arith.constant 0 : index
    %69 = vector.load %arg4[%c5_39, %c0_40, %c0_41] : memref<7x256x256xbf16, #tpu.memory_space<vmem>>, vector<1x256x256xbf16>
    %70 = vector.shape_cast %69 : vector<1x256x256xbf16> to vector<256x256xbf16>
    %cst_42 = arith.constant dense<0.000000e+00> : vector<512x256xf32>
    %71 = tpu.matmul %68, %70, %cst_42 {dimension_numbers = #tpu.dot_dimension_numbers<[1], [0], [0], [1], [0, 0, 1, 1], [], []>} : vector<512x256xbf16>, vector<256x256xbf16>, vector<512x256xf32> -> vector<512x256xf32>
    %c6 = arith.constant 6 : index
    %c0_43 = arith.constant 0 : index
    %72 = vector.load %arg5[%c6, %c0_43] : memref<8x256xf32, #tpu.memory_space<vmem>>, vector<1x256xf32>
    %73 = vector.shape_cast %72 : vector<1x256xf32> to vector<256xf32>
    %74 = vector.shape_cast %73 : vector<256xf32> to vector<1x256xf32>
    %75 = vector.broadcast %74 : vector<1x256xf32> to vector<512x256xf32>
    %76 = arith.addf %71, %75 : vector<512x256xf32>
    %cst_44 = arith.constant 0.000000e+00 : f32
    %77 = vector.broadcast %cst_44 : f32 to vector<512x256xf32>
    %78 = arith.maximumf %76, %77 : vector<512x256xf32>
    %79 = arith.truncf %78 : vector<512x256xf32> to vector<512x256xbf16>
    %c6_45 = arith.constant 6 : index
    %c0_46 = arith.constant 0 : index
    %c0_47 = arith.constant 0 : index
    %80 = vector.load %arg4[%c6_45, %c0_46, %c0_47] : memref<7x256x256xbf16, #tpu.memory_space<vmem>>, vector<1x256x256xbf16>
    %81 = vector.shape_cast %80 : vector<1x256x256xbf16> to vector<256x256xbf16>
    %cst_48 = arith.constant dense<0.000000e+00> : vector<512x256xf32>
    %82 = tpu.matmul %79, %81, %cst_48 {dimension_numbers = #tpu.dot_dimension_numbers<[1], [0], [0], [1], [0, 0, 1, 1], [], []>} : vector<512x256xbf16>, vector<256x256xbf16>, vector<512x256xf32> -> vector<512x256xf32>
    %c7 = arith.constant 7 : index
    %c0_49 = arith.constant 0 : index
    %83 = vector.load %arg5[%c7, %c0_49] : memref<8x256xf32, #tpu.memory_space<vmem>>, vector<1x256xf32>
    %84 = vector.shape_cast %83 : vector<1x256xf32> to vector<256xf32>
    %85 = vector.shape_cast %84 : vector<256xf32> to vector<1x256xf32>
    %86 = vector.broadcast %85 : vector<1x256xf32> to vector<512x256xf32>
    %87 = arith.addf %82, %86 : vector<512x256xf32>
    %cst_50 = arith.constant 0.000000e+00 : f32
    %88 = vector.broadcast %cst_50 : f32 to vector<512x256xf32>
    %89 = arith.maximumf %87, %88 : vector<512x256xf32>
    %90 = arith.truncf %89 : vector<512x256xf32> to vector<512x256xbf16>
    %c0_51 = arith.constant 0 : index
    %c0_52 = arith.constant 0 : index
    %91 = vector.load %arg6[%c0_51, %c0_52] : memref<256x128xbf16, #tpu.memory_space<vmem>>, vector<256x128xbf16>
    %cst_53 = arith.constant dense<0.000000e+00> : vector<512x128xf32>
    %92 = tpu.matmul %90, %91, %cst_53 {dimension_numbers = #tpu.dot_dimension_numbers<[1], [0], [0], [1], [0, 0, 1, 1], [], []>} : vector<512x256xbf16>, vector<256x128xbf16>, vector<512x128xf32> -> vector<512x128xf32>
    %c0_54 = arith.constant 0 : index
    %c0_55 = arith.constant 0 : index
    %93 = vector.load %arg7[%c0_54, %c0_55] : memref<1x128xf32, #tpu.memory_space<vmem>>, vector<1x128xf32>
    %94 = vector.broadcast %93 : vector<1x128xf32> to vector<512x128xf32>
    %95 = arith.addf %92, %94 : vector<512x128xf32>
    %96 = arith.truncf %95 : vector<512x128xf32> to vector<512x128xbf16>
    %c0_56 = arith.constant 0 : index
    %c0_57 = arith.constant 0 : index
    %97 = vector.load %arg8[%c0_56, %c0_57] : memref<512x128xbf16, #tpu.memory_space<vmem>>, vector<512x128xbf16>
    tpu.vector_store %arg8[%c0_56, %c0_57], %96 {strides = array<i32>} : memref<512x128xbf16, #tpu.memory_space<vmem>>, vector<512x128xbf16>,
    return
  }
  func.func @transform_0(%arg0: i32) -> (i32, i32) {
    %c0_i32 = arith.constant 0 : i32
    %c0_i32_0 = arith.constant 0 : i32
    return %arg0, %c0_i32 : i32, i32
  }
  func.func @transform_1(%arg0: i32) -> (i32, i32) {
    %c0_i32 = arith.constant 0 : i32
    %c0_i32_0 = arith.constant 0 : i32
    %c0_i32_1 = arith.constant 0 : i32
    return %c0_i32, %c0_i32_0 : i32, i32
  }
  func.func @transform_2(%arg0: i32) -> (i32, i32) {
    %c0_i32 = arith.constant 0 : i32
    %c0_i32_0 = arith.constant 0 : i32
    %c0_i32_1 = arith.constant 0 : i32
    return %c0_i32, %c0_i32_0 : i32, i32
  }
  func.func @transform_3(%arg0: i32) -> (i32, i32, i32) {
    %c0_i32 = arith.constant 0 : i32
    %c0_i32_0 = arith.constant 0 : i32
    %c0_i32_1 = arith.constant 0 : i32
    %c0_i32_2 = arith.constant 0 : i32
    return %c0_i32, %c0_i32_0, %c0_i32_1 : i32, i32, i32
  }
  func.func @transform_4(%arg0: i32) -> (i32, i32) {
    %c0_i32 = arith.constant 0 : i32
    %c0_i32_0 = arith.constant 0 : i32
    %c0_i32_1 = arith.constant 0 : i32
    return %c0_i32, %c0_i32_0 : i32, i32
  }
  func.func @transform_5(%arg0: i32) -> (i32, i32) {
    %c0_i32 = arith.constant 0 : i32
    %c0_i32_0 = arith.constant 0 : i32
    %c0_i32_1 = arith.constant 0 : i32
    return %c0_i32, %c0_i32_0 : i32, i32
  }
  func.func @transform_6(%arg0: i32) -> (i32, i32) {
    %c0_i32 = arith.constant 0 : i32
    %c0_i32_0 = arith.constant 0 : i32
    %c0_i32_1 = arith.constant 0 : i32
    return %c0_i32, %c0_i32_0 : i32, i32
  }
  func.func @transform_7(%arg0: i32) -> (i32, i32) {
    %c0_i32 = arith.constant 0 : i32
    %c0_i32_0 = arith.constant 0 : i32
    return %arg0, %c0_i32 : i32, i32
  }
}

</mosaic_0001>

<llo_original>
// kernel: tpu_custom_call.1
$region0: #{tpu_custom_call.1}
  #allocation0 [shape = 'u32[]', space=smem, size = 0x4, offset = 0x4, fixed_abs, tag = 'smem constant byte address 0x4 - core index']
  #allocation1 [shape = 'u32[144,128]{1,0:T(1,128)}', space=vmem, size = 0x12000, scoped, tag = 'internal scratch']
  %s0 = inlined_call_operand.vmem [shape: bf16[1024,16], index: 0, kind: input, shape index: {}]
  %s1 = inlined_call_operand.vmem [shape: bf16[16,256], index: 1, kind: input, shape index: {}]
  %s2 = inlined_call_operand.vmem [shape: bf16[16,256], index: 2, kind: input, shape index: {}]
  %s3 = inlined_call_operand.hbm [shape: bf16[7,256,256], index: 3, kind: input, shape index: {}]
  %s4 = inlined_call_operand.vmem [shape: f32[8,256], index: 4, kind: input, shape index: {}]
  %s5 = inlined_call_operand.vmem [shape: bf16[256,128], index: 5, kind: input, shape index: {}]
  %s6 = inlined_call_operand.vmem [shape: f32[1,128], index: 6, kind: input, shape index: {}]
  %s7 = inlined_call_operand.hbm [shape: bf16[1024,128], index: 7, kind: output, shape index: {}]
  %s8 = sld [smem:[#allocation0]]
  $region65: #{tpu_custom_call.1} parent=0
    _
  %s10 = ssub.s32 1, %s8
  %s11 = scalar_select 0, %s10, %s8
  $region1: #{tpu_custom_call.1} parent=0
    #allocation2 [shape = 'u8[917504]{0}', space=vmem, size = 0xe0000, scoped, tag = 'input window, operand 3, single buffered']
    #allocation3 [shape = 's32[2]{0}', space=sflag, size = 0x8, scoped, tag = 'scoped memory for tpu_custom_call.1']
    #allocation4 [shape = 's32[2]{0}', space=sflag, size = 0x8, scoped, tag = 'scoped memory for tpu_custom_call.1']
    #allocation5 [shape = 'u8[262144]{0}', space=vmem, size = 0x40000, scoped, tag = 'output window, operand 0']
    %12 = vsyncpa [#allocation3], 0
    %13 = vsyncpa [#allocation4], 0
    %s14 = scalar_lea.sflag [#allocation4], 1
    %15 = vsyncpa %s14, 0
    loop: start=0, step=1, limit=4
    $region2: #{tpu_custom_call.1} parent=1 // loop_pre_header
      _
    $region3: #{tpu_custom_call.1} parent=1 // loop_header
      %s17 = sphi 0, %s21
      %p18 = scmp.ge.s32.totalorder %s17, 4
      %s27 = sphi 0, %s29
      %s30 = sphi 0, %s27
      %s31 = sphi 0, %s30
      %s47 = sphi 0, %s31
      %s51 = sphi 0, %s51
      %s53 = sphi 0, %s51
      %s54 = sphi 0, %s53
      %s68 = sphi 0, %s54
      %s72 = sphi 0, %s72
      %s74 = sphi 0, %s72
      %s75 = sphi 0, %s74
      %s89 = sphi 0, %s75
      %s93 = sphi 0, %s93
      %s95 = sphi 0, %s93
      %s96 = sphi 0, %s95
      %s110 = sphi 0, %s96
      %s114 = sphi 0, %s114
      %s116 = sphi 0, %s114
      %s117 = sphi 0, %s116
      %s131 = sphi 0, %s117
      %s135 = sphi 0, %s135
      %s137 = sphi 0, %s135
      %s138 = sphi 0, %s137
      %s152 = sphi 0, %s138
      %s156 = sphi 0, %s156
      %s158 = sphi 0, %s156
      %s159 = sphi 0, %s158
      %s173 = sphi 0, %s159
      %s179 = sphi 0, %s181
      %s182 = sphi 0, %s179
      %s183 = sphi 0, %s182
      %s199 = sphi 0, %s183
    $region4: #{tpu_custom_call.1} parent=1 // loop_header_branch
      %20 = sbr.rel (%p18) target = $region8
    $region5: #{tpu_custom_call.1} parent=1 // loop_body
      %s22 = ssub.s32 %s17, 1
      %s23 = ssub.s32 %s17, 2
      %s24 = sadd.s32 %s17, 1
      %s25 = ssub.s32 %s17, %s24
      %p26 = scmp.eq.s32.totalorder %s25, 0
      %s28 = sadd.s32 %s27, 1
      %s29 = scalar_select %p26, %s27, %s28
      %p32 = pneg %p26
      %p33 = scmp.eq.s32.totalorder %s17, 1
      %p34 = por %p32, %p33
      %p35 = scmp.ne.s32.totalorder %s27, %s30
      %p36 = scmp.eq.s32.totalorder %s17, 0
      %p37 = por %p35, %p36
      %p38 = scmp.ne.s32.totalorder %s27, %s30
      %p39 = scmp.eq.s32.totalorder %s22, 1
      %p40 = por %p38, %p39
      %p41 = scmp.ne.s32.totalorder %s30, %s31
      %p42 = scmp.eq.s32.totalorder %s22, 0
      %p43 = por %p41, %p42
      %p44 = scmp.ne.s32.totalorder %s30, %s31
      %p45 = scmp.eq.s32.totalorder %s23, 1
      %p46 = por %p44, %p45
      %p48 = scmp.ne.s32.totalorder %s31, %s47
      %p49 = scmp.eq.s32.totalorder %s23, 0
      %p50 = por %p48, %p49
      %s52 = sadd.s32 %s51, 1
      %p55 = scmp.eq.s32.totalorder %s17, 1
      %p56 = scmp.ne.s32.totalorder %s51, %s53
      %p57 = scmp.eq.s32.totalorder %s17, 0
      %p58 = por %p56, %p57
      %p59 = scmp.ne.s32.totalorder %s51, %s53
      %p60 = scmp.eq.s32.totalorder %s22, 1
      %p61 = por %p59, %p60
      %p62 = scmp.ne.s32.totalorder %s53, %s54
      %p63 = scmp.eq.s32.totalorder %s22, 0
      %p64 = por %p62, %p63
      %p65 = scmp.ne.s32.totalorder %s53, %s54
      %p66 = scmp.eq.s32.totalorder %s23, 1
      %p67 = por %p65, %p66
      %p69 = scmp.ne.s32.totalorder %s54, %s68
      %p70 = scmp.eq.s32.totalorder %s23, 0
      %p71 = por %p69, %p70
      %s73 = sadd.s32 %s72, 1
      %p76 = scmp.eq.s32.totalorder %s17, 1
      %p77 = scmp.ne.s32.totalorder %s72, %s74
      %p78 = scmp.eq.s32.totalorder %s17, 0
      %p79 = por %p77, %p78
      %p80 = scmp.ne.s32.totalorder %s72, %s74
      %p81 = scmp.eq.s32.totalorder %s22, 1
      %p82 = por %p80, %p81
      %p83 = scmp.ne.s32.totalorder %s74, %s75
      %p84 = scmp.eq.s32.totalorder %s22, 0
      %p85 = por %p83, %p84
      %p86 = scmp.ne.s32.totalorder %s74, %s75
      %p87 = scmp.eq.s32.totalorder %s23, 1
      %p88 = por %p86, %p87
      %p90 = scmp.ne.s32.totalorder %s75, %s89
      %p91 = scmp.eq.s32.totalorder %s23, 0
      %p92 = por %p90, %p91
      %s94 = sadd.s32 %s93, 1
      %p97 = scmp.eq.s32.totalorder %s17, 1
      %p98 = scmp.ne.s32.totalorder %s93, %s95
      %p99 = scmp.eq.s32.totalorder %s17, 0
      %p100 = por %p98, %p99
      %p101 = scmp.ne.s32.totalorder %s93, %s95
      %p102 = scmp.eq.s32.totalorder %s22, 1
      %p103 = por %p101, %p102
      %p104 = scmp.ne.s32.totalorder %s95, %s96
      %p105 = scmp.eq.s32.totalorder %s22, 0
      %p106 = por %p104, %p105
      %p107 = scmp.ne.s32.totalorder %s95, %s96
      %p108 = scmp.eq.s32.totalorder %s23, 1
      %p109 = por %p107, %p108
      %p111 = scmp.ne.s32.totalorder %s96, %s110
      %p112 = scmp.eq.s32.totalorder %s23, 0
      %p113 = por %p111, %p112
      %s115 = sadd.s32 %s114, 1
      %p118 = scmp.eq.s32.totalorder %s17, 1
      %p119 = scmp.ne.s32.totalorder %s114, %s116
      %p120 = scmp.eq.s32.totalorder %s17, 0
      %p121 = por %p119, %p120
      %p122 = scmp.ne.s32.totalorder %s114, %s116
      %p123 = scmp.eq.s32.totalorder %s22, 1
      %p124 = por %p122, %p123
      %p125 = scmp.ne.s32.totalorder %s116, %s117
      %p126 = scmp.eq.s32.totalorder %s22, 0
      %p127 = por %p125, %p126
      %p128 = scmp.ne.s32.totalorder %s116, %s117
      %p129 = scmp.eq.s32.totalorder %s23, 1
      %p130 = por %p128, %p129
      %p132 = scmp.ne.s32.totalorder %s117, %s131
      %p133 = scmp.eq.s32.totalorder %s23, 0
      %p134 = por %p132, %p133
      %s136 = sadd.s32 %s135, 1
      %p139 = scmp.eq.s32.totalorder %s17, 1
      %p140 = scmp.ne.s32.totalorder %s135, %s137
      %p141 = scmp.eq.s32.totalorder %s17, 0
      %p142 = por %p140, %p141
      %p143 = scmp.ne.s32.totalorder %s135, %s137
      %p144 = scmp.eq.s32.totalorder %s22, 1
      %p145 = por %p143, %p144
      %p146 = scmp.ne.s32.totalorder %s137, %s138
      %p147 = scmp.eq.s32.totalorder %s22, 0
      %p148 = por %p146, %p147
      %p149 = scmp.ne.s32.totalorder %s137, %s138
      %p150 = scmp.eq.s32.totalorder %s23, 1
      %p151 = por %p149, %p150
      %p153 = scmp.ne.s32.totalorder %s138, %s152
      %p154 = scmp.eq.s32.totalorder %s23, 0
      %p155 = por %p153, %p154
      %s157 = sadd.s32 %s156, 1
      %p160 = scmp.eq.s32.totalorder %s17, 1
      %p161 = scmp.ne.s32.totalorder %s156, %s158
      %p162 = scmp.eq.s32.totalorder %s17, 0
      %p163 = por %p161, %p162
      %p164 = scmp.ne.s32.totalorder %s156, %s158
      %p165 = scmp.eq.s32.totalorder %s22, 1
      %p166 = por %p164, %p165
      %p167 = scmp.ne.s32.totalorder %s158, %s159
      %p168 = scmp.eq.s32.totalorder %s22, 0
      %p169 = por %p167, %p168
      %p170 = scmp.ne.s32.totalorder %s158, %s159
      %p171 = scmp.eq.s32.totalorder %s23, 1
      %p172 = por %p170, %p171
      %p174 = scmp.ne.s32.totalorder %s159, %s173
      %p175 = scmp.eq.s32.totalorder %s23, 0
      %p176 = por %p174, %p175
      %s177 = ssub.s32 %s17, %s24
      %p178 = scmp.eq.s32.totalorder %s177, 0
      %s180 = sadd.s32 %s179, 1
      %s181 = scalar_select %p178, %s179, %s180
      %p184 = pneg %p178
      %p185 = scmp.eq.s32.totalorder %s17, 1
      %p186 = por %p184, %p185
      %p187 = scmp.ne.s32.totalorder %s179, %s182
      %p188 = scmp.eq.s32.totalorder %s17, 0
      %p189 = por %p187, %p188
      %p190 = scmp.ne.s32.totalorder %s179, %s182
      %p191 = scmp.eq.s32.totalorder %s22, 1
      %p192 = por %p190, %p191
      %p193 = scmp.ne.s32.totalorder %s182, %s183
      %p194 = scmp.eq.s32.totalorder %s22, 0
      %p195 = por %p193, %p194
      %p196 = scmp.ne.s32.totalorder %s182, %s183
      %p197 = scmp.eq.s32.totalorder %s23, 1
      %p198 = por %p196, %p197
      %p200 = scmp.ne.s32.totalorder %s183, %s199
      %p201 = scmp.eq.s32.totalorder %s23, 0
      %p202 = por %p200, %p201
      %p203 = scmp.le.s32.totalorder 1, %s17
      %p204 = scmp.lt.s32.totalorder %s17, 3
      %p205 = pnand %p203, %p204
      %p206 = pneg %p205
      // Predicated region
      $region9: #{tpu_custom_call.1} parent=5 // pred_check
        _
      $region10: #{tpu_custom_call.1} parent=5 // pred_check_branch
        %208 = sbr.rel (%p205) target = $region12
      $region11: #{tpu_custom_call.1} parent=5 // pred_region
        %s209 = ssub.s32 %s17, 1
        // Predicated region
        $region13: #{tpu_custom_call.1} parent=11 // pred_check
          %p210 = pneg %p64
        $region14: #{tpu_custom_call.1} parent=11 // pred_check_branch
          %212 = sbr.rel (%p210) target = $region16
        $region15: #{tpu_custom_call.1} parent=11 // pred_region
          _
        $region16: #{tpu_custom_call.1} parent=11 // pred_fallthru
          _
        // Predicated region
        $region17: #{tpu_custom_call.1} parent=11 // pred_check
          %p213 = pneg %p85
        $region18: #{tpu_custom_call.1} parent=11 // pred_check_branch
          %215 = sbr.rel (%p213) target = $region20
        $region19: #{tpu_custom_call.1} parent=11 // pred_region
          _
        $region20: #{tpu_custom_call.1} parent=11 // pred_fallthru
          _
        // Predicated region
        $region21: #{tpu_custom_call.1} parent=11 // pred_check
          %p216 = pneg %p106
        $region22: #{tpu_custom_call.1} parent=11 // pred_check_branch
          %218 = sbr.rel (%p216) target = $region24
        $region23: #{tpu_custom_call.1} parent=11 // pred_region
          %s220 = ssub.s32 28672, 28672
          %221 = vsyncadd [#allocation3], %s220
          %s222 = sshll.u32 [#allocation2], 4
          %s223 = int_to_ptr.vmem [resolvable:$true] %s222
          %228 = dma.hbm_to_vmem [thread:$0]  %s3, 28672, %s223, [#allocation3], 128, 128, 8
        $region24: #{tpu_custom_call.1} parent=11 // pred_fallthru
          _
        // Predicated region
        $region25: #{tpu_custom_call.1} parent=11 // pred_check
          %p229 = pneg %p127
        $region26: #{tpu_custom_call.1} parent=11 // pred_check_branch
          %231 = sbr.rel (%p229) target = $region28
        $region27: #{tpu_custom_call.1} parent=11 // pred_region
          _
        $region28: #{tpu_custom_call.1} parent=11 // pred_fallthru
          _
        // Predicated region
        $region29: #{tpu_custom_call.1} parent=11 // pred_check
          %p232 = pneg %p148
        $region30: #{tpu_custom_call.1} parent=11 // pred_check_branch
          %234 = sbr.rel (%p232) target = $region32
        $region31: #{tpu_custom_call.1} parent=11 // pred_region
          _
        $region32: #{tpu_custom_call.1} parent=11 // pred_fallthru
          _
        // Predicated region
        $region33: #{tpu_custom_call.1} parent=11 // pred_check
          %p235 = pneg %p169
        $region34: #{tpu_custom_call.1} parent=11 // pred_check_branch
          %237 = sbr.rel (%p235) target = $region36
        $region35: #{tpu_custom_call.1} parent=11 // pred_region
          _
        $region36: #{tpu_custom_call.1} parent=11 // pred_fallthru
          _
      $region12: #{tpu_custom_call.1} parent=5 // pred_fallthru
        _
      %p238 = scmp.lt.s32.totalorder %s17, 2
      // Predicated region
      $region37: #{tpu_custom_call.1} parent=5 // pred_check
        %p239 = pneg %p238
      $region38: #{tpu_custom_call.1} parent=5 // pred_check_branch
        %241 = sbr.rel (%p239) target = $region40
      $region39: #{tpu_custom_call.1} parent=5 // pred_region
        // Predicated region
        $region41: #{tpu_custom_call.1} parent=39 // pred_check
          %p242 = pneg %p37
        $region42: #{tpu_custom_call.1} parent=39 // pred_check_branch
          %244 = sbr.rel (%p242) target = $region44
        $region43: #{tpu_custom_call.1} parent=39 // pred_region
          %s245 = smul.u32 64, %s17
          %p246 = scmp.lt.s32.totalorder %s245, 127
          %s247 = scalar_select %p246, %s245, 127
          %s248 = smul.addr %s247, 4
          %s249 = scalar_lea.vmem %s0, %s248
          %s250 = smul.u32 64, %s17
        $region44: #{tpu_custom_call.1} parent=39 // pred_fallthru
          _
      $region40: #{tpu_custom_call.1} parent=5 // pred_fallthru
        _
      %p251 = scmp.le.s32.totalorder 1, %s17
      %p252 = scmp.lt.s32.totalorder %s17, 3
      %p253 = pnand %p251, %p252
      %p254 = pneg %p253
      // Predicated region
      $region45: #{tpu_custom_call.1} parent=5 // pred_check
        _
      $region46: #{tpu_custom_call.1} parent=5 // pred_check_branch
        %256 = sbr.rel (%p253) target = $region48
      $region47: #{tpu_custom_call.1} parent=5 // pred_region
        %s257 = ssub.s32 %s17, 1
        // Predicated region
        $region49: #{tpu_custom_call.1} parent=47 // pred_check
          %p258 = pneg %p106
        $region50: #{tpu_custom_call.1} parent=47 // pred_check_branch
          %260 = sbr.rel (%p258) target = $region52
        $region51: #{tpu_custom_call.1} parent=47 // pred_region
          %261 = dma.done [#allocation3], 28672
        $region52: #{tpu_custom_call.1} parent=47 // pred_fallthru
          _
        %s262 = smul.u32 64, %s22
        %p263 = scmp.lt.s32.totalorder %s262, 127
        %s264 = scalar_select %p263, %s262, 127
        %s265 = smul.addr %s264, 4
        %s266 = scalar_lea.vmem %s0, %s265
        %p267 = pneg %p43
        %p268 = pneg %p40
        %p269 = pneg %p64
        %p270 = pneg %p61
        %p271 = pneg %p85
        %p272 = pneg %p82
        %p273 = pneg %p106
        %p274 = pneg %p103
        %p275 = pneg %p127
        %p276 = pneg %p124
        %p277 = pneg %p148
        %p278 = pneg %p145
        %p279 = pneg %p169
        %p280 = pneg %p166
        %p281 = pneg %p195
        %p282 = pneg %p192
        %s283 = sand.u32 %s182, 1
        %s284 = scalar_lea.sflag [#allocation4], %s283
        %s285 = sand.u32 %s182, 1
        %s286 = smul.addr %s285, 256
        %s287 = scalar_lea.vmem [#allocation5], %s286
        %s288 = smul.u32 64, %s22
        %p289 = scmp.lt.s32.totalorder %s288, 127
        %s290 = scalar_select %p289, %s288, 127
        %s291 = smul.addr %s290, 4
        %s292 = scalar_lea.vmem %s0, %s291
        %s293 = smul.u32 64, %s22
        %s294 = smul.u32 64, %s22
        %v296 = vld [vmem:[%s292] sm:$0xf]
        %v297 = vld [vmem:[%s292 + $0x4] sm:$0xf]
        %v298 = vld [vmem:[%s292 + $0x8] sm:$0xf]
        %v299 = vld [vmem:[%s292 + $0xc] sm:$0xf]
        %v300 = vld [vmem:[%s292 + $0x10] sm:$0xf]
        %v301 = vld [vmem:[%s292 + $0x14] sm:$0xf]
        %v302 = vld [vmem:[%s292 + $0x18] sm:$0xf]
        %v303 = vld [vmem:[%s292 + $0x1c] sm:$0xf]
        %v304 = vld [vmem:[%s292 + $0x20] sm:$0xf]
        %v305 = vld [vmem:[%s292 + $0x24] sm:$0xf]
        %v306 = vld [vmem:[%s292 + $0x28] sm:$0xf]
        %v307 = vld [vmem:[%s292 + $0x2c] sm:$0xf]
        %v308 = vld [vmem:[%s292 + $0x30] sm:$0xf]
        %v309 = vld [vmem:[%s292 + $0x34] sm:$0xf]
        %v310 = vld [vmem:[%s292 + $0x38] sm:$0xf]
        %v311 = vld [vmem:[%s292 + $0x3c] sm:$0xf]
        %v312 = vld [vmem:[%s292 + $0x40] sm:$0xf]
        %v313 = vld [vmem:[%s292 + $0x44] sm:$0xf]
        %v314 = vld [vmem:[%s292 + $0x48] sm:$0xf]
        %v315 = vld [vmem:[%s292 + $0x4c] sm:$0xf]
        %v316 = vld [vmem:[%s292 + $0x50] sm:$0xf]
        %v317 = vld [vmem:[%s292 + $0x54] sm:$0xf]
        %v318 = vld [vmem:[%s292 + $0x58] sm:$0xf]
        %v319 = vld [vmem:[%s292 + $0x5c] sm:$0xf]
        %v320 = vld [vmem:[%s292 + $0x60] sm:$0xf]
        %v321 = vld [vmem:[%s292 + $0x64] sm:$0xf]
        %v322 = vld [vmem:[%s292 + $0x68] sm:$0xf]
        %v323 = vld [vmem:[%s292 + $0x6c] sm:$0xf]
        %v324 = vld [vmem:[%s292 + $0x70] sm:$0xf]
        %v325 = vld [vmem:[%s292 + $0x74] sm:$0xf]
        %v326 = vld [vmem:[%s292 + $0x78] sm:$0xf]
        %v327 = vld [vmem:[%s292 + $0x7c] sm:$0xf]
        %v328 = vld [vmem:[%s292 + $0x80] sm:$0xf]
        %v329 = vld [vmem:[%s292 + $0x84] sm:$0xf]
        %v330 = vld [vmem:[%s292 + $0x88] sm:$0xf]
        %v331 = vld [vmem:[%s292 + $0x8c] sm:$0xf]
        %v332 = vld [vmem:[%s292 + $0x90] sm:$0xf]
        %v333 = vld [vmem:[%s292 + $0x94] sm:$0xf]
        %v334 = vld [vmem:[%s292 + $0x98] sm:$0xf]
        %v335 = vld [vmem:[%s292 + $0x9c] sm:$0xf]
        %v336 = vld [vmem:[%s292 + $0xa0] sm:$0xf]
        %v337 = vld [vmem:[%s292 + $0xa4] sm:$0xf]
        %v338 = vld [vmem:[%s292 + $0xa8] sm:$0xf]
        %v339 = vld [vmem:[%s292 + $0xac] sm:$0xf]
        %v340 = vld [vmem:[%s292 + $0xb0] sm:$0xf]
        %v341 = vld [vmem:[%s292 + $0xb4] sm:$0xf]
        %v342 = vld [vmem:[%s292 + $0xb8] sm:$0xf]
        %v343 = vld [vmem:[%s292 + $0xbc] sm:$0xf]
        %v344 = vld [vmem:[%s292 + $0xc0] sm:$0xf]
        %v345 = vld [vmem:[%s292 + $0xc4] sm:$0xf]
        %v346 = vld [vmem:[%s292 + $0xc8] sm:$0xf]
        %v347 = vld [vmem:[%s292 + $0xcc] sm:$0xf]
        %v348 = vld [vmem:[%s292 + $0xd0] sm:$0xf]
        %v349 = vld [vmem:[%s292 + $0xd4] sm:$0xf]
        %v350 = vld [vmem:[%s292 + $0xd8] sm:$0xf]
        %v351 = vld [vmem:[%s292 + $0xdc] sm:$0xf]
        %v352 = vld [vmem:[%s292 + $0xe0] sm:$0xf]
        %v353 = vld [vmem:[%s292 + $0xe4] sm:$0xf]
        %v354 = vld [vmem:[%s292 + $0xe8] sm:$0xf]
        %v355 = vld [vmem:[%s292 + $0xec] sm:$0xf]
        %v356 = vld [vmem:[%s292 + $0xf0] sm:$0xf]
        %v357 = vld [vmem:[%s292 + $0xf4] sm:$0xf]
        %v358 = vld [vmem:[%s292 + $0xf8] sm:$0xf]
        %v359 = vld [vmem:[%s292 + $0xfc] sm:$0xf]
        %v360 = vld [vmem:[%s1] sm:$0xff]
        %v361 = vld [vmem:[%s1 + $0x8] sm:$0xff]
        %v362 = vld [vmem:[%s4] ss:$8 sm:$0x3]
        %v364 = vlaneseq
        %v365 = vshrl.u32 %v364, 7
        %v366 = vsub.s32 0, %v365
        %v367 = vrot.slane %v362, %v366
        %v368 = vlaneseq
        %v369 = vshrl.u32 %v368, 7
        %v370 = vsub.s32 1, %v369
        %v371 = vrot.slane %v362, %v370
        %v438 = vunpack.c.l.b16 %v296
        %v439 = vunpack.c.l.b16 %v297
        %v440 = vunpack.c.l.b16 %v298
        %v441 = vunpack.c.l.b16 %v299
        %v442 = vunpack.c.l.b16 %v300
        %v443 = vunpack.c.l.b16 %v301
        %v444 = vunpack.c.l.b16 %v302
        %v445 = vunpack.c.l.b16 %v303
        %v446 = vunpack.c.l.b16 %v304
        %v447 = vunpack.c.l.b16 %v305
        %v448 = vunpack.c.l.b16 %v306
        %v449 = vunpack.c.l.b16 %v307
        %v450 = vunpack.c.l.b16 %v308
        %v451 = vunpack.c.l.b16 %v309
        %v452 = vunpack.c.l.b16 %v310
        %v453 = vunpack.c.l.b16 %v311
        %v454 = vunpack.c.l.b16 %v312
        %v455 = vunpack.c.l.b16 %v313
        %v456 = vunpack.c.l.b16 %v314
        %v457 = vunpack.c.l.b16 %v315
        %v458 = vunpack.c.l.b16 %v316
        %v459 = vunpack.c.l.b16 %v317
        %v460 = vunpack.c.l.b16 %v318
        %v461 = vunpack.c.l.b16 %v319
        %v462 = vunpack.c.l.b16 %v320
        %v463 = vunpack.c.l.b16 %v321
        %v464 = vunpack.c.l.b16 %v322
        %v465 = vunpack.c.l.b16 %v323
        %v466 = vunpack.c.l.b16 %v324
        %v467 = vunpack.c.l.b16 %v325
        %v468 = vunpack.c.l.b16 %v326
        %v469 = vunpack.c.l.b16 %v327
        %v470 = vunpack.c.l.b16 %v328
        %v471 = vunpack.c.l.b16 %v329
        %v472 = vunpack.c.l.b16 %v330
        %v473 = vunpack.c.l.b16 %v331
        %v474 = vunpack.c.l.b16 %v332
        %v475 = vunpack.c.l.b16 %v333
        %v476 = vunpack.c.l.b16 %v334
        %v477 = vunpack.c.l.b16 %v335
        %v478 = vunpack.c.l.b16 %v336
        %v479 = vunpack.c.l.b16 %v337
        %v480 = vunpack.c.l.b16 %v338
        %v481 = vunpack.c.l.b16 %v339
        %v482 = vunpack.c.l.b16 %v340
        %v483 = vunpack.c.l.b16 %v341
        %v484 = vunpack.c.l.b16 %v342
        %v485 = vunpack.c.l.b16 %v343
        %v486 = vunpack.c.l.b16 %v344
        %v487 = vunpack.c.l.b16 %v345
        %v488 = vunpack.c.l.b16 %v346
        %v489 = vunpack.c.l.b16 %v347
        %v490 = vunpack.c.l.b16 %v348
        %v491 = vunpack.c.l.b16 %v349
        %v492 = vunpack.c.l.b16 %v350
        %v493 = vunpack.c.l.b16 %v351
        %v494 = vunpack.c.l.b16 %v352
        %v495 = vunpack.c.l.b16 %v353
        %v496 = vunpack.c.l.b16 %v354
        %v497 = vunpack.c.l.b16 %v355
        %v498 = vunpack.c.l.b16 %v356
        %v499 = vunpack.c.l.b16 %v357
        %v500 = vunpack.c.l.b16 %v358
        %v501 = vunpack.c.l.b16 %v359
        %v502 = vpack.c.b16 %v439, %v438
        %v503 = vpack.c.b16 %v441, %v440
        %v504 = vpack.c.b16 %v443, %v442
        %v505 = vpack.c.b16 %v445, %v444
        %v506 = vpack.c.b16 %v447, %v446
        %v507 = vpack.c.b16 %v449, %v448
        %v508 = vpack.c.b16 %v451, %v450
        %v509 = vpack.c.b16 %v453, %v452
        %v510 = vpack.c.b16 %v455, %v454
        %v511 = vpack.c.b16 %v457, %v456
        %v512 = vpack.c.b16 %v459, %v458
        %v513 = vpack.c.b16 %v461, %v460
        %v514 = vpack.c.b16 %v463, %v462
        %v515 = vpack.c.b16 %v465, %v464
        %v516 = vpack.c.b16 %v467, %v466
        %v517 = vpack.c.b16 %v469, %v468
        %v518 = vpack.c.b16 %v471, %v470
        %v519 = vpack.c.b16 %v473, %v472
        %v520 = vpack.c.b16 %v475, %v474
        %v521 = vpack.c.b16 %v477, %v476
        %v522 = vpack.c.b16 %v479, %v478
        %v523 = vpack.c.b16 %v481, %v480
        %v524 = vpack.c.b16 %v483, %v482
        %v525 = vpack.c.b16 %v485, %v484
        %v526 = vpack.c.b16 %v487, %v486
        %v527 = vpack.c.b16 %v489, %v488
        %v528 = vpack.c.b16 %v491, %v490
        %v529 = vpack.c.b16 %v493, %v492
        %v530 = vpack.c.b16 %v495, %v494
        %v531 = vpack.c.b16 %v497, %v496
        %v532 = vpack.c.b16 %v499, %v498
        %v533 = vpack.c.b16 %v501, %v500
        %v536 = vunpack.c.l.b16 %v360
        %v537 = vunpack.c.h.b16 %v360
        %v538 = vunpack.c.l.b16 %v361
        %v539 = vunpack.c.h.b16 %v361
        %v540 = vpack.c.b16 %v538, %v536
        %v541 = vpack.c.b16 %v539, %v537
        %vm544 = vcmask 130048
        %v546 = vsel %vm544, %v502, 0
        %v549 = vsel %vm544, %v503, 0
        %v552 = vsel %vm544, %v504, 0
        %v555 = vsel %vm544, %v505, 0
        %v558 = vsel %vm544, %v506, 0
        %v561 = vsel %vm544, %v507, 0
        %v564 = vsel %vm544, %v508, 0
        %v567 = vsel %vm544, %v509, 0
        %v570 = vsel %vm544, %v510, 0
        %v573 = vsel %vm544, %v511, 0
        %v576 = vsel %vm544, %v512, 0
        %v579 = vsel %vm544, %v513, 0
        %v582 = vsel %vm544, %v514, 0
        %v585 = vsel %vm544, %v515, 0
        %v588 = vsel %vm544, %v516, 0
        %v591 = vsel %vm544, %v517, 0
        %v594 = vsel %vm544, %v518, 0
        %v597 = vsel %vm544, %v519, 0
        %v600 = vsel %vm544, %v520, 0
        %v603 = vsel %vm544, %v521, 0
        %v606 = vsel %vm544, %v522, 0
        %v609 = vsel %vm544, %v523, 0
        %v612 = vsel %vm544, %v524, 0
        %v615 = vsel %vm544, %v525, 0
        %v618 = vsel %vm544, %v526, 0
        %v621 = vsel %vm544, %v527, 0
        %v624 = vsel %vm544, %v528, 0
        %v627 = vsel %vm544, %v529, 0
        %v630 = vsel %vm544, %v530, 0
        %v633 = vsel %vm544, %v531, 0
        %v636 = vsel %vm544, %v532, 0
        %v639 = vsel %vm544, %v533, 0
        %641 = vmatprep.subr.bf16.mxu0 %v541
        %642 = vmatpush1.bf16.msra.mxu0 %v540
        %643 = vmatprep.subr.bf16.mxu0 0
        %644 = vmatpush1.bf16.msra.mxu0 0
        %645 = vmatprep.subr.bf16.mxu0 0
        %646 = vmatpush1.bf16.msra.mxu0 0
        %647 = vmatprep.subr.bf16.mxu0 0
        %648 = vmatpush1.bf16.msra.mxu0 0
        %649 = vmatprep.subr.bf16.mxu0 0
        %650 = vmatpush1.bf16.msra.mxu0 0
        %651 = vmatprep.subr.bf16.mxu0 0
        %652 = vmatpush1.bf16.msra.mxu0 0
        %653 = vmatprep.subr.bf16.mxu0 0
        %654 = vmatpush1.bf16.msra.mxu0 0
        %655 = vmatprep.subr.bf16.mxu0 0
        %656 = vmatpush1.bf16.msra.mxu0 0
        %657 = vmatprep.subr.bf16.mxu0 0
        %658 = vmatpush1.bf16.msra.mxu0 0
        %659 = vmatprep.subr.bf16.mxu0 0
        %660 = vmatpush1.bf16.msra.mxu0 0
        %661 = vmatprep.subr.bf16.mxu0 0
        %662 = vmatpush1.bf16.msra.mxu0 0
        %663 = vmatprep.subr.bf16.mxu0 0
        %664 = vmatpush1.bf16.msra.mxu0 0
        %665 = vmatprep.subr.bf16.mxu0 0
        %666 = vmatpush1.bf16.msra.mxu0 0
        %667 = vmatprep.subr.bf16.mxu0 0
        %668 = vmatpush1.bf16.msra.mxu0 0
        %669 = vmatprep.subr.bf16.mxu0 0
        %670 = vmatpush1.bf16.msra.mxu0 0
        %671 = vmatprep.subr.bf16.mxu0 0
        %672 = vmatpush1.bf16.msra.mxu0 0
        %673 = vmatprep.mubr.bf16.mxu0 0
        %674 = vmatmul.mubr.bf16.gmra.mrb[0].mxu0 %v546
        %v675 = vpop.f32.mrb[0].mxu0
        %v676 = vadd.f32 %v367, %v675
        %v677 = vpop.f32.mrb[0].mxu0
        %v678 = vadd.f32 %v371, %v677
        %v679 = vpop.f32.mrb[0].mxu0
        %v680 = vadd.f32 %v367, %v679
        %v681 = vpop.f32.mrb[0].mxu0
        %v682 = vadd.f32 %v371, %v681
        %683 = vmatprep.mubr.bf16.mxu0 0
        %684 = vmatmul.mubr.bf16.gmra.mrb[0].mxu0 %v549
        %v685 = vpop.f32.mrb[0].mxu0
        %v686 = vadd.f32 %v367, %v685
        %v687 = vpop.f32.mrb[0].mxu0
        %v688 = vadd.f32 %v371, %v687
        %v689 = vpop.f32.mrb[0].mxu0
        %v690 = vadd.f32 %v367, %v689
        %v691 = vpop.f32.mrb[0].mxu0
        %v692 = vadd.f32 %v371, %v691
        %693 = vmatprep.mubr.bf16.mxu0 0
        %694 = vmatmul.mubr.bf16.gmra.mrb[0].mxu0 %v552
        %v695 = vpop.f32.mrb[0].mxu0
        %v696 = vadd.f32 %v367, %v695
        %v697 = vpop.f32.mrb[0].mxu0
        %v698 = vadd.f32 %v371, %v697
        %v699 = vpop.f32.mrb[0].mxu0
        %v700 = vadd.f32 %v367, %v699
        %v701 = vpop.f32.mrb[0].mxu0
        %v702 = vadd.f32 %v371, %v701
        %703 = vmatprep.mubr.bf16.mxu0 0
        %704 = vmatmul.mubr.bf16.gmra.mrb[0].mxu0 %v555
        %v705 = vpop.f32.mrb[0].mxu0
        %v706 = vadd.f32 %v367, %v705
        %v707 = vpop.f32.mrb[0].mxu0
        %v708 = vadd.f32 %v371, %v707
        %v709 = vpop.f32.mrb[0].mxu0
        %v710 = vadd.f32 %v367, %v709
        %v711 = vpop.f32.mrb[0].mxu0
        %v712 = vadd.f32 %v371, %v711
        %713 = vmatprep.mubr.bf16.mxu0 0
        %714 = vmatmul.mubr.bf16.gmra.mrb[0].mxu0 %v558
        %v715 = vpop.f32.mrb[0].mxu0
        %v716 = vadd.f32 %v367, %v715
        %v717 = vpop.f32.mrb[0].mxu0
        %v718 = vadd.f32 %v371, %v717
        %v719 = vpop.f32.mrb[0].mxu0
        %v720 = vadd.f32 %v367, %v719
        %v721 = vpop.f32.mrb[0].mxu0
        %v722 = vadd.f32 %v371, %v721
        %723 = vmatprep.mubr.bf16.mxu0 0
        %724 = vmatmul.mubr.bf16.gmra.mrb[0].mxu0 %v561
        %v725 = vpop.f32.mrb[0].mxu0
        %v726 = vadd.f32 %v367, %v725
        %v727 = vpop.f32.mrb[0].mxu0
        %v728 = vadd.f32 %v371, %v727
        %v729 = vpop.f32.mrb[0].mxu0
        %v730 = vadd.f32 %v367, %v729
        %v731 = vpop.f32.mrb[0].mxu0
        %v732 = vadd.f32 %v371, %v731
        %733 = vmatprep.mubr.bf16.mxu0 0
        %734 = vmatmul.mubr.bf16.gmra.mrb[0].mxu0 %v564
        %v735 = vpop.f32.mrb[0].mxu0
        %v736 = vadd.f32 %v367, %v735
        %v737 = vpop.f32.mrb[0].mxu0
        %v738 = vadd.f32 %v371, %v737
        %v739 = vpop.f32.mrb[0].mxu0
        %v740 = vadd.f32 %v367, %v739
        %v741 = vpop.f32.mrb[0].mxu0
        %v742 = vadd.f32 %v371, %v741
        %743 = vmatprep.mubr.bf16.mxu0 0
        %744 = vmatmul.mubr.bf16.gmra.mrb[0].mxu0 %v567
        %v745 = vpop.f32.mrb[0].mxu0
        %v746 = vadd.f32 %v367, %v745
        %v747 = vpop.f32.mrb[0].mxu0
        %v748 = vadd.f32 %v371, %v747
        %v749 = vpop.f32.mrb[0].mxu0
        %v750 = vadd.f32 %v367, %v749
        %v751 = vpop.f32.mrb[0].mxu0
        %v752 = vadd.f32 %v371, %v751
        %753 = vmatprep.mubr.bf16.mxu0 0
        %754 = vmatmul.mubr.bf16.gmra.mrb[0].mxu0 %v570
        %v755 = vpop.f32.mrb[0].mxu0
        %v756 = vadd.f32 %v367, %v755
        %v757 = vpop.f32.mrb[0].mxu0
        %v758 = vadd.f32 %v371, %v757
        %v759 = vpop.f32.mrb[0].mxu0
        %v760 = vadd.f32 %v367, %v759
        %v761 = vpop.f32.mrb[0].mxu0
        %v762 = vadd.f32 %v371, %v761
        %763 = vmatprep.mubr.bf16.mxu0 0
        %764 = vmatmul.mubr.bf16.gmra.mrb[0].mxu0 %v573
        %v765 = vpop.f32.mrb[0].mxu0
        %v766 = vadd.f32 %v367, %v765
        %v767 = vpop.f32.mrb[0].mxu0
        %v768 = vadd.f32 %v371, %v767
        %v769 = vpop.f32.mrb[0].mxu0
        %v770 = vadd.f32 %v367, %v769
        %v771 = vpop.f32.mrb[0].mxu0
        %v772 = vadd.f32 %v371, %v771
        %773 = vmatprep.mubr.bf16.mxu0 0
        %774 = vmatmul.mubr.bf16.gmra.mrb[0].mxu0 %v576
        %v775 = vpop.f32.mrb[0].mxu0
        %v776 = vadd.f32 %v367, %v775
        %v777 = vpop.f32.mrb[0].mxu0
        %v778 = vadd.f32 %v371, %v777
        %v779 = vpop.f32.mrb[0].mxu0
        %v780 = vadd.f32 %v367, %v779
        %v781 = vpop.f32.mrb[0].mxu0
        %v782 = vadd.f32 %v371, %v781
        %783 = vmatprep.mubr.bf16.mxu0 0
        %784 = vmatmul.mubr.bf16.gmra.mrb[0].mxu0 %v579
        %v785 = vpop.f32.mrb[0].mxu0
        %v786 = vadd.f32 %v367, %v785
        %v787 = vpop.f32.mrb[0].mxu0
        %v788 = vadd.f32 %v371, %v787
        %v789 = vpop.f32.mrb[0].mxu0
        %v790 = vadd.f32 %v367, %v789
        %v791 = vpop.f32.mrb[0].mxu0
        %v792 = vadd.f32 %v371, %v791
        %793 = vmatprep.mubr.bf16.mxu0 0
        %794 = vmatmul.mubr.bf16.gmra.mrb[0].mxu0 %v582
        %v795 = vpop.f32.mrb[0].mxu0
        %v796 = vadd.f32 %v367, %v795
        %v797 = vpop.f32.mrb[0].mxu0
        %v798 = vadd.f32 %v371, %v797
        %v799 = vpop.f32.mrb[0].mxu0
        %v800 = vadd.f32 %v367, %v799
        %v801 = vpop.f32.mrb[0].mxu0
        %v802 = vadd.f32 %v371, %v801
        %803 = vmatprep.mubr.bf16.mxu0 0
        %804 = vmatmul.mubr.bf16.gmra.mrb[0].mxu0 %v585
        %v805 = vpop.f32.mrb[0].mxu0
        %v806 = vadd.f32 %v367, %v805
        %v807 = vpop.f32.mrb[0].mxu0
        %v808 = vadd.f32 %v371, %v807
        %v809 = vpop.f32.mrb[0].mxu0
        %v810 = vadd.f32 %v367, %v809
        %v811 = vpop.f32.mrb[0].mxu0
        %v812 = vadd.f32 %v371, %v811
        %813 = vmatprep.mubr.bf16.mxu0 0
        %814 = vmatmul.mubr.bf16.gmra.mrb[0].mxu0 %v588
        %v815 = vpop.f32.mrb[0].mxu0
        %v816 = vadd.f32 %v367, %v815
        %v817 = vpop.f32.mrb[0].mxu0
        %v818 = vadd.f32 %v371, %v817
        %v819 = vpop.f32.mrb[0].mxu0
        %v820 = vadd.f32 %v367, %v819
        %v821 = vpop.f32.mrb[0].mxu0
        %v822 = vadd.f32 %v371, %v821
        %823 = vmatprep.mubr.bf16.mxu0 0
        %824 = vmatmul.mubr.bf16.gmra.mrb[0].mxu0 %v591
        %v825 = vpop.f32.mrb[0].mxu0
        %v826 = vadd.f32 %v367, %v825
        %v827 = vpop.f32.mrb[0].mxu0
        %v828 = vadd.f32 %v371, %v827
        %v829 = vpop.f32.mrb[0].mxu0
        %v830 = vadd.f32 %v367, %v829
        %v831 = vpop.f32.mrb[0].mxu0
        %v832 = vadd.f32 %v371, %v831
        %833 = vmatprep.mubr.bf16.mxu0 0
        %834 = vmatmul.mubr.bf16.gmra.mrb[0].mxu0 %v594
        %v835 = vpop.f32.mrb[0].mxu0
        %v836 = vadd.f32 %v367, %v835
        %v837 = vpop.f32.mrb[0].mxu0
        %v838 = vadd.f32 %v371, %v837
        %v839 = vpop.f32.mrb[0].mxu0
        %v840 = vadd.f32 %v367, %v839
        %v841 = vpop.f32.mrb[0].mxu0
        %v842 = vadd.f32 %v371, %v841
        %843 = vmatprep.mubr.bf16.mxu0 0
        %844 = vmatmul.mubr.bf16.gmra.mrb[0].mxu0 %v597
        %v845 = vpop.f32.mrb[0].mxu0
        %v846 = vadd.f32 %v367, %v845
        %v847 = vpop.f32.mrb[0].mxu0
        %v848 = vadd.f32 %v371, %v847
        %v849 = vpop.f32.mrb[0].mxu0
        %v850 = vadd.f32 %v367, %v849
        %v851 = vpop.f32.mrb[0].mxu0
        %v852 = vadd.f32 %v371, %v851
        %853 = vmatprep.mubr.bf16.mxu0 0
        %854 = vmatmul.mubr.bf16.gmra.mrb[0].mxu0 %v600
        %v855 = vpop.f32.mrb[0].mxu0
        %v856 = vadd.f32 %v367, %v855
        %v857 = vpop.f32.mrb[0].mxu0
        %v858 = vadd.f32 %v371, %v857
        %v859 = vpop.f32.mrb[0].mxu0
        %v860 = vadd.f32 %v367, %v859
        %v861 = vpop.f32.mrb[0].mxu0
        %v862 = vadd.f32 %v371, %v861
        %863 = vmatprep.mubr.bf16.mxu0 0
        %864 = vmatmul.mubr.bf16.gmra.mrb[0].mxu0 %v603
        %v865 = vpop.f32.mrb[0].mxu0
        %v866 = vadd.f32 %v367, %v865
        %v867 = vpop.f32.mrb[0].mxu0
        %v868 = vadd.f32 %v371, %v867
        %v869 = vpop.f32.mrb[0].mxu0
        %v870 = vadd.f32 %v367, %v869
        %v871 = vpop.f32.mrb[0].mxu0
        %v872 = vadd.f32 %v371, %v871
        %873 = vmatprep.mubr.bf16.mxu0 0
        %874 = vmatmul.mubr.bf16.gmra.mrb[0].mxu0 %v606
        %v875 = vpop.f32.mrb[0].mxu0
        %v876 = vadd.f32 %v367, %v875
        %v877 = vpop.f32.mrb[0].mxu0
        %v878 = vadd.f32 %v371, %v877
        %v879 = vpop.f32.mrb[0].mxu0
        %v880 = vadd.f32 %v367, %v879
        %v881 = vpop.f32.mrb[0].mxu0
        %v882 = vadd.f32 %v371, %v881
        %883 = vmatprep.mubr.bf16.mxu0 0
        %884 = vmatmul.mubr.bf16.gmra.mrb[0].mxu0 %v609
        %v885 = vpop.f32.mrb[0].mxu0
        %v886 = vadd.f32 %v367, %v885
        %v887 = vpop.f32.mrb[0].mxu0
        %v888 = vadd.f32 %v371, %v887
        %v889 = vpop.f32.mrb[0].mxu0
        %v890 = vadd.f32 %v367, %v889
        %v891 = vpop.f32.mrb[0].mxu0
        %v892 = vadd.f32 %v371, %v891
        %893 = vmatprep.mubr.bf16.mxu0 0
        %894 = vmatmul.mubr.bf16.gmra.mrb[0].mxu0 %v612
        %v895 = vpop.f32.mrb[0].mxu0
        %v896 = vadd.f32 %v367, %v895
        %v897 = vpop.f32.mrb[0].mxu0
        %v898 = vadd.f32 %v371, %v897
        %v899 = vpop.f32.mrb[0].mxu0
        %v900 = vadd.f32 %v367, %v899
        %v901 = vpop.f32.mrb[0].mxu0
        %v902 = vadd.f32 %v371, %v901
        %903 = vmatprep.mubr.bf16.mxu0 0
        %904 = vmatmul.mubr.bf16.gmra.mrb[0].mxu0 %v615
        %v905 = vpop.f32.mrb[0].mxu0
        %v906 = vadd.f32 %v367, %v905
        %v907 = vpop.f32.mrb[0].mxu0
        %v908 = vadd.f32 %v371, %v907
        %v909 = vpop.f32.mrb[0].mxu0
        %v910 = vadd.f32 %v367, %v909
        %v911 = vpop.f32.mrb[0].mxu0
        %v912 = vadd.f32 %v371, %v911
        %913 = vmatprep.mubr.bf16.mxu0 0
        %914 = vmatmul.mubr.bf16.gmra.mrb[0].mxu0 %v618
        %v915 = vpop.f32.mrb[0].mxu0
        %v916 = vadd.f32 %v367, %v915
        %v917 = vpop.f32.mrb[0].mxu0
        %v918 = vadd.f32 %v371, %v917
        %v919 = vpop.f32.mrb[0].mxu0
        %v920 = vadd.f32 %v367, %v919
        %v921 = vpop.f32.mrb[0].mxu0
        %v922 = vadd.f32 %v371, %v921
        %923 = vmatprep.mubr.bf16.mxu0 0
        %924 = vmatmul.mubr.bf16.gmra.mrb[0].mxu0 %v621
        %v925 = vpop.f32.mrb[0].mxu0
        %v926 = vadd.f32 %v367, %v925
        %v927 = vpop.f32.mrb[0].mxu0
        %v928 = vadd.f32 %v371, %v927
        %v929 = vpop.f32.mrb[0].mxu0
        %v930 = vadd.f32 %v367, %v929
        %v931 = vpop.f32.mrb[0].mxu0
        %v932 = vadd.f32 %v371, %v931
        %933 = vmatprep.mubr.bf16.mxu0 0
        %934 = vmatmul.mubr.bf16.gmra.mrb[0].mxu0 %v624
        %v935 = vpop.f32.mrb[0].mxu0
        %v936 = vadd.f32 %v367, %v935
        %v937 = vpop.f32.mrb[0].mxu0
        %v938 = vadd.f32 %v371, %v937
        %v939 = vpop.f32.mrb[0].mxu0
        %v940 = vadd.f32 %v367, %v939
        %v941 = vpop.f32.mrb[0].mxu0
        %v942 = vadd.f32 %v371, %v941
        %943 = vmatprep.mubr.bf16.mxu0 0
        %944 = vmatmul.mubr.bf16.gmra.mrb[0].mxu0 %v627
        %v945 = vpop.f32.mrb[0].mxu0
        %v946 = vadd.f32 %v367, %v945
        %v947 = vpop.f32.mrb[0].mxu0
        %v948 = vadd.f32 %v371, %v947
        %v949 = vpop.f32.mrb[0].mxu0
        %v950 = vadd.f32 %v367, %v949
        %v951 = vpop.f32.mrb[0].mxu0
        %v952 = vadd.f32 %v371, %v951
        %953 = vmatprep.mubr.bf16.mxu0 0
        %954 = vmatmul.mubr.bf16.gmra.mrb[0].mxu0 %v630
        %v955 = vpop.f32.mrb[0].mxu0
        %v956 = vadd.f32 %v367, %v955
        %v957 = vpop.f32.mrb[0].mxu0
        %v958 = vadd.f32 %v371, %v957
        %v959 = vpop.f32.mrb[0].mxu0
        %v960 = vadd.f32 %v367, %v959
        %v961 = vpop.f32.mrb[0].mxu0
        %v962 = vadd.f32 %v371, %v961
        %963 = vmatprep.mubr.bf16.mxu0 0
        %964 = vmatmul.mubr.bf16.gmra.mrb[0].mxu0 %v633
        %v965 = vpop.f32.mrb[0].mxu0
        %v966 = vadd.f32 %v367, %v965
        %v967 = vpop.f32.mrb[0].mxu0
        %v968 = vadd.f32 %v371, %v967
        %v969 = vpop.f32.mrb[0].mxu0
        %v970 = vadd.f32 %v367, %v969
        %v971 = vpop.f32.mrb[0].mxu0
        %v972 = vadd.f32 %v371, %v971
        %973 = vmatprep.mubr.bf16.mxu0 0
        %974 = vmatmul.mubr.bf16.gmra.mrb[0].mxu0 %v636
        %v975 = vpop.f32.mrb[0].mxu0
        %v976 = vadd.f32 %v367, %v975
        %v977 = vpop.f32.mrb[0].mxu0
        %v978 = vadd.f32 %v371, %v977
        %v979 = vpop.f32.mrb[0].mxu0
        %v980 = vadd.f32 %v367, %v979
        %v981 = vpop.f32.mrb[0].mxu0
        %v982 = vadd.f32 %v371, %v981
        %983 = vmatprep.mubr.bf16.mxu0 0
        %984 = vmatmul.mubr.bf16.gmra.mrb[0].mxu0 %v639
        %v985 = vpop.f32.mrb[0].mxu0
        %v986 = vadd.f32 %v367, %v985
        %v987 = vpop.f32.mrb[0].mxu0
        %v988 = vadd.f32 %v371, %v987
        %v989 = vpop.f32.mrb[0].mxu0
        %v990 = vadd.f32 %v367, %v989
        %v991 = vpop.f32.mrb[0].mxu0
        %v992 = vadd.f32 %v371, %v991
        %993 = vdwg.mxu0
        %v994 = vmax.f32 %v676, 0.0
        %v995 = vmax.f32 %v678, 0.0
        %v996 = vmax.f32 %v680, 0.0
        %v997 = vmax.f32 %v682, 0.0
        %v998 = vmax.f32 %v686, 0.0
        %v999 = vmax.f32 %v688, 0.0
        %v1000 = vmax.f32 %v690, 0.0
        %v1001 = vmax.f32 %v692, 0.0
        %v1002 = vmax.f32 %v696, 0.0
        %v1003 = vmax.f32 %v698, 0.0
        %v1004 = vmax.f32 %v700, 0.0
        %v1005 = vmax.f32 %v702, 0.0
        %v1006 = vmax.f32 %v706, 0.0
        %v1007 = vmax.f32 %v708, 0.0
        %v1008 = vmax.f32 %v710, 0.0
        %v1009 = vmax.f32 %v712, 0.0
        %v1010 = vmax.f32 %v716, 0.0
        %v1011 = vmax.f32 %v718, 0.0
        %v1012 = vmax.f32 %v720, 0.0
        %v1013 = vmax.f32 %v722, 0.0
        %v1014 = vmax.f32 %v726, 0.0
        %v1015 = vmax.f32 %v728, 0.0
        %v1016 = vmax.f32 %v730, 0.0
        %v1017 = vmax.f32 %v732, 0.0
        %v1018 = vmax.f32 %v736, 0.0
        %v1019 = vmax.f32 %v738, 0.0
        %v1020 = vmax.f32 %v740, 0.0
        %v1021 = vmax.f32 %v742, 0.0
        %v1022 = vmax.f32 %v746, 0.0
        %v1023 = vmax.f32 %v748, 0.0
        %v1024 = vmax.f32 %v750, 0.0
        %v1025 = vmax.f32 %v752, 0.0
        %v1026 = vmax.f32 %v756, 0.0
        %v1027 = vmax.f32 %v758, 0.0
        %v1028 = vmax.f32 %v760, 0.0
        %v1029 = vmax.f32 %v762, 0.0
        %v1030 = vmax.f32 %v766, 0.0
        %v1031 = vmax.f32 %v768, 0.0
        %v1032 = vmax.f32 %v770, 0.0
        %v1033 = vmax.f32 %v772, 0.0
        %v1034 = vmax.f32 %v776, 0.0
        %v1035 = vmax.f32 %v778, 0.0
        %v1036 = vmax.f32 %v780, 0.0
        %v1037 = vmax.f32 %v782, 0.0
        %v1038 = vmax.f32 %v786, 0.0
        %v1039 = vmax.f32 %v788, 0.0
        %v1040 = vmax.f32 %v790, 0.0
        %v1041 = vmax.f32 %v792, 0.0
        %v1042 = vmax.f32 %v796, 0.0
        %v1043 = vmax.f32 %v798, 0.0
        %v1044 = vmax.f32 %v800, 0.0
        %v1045 = vmax.f32 %v802, 0.0
        %v1046 = vmax.f32 %v806, 0.0
        %v1047 = vmax.f32 %v808, 0.0
        %v1048 = vmax.f32 %v810, 0.0
        %v1049 = vmax.f32 %v812, 0.0
        %v1050 = vmax.f32 %v816, 0.0
        %v1051 = vmax.f32 %v818, 0.0
        %v1052 = vmax.f32 %v820, 0.0
        %v1053 = vmax.f32 %v822, 0.0
        %v1054 = vmax.f32 %v826, 0.0
        %v1055 = vmax.f32 %v828, 0.0
        %v1056 = vmax.f32 %v830, 0.0
        %v1057 = vmax.f32 %v832, 0.0
        %v1058 = vmax.f32 %v836, 0.0
        %v1059 = vmax.f32 %v838, 0.0
        %v1060 = vmax.f32 %v840, 0.0
        %v1061 = vmax.f32 %v842, 0.0
        %v1062 = vmax.f32 %v846, 0.0
        %v1063 = vmax.f32 %v848, 0.0
        %v1064 = vmax.f32 %v850, 0.0
        %v1065 = vmax.f32 %v852, 0.0
        %v1066 = vmax.f32 %v856, 0.0
        %v1067 = vmax.f32 %v858, 0.0
        %v1068 = vmax.f32 %v860, 0.0
        %v1069 = vmax.f32 %v862, 0.0
        %v1070 = vmax.f32 %v866, 0.0
        %v1071 = vmax.f32 %v868, 0.0
        %v1072 = vmax.f32 %v870, 0.0
        %v1073 = vmax.f32 %v872, 0.0
        %v1074 = vmax.f32 %v876, 0.0
        %v1075 = vmax.f32 %v878, 0.0
        %v1076 = vmax.f32 %v880, 0.0
        %v1077 = vmax.f32 %v882, 0.0
        %v1078 = vmax.f32 %v886, 0.0
        %v1079 = vmax.f32 %v888, 0.0
        %v1080 = vmax.f32 %v890, 0.0
        %v1081 = vmax.f32 %v892, 0.0
        %v1082 = vmax.f32 %v896, 0.0
        %v1083 = vmax.f32 %v898, 0.0
        %v1084 = vmax.f32 %v900, 0.0
        %v1085 = vmax.f32 %v902, 0.0
        %v1086 = vmax.f32 %v906, 0.0
        %v1087 = vmax.f32 %v908, 0.0
        %v1088 = vmax.f32 %v910, 0.0
        %v1089 = vmax.f32 %v912, 0.0
        %v1090 = vmax.f32 %v916, 0.0
        %v1091 = vmax.f32 %v918, 0.0
        %v1092 = vmax.f32 %v920, 0.0
        %v1093 = vmax.f32 %v922, 0.0
        %v1094 = vmax.f32 %v926, 0.0
        %v1095 = vmax.f32 %v928, 0.0
        %v1096 = vmax.f32 %v930, 0.0
        %v1097 = vmax.f32 %v932, 0.0
        %v1098 = vmax.f32 %v936, 0.0
        %v1099 = vmax.f32 %v938, 0.0
        %v1100 = vmax.f32 %v940, 0.0
        %v1101 = vmax.f32 %v942, 0.0
        %v1102 = vmax.f32 %v946, 0.0
        %v1103 = vmax.f32 %v948, 0.0
        %v1104 = vmax.f32 %v950, 0.0
        %v1105 = vmax.f32 %v952, 0.0
        %v1106 = vmax.f32 %v956, 0.0
        %v1107 = vmax.f32 %v958, 0.0
        %v1108 = vmax.f32 %v960, 0.0
        %v1109 = vmax.f32 %v962, 0.0
        %v1110 = vmax.f32 %v966, 0.0
        %v1111 = vmax.f32 %v968, 0.0
        %v1112 = vmax.f32 %v970, 0.0
        %v1113 = vmax.f32 %v972, 0.0
        %v1114 = vmax.f32 %v976, 0.0
        %v1115 = vmax.f32 %v978, 0.0
        %v1116 = vmax.f32 %v980, 0.0
        %v1117 = vmax.f32 %v982, 0.0
        %v1118 = vmax.f32 %v986, 0.0
        %v1119 = vmax.f32 %v988, 0.0
        %v1120 = vmax.f32 %v990, 0.0
        %v1121 = vmax.f32 %v992, 0.0
        %v1122 = vpack.c.bf16 %v996, %v994
        %v1123 = vpack.c.bf16 %v997, %v995
        %v1124 = vpack.c.bf16 %v1000, %v998
        %v1125 = vpack.c.bf16 %v1001, %v999
        %v1126 = vpack.c.bf16 %v1004, %v1002
        %v1127 = vpack.c.bf16 %v1005, %v1003
        %v1128 = vpack.c.bf16 %v1008, %v1006
        %v1129 = vpack.c.bf16 %v1009, %v1007
        %v1130 = vpack.c.bf16 %v1012, %v1010
        %v1131 = vpack.c.bf16 %v1013, %v1011
        %v1132 = vpack.c.bf16 %v1016, %v1014
        %v1133 = vpack.c.bf16 %v1017, %v1015
        %v1134 = vpack.c.bf16 %v1020, %v1018
        %v1135 = vpack.c.bf16 %v1021, %v1019
        %v1136 = vpack.c.bf16 %v1024, %v1022
        %v1137 = vpack.c.bf16 %v1025, %v1023
        %v1138 = vpack.c.bf16 %v1028, %v1026
        %v1139 = vpack.c.bf16 %v1029, %v1027
        %v1140 = vpack.c.bf16 %v1032, %v1030
        %v1141 = vpack.c.bf16 %v1033, %v1031
        %v1142 = vpack.c.bf16 %v1036, %v1034
        %v1143 = vpack.c.bf16 %v1037, %v1035
        %v1144 = vpack.c.bf16 %v1040, %v1038
        %v1145 = vpack.c.bf16 %v1041, %v1039
        %v1146 = vpack.c.bf16 %v1044, %v1042
        %v1147 = vpack.c.bf16 %v1045, %v1043
        %v1148 = vpack.c.bf16 %v1048, %v1046
        %v1149 = vpack.c.bf16 %v1049, %v1047
        %v1150 = vpack.c.bf16 %v1052, %v1050
        %v1151 = vpack.c.bf16 %v1053, %v1051
        %v1152 = vpack.c.bf16 %v1056, %v1054
        %v1153 = vpack.c.bf16 %v1057, %v1055
        %v1154 = vpack.c.bf16 %v1060, %v1058
        %v1155 = vpack.c.bf16 %v1061, %v1059
        %v1156 = vpack.c.bf16 %v1064, %v1062
        %v1157 = vpack.c.bf16 %v1065, %v1063
        %v1158 = vpack.c.bf16 %v1068, %v1066
        %v1159 = vpack.c.bf16 %v1069, %v1067
        %v1160 = vpack.c.bf16 %v1072, %v1070
        %v1161 = vpack.c.bf16 %v1073, %v1071
        %v1162 = vpack.c.bf16 %v1076, %v1074
        %v1163 = vpack.c.bf16 %v1077, %v1075
        %v1164 = vpack.c.bf16 %v1080, %v1078
        %v1165 = vpack.c.bf16 %v1081, %v1079
        %v1166 = vpack.c.bf16 %v1084, %v1082
        %v1167 = vpack.c.bf16 %v1085, %v1083
        %v1168 = vpack.c.bf16 %v1088, %v1086
        %v1169 = vpack.c.bf16 %v1089, %v1087
        %v1170 = vpack.c.bf16 %v1092, %v1090
        %v1171 = vpack.c.bf16 %v1093, %v1091
        %v1172 = vpack.c.bf16 %v1096, %v1094
        %v1173 = vpack.c.bf16 %v1097, %v1095
        %v1174 = vpack.c.bf16 %v1100, %v1098
        %v1175 = vpack.c.bf16 %v1101, %v1099
        %v1176 = vpack.c.bf16 %v1104, %v1102
        %v1177 = vpack.c.bf16 %v1105, %v1103
        %v1178 = vpack.c.bf16 %v1108, %v1106
        %v1179 = vpack.c.bf16 %v1109, %v1107
        %v1180 = vpack.c.bf16 %v1112, %v1110
        %v1181 = vpack.c.bf16 %v1113, %v1111
        %v1182 = vpack.c.bf16 %v1116, %v1114
        %v1183 = vpack.c.bf16 %v1117, %v1115
        %v1184 = vpack.c.bf16 %v1120, %v1118
        %v1185 = vpack.c.bf16 %v1121, %v1119
        %v1186 = vld [vmem:[#allocation2] sm:$0xff]
        %v1187 = vld [vmem:[#allocation2 + $0x8] sm:$0xff]
        %v1188 = vld [vmem:[#allocation2 + $0x10] sm:$0xff]
        %v1189 = vld [vmem:[#allocation2 + $0x18] sm:$0xff]
        %v1190 = vld [vmem:[#allocation2 + $0x20] sm:$0xff]
        %v1191 = vld [vmem:[#allocation2 + $0x28] sm:$0xff]
        %v1192 = vld [vmem:[#allocation2 + $0x30] sm:$0xff]
        %v1193 = vld [vmem:[#allocation2 + $0x38] sm:$0xff]
        %v1194 = vld [vmem:[#allocation2 + $0x40] sm:$0xff]
        %v1195 = vld [vmem:[#allocation2 + $0x48] sm:$0xff]
        %v1196 = vld [vmem:[#allocation2 + $0x50] sm:$0xff]
        %v1197 = vld [vmem:[#allocation2 + $0x58] sm:$0xff]
        %v1198 = vld [vmem:[#allocation2 + $0x60] sm:$0xff]
        %v1199 = vld [vmem:[#allocation2 + $0x68] sm:$0xff]
        %v1200 = vld [vmem:[#allocation2 + $0x70] sm:$0xff]
        %v1201 = vld [vmem:[#allocation2 + $0x78] sm:$0xff]
        %v1202 = vld [vmem:[#allocation2 + $0x80] sm:$0xff]
        %v1203 = vld [vmem:[#allocation2 + $0x88] sm:$0xff]
        %v1204 = vld [vmem:[#allocation2 + $0x90] sm:$0xff]
        %v1205 = vld [vmem:[#allocation2 + $0x98] sm:$0xff]
        %v1206 = vld [vmem:[#allocation2 + $0xa0] sm:$0xff]
        %v1207 = vld [vmem:[#allocation2 + $0xa8] sm:$0xff]
        %v1208 = vld [vmem:[#allocation2 + $0xb0] sm:$0xff]
        %v1209 = vld [vmem:[#allocation2 + $0xb8] sm:$0xff]
        %v1210 = vld [vmem:[#allocation2 + $0xc0] sm:$0xff]
        %v1211 = vld [vmem:[#allocation2 + $0xc8] sm:$0xff]
        %v1212 = vld [vmem:[#allocation2 + $0xd0] sm:$0xff]
        %v1213 = vld [vmem:[#allocation2 + $0xd8] sm:$0xff]
        %v1214 = vld [vmem:[#allocation2 + $0xe0] sm:$0xff]
        %v1215 = vld [vmem:[#allocation2 + $0xe8] sm:$0xff]
        %v1216 = vld [vmem:[#allocation2 + $0xf0] sm:$0xff]
        %v1217 = vld [vmem:[#allocation2 + $0xf8] sm:$0xff]
        %s1218 = scalar_lea.vmem %s4, 1
        %v1219 = vld [vmem:[%s1218] ss:$8 sm:$0x3]
        %v1221 = vlaneseq
        %v1222 = vshrl.u32 %v1221, 7
        %v1223 = vsub.s32 0, %v1222
        %v1224 = vrot.slane %v1219, %v1223
        %v1225 = vlaneseq
        %v1226 = vshrl.u32 %v1225, 7
        %v1227 = vsub.s32 1, %v1226
        %v1228 = vrot.slane %v1219, %v1227
        %v1263 = vunpack.c.l.b16 %v1186
        %v1264 = vunpack.c.h.b16 %v1186
        %v1265 = vunpack.c.l.b16 %v1187
        %v1266 = vunpack.c.h.b16 %v1187
        %v1267 = vunpack.c.l.b16 %v1188
        %v1268 = vunpack.c.h.b16 %v1188
        %v1269 = vunpack.c.l.b16 %v1189
        %v1270 = vunpack.c.h.b16 %v1189
        %v1271 = vunpack.c.l.b16 %v1190
        %v1272 = vunpack.c.h.b16 %v1190
        %v1273 = vunpack.c.l.b16 %v1191
        %v1274 = vunpack.c.h.b16 %v1191
        %v1275 = vunpack.c.l.b16 %v1192
        %v1276 = vunpack.c.h.b16 %v1192
        %v1277 = vunpack.c.l.b16 %v1193
        %v1278 = vunpack.c.h.b16 %v1193
        %v1279 = vunpack.c.l.b16 %v1194
        %v1280 = vunpack.c.h.b16 %v1194
        %v1281 = vunpack.c.l.b16 %v1195
        %v1282 = vunpack.c.h.b16 %v1195
        %v1283 = vunpack.c.l.b16 %v1196
        %v1284 = vunpack.c.h.b16 %v1196
        %v1285 = vunpack.c.l.b16 %v1197
        %v1286 = vunpack.c.h.b16 %v1197
        %v1287 = vunpack.c.l.b16 %v1198
        %v1288 = vunpack.c.h.b16 %v1198
        %v1289 = vunpack.c.l.b16 %v1199
        %v1290 = vunpack.c.h.b16 %v1199
        %v1291 = vunpack.c.l.b16 %v1200
        %v1292 = vunpack.c.h.b16 %v1200
        %v1293 = vunpack.c.l.b16 %v1201
        %v1294 = vunpack.c.h.b16 %v1201
        %v1295 = vunpack.c.l.b16 %v1202
        %v1296 = vunpack.c.h.b16 %v1202
        %v1297 = vunpack.c.l.b16 %v1203
        %v1298 = vunpack.c.h.b16 %v1203
        %v1299 = vunpack.c.l.b16 %v1204
        %v1300 = vunpack.c.h.b16 %v1204
        %v1301 = vunpack.c.l.b16 %v1205
        %v1302 = vunpack.c.h.b16 %v1205
        %v1303 = vunpack.c.l.b16 %v1206
        %v1304 = vunpack.c.h.b16 %v1206
        %v1305 = vunpack.c.l.b16 %v1207
        %v1306 = vunpack.c.h.b16 %v1207
        %v1307 = vunpack.c.l.b16 %v1208
        %v1308 = vunpack.c.h.b16 %v1208
        %v1309 = vunpack.c.l.b16 %v1209
        %v1310 = vunpack.c.h.b16 %v1209
        %v1311 = vunpack.c.l.b16 %v1210
        %v1312 = vunpack.c.h.b16 %v1210
        %v1313 = vunpack.c.l.b16 %v1211
        %v1314 = vunpack.c.h.b16 %v1211
        %v1315 = vunpack.c.l.b16 %v1212
        %v1316 = vunpack.c.h.b16 %v1212
        %v1317 = vunpack.c.l.b16 %v1213
        %v1318 = vunpack.c.h.b16 %v1213
        %v1319 = vunpack.c.l.b16 %v1214
        %v1320 = vunpack.c.h.b16 %v1214
        %v1321 = vunpack.c.l.b16 %v1215
        %v1322 = vunpack.c.h.b16 %v1215
        %v1323 = vunpack.c.l.b16 %v1216
        %v1324 = vunpack.c.h.b16 %v1216
        %v1325 = vunpack.c.l.b16 %v1217
        %v1326 = vunpack.c.h.b16 %v1217
        %v1327 = vpack.c.b16 %v1265, %v1263
        %v1328 = vpack.c.b16 %v1266, %v1264
        %v1329 = vpack.c.b16 %v1269, %v1267
        %v1330 = vpack.c.b16 %v1270, %v1268
        %v1331 = vpack.c.b16 %v1273, %v1271
        %v1332 = vpack.c.b16 %v1274, %v1272
        %v1333 = vpack.c.b16 %v1277, %v1275
        %v1334 = vpack.c.b16 %v1278, %v1276
        %v1335 = vpack.c.b16 %v1281, %v1279
        %v1336 = vpack.c.b16 %v1282, %v1280
        %v1337 = vpack.c.b16 %v1285, %v1283
        %v1338 = vpack.c.b16 %v1286, %v1284
        %v1339 = vpack.c.b16 %v1289, %v1287
        %v1340 = vpack.c.b16 %v1290, %v1288
        %v1341 = vpack.c.b16 %v1293, %v1291
        %v1342 = vpack.c.b16 %v1294, %v1292
        %v1343 = vpack.c.b16 %v1297, %v1295
        %v1344 = vpack.c.b16 %v1298, %v1296
        %v1345 = vpack.c.b16 %v1301, %v1299
        %v1346 = vpack.c.b16 %v1302, %v1300
        %v1347 = vpack.c.b16 %v1305, %v1303
        %v1348 = vpack.c.b16 %v1306, %v1304
        %v1349 = vpack.c.b16 %v1309, %v1307
        %v1350 = vpack.c.b16 %v1310, %v1308
        %v1351 = vpack.c.b16 %v1313, %v1311
        %v1352 = vpack.c.b16 %v1314, %v1312
        %v1353 = vpack.c.b16 %v1317, %v1315
        %v1354 = vpack.c.b16 %v1318, %v1316
        %v1355 = vpack.c.b16 %v1321, %v1319
        %v1356 = vpack.c.b16 %v1322, %v1320
        %v1357 = vpack.c.b16 %v1325, %v1323
        %v1358 = vpack.c.b16 %v1326, %v1324
        %1391 = vmatprep.subr.bf16.mxu0 %v1328
        %1392 = vmatpush1.bf16.msra.mxu0 %v1327
        %1393 = vmatprep.subr.bf16.mxu0 %v1330
        %1394 = vmatpush1.bf16.msra.mxu0 %v1329
        %1395 = vmatprep.subr.bf16.mxu0 %v1332
        %1396 = vmatpush1.bf16.msra.mxu0 %v1331
        %1397 = vmatprep.subr.bf16.mxu0 %v1334
        %1398 = vmatpush1.bf16.msra.mxu0 %v1333
        %1399 = vmatprep.subr.bf16.mxu0 %v1336
        %1400 = vmatpush1.bf16.msra.mxu0 %v1335
        %1401 = vmatprep.subr.bf16.mxu0 %v1338
        %1402 = vmatpush1.bf16.msra.mxu0 %v1337
        %1403 = vmatprep.subr.bf16.mxu0 %v1340
        %1404 = vmatpush1.bf16.msra.mxu0 %v1339
        %1405 = vmatprep.subr.bf16.mxu0 %v1342
        %1406 = vmatpush1.bf16.msra.mxu0 %v1341
        %1407 = vmatprep.subr.bf16.mxu0 %v1344
        %1408 = vmatpush1.bf16.msra.mxu0 %v1343
        %1409 = vmatprep.subr.bf16.mxu0 %v1346
        %1410 = vmatpush1.bf16.msra.mxu0 %v1345
        %1411 = vmatprep.subr.bf16.mxu0 %v1348
        %1412 = vmatpush1.bf16.msra.mxu0 %v1347
        %1413 = vmatprep.subr.bf16.mxu0 %v1350
        %1414 = vmatpush1.bf16.msra.mxu0 %v1349
        %1415 = vmatprep.subr.bf16.mxu0 %v1352
        %1416 = vmatpush1.bf16.msra.mxu0 %v1351
        %1417 = vmatprep.subr.bf16.mxu0 %v1354
        %1418 = vmatpush1.bf16.msra.mxu0 %v1353
        %1419 = vmatprep.subr.bf16.mxu0 %v1356
        %1420 = vmatpush1.bf16.msra.mxu0 %v1355
        %1421 = vmatprep.subr.bf16.mxu0 %v1358
        %1422 = vmatpush1.bf16.msra.mxu0 %v1357
        %1423 = vmatprep.mubr.bf16.mxu0 %v1123
        %1424 = vmatmul.mubr.bf16.gmra.mrb[0].mxu0 %v1122
        %v1425 = vpop.f32.mrb[0].mxu0
        %v1426 = vadd.f32 %v1224, %v1425
        %v1427 = vpop.f32.mrb[0].mxu0
        %v1428 = vadd.f32 %v1228, %v1427
        %v1429 = vpop.f32.mrb[0].mxu0
        %v1430 = vadd.f32 %v1224, %v1429
        %v1431 = vpop.f32.mrb[0].mxu0
        %v1432 = vadd.f32 %v1228, %v1431
        %1433 = vmatprep.mubr.bf16.mxu0 %v1125
        %1434 = vmatmul.mubr.bf16.gmra.mrb[0].mxu0 %v1124
        %v1435 = vpop.f32.mrb[0].mxu0
        %v1436 = vadd.f32 %v1224, %v1435
        %v1437 = vpop.f32.mrb[0].mxu0
        %v1438 = vadd.f32 %v1228, %v1437
        %v1439 = vpop.f32.mrb[0].mxu0
        %v1440 = vadd.f32 %v1224, %v1439
        %v1441 = vpop.f32.mrb[0].mxu0
        %v1442 = vadd.f32 %v1228, %v1441
        %1443 = vmatprep.mubr.bf16.mxu0 %v1127
        %1444 = vmatmul.mubr.bf16.gmra.mrb[0].mxu0 %v1126
        %v1445 = vpop.f32.mrb[0].mxu0
        %v1446 = vadd.f32 %v1224, %v1445
        %v1447 = vpop.f32.mrb[0].mxu0
        %v1448 = vadd.f32 %v1228, %v1447
        %v1449 = vpop.f32.mrb[0].mxu0
        %v1450 = vadd.f32 %v1224, %v1449
        %v1451 = vpop.f32.mrb[0].mxu0
        %v1452 = vadd.f32 %v1228, %v1451
        %1453 = vmatprep.mubr.bf16.mxu0 %v1129
        %1454 = vmatmul.mubr.bf16.gmra.mrb[0].mxu0 %v1128
        %v1455 = vpop.f32.mrb[0].mxu0
        %v1456 = vadd.f32 %v1224, %v1455
        %v1457 = vpop.f32.mrb[0].mxu0
        %v1458 = vadd.f32 %v1228, %v1457
        %v1459 = vpop.f32.mrb[0].mxu0
        %v1460 = vadd.f32 %v1224, %v1459
        %v1461 = vpop.f32.mrb[0].mxu0
        %v1462 = vadd.f32 %v1228, %v1461
        %1463 = vmatprep.mubr.bf16.mxu0 %v1131
        %1464 = vmatmul.mubr.bf16.gmra.mrb[0].mxu0 %v1130
        %v1465 = vpop.f32.mrb[0].mxu0
        %v1466 = vadd.f32 %v1224, %v1465
        %v1467 = vpop.f32.mrb[0].mxu0
        %v1468 = vadd.f32 %v1228, %v1467
        %v1469 = vpop.f32.mrb[0].mxu0
        %v1470 = vadd.f32 %v1224, %v1469
        %v1471 = vpop.f32.mrb[0].mxu0
        %v1472 = vadd.f32 %v1228, %v1471
        %1473 = vmatprep.mubr.bf16.mxu0 %v1133
        %1474 = vmatmul.mubr.bf16.gmra.mrb[0].mxu0 %v1132
        %v1475 = vpop.f32.mrb[0].mxu0
        %v1476 = vadd.f32 %v1224, %v1475
        %v1477 = vpop.f32.mrb[0].mxu0
        %v1478 = vadd.f32 %v1228, %v1477
        %v1479 = vpop.f32.mrb[0].mxu0
        %v1480 = vadd.f32 %v1224, %v1479
        %v1481 = vpop.f32.mrb[0].mxu0
        %v1482 = vadd.f32 %v1228, %v1481
        %1483 = vmatprep.mubr.bf16.mxu0 %v1135
        %1484 = vmatmul.mubr.bf16.gmra.mrb[0].mxu0 %v1134
        %v1485 = vpop.f32.mrb[0].mxu0
        %v1486 = vadd.f32 %v1224, %v1485
        %v1487 = vpop.f32.mrb[0].mxu0
        %v1488 = vadd.f32 %v1228, %v1487
        %v1489 = vpop.f32.mrb[0].mxu0
        %v1490 = vadd.f32 %v1224, %v1489
        %v1491 = vpop.f32.mrb[0].mxu0
        %v1492 = vadd.f32 %v1228, %v1491
        %1493 = vmatprep.mubr.bf16.mxu0 %v1137
        %1494 = vmatmul.mubr.bf16.gmra.mrb[0].mxu0 %v1136
        %v1495 = vpop.f32.mrb[0].mxu0
        %v1496 = vadd.f32 %v1224, %v1495
        %v1497 = vpop.f32.mrb[0].mxu0
        %v1498 = vadd.f32 %v1228, %v1497
        %v1499 = vpop.f32.mrb[0].mxu0
        %v1500 = vadd.f32 %v1224, %v1499
        %v1501 = vpop.f32.mrb[0].mxu0
        %v1502 = vadd.f32 %v1228, %v1501
        %1503 = vmatprep.mubr.bf16.mxu0 %v1139
        %1504 = vmatmul.mubr.bf16.gmra.mrb[0].mxu0 %v1138
        %v1505 = vpop.f32.mrb[0].mxu0
        %v1506 = vadd.f32 %v1224, %v1505
        %v1507 = vpop.f32.mrb[0].mxu0
        %v1508 = vadd.f32 %v1228, %v1507
        %v1509 = vpop.f32.mrb[0].mxu0
        %v1510 = vadd.f32 %v1224, %v1509
        %v1511 = vpop.f32.mrb[0].mxu0
        %v1512 = vadd.f32 %v1228, %v1511
        %1513 = vmatprep.mubr.bf16.mxu0 %v1141
        %1514 = vmatmul.mubr.bf16.gmra.mrb[0].mxu0 %v1140
        %v1515 = vpop.f32.mrb[0].mxu0
        %v1516 = vadd.f32 %v1224, %v1515
        %v1517 = vpop.f32.mrb[0].mxu0
        %v1518 = vadd.f32 %v1228, %v1517
        %v1519 = vpop.f32.mrb[0].mxu0
        %v1520 = vadd.f32 %v1224, %v1519
        %v1521 = vpop.f32.mrb[0].mxu0
        %v1522 = vadd.f32 %v1228, %v1521
        %1523 = vmatprep.mubr.bf16.mxu0 %v1143
        %1524 = vmatmul.mubr.bf16.gmra.mrb[0].mxu0 %v1142
        %v1525 = vpop.f32.mrb[0].mxu0
        %v1526 = vadd.f32 %v1224, %v1525
        %v1527 = vpop.f32.mrb[0].mxu0
        %v1528 = vadd.f32 %v1228, %v1527
        %v1529 = vpop.f32.mrb[0].mxu0
        %v1530 = vadd.f32 %v1224, %v1529
        %v1531 = vpop.f32.mrb[0].mxu0
        %v1532 = vadd.f32 %v1228, %v1531
        %1533 = vmatprep.mubr.bf16.mxu0 %v1145
        %1534 = vmatmul.mubr.bf16.gmra.mrb[0].mxu0 %v1144
        %v1535 = vpop.f32.mrb[0].mxu0
        %v1536 = vadd.f32 %v1224, %v1535
        %v1537 = vpop.f32.mrb[0].mxu0
        %v1538 = vadd.f32 %v1228, %v1537
        %v1539 = vpop.f32.mrb[0].mxu0
        %v1540 = vadd.f32 %v1224, %v1539
        %v1541 = vpop.f32.mrb[0].mxu0
        %v1542 = vadd.f32 %v1228, %v1541
        %1543 = vmatprep.mubr.bf16.mxu0 %v1147
        %1544 = vmatmul.mubr.bf16.gmra.mrb[0].mxu0 %v1146
        %v1545 = vpop.f32.mrb[0].mxu0
        %v1546 = vadd.f32 %v1224, %v1545
        %v1547 = vpop.f32.mrb[0].mxu0
        %v1548 = vadd.f32 %v1228, %v1547
        %v1549 = vpop.f32.mrb[0].mxu0
        %v1550 = vadd.f32 %v1224, %v1549
        %v1551 = vpop.f32.mrb[0].mxu0
        %v1552 = vadd.f32 %v1228, %v1551
        %1553 = vmatprep.mubr.bf16.mxu0 %v1149
        %1554 = vmatmul.mubr.bf16.gmra.mrb[0].mxu0 %v1148
        %v1555 = vpop.f32.mrb[0].mxu0
        %v1556 = vadd.f32 %v1224, %v1555
        %v1557 = vpop.f32.mrb[0].mxu0
        %v1558 = vadd.f32 %v1228, %v1557
        %v1559 = vpop.f32.mrb[0].mxu0
        %v1560 = vadd.f32 %v1224, %v1559
        %v1561 = vpop.f32.mrb[0].mxu0
        %v1562 = vadd.f32 %v1228, %v1561
        %1563 = vmatprep.mubr.bf16.mxu0 %v1151
        %1564 = vmatmul.mubr.bf16.gmra.mrb[0].mxu0 %v1150
        %v1565 = vpop.f32.mrb[0].mxu0
        %v1566 = vadd.f32 %v1224, %v1565
        %v1567 = vpop.f32.mrb[0].mxu0
        %v1568 = vadd.f32 %v1228, %v1567
        %v1569 = vpop.f32.mrb[0].mxu0
        %v1570 = vadd.f32 %v1224, %v1569
        %v1571 = vpop.f32.mrb[0].mxu0
        %v1572 = vadd.f32 %v1228, %v1571
        %1573 = vmatprep.mubr.bf16.mxu0 %v1153
        %1574 = vmatmul.mubr.bf16.gmra.mrb[0].mxu0 %v1152
        %v1575 = vpop.f32.mrb[0].mxu0
        %v1576 = vadd.f32 %v1224, %v1575
        %v1577 = vpop.f32.mrb[0].mxu0
        %v1578 = vadd.f32 %v1228, %v1577
        %v1579 = vpop.f32.mrb[0].mxu0
        %v1580 = vadd.f32 %v1224, %v1579
        %v1581 = vpop.f32.mrb[0].mxu0
        %v1582 = vadd.f32 %v1228, %v1581
        %1583 = vmatprep.mubr.bf16.mxu0 %v1155
        %1584 = vmatmul.mubr.bf16.gmra.mrb[0].mxu0 %v1154
        %v1585 = vpop.f32.mrb[0].mxu0
        %v1586 = vadd.f32 %v1224, %v1585
        %v1587 = vpop.f32.mrb[0].mxu0
        %v1588 = vadd.f32 %v1228, %v1587
        %v1589 = vpop.f32.mrb[0].mxu0
        %v1590 = vadd.f32 %v1224, %v1589
        %v1591 = vpop.f32.mrb[0].mxu0
        %v1592 = vadd.f32 %v1228, %v1591
        %1593 = vmatprep.mubr.bf16.mxu0 %v1157
        %1594 = vmatmul.mubr.bf16.gmra.mrb[0].mxu0 %v1156
        %v1595 = vpop.f32.mrb[0].mxu0
        %v1596 = vadd.f32 %v1224, %v1595
        %v1597 = vpop.f32.mrb[0].mxu0
        %v1598 = vadd.f32 %v1228, %v1597
        %v1599 = vpop.f32.mrb[0].mxu0
        %v1600 = vadd.f32 %v1224, %v1599
        %v1601 = vpop.f32.mrb[0].mxu0
        %v1602 = vadd.f32 %v1228, %v1601
        %1603 = vmatprep.mubr.bf16.mxu0 %v1159
        %1604 = vmatmul.mubr.bf16.gmra.mrb[0].mxu0 %v1158
        %v1605 = vpop.f32.mrb[0].mxu0
        %v1606 = vadd.f32 %v1224, %v1605
        %v1607 = vpop.f32.mrb[0].mxu0
        %v1608 = vadd.f32 %v1228, %v1607
        %v1609 = vpop.f32.mrb[0].mxu0
        %v1610 = vadd.f32 %v1224, %v1609
        %v1611 = vpop.f32.mrb[0].mxu0
        %v1612 = vadd.f32 %v1228, %v1611
        %1613 = vmatprep.mubr.bf16.mxu0 %v1161
        %1614 = vmatmul.mubr.bf16.gmra.mrb[0].mxu0 %v1160
        %v1615 = vpop.f32.mrb[0].mxu0
        %v1616 = vadd.f32 %v1224, %v1615
        %v1617 = vpop.f32.mrb[0].mxu0
        %v1618 = vadd.f32 %v1228, %v1617
        %v1619 = vpop.f32.mrb[0].mxu0
        %v1620 = vadd.f32 %v1224, %v1619
        %v1621 = vpop.f32.mrb[0].mxu0
        %v1622 = vadd.f32 %v1228, %v1621
        %1623 = vmatprep.mubr.bf16.mxu0 %v1163
        %1624 = vmatmul.mubr.bf16.gmra.mrb[0].mxu0 %v1162
        %v1625 = vpop.f32.mrb[0].mxu0
        %v1626 = vadd.f32 %v1224, %v1625
        %v1627 = vpop.f32.mrb[0].mxu0
        %v1628 = vadd.f32 %v1228, %v1627
        %v1629 = vpop.f32.mrb[0].mxu0
        %v1630 = vadd.f32 %v1224, %v1629
        %v1631 = vpop.f32.mrb[0].mxu0
        %v1632 = vadd.f32 %v1228, %v1631
        %1633 = vmatprep.mubr.bf16.mxu0 %v1165
        %1634 = vmatmul.mubr.bf16.gmra.mrb[0].mxu0 %v1164
        %v1635 = vpop.f32.mrb[0].mxu0
        %v1636 = vadd.f32 %v1224, %v1635
        %v1637 = vpop.f32.mrb[0].mxu0
        %v1638 = vadd.f32 %v1228, %v1637
        %v1639 = vpop.f32.mrb[0].mxu0
        %v1640 = vadd.f32 %v1224, %v1639
        %v1641 = vpop.f32.mrb[0].mxu0
        %v1642 = vadd.f32 %v1228, %v1641
        %1643 = vmatprep.mubr.bf16.mxu0 %v1167
        %1644 = vmatmul.mubr.bf16.gmra.mrb[0].mxu0 %v1166
        %v1645 = vpop.f32.mrb[0].mxu0
        %v1646 = vadd.f32 %v1224, %v1645
        %v1647 = vpop.f32.mrb[0].mxu0
        %v1648 = vadd.f32 %v1228, %v1647
        %v1649 = vpop.f32.mrb[0].mxu0
        %v1650 = vadd.f32 %v1224, %v1649
        %v1651 = vpop.f32.mrb[0].mxu0
        %v1652 = vadd.f32 %v1228, %v1651
        %1653 = vmatprep.mubr.bf16.mxu0 %v1169
        %1654 = vmatmul.mubr.bf16.gmra.mrb[0].mxu0 %v1168
        %v1655 = vpop.f32.mrb[0].mxu0
        %v1656 = vadd.f32 %v1224, %v1655
        %v1657 = vpop.f32.mrb[0].mxu0
        %v1658 = vadd.f32 %v1228, %v1657
        %v1659 = vpop.f32.mrb[0].mxu0
        %v1660 = vadd.f32 %v1224, %v1659
        %v1661 = vpop.f32.mrb[0].mxu0
        %v1662 = vadd.f32 %v1228, %v1661
        %1663 = vmatprep.mubr.bf16.mxu0 %v1171
        %1664 = vmatmul.mubr.bf16.gmra.mrb[0].mxu0 %v1170
        %v1665 = vpop.f32.mrb[0].mxu0
        %v1666 = vadd.f32 %v1224, %v1665
        %v1667 = vpop.f32.mrb[0].mxu0
        %v1668 = vadd.f32 %v1228, %v1667
        %v1669 = vpop.f32.mrb[0].mxu0
        %v1670 = vadd.f32 %v1224, %v1669
        %v1671 = vpop.f32.mrb[0].mxu0
        %v1672 = vadd.f32 %v1228, %v1671
        %1673 = vmatprep.mubr.bf16.mxu0 %v1173
        %1674 = vmatmul.mubr.bf16.gmra.mrb[0].mxu0 %v1172
        %v1675 = vpop.f32.mrb[0].mxu0
        %v1676 = vadd.f32 %v1224, %v1675
        %v1677 = vpop.f32.mrb[0].mxu0
        %v1678 = vadd.f32 %v1228, %v1677
        %v1679 = vpop.f32.mrb[0].mxu0
        %v1680 = vadd.f32 %v1224, %v1679
        %v1681 = vpop.f32.mrb[0].mxu0
        %v1682 = vadd.f32 %v1228, %v1681
        %1683 = vmatprep.mubr.bf16.mxu0 %v1175
        %1684 = vmatmul.mubr.bf16.gmra.mrb[0].mxu0 %v1174
        %v1685 = vpop.f32.mrb[0].mxu0
        %v1686 = vadd.f32 %v1224, %v1685
        %v1687 = vpop.f32.mrb[0].mxu0
        %v1688 = vadd.f32 %v1228, %v1687
        %v1689 = vpop.f32.mrb[0].mxu0
        %v1690 = vadd.f32 %v1224, %v1689
        %v1691 = vpop.f32.mrb[0].mxu0
        %v1692 = vadd.f32 %v1228, %v1691
        %1693 = vmatprep.mubr.bf16.mxu0 %v1177
        %1694 = vmatmul.mubr.bf16.gmra.mrb[0].mxu0 %v1176
        %v1695 = vpop.f32.mrb[0].mxu0
        %v1696 = vadd.f32 %v1224, %v1695
        %v1697 = vpop.f32.mrb[0].mxu0
        %v1698 = vadd.f32 %v1228, %v1697
        %v1699 = vpop.f32.mrb[0].mxu0
        %v1700 = vadd.f32 %v1224, %v1699
        %v1701 = vpop.f32.mrb[0].mxu0
        %v1702 = vadd.f32 %v1228, %v1701
        %1703 = vmatprep.mubr.bf16.mxu0 %v1179
        %1704 = vmatmul.mubr.bf16.gmra.mrb[0].mxu0 %v1178
        %v1705 = vpop.f32.mrb[0].mxu0
        %v1706 = vadd.f32 %v1224, %v1705
        %v1707 = vpop.f32.mrb[0].mxu0
        %v1708 = vadd.f32 %v1228, %v1707
        %v1709 = vpop.f32.mrb[0].mxu0
        %v1710 = vadd.f32 %v1224, %v1709
        %v1711 = vpop.f32.mrb[0].mxu0
        %v1712 = vadd.f32 %v1228, %v1711
        %1713 = vmatprep.mubr.bf16.mxu0 %v1181
        %1714 = vmatmul.mubr.bf16.gmra.mrb[0].mxu0 %v1180
        %v1715 = vpop.f32.mrb[0].mxu0
        %v1716 = vadd.f32 %v1224, %v1715
        %v1717 = vpop.f32.mrb[0].mxu0
        %v1718 = vadd.f32 %v1228, %v1717
        %v1719 = vpop.f32.mrb[0].mxu0
        %v1720 = vadd.f32 %v1224, %v1719
        %v1721 = vpop.f32.mrb[0].mxu0
        %v1722 = vadd.f32 %v1228, %v1721
        %1723 = vmatprep.mubr.bf16.mxu0 %v1183
        %1724 = vmatmul.mubr.bf16.gmra.mrb[0].mxu0 %v1182
        %v1725 = vpop.f32.mrb[0].mxu0
        %v1726 = vadd.f32 %v1224, %v1725
        %v1727 = vpop.f32.mrb[0].mxu0
        %v1728 = vadd.f32 %v1228, %v1727
        %v1729 = vpop.f32.mrb[0].mxu0
        %v1730 = vadd.f32 %v1224, %v1729
        %v1731 = vpop.f32.mrb[0].mxu0
        %v1732 = vadd.f32 %v1228, %v1731
        %1733 = vmatprep.mubr.bf16.mxu0 %v1185
        %1734 = vmatmul.mubr.bf16.gmra.mrb[0].mxu0 %v1184
        %v1735 = vpop.f32.mrb[0].mxu0
        %v1736 = vadd.f32 %v1224, %v1735
        %v1737 = vpop.f32.mrb[0].mxu0
        %v1738 = vadd.f32 %v1228, %v1737
        %v1739 = vpop.f32.mrb[0].mxu0
        %v1740 = vadd.f32 %v1224, %v1739
        %v1741 = vpop.f32.mrb[0].mxu0
        %v1742 = vadd.f32 %v1228, %v1741
        %1743 = vdwg.mxu0
        %v1744 = vmax.f32 %v1426, 0.0
        %v1745 = vmax.f32 %v1428, 0.0
        %v1746 = vmax.f32 %v1430, 0.0
        %v1747 = vmax.f32 %v1432, 0.0
        %v1748 = vmax.f32 %v1436, 0.0
        %v1749 = vmax.f32 %v1438, 0.0
        %v1750 = vmax.f32 %v1440, 0.0
        %v1751 = vmax.f32 %v1442, 0.0
        %v1752 = vmax.f32 %v1446, 0.0
        %v1753 = vmax.f32 %v1448, 0.0
        %v1754 = vmax.f32 %v1450, 0.0
        %v1755 = vmax.f32 %v1452, 0.0
        %v1756 = vmax.f32 %v1456, 0.0
        %v1757 = vmax.f32 %v1458, 0.0
        %v1758 = vmax.f32 %v1460, 0.0
        %v1759 = vmax.f32 %v1462, 0.0
        %v1760 = vmax.f32 %v1466, 0.0
        %v1761 = vmax.f32 %v1468, 0.0
        %v1762 = vmax.f32 %v1470, 0.0
        %v1763 = vmax.f32 %v1472, 0.0
        %v1764 = vmax.f32 %v1476, 0.0
        %v1765 = vmax.f32 %v1478, 0.0
        %v1766 = vmax.f32 %v1480, 0.0
        %v1767 = vmax.f32 %v1482, 0.0
        %v1768 = vmax.f32 %v1486, 0.0
        %v1769 = vmax.f32 %v1488, 0.0
        %v1770 = vmax.f32 %v1490, 0.0
        %v1771 = vmax.f32 %v1492, 0.0
        %v1772 = vmax.f32 %v1496, 0.0
        %v1773 = vmax.f32 %v1498, 0.0
        %v1774 = vmax.f32 %v1500, 0.0
        %v1775 = vmax.f32 %v1502, 0.0
        %v1776 = vmax.f32 %v1506, 0.0
        %v1777 = vmax.f32 %v1508, 0.0
        %v1778 = vmax.f32 %v1510, 0.0
        %v1779 = vmax.f32 %v1512, 0.0
        %v1780 = vmax.f32 %v1516, 0.0
        %v1781 = vmax.f32 %v1518, 0.0
        %v1782 = vmax.f32 %v1520, 0.0
        %v1783 = vmax.f32 %v1522, 0.0
        %v1784 = vmax.f32 %v1526, 0.0
        %v1785 = vmax.f32 %v1528, 0.0
        %v1786 = vmax.f32 %v1530, 0.0
        %v1787 = vmax.f32 %v1532, 0.0
        %v1788 = vmax.f32 %v1536, 0.0
        %v1789 = vmax.f32 %v1538, 0.0
        %v1790 = vmax.f32 %v1540, 0.0
        %v1791 = vmax.f32 %v1542, 0.0
        %v1792 = vmax.f32 %v1546, 0.0
        %v1793 = vmax.f32 %v1548, 0.0
        %v1794 = vmax.f32 %v1550, 0.0
        %v1795 = vmax.f32 %v1552, 0.0
        %v1796 = vmax.f32 %v1556, 0.0
        %v1797 = vmax.f32 %v1558, 0.0
        %v1798 = vmax.f32 %v1560, 0.0
        %v1799 = vmax.f32 %v1562, 0.0
        %v1800 = vmax.f32 %v1566, 0.0
        %v1801 = vmax.f32 %v1568, 0.0
        %v1802 = vmax.f32 %v1570, 0.0
        %v1803 = vmax.f32 %v1572, 0.0
        %v1804 = vmax.f32 %v1576, 0.0
        %v1805 = vmax.f32 %v1578, 0.0
        %v1806 = vmax.f32 %v1580, 0.0
        %v1807 = vmax.f32 %v1582, 0.0
        %v1808 = vmax.f32 %v1586, 0.0
        %v1809 = vmax.f32 %v1588, 0.0
        %v1810 = vmax.f32 %v1590, 0.0
        %v1811 = vmax.f32 %v1592, 0.0
        %v1812 = vmax.f32 %v1596, 0.0
        %v1813 = vmax.f32 %v1598, 0.0
        %v1814 = vmax.f32 %v1600, 0.0
        %v1815 = vmax.f32 %v1602, 0.0
        %v1816 = vmax.f32 %v1606, 0.0
        %v1817 = vmax.f32 %v1608, 0.0
        %v1818 = vmax.f32 %v1610, 0.0
        %v1819 = vmax.f32 %v1612, 0.0
        %v1820 = vmax.f32 %v1616, 0.0
        %v1821 = vmax.f32 %v1618, 0.0
        %v1822 = vmax.f32 %v1620, 0.0
        %v1823 = vmax.f32 %v1622, 0.0
        %v1824 = vmax.f32 %v1626, 0.0
        %v1825 = vmax.f32 %v1628, 0.0
        %v1826 = vmax.f32 %v1630, 0.0
        %v1827 = vmax.f32 %v1632, 0.0
        %v1828 = vmax.f32 %v1636, 0.0
        %v1829 = vmax.f32 %v1638, 0.0
        %v1830 = vmax.f32 %v1640, 0.0
        %v1831 = vmax.f32 %v1642, 0.0
        %v1832 = vmax.f32 %v1646, 0.0
        %v1833 = vmax.f32 %v1648, 0.0
        %v1834 = vmax.f32 %v1650, 0.0
        %v1835 = vmax.f32 %v1652, 0.0
        %v1836 = vmax.f32 %v1656, 0.0
        %v1837 = vmax.f32 %v1658, 0.0
        %v1838 = vmax.f32 %v1660, 0.0
        %v1839 = vmax.f32 %v1662, 0.0
        %v1840 = vmax.f32 %v1666, 0.0
        %v1841 = vmax.f32 %v1668, 0.0
        %v1842 = vmax.f32 %v1670, 0.0
        %v1843 = vmax.f32 %v1672, 0.0
        %v1844 = vmax.f32 %v1676, 0.0
        %v1845 = vmax.f32 %v1678, 0.0
        %v1846 = vmax.f32 %v1680, 0.0
        %v1847 = vmax.f32 %v1682, 0.0
        %v1848 = vmax.f32 %v1686, 0.0
        %v1849 = vmax.f32 %v1688, 0.0
        %v1850 = vmax.f32 %v1690, 0.0
        %v1851 = vmax.f32 %v1692, 0.0
        %v1852 = vmax.f32 %v1696, 0.0
        %v1853 = vmax.f32 %v1698, 0.0
        %v1854 = vmax.f32 %v1700, 0.0
        %v1855 = vmax.f32 %v1702, 0.0
        %v1856 = vmax.f32 %v1706, 0.0
        %v1857 = vmax.f32 %v1708, 0.0
        %v1858 = vmax.f32 %v1710, 0.0
        %v1859 = vmax.f32 %v1712, 0.0
        %v1860 = vmax.f32 %v1716, 0.0
        %v1861 = vmax.f32 %v1718, 0.0
        %v1862 = vmax.f32 %v1720, 0.0
        %v1863 = vmax.f32 %v1722, 0.0
        %v1864 = vmax.f32 %v1726, 0.0
        %v1865 = vmax.f32 %v1728, 0.0
        %v1866 = vmax.f32 %v1730, 0.0
        %v1867 = vmax.f32 %v1732, 0.0
        %v1868 = vmax.f32 %v1736, 0.0
        %v1869 = vmax.f32 %v1738, 0.0
        %v1870 = vmax.f32 %v1740, 0.0
        %v1871 = vmax.f32 %v1742, 0.0
        %v1872 = vpack.c.bf16 %v1746, %v1744
        %v1873 = vpack.c.bf16 %v1747, %v1745
        %v1874 = vpack.c.bf16 %v1750, %v1748
        %v1875 = vpack.c.bf16 %v1751, %v1749
        %v1876 = vpack.c.bf16 %v1754, %v1752
        %v1877 = vpack.c.bf16 %v1755, %v1753
        %v1878 = vpack.c.bf16 %v1758, %v1756
        %v1879 = vpack.c.bf16 %v1759, %v1757
        %v1880 = vpack.c.bf16 %v1762, %v1760
        %v1881 = vpack.c.bf16 %v1763, %v1761
        %v1882 = vpack.c.bf16 %v1766, %v1764
        %v1883 = vpack.c.bf16 %v1767, %v1765
        %v1884 = vpack.c.bf16 %v1770, %v1768
        %v1885 = vpack.c.bf16 %v1771, %v1769
        %v1886 = vpack.c.bf16 %v1774, %v1772
        %v1887 = vpack.c.bf16 %v1775, %v1773
        %v1888 = vpack.c.bf16 %v1778, %v1776
        %v1889 = vpack.c.bf16 %v1779, %v1777
        %v1890 = vpack.c.bf16 %v1782, %v1780
        %v1891 = vpack.c.bf16 %v1783, %v1781
        %v1892 = vpack.c.bf16 %v1786, %v1784
        %v1893 = vpack.c.bf16 %v1787, %v1785
        %v1894 = vpack.c.bf16 %v1790, %v1788
        %v1895 = vpack.c.bf16 %v1791, %v1789
        %v1896 = vpack.c.bf16 %v1794, %v1792
        %v1897 = vpack.c.bf16 %v1795, %v1793
        %v1898 = vpack.c.bf16 %v1798, %v1796
        %v1899 = vpack.c.bf16 %v1799, %v1797
        %v1900 = vpack.c.bf16 %v1802, %v1800
        %v1901 = vpack.c.bf16 %v1803, %v1801
        %v1902 = vpack.c.bf16 %v1806, %v1804
        %v1903 = vpack.c.bf16 %v1807, %v1805
        %v1904 = vpack.c.bf16 %v1810, %v1808
        %v1905 = vpack.c.bf16 %v1811, %v1809
        %v1906 = vpack.c.bf16 %v1814, %v1812
        %v1907 = vpack.c.bf16 %v1815, %v1813
        %v1908 = vpack.c.bf16 %v1818, %v1816
        %v1909 = vpack.c.bf16 %v1819, %v1817
        %v1910 = vpack.c.bf16 %v1822, %v1820
        %v1911 = vpack.c.bf16 %v1823, %v1821
        %v1912 = vpack.c.bf16 %v1826, %v1824
        %v1913 = vpack.c.bf16 %v1827, %v1825
        %v1914 = vpack.c.bf16 %v1830, %v1828
        %v1915 = vpack.c.bf16 %v1831, %v1829
        %v1916 = vpack.c.bf16 %v1834, %v1832
        %v1917 = vpack.c.bf16 %v1835, %v1833
        %v1918 = vpack.c.bf16 %v1838, %v1836
        %v1919 = vpack.c.bf16 %v1839, %v1837
        %v1920 = vpack.c.bf16 %v1842, %v1840
        %v1921 = vpack.c.bf16 %v1843, %v1841
        %v1922 = vpack.c.bf16 %v1846, %v1844
        %v1923 = vpack.c.bf16 %v1847, %v1845
        %v1924 = vpack.c.bf16 %v1850, %v1848
        %v1925 = vpack.c.bf16 %v1851, %v1849
        %v1926 = vpack.c.bf16 %v1854, %v1852
        %v1927 = vpack.c.bf16 %v1855, %v1853
        %v1928 = vpack.c.bf16 %v1858, %v1856
        %v1929 = vpack.c.bf16 %v1859, %v1857
        %v1930 = vpack.c.bf16 %v1862, %v1860
        %v1931 = vpack.c.bf16 %v1863, %v1861
        %v1932 = vpack.c.bf16 %v1866, %v1864
        %v1933 = vpack.c.bf16 %v1867, %v1865
        %v1934 = vpack.c.bf16 %v1870, %v1868
        %v1935 = vpack.c.bf16 %v1871, %v1869
        %s1936 = scalar_lea.vmem [#allocation2], 256
        %v1937 = vld [vmem:[%s1936] sm:$0xff]
        %v1938 = vld [vmem:[%s1936 + $0x8] sm:$0xff]
        %v1939 = vld [vmem:[%s1936 + $0x10] sm:$0xff]
        %v1940 = vld [vmem:[%s1936 + $0x18] sm:$0xff]
        %v1941 = vld [vmem:[%s1936 + $0x20] sm:$0xff]
        %v1942 = vld [vmem:[%s1936 + $0x28] sm:$0xff]
        %v1943 = vld [vmem:[%s1936 + $0x30] sm:$0xff]
        %v1944 = vld [vmem:[%s1936 + $0x38] sm:$0xff]
        %v1945 = vld [vmem:[%s1936 + $0x40] sm:$0xff]
        %v1946 = vld [vmem:[%s1936 + $0x48] sm:$0xff]
        %v1947 = vld [vmem:[%s1936 + $0x50] sm:$0xff]
        %v1948 = vld [vmem:[%s1936 + $0x58] sm:$0xff]
        %v1949 = vld [vmem:[%s1936 + $0x60] sm:$0xff]
        %v1950 = vld [vmem:[%s1936 + $0x68] sm:$0xff]
        %v1951 = vld [vmem:[%s1936 + $0x70] sm:$0xff]
        %v1952 = vld [vmem:[%s1936 + $0x78] sm:$0xff]
        %v1953 = vld [vmem:[%s1936 + $0x80] sm:$0xff]
        %v1954 = vld [vmem:[%s1936 + $0x88] sm:$0xff]
        %v1955 = vld [vmem:[%s1936 + $0x90] sm:$0xff]
        %v1956 = vld [vmem:[%s1936 + $0x98] sm:$0xff]
        %v1957 = vld [vmem:[%s1936 + $0xa0] sm:$0xff]
        %v1958 = vld [vmem:[%s1936 + $0xa8] sm:$0xff]
        %v1959 = vld [vmem:[%s1936 + $0xb0] sm:$0xff]
        %v1960 = vld [vmem:[%s1936 + $0xb8] sm:$0xff]
        %v1961 = vld [vmem:[%s1936 + $0xc0] sm:$0xff]
        %v1962 = vld [vmem:[%s1936 + $0xc8] sm:$0xff]
        %v1963 = vld [vmem:[%s1936 + $0xd0] sm:$0xff]
        %v1964 = vld [vmem:[%s1936 + $0xd8] sm:$0xff]
        %v1965 = vld [vmem:[%s1936 + $0xe0] sm:$0xff]
        %v1966 = vld [vmem:[%s1936 + $0xe8] sm:$0xff]
        %v1967 = vld [vmem:[%s1936 + $0xf0] sm:$0xff]
        %v1968 = vld [vmem:[%s1936 + $0xf8] sm:$0xff]
        %s1969 = scalar_lea.vmem %s4, 2
        %v1970 = vld [vmem:[%s1969] ss:$8 sm:$0x3]
        %v1972 = vlaneseq
        %v1973 = vshrl.u32 %v1972, 7
        %v1974 = vsub.s32 0, %v1973
        %v1975 = vrot.slane %v1970, %v1974
        %v1976 = vlaneseq
        %v1977 = vshrl.u32 %v1976, 7
        %v1978 = vsub.s32 1, %v1977
        %v1979 = vrot.slane %v1970, %v1978
        %v2014 = vunpack.c.l.b16 %v1937
        %v2015 = vunpack.c.h.b16 %v1937
        %v2016 = vunpack.c.l.b16 %v1938
        %v2017 = vunpack.c.h.b16 %v1938
        %v2018 = vunpack.c.l.b16 %v1939
        %v2019 = vunpack.c.h.b16 %v1939
        %v2020 = vunpack.c.l.b16 %v1940
        %v2021 = vunpack.c.h.b16 %v1940
        %v2022 = vunpack.c.l.b16 %v1941
        %v2023 = vunpack.c.h.b16 %v1941
        %v2024 = vunpack.c.l.b16 %v1942
        %v2025 = vunpack.c.h.b16 %v1942
        %v2026 = vunpack.c.l.b16 %v1943
        %v2027 = vunpack.c.h.b16 %v1943
        %v2028 = vunpack.c.l.b16 %v1944
        %v2029 = vunpack.c.h.b16 %v1944
        %v2030 = vunpack.c.l.b16 %v1945
        %v2031 = vunpack.c.h.b16 %v1945
        %v2032 = vunpack.c.l.b16 %v1946
        %v2033 = vunpack.c.h.b16 %v1946
        %v2034 = vunpack.c.l.b16 %v1947
        %v2035 = vunpack.c.h.b16 %v1947
        %v2036 = vunpack.c.l.b16 %v1948
        %v2037 = vunpack.c.h.b16 %v1948
        %v2038 = vunpack.c.l.b16 %v1949
        %v2039 = vunpack.c.h.b16 %v1949
        %v2040 = vunpack.c.l.b16 %v1950
        %v2041 = vunpack.c.h.b16 %v1950
        %v2042 = vunpack.c.l.b16 %v1951
        %v2043 = vunpack.c.h.b16 %v1951
        %v2044 = vunpack.c.l.b16 %v1952
        %v2045 = vunpack.c.h.b16 %v1952
        %v2046 = vunpack.c.l.b16 %v1953
        %v2047 = vunpack.c.h.b16 %v1953
        %v2048 = vunpack.c.l.b16 %v1954
        %v2049 = vunpack.c.h.b16 %v1954
        %v2050 = vunpack.c.l.b16 %v1955
        %v2051 = vunpack.c.h.b16 %v1955
        %v2052 = vunpack.c.l.b16 %v1956
        %v2053 = vunpack.c.h.b16 %v1956
        %v2054 = vunpack.c.l.b16 %v1957
        %v2055 = vunpack.c.h.b16 %v1957
        %v2056 = vunpack.c.l.b16 %v1958
        %v2057 = vunpack.c.h.b16 %v1958
        %v2058 = vunpack.c.l.b16 %v1959
        %v2059 = vunpack.c.h.b16 %v1959
        %v2060 = vunpack.c.l.b16 %v1960
        %v2061 = vunpack.c.h.b16 %v1960
        %v2062 = vunpack.c.l.b16 %v1961
        %v2063 = vunpack.c.h.b16 %v1961
        %v2064 = vunpack.c.l.b16 %v1962
        %v2065 = vunpack.c.h.b16 %v1962
        %v2066 = vunpack.c.l.b16 %v1963
        %v2067 = vunpack.c.h.b16 %v1963
        %v2068 = vunpack.c.l.b16 %v1964
        %v2069 = vunpack.c.h.b16 %v1964
        %v2070 = vunpack.c.l.b16 %v1965
        %v2071 = vunpack.c.h.b16 %v1965
        %v2072 = vunpack.c.l.b16 %v1966
        %v2073 = vunpack.c.h.b16 %v1966
        %v2074 = vunpack.c.l.b16 %v1967
        %v2075 = vunpack.c.h.b16 %v1967
        %v2076 = vunpack.c.l.b16 %v1968
        %v2077 = vunpack.c.h.b16 %v1968
        %v2078 = vpack.c.b16 %v2016, %v2014
        %v2079 = vpack.c.b16 %v2017, %v2015
        %v2080 = vpack.c.b16 %v2020, %v2018
        %v2081 = vpack.c.b16 %v2021, %v2019
        %v2082 = vpack.c.b16 %v2024, %v2022
        %v2083 = vpack.c.b16 %v2025, %v2023
        %v2084 = vpack.c.b16 %v2028, %v2026
        %v2085 = vpack.c.b16 %v2029, %v2027
        %v2086 = vpack.c.b16 %v2032, %v2030
        %v2087 = vpack.c.b16 %v2033, %v2031
        %v2088 = vpack.c.b16 %v2036, %v2034
        %v2089 = vpack.c.b16 %v2037, %v2035
        %v2090 = vpack.c.b16 %v2040, %v2038
        %v2091 = vpack.c.b16 %v2041, %v2039
        %v2092 = vpack.c.b16 %v2044, %v2042
        %v2093 = vpack.c.b16 %v2045, %v2043
        %v2094 = vpack.c.b16 %v2048, %v2046
        %v2095 = vpack.c.b16 %v2049, %v2047
        %v2096 = vpack.c.b16 %v2052, %v2050
        %v2097 = vpack.c.b16 %v2053, %v2051
        %v2098 = vpack.c.b16 %v2056, %v2054
        %v2099 = vpack.c.b16 %v2057, %v2055
        %v2100 = vpack.c.b16 %v2060, %v2058
        %v2101 = vpack.c.b16 %v2061, %v2059
        %v2102 = vpack.c.b16 %v2064, %v2062
        %v2103 = vpack.c.b16 %v2065, %v2063
        %v2104 = vpack.c.b16 %v2068, %v2066
        %v2105 = vpack.c.b16 %v2069, %v2067
        %v2106 = vpack.c.b16 %v2072, %v2070
        %v2107 = vpack.c.b16 %v2073, %v2071
        %v2108 = vpack.c.b16 %v2076, %v2074
        %v2109 = vpack.c.b16 %v2077, %v2075
        %2142 = vmatprep.subr.bf16.mxu0 %v2079
        %2143 = vmatpush1.bf16.msra.mxu0 %v2078
        %2144 = vmatprep.subr.bf16.mxu0 %v2081
        %2145 = vmatpush1.bf16.msra.mxu0 %v2080
        %2146 = vmatprep.subr.bf16.mxu0 %v2083
        %2147 = vmatpush1.bf16.msra.mxu0 %v2082
        %2148 = vmatprep.subr.bf16.mxu0 %v2085
        %2149 = vmatpush1.bf16.msra.mxu0 %v2084
        %2150 = vmatprep.subr.bf16.mxu0 %v2087
        %2151 = vmatpush1.bf16.msra.mxu0 %v2086
        %2152 = vmatprep.subr.bf16.mxu0 %v2089
        %2153 = vmatpush1.bf16.msra.mxu0 %v2088
        %2154 = vmatprep.subr.bf16.mxu0 %v2091
        %2155 = vmatpush1.bf16.msra.mxu0 %v2090
        %2156 = vmatprep.subr.bf16.mxu0 %v2093
        %2157 = vmatpush1.bf16.msra.mxu0 %v2092
        %2158 = vmatprep.subr.bf16.mxu0 %v2095
        %2159 = vmatpush1.bf16.msra.mxu0 %v2094
        %2160 = vmatprep.subr.bf16.mxu0 %v2097
        %2161 = vmatpush1.bf16.msra.mxu0 %v2096
        %2162 = vmatprep.subr.bf16.mxu0 %v2099
        %2163 = vmatpush1.bf16.msra.mxu0 %v2098
        %2164 = vmatprep.subr.bf16.mxu0 %v2101
        %2165 = vmatpush1.bf16.msra.mxu0 %v2100
        %2166 = vmatprep.subr.bf16.mxu0 %v2103
        %2167 = vmatpush1.bf16.msra.mxu0 %v2102
        %2168 = vmatprep.subr.bf16.mxu0 %v2105
        %2169 = vmatpush1.bf16.msra.mxu0 %v2104
        %2170 = vmatprep.subr.bf16.mxu0 %v2107
        %2171 = vmatpush1.bf16.msra.mxu0 %v2106
        %2172 = vmatprep.subr.bf16.mxu0 %v2109
        %2173 = vmatpush1.bf16.msra.mxu0 %v2108
        %2174 = vmatprep.mubr.bf16.mxu0 %v1873
        %2175 = vmatmul.mubr.bf16.gmra.mrb[0].mxu0 %v1872
        %v2176 = vpop.f32.mrb[0].mxu0
        %v2177 = vadd.f32 %v1975, %v2176
        %v2178 = vpop.f32.mrb[0].mxu0
        %v2179 = vadd.f32 %v1979, %v2178
        %v2180 = vpop.f32.mrb[0].mxu0
        %v2181 = vadd.f32 %v1975, %v2180
        %v2182 = vpop.f32.mrb[0].mxu0
        %v2183 = vadd.f32 %v1979, %v2182
        %2184 = vmatprep.mubr.bf16.mxu0 %v1875
        %2185 = vmatmul.mubr.bf16.gmra.mrb[0].mxu0 %v1874
        %v2186 = vpop.f32.mrb[0].mxu0
        %v2187 = vadd.f32 %v1975, %v2186
        %v2188 = vpop.f32.mrb[0].mxu0
        %v2189 = vadd.f32 %v1979, %v2188
        %v2190 = vpop.f32.mrb[0].mxu0
        %v2191 = vadd.f32 %v1975, %v2190
        %v2192 = vpop.f32.mrb[0].mxu0
        %v2193 = vadd.f32 %v1979, %v2192
        %2194 = vmatprep.mubr.bf16.mxu0 %v1877
        %2195 = vmatmul.mubr.bf16.gmra.mrb[0].mxu0 %v1876
        %v2196 = vpop.f32.mrb[0].mxu0
        %v2197 = vadd.f32 %v1975, %v2196
        %v2198 = vpop.f32.mrb[0].mxu0
        %v2199 = vadd.f32 %v1979, %v2198
        %v2200 = vpop.f32.mrb[0].mxu0
        %v2201 = vadd.f32 %v1975, %v2200
        %v2202 = vpop.f32.mrb[0].mxu0
        %v2203 = vadd.f32 %v1979, %v2202
        %2204 = vmatprep.mubr.bf16.mxu0 %v1879
        %2205 = vmatmul.mubr.bf16.gmra.mrb[0].mxu0 %v1878
        %v2206 = vpop.f32.mrb[0].mxu0
        %v2207 = vadd.f32 %v1975, %v2206
        %v2208 = vpop.f32.mrb[0].mxu0
        %v2209 = vadd.f32 %v1979, %v2208
        %v2210 = vpop.f32.mrb[0].mxu0
        %v2211 = vadd.f32 %v1975, %v2210
        %v2212 = vpop.f32.mrb[0].mxu0
        %v2213 = vadd.f32 %v1979, %v2212
        %2214 = vmatprep.mubr.bf16.mxu0 %v1881
        %2215 = vmatmul.mubr.bf16.gmra.mrb[0].mxu0 %v1880
        %v2216 = vpop.f32.mrb[0].mxu0
        %v2217 = vadd.f32 %v1975, %v2216
        %v2218 = vpop.f32.mrb[0].mxu0
        %v2219 = vadd.f32 %v1979, %v2218
        %v2220 = vpop.f32.mrb[0].mxu0
        %v2221 = vadd.f32 %v1975, %v2220
        %v2222 = vpop.f32.mrb[0].mxu0
        %v2223 = vadd.f32 %v1979, %v2222
        %2224 = vmatprep.mubr.bf16.mxu0 %v1883
        %2225 = vmatmul.mubr.bf16.gmra.mrb[0].mxu0 %v1882
        %v2226 = vpop.f32.mrb[0].mxu0
        %v2227 = vadd.f32 %v1975, %v2226
        %v2228 = vpop.f32.mrb[0].mxu0
        %v2229 = vadd.f32 %v1979, %v2228
        %v2230 = vpop.f32.mrb[0].mxu0
        %v2231 = vadd.f32 %v1975, %v2230
        %v2232 = vpop.f32.mrb[0].mxu0
        %v2233 = vadd.f32 %v1979, %v2232
        %2234 = vmatprep.mubr.bf16.mxu0 %v1885
        %2235 = vmatmul.mubr.bf16.gmra.mrb[0].mxu0 %v1884
        %v2236 = vpop.f32.mrb[0].mxu0
        %v2237 = vadd.f32 %v1975, %v2236
        %v2238 = vpop.f32.mrb[0].mxu0
        %v2239 = vadd.f32 %v1979, %v2238
        %v2240 = vpop.f32.mrb[0].mxu0
        %v2241 = vadd.f32 %v1975, %v2240
        %v2242 = vpop.f32.mrb[0].mxu0
        %v2243 = vadd.f32 %v1979, %v2242
        %2244 = vmatprep.mubr.bf16.mxu0 %v1887
        %2245 = vmatmul.mubr.bf16.gmra.mrb[0].mxu0 %v1886
        %v2246 = vpop.f32.mrb[0].mxu0
        %v2247 = vadd.f32 %v1975, %v2246
        %v2248 = vpop.f32.mrb[0].mxu0
        %v2249 = vadd.f32 %v1979, %v2248
        %v2250 = vpop.f32.mrb[0].mxu0
        %v2251 = vadd.f32 %v1975, %v2250
        %v2252 = vpop.f32.mrb[0].mxu0
        %v2253 = vadd.f32 %v1979, %v2252
        %2254 = vmatprep.mubr.bf16.mxu0 %v1889
        %2255 = vmatmul.mubr.bf16.gmra.mrb[0].mxu0 %v1888
        %v2256 = vpop.f32.mrb[0].mxu0
        %v2257 = vadd.f32 %v1975, %v2256
        %v2258 = vpop.f32.mrb[0].mxu0
        %v2259 = vadd.f32 %v1979, %v2258
        %v2260 = vpop.f32.mrb[0].mxu0
        %v2261 = vadd.f32 %v1975, %v2260
        %v2262 = vpop.f32.mrb[0].mxu0
        %v2263 = vadd.f32 %v1979, %v2262
        %2264 = vmatprep.mubr.bf16.mxu0 %v1891
        %2265 = vmatmul.mubr.bf16.gmra.mrb[0].mxu0 %v1890
        %v2266 = vpop.f32.mrb[0].mxu0
        %v2267 = vadd.f32 %v1975, %v2266
        %v2268 = vpop.f32.mrb[0].mxu0
        %v2269 = vadd.f32 %v1979, %v2268
        %v2270 = vpop.f32.mrb[0].mxu0
        %v2271 = vadd.f32 %v1975, %v2270
        %v2272 = vpop.f32.mrb[0].mxu0
        %v2273 = vadd.f32 %v1979, %v2272
        %2274 = vmatprep.mubr.bf16.mxu0 %v1893
        %2275 = vmatmul.mubr.bf16.gmra.mrb[0].mxu0 %v1892
        %v2276 = vpop.f32.mrb[0].mxu0
        %v2277 = vadd.f32 %v1975, %v2276
        %v2278 = vpop.f32.mrb[0].mxu0
        %v2279 = vadd.f32 %v1979, %v2278
        %v2280 = vpop.f32.mrb[0].mxu0
        %v2281 = vadd.f32 %v1975, %v2280
        %v2282 = vpop.f32.mrb[0].mxu0
        %v2283 = vadd.f32 %v1979, %v2282
        %2284 = vmatprep.mubr.bf16.mxu0 %v1895
        %2285 = vmatmul.mubr.bf16.gmra.mrb[0].mxu0 %v1894
        %v2286 = vpop.f32.mrb[0].mxu0
        %v2287 = vadd.f32 %v1975, %v2286
        %v2288 = vpop.f32.mrb[0].mxu0
        %v2289 = vadd.f32 %v1979, %v2288
        %v2290 = vpop.f32.mrb[0].mxu0
        %v2291 = vadd.f32 %v1975, %v2290
        %v2292 = vpop.f32.mrb[0].mxu0
        %v2293 = vadd.f32 %v1979, %v2292
        %2294 = vmatprep.mubr.bf16.mxu0 %v1897
        %2295 = vmatmul.mubr.bf16.gmra.mrb[0].mxu0 %v1896
        %v2296 = vpop.f32.mrb[0].mxu0
        %v2297 = vadd.f32 %v1975, %v2296
        %v2298 = vpop.f32.mrb[0].mxu0
        %v2299 = vadd.f32 %v1979, %v2298
        %v2300 = vpop.f32.mrb[0].mxu0
        %v2301 = vadd.f32 %v1975, %v2300
        %v2302 = vpop.f32.mrb[0].mxu0
        %v2303 = vadd.f32 %v1979, %v2302
        %2304 = vmatprep.mubr.bf16.mxu0 %v1899
        %2305 = vmatmul.mubr.bf16.gmra.mrb[0].mxu0 %v1898
        %v2306 = vpop.f32.mrb[0].mxu0
        %v2307 = vadd.f32 %v1975, %v2306
        %v2308 = vpop.f32.mrb[0].mxu0
        %v2309 = vadd.f32 %v1979, %v2308
        %v2310 = vpop.f32.mrb[0].mxu0
        %v2311 = vadd.f32 %v1975, %v2310
        %v2312 = vpop.f32.mrb[0].mxu0
        %v2313 = vadd.f32 %v1979, %v2312
        %2314 = vmatprep.mubr.bf16.mxu0 %v1901
        %2315 = vmatmul.mubr.bf16.gmra.mrb[0].mxu0 %v1900
        %v2316 = vpop.f32.mrb[0].mxu0
        %v2317 = vadd.f32 %v1975, %v2316
        %v2318 = vpop.f32.mrb[0].mxu0
        %v2319 = vadd.f32 %v1979, %v2318
        %v2320 = vpop.f32.mrb[0].mxu0
        %v2321 = vadd.f32 %v1975, %v2320
        %v2322 = vpop.f32.mrb[0].mxu0
        %v2323 = vadd.f32 %v1979, %v2322
        %2324 = vmatprep.mubr.bf16.mxu0 %v1903
        %2325 = vmatmul.mubr.bf16.gmra.mrb[0].mxu0 %v1902
        %v2326 = vpop.f32.mrb[0].mxu0
        %v2327 = vadd.f32 %v1975, %v2326
        %v2328 = vpop.f32.mrb[0].mxu0
        %v2329 = vadd.f32 %v1979, %v2328
        %v2330 = vpop.f32.mrb[0].mxu0
        %v2331 = vadd.f32 %v1975, %v2330
        %v2332 = vpop.f32.mrb[0].mxu0
        %v2333 = vadd.f32 %v1979, %v2332
        %2334 = vmatprep.mubr.bf16.mxu0 %v1905
        %2335 = vmatmul.mubr.bf16.gmra.mrb[0].mxu0 %v1904
        %v2336 = vpop.f32.mrb[0].mxu0
        %v2337 = vadd.f32 %v1975, %v2336
        %v2338 = vpop.f32.mrb[0].mxu0
        %v2339 = vadd.f32 %v1979, %v2338
        %v2340 = vpop.f32.mrb[0].mxu0
        %v2341 = vadd.f32 %v1975, %v2340
        %v2342 = vpop.f32.mrb[0].mxu0
        %v2343 = vadd.f32 %v1979, %v2342
        %2344 = vmatprep.mubr.bf16.mxu0 %v1907
        %2345 = vmatmul.mubr.bf16.gmra.mrb[0].mxu0 %v1906
        %v2346 = vpop.f32.mrb[0].mxu0
        %v2347 = vadd.f32 %v1975, %v2346
        %v2348 = vpop.f32.mrb[0].mxu0
        %v2349 = vadd.f32 %v1979, %v2348
        %v2350 = vpop.f32.mrb[0].mxu0
        %v2351 = vadd.f32 %v1975, %v2350
        %v2352 = vpop.f32.mrb[0].mxu0
        %v2353 = vadd.f32 %v1979, %v2352
        %2354 = vmatprep.mubr.bf16.mxu0 %v1909
        %2355 = vmatmul.mubr.bf16.gmra.mrb[0].mxu0 %v1908
        %v2356 = vpop.f32.mrb[0].mxu0
        %v2357 = vadd.f32 %v1975, %v2356
        %v2358 = vpop.f32.mrb[0].mxu0
        %v2359 = vadd.f32 %v1979, %v2358
        %v2360 = vpop.f32.mrb[0].mxu0
        %v2361 = vadd.f32 %v1975, %v2360
        %v2362 = vpop.f32.mrb[0].mxu0
        %v2363 = vadd.f32 %v1979, %v2362
        %2364 = vmatprep.mubr.bf16.mxu0 %v1911
        %2365 = vmatmul.mubr.bf16.gmra.mrb[0].mxu0 %v1910
        %v2366 = vpop.f32.mrb[0].mxu0
        %v2367 = vadd.f32 %v1975, %v2366
        %v2368 = vpop.f32.mrb[0].mxu0
        %v2369 = vadd.f32 %v1979, %v2368
        %v2370 = vpop.f32.mrb[0].mxu0
        %v2371 = vadd.f32 %v1975, %v2370
        %v2372 = vpop.f32.mrb[0].mxu0
        %v2373 = vadd.f32 %v1979, %v2372
        %2374 = vmatprep.mubr.bf16.mxu0 %v1913
        %2375 = vmatmul.mubr.bf16.gmra.mrb[0].mxu0 %v1912
        %v2376 = vpop.f32.mrb[0].mxu0
        %v2377 = vadd.f32 %v1975, %v2376
        %v2378 = vpop.f32.mrb[0].mxu0
        %v2379 = vadd.f32 %v1979, %v2378
        %v2380 = vpop.f32.mrb[0].mxu0
        %v2381 = vadd.f32 %v1975, %v2380
        %v2382 = vpop.f32.mrb[0].mxu0
        %v2383 = vadd.f32 %v1979, %v2382
        %2384 = vmatprep.mubr.bf16.mxu0 %v1915
        %2385 = vmatmul.mubr.bf16.gmra.mrb[0].mxu0 %v1914
        %v2386 = vpop.f32.mrb[0].mxu0
        %v2387 = vadd.f32 %v1975, %v2386
        %v2388 = vpop.f32.mrb[0].mxu0
        %v2389 = vadd.f32 %v1979, %v2388
        %v2390 = vpop.f32.mrb[0].mxu0
        %v2391 = vadd.f32 %v1975, %v2390
        %v2392 = vpop.f32.mrb[0].mxu0
        %v2393 = vadd.f32 %v1979, %v2392
        %2394 = vmatprep.mubr.bf16.mxu0 %v1917
        %2395 = vmatmul.mubr.bf16.gmra.mrb[0].mxu0 %v1916
        %v2396 = vpop.f32.mrb[0].mxu0
        %v2397 = vadd.f32 %v1975, %v2396
        %v2398 = vpop.f32.mrb[0].mxu0
        %v2399 = vadd.f32 %v1979, %v2398
        %v2400 = vpop.f32.mrb[0].mxu0
        %v2401 = vadd.f32 %v1975, %v2400
        %v2402 = vpop.f32.mrb[0].mxu0
        %v2403 = vadd.f32 %v1979, %v2402
        %2404 = vmatprep.mubr.bf16.mxu0 %v1919
        %2405 = vmatmul.mubr.bf16.gmra.mrb[0].mxu0 %v1918
        %v2406 = vpop.f32.mrb[0].mxu0
        %v2407 = vadd.f32 %v1975, %v2406
        %v2408 = vpop.f32.mrb[0].mxu0
        %v2409 = vadd.f32 %v1979, %v2408
        %v2410 = vpop.f32.mrb[0].mxu0
        %v2411 = vadd.f32 %v1975, %v2410
        %v2412 = vpop.f32.mrb[0].mxu0
        %v2413 = vadd.f32 %v1979, %v2412
        %2414 = vmatprep.mubr.bf16.mxu0 %v1921
        %2415 = vmatmul.mubr.bf16.gmra.mrb[0].mxu0 %v1920
        %v2416 = vpop.f32.mrb[0].mxu0
        %v2417 = vadd.f32 %v1975, %v2416
        %v2418 = vpop.f32.mrb[0].mxu0
        %v2419 = vadd.f32 %v1979, %v2418
        %v2420 = vpop.f32.mrb[0].mxu0
        %v2421 = vadd.f32 %v1975, %v2420
        %v2422 = vpop.f32.mrb[0].mxu0
        %v2423 = vadd.f32 %v1979, %v2422
        %2424 = vmatprep.mubr.bf16.mxu0 %v1923
        %2425 = vmatmul.mubr.bf16.gmra.mrb[0].mxu0 %v1922
        %v2426 = vpop.f32.mrb[0].mxu0
        %v2427 = vadd.f32 %v1975, %v2426
        %v2428 = vpop.f32.mrb[0].mxu0
        %v2429 = vadd.f32 %v1979, %v2428
        %v2430 = vpop.f32.mrb[0].mxu0
        %v2431 = vadd.f32 %v1975, %v2430
        %v2432 = vpop.f32.mrb[0].mxu0
        %v2433 = vadd.f32 %v1979, %v2432
        %2434 = vmatprep.mubr.bf16.mxu0 %v1925
        %2435 = vmatmul.mubr.bf16.gmra.mrb[0].mxu0 %v1924
        %v2436 = vpop.f32.mrb[0].mxu0
        %v2437 = vadd.f32 %v1975, %v2436
        %v2438 = vpop.f32.mrb[0].mxu0
        %v2439 = vadd.f32 %v1979, %v2438
        %v2440 = vpop.f32.mrb[0].mxu0
        %v2441 = vadd.f32 %v1975, %v2440
        %v2442 = vpop.f32.mrb[0].mxu0
        %v2443 = vadd.f32 %v1979, %v2442
        %2444 = vmatprep.mubr.bf16.mxu0 %v1927
        %2445 = vmatmul.mubr.bf16.gmra.mrb[0].mxu0 %v1926
        %v2446 = vpop.f32.mrb[0].mxu0
        %v2447 = vadd.f32 %v1975, %v2446
        %v2448 = vpop.f32.mrb[0].mxu0
        %v2449 = vadd.f32 %v1979, %v2448
        %v2450 = vpop.f32.mrb[0].mxu0
        %v2451 = vadd.f32 %v1975, %v2450
        %v2452 = vpop.f32.mrb[0].mxu0
        %v2453 = vadd.f32 %v1979, %v2452
        %2454 = vmatprep.mubr.bf16.mxu0 %v1929
        %2455 = vmatmul.mubr.bf16.gmra.mrb[0].mxu0 %v1928
        %v2456 = vpop.f32.mrb[0].mxu0
        %v2457 = vadd.f32 %v1975, %v2456
        %v2458 = vpop.f32.mrb[0].mxu0
        %v2459 = vadd.f32 %v1979, %v2458
        %v2460 = vpop.f32.mrb[0].mxu0
        %v2461 = vadd.f32 %v1975, %v2460
        %v2462 = vpop.f32.mrb[0].mxu0
        %v2463 = vadd.f32 %v1979, %v2462
        %2464 = vmatprep.mubr.bf16.mxu0 %v1931
        %2465 = vmatmul.mubr.bf16.gmra.mrb[0].mxu0 %v1930
        %v2466 = vpop.f32.mrb[0].mxu0
        %v2467 = vadd.f32 %v1975, %v2466
        %v2468 = vpop.f32.mrb[0].mxu0
        %v2469 = vadd.f32 %v1979, %v2468
        %v2470 = vpop.f32.mrb[0].mxu0
        %v2471 = vadd.f32 %v1975, %v2470
        %v2472 = vpop.f32.mrb[0].mxu0
        %v2473 = vadd.f32 %v1979, %v2472
        %2474 = vmatprep.mubr.bf16.mxu0 %v1933
        %2475 = vmatmul.mubr.bf16.gmra.mrb[0].mxu0 %v1932
        %v2476 = vpop.f32.mrb[0].mxu0
        %v2477 = vadd.f32 %v1975, %v2476
        %v2478 = vpop.f32.mrb[0].mxu0
        %v2479 = vadd.f32 %v1979, %v2478
        %v2480 = vpop.f32.mrb[0].mxu0
        %v2481 = vadd.f32 %v1975, %v2480
        %v2482 = vpop.f32.mrb[0].mxu0
        %v2483 = vadd.f32 %v1979, %v2482
        %2484 = vmatprep.mubr.bf16.mxu0 %v1935
        %2485 = vmatmul.mubr.bf16.gmra.mrb[0].mxu0 %v1934
        %v2486 = vpop.f32.mrb[0].mxu0
        %v2487 = vadd.f32 %v1975, %v2486
        %v2488 = vpop.f32.mrb[0].mxu0
        %v2489 = vadd.f32 %v1979, %v2488
        %v2490 = vpop.f32.mrb[0].mxu0
        %v2491 = vadd.f32 %v1975, %v2490
        %v2492 = vpop.f32.mrb[0].mxu0
        %v2493 = vadd.f32 %v1979, %v2492
        %2494 = vdwg.mxu0
        %v2495 = vmax.f32 %v2177, 0.0
        %v2496 = vmax.f32 %v2179, 0.0
        %v2497 = vmax.f32 %v2181, 0.0
        %v2498 = vmax.f32 %v2183, 0.0
        %v2499 = vmax.f32 %v2187, 0.0
        %v2500 = vmax.f32 %v2189, 0.0
        %v2501 = vmax.f32 %v2191, 0.0
        %v2502 = vmax.f32 %v2193, 0.0
        %v2503 = vmax.f32 %v2197, 0.0
        %v2504 = vmax.f32 %v2199, 0.0
        %v2505 = vmax.f32 %v2201, 0.0
        %v2506 = vmax.f32 %v2203, 0.0
        %v2507 = vmax.f32 %v2207, 0.0
        %v2508 = vmax.f32 %v2209, 0.0
        %v2509 = vmax.f32 %v2211, 0.0
        %v2510 = vmax.f32 %v2213, 0.0
        %v2511 = vmax.f32 %v2217, 0.0
        %v2512 = vmax.f32 %v2219, 0.0
        %v2513 = vmax.f32 %v2221, 0.0
        %v2514 = vmax.f32 %v2223, 0.0
        %v2515 = vmax.f32 %v2227, 0.0
        %v2516 = vmax.f32 %v2229, 0.0
        %v2517 = vmax.f32 %v2231, 0.0
        %v2518 = vmax.f32 %v2233, 0.0
        %v2519 = vmax.f32 %v2237, 0.0
        %v2520 = vmax.f32 %v2239, 0.0
        %v2521 = vmax.f32 %v2241, 0.0
        %v2522 = vmax.f32 %v2243, 0.0
        %v2523 = vmax.f32 %v2247, 0.0
        %v2524 = vmax.f32 %v2249, 0.0
        %v2525 = vmax.f32 %v2251, 0.0
        %v2526 = vmax.f32 %v2253, 0.0
        %v2527 = vmax.f32 %v2257, 0.0
        %v2528 = vmax.f32 %v2259, 0.0
        %v2529 = vmax.f32 %v2261, 0.0
        %v2530 = vmax.f32 %v2263, 0.0
        %v2531 = vmax.f32 %v2267, 0.0
        %v2532 = vmax.f32 %v2269, 0.0
        %v2533 = vmax.f32 %v2271, 0.0
        %v2534 = vmax.f32 %v2273, 0.0
        %v2535 = vmax.f32 %v2277, 0.0
        %v2536 = vmax.f32 %v2279, 0.0
        %v2537 = vmax.f32 %v2281, 0.0
        %v2538 = vmax.f32 %v2283, 0.0
        %v2539 = vmax.f32 %v2287, 0.0
        %v2540 = vmax.f32 %v2289, 0.0
        %v2541 = vmax.f32 %v2291, 0.0
        %v2542 = vmax.f32 %v2293, 0.0
        %v2543 = vmax.f32 %v2297, 0.0
        %v2544 = vmax.f32 %v2299, 0.0
        %v2545 = vmax.f32 %v2301, 0.0
        %v2546 = vmax.f32 %v2303, 0.0
        %v2547 = vmax.f32 %v2307, 0.0
        %v2548 = vmax.f32 %v2309, 0.0
        %v2549 = vmax.f32 %v2311, 0.0
        %v2550 = vmax.f32 %v2313, 0.0
        %v2551 = vmax.f32 %v2317, 0.0
        %v2552 = vmax.f32 %v2319, 0.0
        %v2553 = vmax.f32 %v2321, 0.0
        %v2554 = vmax.f32 %v2323, 0.0
        %v2555 = vmax.f32 %v2327, 0.0
        %v2556 = vmax.f32 %v2329, 0.0
        %v2557 = vmax.f32 %v2331, 0.0
        %v2558 = vmax.f32 %v2333, 0.0
        %v2559 = vmax.f32 %v2337, 0.0
        %v2560 = vmax.f32 %v2339, 0.0
        %v2561 = vmax.f32 %v2341, 0.0
        %v2562 = vmax.f32 %v2343, 0.0
        %v2563 = vmax.f32 %v2347, 0.0
        %v2564 = vmax.f32 %v2349, 0.0
        %v2565 = vmax.f32 %v2351, 0.0
        %v2566 = vmax.f32 %v2353, 0.0
        %v2567 = vmax.f32 %v2357, 0.0
        %v2568 = vmax.f32 %v2359, 0.0
        %v2569 = vmax.f32 %v2361, 0.0
        %v2570 = vmax.f32 %v2363, 0.0
        %v2571 = vmax.f32 %v2367, 0.0
        %v2572 = vmax.f32 %v2369, 0.0
        %v2573 = vmax.f32 %v2371, 0.0
        %v2574 = vmax.f32 %v2373, 0.0
        %v2575 = vmax.f32 %v2377, 0.0
        %v2576 = vmax.f32 %v2379, 0.0
        %v2577 = vmax.f32 %v2381, 0.0
        %v2578 = vmax.f32 %v2383, 0.0
        %v2579 = vmax.f32 %v2387, 0.0
        %v2580 = vmax.f32 %v2389, 0.0
        %v2581 = vmax.f32 %v2391, 0.0
        %v2582 = vmax.f32 %v2393, 0.0
        %v2583 = vmax.f32 %v2397, 0.0
        %v2584 = vmax.f32 %v2399, 0.0
        %v2585 = vmax.f32 %v2401, 0.0
        %v2586 = vmax.f32 %v2403, 0.0
        %v2587 = vmax.f32 %v2407, 0.0
        %v2588 = vmax.f32 %v2409, 0.0
        %v2589 = vmax.f32 %v2411, 0.0
        %v2590 = vmax.f32 %v2413, 0.0
        %v2591 = vmax.f32 %v2417, 0.0
        %v2592 = vmax.f32 %v2419, 0.0
        %v2593 = vmax.f32 %v2421, 0.0
        %v2594 = vmax.f32 %v2423, 0.0
        %v2595 = vmax.f32 %v2427, 0.0
        %v2596 = vmax.f32 %v2429, 0.0
        %v2597 = vmax.f32 %v2431, 0.0
        %v2598 = vmax.f32 %v2433, 0.0
        %v2599 = vmax.f32 %v2437, 0.0
        %v2600 = vmax.f32 %v2439, 0.0
        %v2601 = vmax.f32 %v2441, 0.0
        %v2602 = vmax.f32 %v2443, 0.0
        %v2603 = vmax.f32 %v2447, 0.0
        %v2604 = vmax.f32 %v2449, 0.0
        %v2605 = vmax.f32 %v2451, 0.0
        %v2606 = vmax.f32 %v2453, 0.0
        %v2607 = vmax.f32 %v2457, 0.0
        %v2608 = vmax.f32 %v2459, 0.0
        %v2609 = vmax.f32 %v2461, 0.0
        %v2610 = vmax.f32 %v2463, 0.0
        %v2611 = vmax.f32 %v2467, 0.0
        %v2612 = vmax.f32 %v2469, 0.0
        %v2613 = vmax.f32 %v2471, 0.0
        %v2614 = vmax.f32 %v2473, 0.0
        %v2615 = vmax.f32 %v2477, 0.0
        %v2616 = vmax.f32 %v2479, 0.0
        %v2617 = vmax.f32 %v2481, 0.0
        %v2618 = vmax.f32 %v2483, 0.0
        %v2619 = vmax.f32 %v2487, 0.0
        %v2620 = vmax.f32 %v2489, 0.0
        %v2621 = vmax.f32 %v2491, 0.0
        %v2622 = vmax.f32 %v2493, 0.0
        %v2623 = vpack.c.bf16 %v2497, %v2495
        %v2624 = vpack.c.bf16 %v2498, %v2496
        %v2625 = vpack.c.bf16 %v2501, %v2499
        %v2626 = vpack.c.bf16 %v2502, %v2500
        %v2627 = vpack.c.bf16 %v2505, %v2503
        %v2628 = vpack.c.bf16 %v2506, %v2504
        %v2629 = vpack.c.bf16 %v2509, %v2507
        %v2630 = vpack.c.bf16 %v2510, %v2508
        %v2631 = vpack.c.bf16 %v2513, %v2511
        %v2632 = vpack.c.bf16 %v2514, %v2512
        %v2633 = vpack.c.bf16 %v2517, %v2515
        %v2634 = vpack.c.bf16 %v2518, %v2516
        %v2635 = vpack.c.bf16 %v2521, %v2519
        %v2636 = vpack.c.bf16 %v2522, %v2520
        %v2637 = vpack.c.bf16 %v2525, %v2523
        %v2638 = vpack.c.bf16 %v2526, %v2524
        %v2639 = vpack.c.bf16 %v2529, %v2527
        %v2640 = vpack.c.bf16 %v2530, %v2528
        %v2641 = vpack.c.bf16 %v2533, %v2531
        %v2642 = vpack.c.bf16 %v2534, %v2532
        %v2643 = vpack.c.bf16 %v2537, %v2535
        %v2644 = vpack.c.bf16 %v2538, %v2536
        %v2645 = vpack.c.bf16 %v2541, %v2539
        %v2646 = vpack.c.bf16 %v2542, %v2540
        %v2647 = vpack.c.bf16 %v2545, %v2543
        %v2648 = vpack.c.bf16 %v2546, %v2544
        %v2649 = vpack.c.bf16 %v2549, %v2547
        %v2650 = vpack.c.bf16 %v2550, %v2548
        %v2651 = vpack.c.bf16 %v2553, %v2551
        %v2652 = vpack.c.bf16 %v2554, %v2552
        %v2653 = vpack.c.bf16 %v2557, %v2555
        %v2654 = vpack.c.bf16 %v2558, %v2556
        %v2655 = vpack.c.bf16 %v2561, %v2559
        %v2656 = vpack.c.bf16 %v2562, %v2560
        %v2657 = vpack.c.bf16 %v2565, %v2563
        %v2658 = vpack.c.bf16 %v2566, %v2564
        %v2659 = vpack.c.bf16 %v2569, %v2567
        %v2660 = vpack.c.bf16 %v2570, %v2568
        %v2661 = vpack.c.bf16 %v2573, %v2571
        %v2662 = vpack.c.bf16 %v2574, %v2572
        %v2663 = vpack.c.bf16 %v2577, %v2575
        %v2664 = vpack.c.bf16 %v2578, %v2576
        %v2665 = vpack.c.bf16 %v2581, %v2579
        %v2666 = vpack.c.bf16 %v2582, %v2580
        %v2667 = vpack.c.bf16 %v2585, %v2583
        %v2668 = vpack.c.bf16 %v2586, %v2584
        %v2669 = vpack.c.bf16 %v2589, %v2587
        %v2670 = vpack.c.bf16 %v2590, %v2588
        %v2671 = vpack.c.bf16 %v2593, %v2591
        %v2672 = vpack.c.bf16 %v2594, %v2592
        %v2673 = vpack.c.bf16 %v2597, %v2595
        %v2674 = vpack.c.bf16 %v2598, %v2596
        %v2675 = vpack.c.bf16 %v2601, %v2599
        %v2676 = vpack.c.bf16 %v2602, %v2600
        %v2677 = vpack.c.bf16 %v2605, %v2603
        %v2678 = vpack.c.bf16 %v2606, %v2604
        %v2679 = vpack.c.bf16 %v2609, %v2607
        %v2680 = vpack.c.bf16 %v2610, %v2608
        %v2681 = vpack.c.bf16 %v2613, %v2611
        %v2682 = vpack.c.bf16 %v2614, %v2612
        %v2683 = vpack.c.bf16 %v2617, %v2615
        %v2684 = vpack.c.bf16 %v2618, %v2616
        %v2685 = vpack.c.bf16 %v2621, %v2619
        %v2686 = vpack.c.bf16 %v2622, %v2620
        %s2687 = scalar_lea.vmem [#allocation2], 512
        %v2688 = vld [vmem:[%s2687] sm:$0xff]
        %v2689 = vld [vmem:[%s2687 + $0x8] sm:$0xff]
        %v2690 = vld [vmem:[%s2687 + $0x10] sm:$0xff]
        %v2691 = vld [vmem:[%s2687 + $0x18] sm:$0xff]
        %v2692 = vld [vmem:[%s2687 + $0x20] sm:$0xff]
        %v2693 = vld [vmem:[%s2687 + $0x28] sm:$0xff]
        %v2694 = vld [vmem:[%s2687 + $0x30] sm:$0xff]
        %v2695 = vld [vmem:[%s2687 + $0x38] sm:$0xff]
        %v2696 = vld [vmem:[%s2687 + $0x40] sm:$0xff]
        %v2697 = vld [vmem:[%s2687 + $0x48] sm:$0xff]
        %v2698 = vld [vmem:[%s2687 + $0x50] sm:$0xff]
        %v2699 = vld [vmem:[%s2687 + $0x58] sm:$0xff]
        %v2700 = vld [vmem:[%s2687 + $0x60] sm:$0xff]
        %v2701 = vld [vmem:[%s2687 + $0x68] sm:$0xff]
        %v2702 = vld [vmem:[%s2687 + $0x70] sm:$0xff]
        %v2703 = vld [vmem:[%s2687 + $0x78] sm:$0xff]
        %v2704 = vld [vmem:[%s2687 + $0x80] sm:$0xff]
        %v2705 = vld [vmem:[%s2687 + $0x88] sm:$0xff]
        %v2706 = vld [vmem:[%s2687 + $0x90] sm:$0xff]
        %v2707 = vld [vmem:[%s2687 + $0x98] sm:$0xff]
        %v2708 = vld [vmem:[%s2687 + $0xa0] sm:$0xff]
        %v2709 = vld [vmem:[%s2687 + $0xa8] sm:$0xff]
        %v2710 = vld [vmem:[%s2687 + $0xb0] sm:$0xff]
        %v2711 = vld [vmem:[%s2687 + $0xb8] sm:$0xff]
        %v2712 = vld [vmem:[%s2687 + $0xc0] sm:$0xff]
        %v2713 = vld [vmem:[%s2687 + $0xc8] sm:$0xff]
        %v2714 = vld [vmem:[%s2687 + $0xd0] sm:$0xff]
        %v2715 = vld [vmem:[%s2687 + $0xd8] sm:$0xff]
        %v2716 = vld [vmem:[%s2687 + $0xe0] sm:$0xff]
        %v2717 = vld [vmem:[%s2687 + $0xe8] sm:$0xff]
        %v2718 = vld [vmem:[%s2687 + $0xf0] sm:$0xff]
        %v2719 = vld [vmem:[%s2687 + $0xf8] sm:$0xff]
        %s2720 = scalar_lea.vmem %s4, 3
        %v2721 = vld [vmem:[%s2720] ss:$8 sm:$0x3]
        %v2723 = vlaneseq
        %v2724 = vshrl.u32 %v2723, 7
        %v2725 = vsub.s32 0, %v2724
        %v2726 = vrot.slane %v2721, %v2725
        %v2727 = vlaneseq
        %v2728 = vshrl.u32 %v2727, 7
        %v2729 = vsub.s32 1, %v2728
        %v2730 = vrot.slane %v2721, %v2729
        %v2765 = vunpack.c.l.b16 %v2688
        %v2766 = vunpack.c.h.b16 %v2688
        %v2767 = vunpack.c.l.b16 %v2689
        %v2768 = vunpack.c.h.b16 %v2689
        %v2769 = vunpack.c.l.b16 %v2690
        %v2770 = vunpack.c.h.b16 %v2690
        %v2771 = vunpack.c.l.b16 %v2691
        %v2772 = vunpack.c.h.b16 %v2691
        %v2773 = vunpack.c.l.b16 %v2692
        %v2774 = vunpack.c.h.b16 %v2692
        %v2775 = vunpack.c.l.b16 %v2693
        %v2776 = vunpack.c.h.b16 %v2693
        %v2777 = vunpack.c.l.b16 %v2694
        %v2778 = vunpack.c.h.b16 %v2694
        %v2779 = vunpack.c.l.b16 %v2695
        %v2780 = vunpack.c.h.b16 %v2695
        %v2781 = vunpack.c.l.b16 %v2696
        %v2782 = vunpack.c.h.b16 %v2696
        %v2783 = vunpack.c.l.b16 %v2697
        %v2784 = vunpack.c.h.b16 %v2697
        %v2785 = vunpack.c.l.b16 %v2698
        %v2786 = vunpack.c.h.b16 %v2698
        %v2787 = vunpack.c.l.b16 %v2699
        %v2788 = vunpack.c.h.b16 %v2699
        %v2789 = vunpack.c.l.b16 %v2700
        %v2790 = vunpack.c.h.b16 %v2700
        %v2791 = vunpack.c.l.b16 %v2701
        %v2792 = vunpack.c.h.b16 %v2701
        %v2793 = vunpack.c.l.b16 %v2702
        %v2794 = vunpack.c.h.b16 %v2702
        %v2795 = vunpack.c.l.b16 %v2703
        %v2796 = vunpack.c.h.b16 %v2703
        %v2797 = vunpack.c.l.b16 %v2704
        %v2798 = vunpack.c.h.b16 %v2704
        %v2799 = vunpack.c.l.b16 %v2705
        %v2800 = vunpack.c.h.b16 %v2705
        %v2801 = vunpack.c.l.b16 %v2706
        %v2802 = vunpack.c.h.b16 %v2706
        %v2803 = vunpack.c.l.b16 %v2707
        %v2804 = vunpack.c.h.b16 %v2707
        %v2805 = vunpack.c.l.b16 %v2708
        %v2806 = vunpack.c.h.b16 %v2708
        %v2807 = vunpack.c.l.b16 %v2709
        %v2808 = vunpack.c.h.b16 %v2709
        %v2809 = vunpack.c.l.b16 %v2710
        %v2810 = vunpack.c.h.b16 %v2710
        %v2811 = vunpack.c.l.b16 %v2711
        %v2812 = vunpack.c.h.b16 %v2711
        %v2813 = vunpack.c.l.b16 %v2712
        %v2814 = vunpack.c.h.b16 %v2712
        %v2815 = vunpack.c.l.b16 %v2713
        %v2816 = vunpack.c.h.b16 %v2713
        %v2817 = vunpack.c.l.b16 %v2714
        %v2818 = vunpack.c.h.b16 %v2714
        %v2819 = vunpack.c.l.b16 %v2715
        %v2820 = vunpack.c.h.b16 %v2715
        %v2821 = vunpack.c.l.b16 %v2716
        %v2822 = vunpack.c.h.b16 %v2716
        %v2823 = vunpack.c.l.b16 %v2717
        %v2824 = vunpack.c.h.b16 %v2717
        %v2825 = vunpack.c.l.b16 %v2718
        %v2826 = vunpack.c.h.b16 %v2718
        %v2827 = vunpack.c.l.b16 %v2719
        %v2828 = vunpack.c.h.b16 %v2719
        %v2829 = vpack.c.b16 %v2767, %v2765
        %v2830 = vpack.c.b16 %v2768, %v2766
        %v2831 = vpack.c.b16 %v2771, %v2769
        %v2832 = vpack.c.b16 %v2772, %v2770
        %v2833 = vpack.c.b16 %v2775, %v2773
        %v2834 = vpack.c.b16 %v2776, %v2774
        %v2835 = vpack.c.b16 %v2779, %v2777
        %v2836 = vpack.c.b16 %v2780, %v2778
        %v2837 = vpack.c.b16 %v2783, %v2781
        %v2838 = vpack.c.b16 %v2784, %v2782
        %v2839 = vpack.c.b16 %v2787, %v2785
        %v2840 = vpack.c.b16 %v2788, %v2786
        %v2841 = vpack.c.b16 %v2791, %v2789
        %v2842 = vpack.c.b16 %v2792, %v2790
        %v2843 = vpack.c.b16 %v2795, %v2793
        %v2844 = vpack.c.b16 %v2796, %v2794
        %v2845 = vpack.c.b16 %v2799, %v2797
        %v2846 = vpack.c.b16 %v2800, %v2798
        %v2847 = vpack.c.b16 %v2803, %v2801
        %v2848 = vpack.c.b16 %v2804, %v2802
        %v2849 = vpack.c.b16 %v2807, %v2805
        %v2850 = vpack.c.b16 %v2808, %v2806
        %v2851 = vpack.c.b16 %v2811, %v2809
        %v2852 = vpack.c.b16 %v2812, %v2810
        %v2853 = vpack.c.b16 %v2815, %v2813
        %v2854 = vpack.c.b16 %v2816, %v2814
        %v2855 = vpack.c.b16 %v2819, %v2817
        %v2856 = vpack.c.b16 %v2820, %v2818
        %v2857 = vpack.c.b16 %v2823, %v2821
        %v2858 = vpack.c.b16 %v2824, %v2822
        %v2859 = vpack.c.b16 %v2827, %v2825
        %v2860 = vpack.c.b16 %v2828, %v2826
        %2893 = vmatprep.subr.bf16.mxu0 %v2830
        %2894 = vmatpush1.bf16.msra.mxu0 %v2829
        %2895 = vmatprep.subr.bf16.mxu0 %v2832
        %2896 = vmatpush1.bf16.msra.mxu0 %v2831
        %2897 = vmatprep.subr.bf16.mxu0 %v2834
        %2898 = vmatpush1.bf16.msra.mxu0 %v2833
        %2899 = vmatprep.subr.bf16.mxu0 %v2836
        %2900 = vmatpush1.bf16.msra.mxu0 %v2835
        %2901 = vmatprep.subr.bf16.mxu0 %v2838
        %2902 = vmatpush1.bf16.msra.mxu0 %v2837
        %2903 = vmatprep.subr.bf16.mxu0 %v2840
        %2904 = vmatpush1.bf16.msra.mxu0 %v2839
        %2905 = vmatprep.subr.bf16.mxu0 %v2842
        %2906 = vmatpush1.bf16.msra.mxu0 %v2841
        %2907 = vmatprep.subr.bf16.mxu0 %v2844
        %2908 = vmatpush1.bf16.msra.mxu0 %v2843
        %2909 = vmatprep.subr.bf16.mxu0 %v2846
        %2910 = vmatpush1.bf16.msra.mxu0 %v2845
        %2911 = vmatprep.subr.bf16.mxu0 %v2848
        %2912 = vmatpush1.bf16.msra.mxu0 %v2847
        %2913 = vmatprep.subr.bf16.mxu0 %v2850
        %2914 = vmatpush1.bf16.msra.mxu0 %v2849
        %2915 = vmatprep.subr.bf16.mxu0 %v2852
        %2916 = vmatpush1.bf16.msra.mxu0 %v2851
        %2917 = vmatprep.subr.bf16.mxu0 %v2854
        %2918 = vmatpush1.bf16.msra.mxu0 %v2853
        %2919 = vmatprep.subr.bf16.mxu0 %v2856
        %2920 = vmatpush1.bf16.msra.mxu0 %v2855
        %2921 = vmatprep.subr.bf16.mxu0 %v2858
        %2922 = vmatpush1.bf16.msra.mxu0 %v2857
        %2923 = vmatprep.subr.bf16.mxu0 %v2860
        %2924 = vmatpush1.bf16.msra.mxu0 %v2859
        %2925 = vmatprep.mubr.bf16.mxu0 %v2624
        %2926 = vmatmul.mubr.bf16.gmra.mrb[0].mxu0 %v2623
        %v2927 = vpop.f32.mrb[0].mxu0
        %v2928 = vadd.f32 %v2726, %v2927
        %v2929 = vpop.f32.mrb[0].mxu0
        %v2930 = vadd.f32 %v2730, %v2929
        %v2931 = vpop.f32.mrb[0].mxu0
        %v2932 = vadd.f32 %v2726, %v2931
        %v2933 = vpop.f32.mrb[0].mxu0
        %v2934 = vadd.f32 %v2730, %v2933
        %2935 = vmatprep.mubr.bf16.mxu0 %v2626
        %2936 = vmatmul.mubr.bf16.gmra.mrb[0].mxu0 %v2625
        %v2937 = vpop.f32.mrb[0].mxu0
        %v2938 = vadd.f32 %v2726, %v2937
        %v2939 = vpop.f32.mrb[0].mxu0
        %v2940 = vadd.f32 %v2730, %v2939
        %v2941 = vpop.f32.mrb[0].mxu0
        %v2942 = vadd.f32 %v2726, %v2941
        %v2943 = vpop.f32.mrb[0].mxu0
        %v2944 = vadd.f32 %v2730, %v2943
        %2945 = vmatprep.mubr.bf16.mxu0 %v2628
        %2946 = vmatmul.mubr.bf16.gmra.mrb[0].mxu0 %v2627
        %v2947 = vpop.f32.mrb[0].mxu0
        %v2948 = vadd.f32 %v2726, %v2947
        %v2949 = vpop.f32.mrb[0].mxu0
        %v2950 = vadd.f32 %v2730, %v2949
        %v2951 = vpop.f32.mrb[0].mxu0
        %v2952 = vadd.f32 %v2726, %v2951
        %v2953 = vpop.f32.mrb[0].mxu0
        %v2954 = vadd.f32 %v2730, %v2953
        %2955 = vmatprep.mubr.bf16.mxu0 %v2630
        %2956 = vmatmul.mubr.bf16.gmra.mrb[0].mxu0 %v2629
        %v2957 = vpop.f32.mrb[0].mxu0
        %v2958 = vadd.f32 %v2726, %v2957
        %v2959 = vpop.f32.mrb[0].mxu0
        %v2960 = vadd.f32 %v2730, %v2959
        %v2961 = vpop.f32.mrb[0].mxu0
        %v2962 = vadd.f32 %v2726, %v2961
        %v2963 = vpop.f32.mrb[0].mxu0
        %v2964 = vadd.f32 %v2730, %v2963
        %2965 = vmatprep.mubr.bf16.mxu0 %v2632
        %2966 = vmatmul.mubr.bf16.gmra.mrb[0].mxu0 %v2631
        %v2967 = vpop.f32.mrb[0].mxu0
        %v2968 = vadd.f32 %v2726, %v2967
        %v2969 = vpop.f32.mrb[0].mxu0
        %v2970 = vadd.f32 %v2730, %v2969
        %v2971 = vpop.f32.mrb[0].mxu0
        %v2972 = vadd.f32 %v2726, %v2971
        %v2973 = vpop.f32.mrb[0].mxu0
        %v2974 = vadd.f32 %v2730, %v2973
        %2975 = vmatprep.mubr.bf16.mxu0 %v2634
        %2976 = vmatmul.mubr.bf16.gmra.mrb[0].mxu0 %v2633
        %v2977 = vpop.f32.mrb[0].mxu0
        %v2978 = vadd.f32 %v2726, %v2977
        %v2979 = vpop.f32.mrb[0].mxu0
        %v2980 = vadd.f32 %v2730, %v2979
        %v2981 = vpop.f32.mrb[0].mxu0
        %v2982 = vadd.f32 %v2726, %v2981
        %v2983 = vpop.f32.mrb[0].mxu0
        %v2984 = vadd.f32 %v2730, %v2983
        %2985 = vmatprep.mubr.bf16.mxu0 %v2636
        %2986 = vmatmul.mubr.bf16.gmra.mrb[0].mxu0 %v2635
        %v2987 = vpop.f32.mrb[0].mxu0
        %v2988 = vadd.f32 %v2726, %v2987
        %v2989 = vpop.f32.mrb[0].mxu0
        %v2990 = vadd.f32 %v2730, %v2989
        %v2991 = vpop.f32.mrb[0].mxu0
        %v2992 = vadd.f32 %v2726, %v2991
        %v2993 = vpop.f32.mrb[0].mxu0
        %v2994 = vadd.f32 %v2730, %v2993
        %2995 = vmatprep.mubr.bf16.mxu0 %v2638
        %2996 = vmatmul.mubr.bf16.gmra.mrb[0].mxu0 %v2637
        %v2997 = vpop.f32.mrb[0].mxu0
        %v2998 = vadd.f32 %v2726, %v2997
        %v2999 = vpop.f32.mrb[0].mxu0
        %v3000 = vadd.f32 %v2730, %v2999
        %v3001 = vpop.f32.mrb[0].mxu0
        %v3002 = vadd.f32 %v2726, %v3001
        %v3003 = vpop.f32.mrb[0].mxu0
        %v3004 = vadd.f32 %v2730, %v3003
        %3005 = vmatprep.mubr.bf16.mxu0 %v2640
        %3006 = vmatmul.mubr.bf16.gmra.mrb[0].mxu0 %v2639
        %v3007 = vpop.f32.mrb[0].mxu0
        %v3008 = vadd.f32 %v2726, %v3007
        %v3009 = vpop.f32.mrb[0].mxu0
        %v3010 = vadd.f32 %v2730, %v3009
        %v3011 = vpop.f32.mrb[0].mxu0
        %v3012 = vadd.f32 %v2726, %v3011
        %v3013 = vpop.f32.mrb[0].mxu0
        %v3014 = vadd.f32 %v2730, %v3013
        %3015 = vmatprep.mubr.bf16.mxu0 %v2642
        %3016 = vmatmul.mubr.bf16.gmra.mrb[0].mxu0 %v2641
        %v3017 = vpop.f32.mrb[0].mxu0
        %v3018 = vadd.f32 %v2726, %v3017
        %v3019 = vpop.f32.mrb[0].mxu0
        %v3020 = vadd.f32 %v2730, %v3019
        %v3021 = vpop.f32.mrb[0].mxu0
        %v3022 = vadd.f32 %v2726, %v3021
        %v3023 = vpop.f32.mrb[0].mxu0
        %v3024 = vadd.f32 %v2730, %v3023
        %3025 = vmatprep.mubr.bf16.mxu0 %v2644
        %3026 = vmatmul.mubr.bf16.gmra.mrb[0].mxu0 %v2643
        %v3027 = vpop.f32.mrb[0].mxu0
        %v3028 = vadd.f32 %v2726, %v3027
        %v3029 = vpop.f32.mrb[0].mxu0
        %v3030 = vadd.f32 %v2730, %v3029
        %v3031 = vpop.f32.mrb[0].mxu0
        %v3032 = vadd.f32 %v2726, %v3031
        %v3033 = vpop.f32.mrb[0].mxu0
        %v3034 = vadd.f32 %v2730, %v3033
        %3035 = vmatprep.mubr.bf16.mxu0 %v2646
        %3036 = vmatmul.mubr.bf16.gmra.mrb[0].mxu0 %v2645
        %v3037 = vpop.f32.mrb[0].mxu0
        %v3038 = vadd.f32 %v2726, %v3037
        %v3039 = vpop.f32.mrb[0].mxu0
        %v3040 = vadd.f32 %v2730, %v3039
        %v3041 = vpop.f32.mrb[0].mxu0
        %v3042 = vadd.f32 %v2726, %v3041
        %v3043 = vpop.f32.mrb[0].mxu0
        %v3044 = vadd.f32 %v2730, %v3043
        %3045 = vmatprep.mubr.bf16.mxu0 %v2648
        %3046 = vmatmul.mubr.bf16.gmra.mrb[0].mxu0 %v2647
        %v3047 = vpop.f32.mrb[0].mxu0
        %v3048 = vadd.f32 %v2726, %v3047
        %v3049 = vpop.f32.mrb[0].mxu0
        %v3050 = vadd.f32 %v2730, %v3049
        %v3051 = vpop.f32.mrb[0].mxu0
        %v3052 = vadd.f32 %v2726, %v3051
        %v3053 = vpop.f32.mrb[0].mxu0
        %v3054 = vadd.f32 %v2730, %v3053
        %3055 = vmatprep.mubr.bf16.mxu0 %v2650
        %3056 = vmatmul.mubr.bf16.gmra.mrb[0].mxu0 %v2649
        %v3057 = vpop.f32.mrb[0].mxu0
        %v3058 = vadd.f32 %v2726, %v3057
        %v3059 = vpop.f32.mrb[0].mxu0
        %v3060 = vadd.f32 %v2730, %v3059
        %v3061 = vpop.f32.mrb[0].mxu0
        %v3062 = vadd.f32 %v2726, %v3061
        %v3063 = vpop.f32.mrb[0].mxu0
        %v3064 = vadd.f32 %v2730, %v3063
        %3065 = vmatprep.mubr.bf16.mxu0 %v2652
        %3066 = vmatmul.mubr.bf16.gmra.mrb[0].mxu0 %v2651
        %v3067 = vpop.f32.mrb[0].mxu0
        %v3068 = vadd.f32 %v2726, %v3067
        %v3069 = vpop.f32.mrb[0].mxu0
        %v3070 = vadd.f32 %v2730, %v3069
        %v3071 = vpop.f32.mrb[0].mxu0
        %v3072 = vadd.f32 %v2726, %v3071
        %v3073 = vpop.f32.mrb[0].mxu0
        %v3074 = vadd.f32 %v2730, %v3073
        %3075 = vmatprep.mubr.bf16.mxu0 %v2654
        %3076 = vmatmul.mubr.bf16.gmra.mrb[0].mxu0 %v2653
        %v3077 = vpop.f32.mrb[0].mxu0
        %v3078 = vadd.f32 %v2726, %v3077
        %v3079 = vpop.f32.mrb[0].mxu0
        %v3080 = vadd.f32 %v2730, %v3079
        %v3081 = vpop.f32.mrb[0].mxu0
        %v3082 = vadd.f32 %v2726, %v3081
        %v3083 = vpop.f32.mrb[0].mxu0
        %v3084 = vadd.f32 %v2730, %v3083
        %3085 = vmatprep.mubr.bf16.mxu0 %v2656
        %3086 = vmatmul.mubr.bf16.gmra.mrb[0].mxu0 %v2655
        %v3087 = vpop.f32.mrb[0].mxu0
        %v3088 = vadd.f32 %v2726, %v3087
        %v3089 = vpop.f32.mrb[0].mxu0
        %v3090 = vadd.f32 %v2730, %v3089
        %v3091 = vpop.f32.mrb[0].mxu0
        %v3092 = vadd.f32 %v2726, %v3091
        %v3093 = vpop.f32.mrb[0].mxu0
        %v3094 = vadd.f32 %v2730, %v3093
        %3095 = vmatprep.mubr.bf16.mxu0 %v2658
        %3096 = vmatmul.mubr.bf16.gmra.mrb[0].mxu0 %v2657
        %v3097 = vpop.f32.mrb[0].mxu0
        %v3098 = vadd.f32 %v2726, %v3097
        %v3099 = vpop.f32.mrb[0].mxu0
        %v3100 = vadd.f32 %v2730, %v3099
        %v3101 = vpop.f32.mrb[0].mxu0
        %v3102 = vadd.f32 %v2726, %v3101
        %v3103 = vpop.f32.mrb[0].mxu0
        %v3104 = vadd.f32 %v2730, %v3103
        %3105 = vmatprep.mubr.bf16.mxu0 %v2660
        %3106 = vmatmul.mubr.bf16.gmra.mrb[0].mxu0 %v2659
        %v3107 = vpop.f32.mrb[0].mxu0
        %v3108 = vadd.f32 %v2726, %v3107
        %v3109 = vpop.f32.mrb[0].mxu0
        %v3110 = vadd.f32 %v2730, %v3109
        %v3111 = vpop.f32.mrb[0].mxu0
        %v3112 = vadd.f32 %v2726, %v3111
        %v3113 = vpop.f32.mrb[0].mxu0
        %v3114 = vadd.f32 %v2730, %v3113
        %3115 = vmatprep.mubr.bf16.mxu0 %v2662
        %3116 = vmatmul.mubr.bf16.gmra.mrb[0].mxu0 %v2661
        %v3117 = vpop.f32.mrb[0].mxu0
        %v3118 = vadd.f32 %v2726, %v3117
        %v3119 = vpop.f32.mrb[0].mxu0
        %v3120 = vadd.f32 %v2730, %v3119
        %v3121 = vpop.f32.mrb[0].mxu0
        %v3122 = vadd.f32 %v2726, %v3121
        %v3123 = vpop.f32.mrb[0].mxu0
        %v3124 = vadd.f32 %v2730, %v3123
        %3125 = vmatprep.mubr.bf16.mxu0 %v2664
        %3126 = vmatmul.mubr.bf16.gmra.mrb[0].mxu0 %v2663
        %v3127 = vpop.f32.mrb[0].mxu0
        %v3128 = vadd.f32 %v2726, %v3127
        %v3129 = vpop.f32.mrb[0].mxu0
        %v3130 = vadd.f32 %v2730, %v3129
        %v3131 = vpop.f32.mrb[0].mxu0
        %v3132 = vadd.f32 %v2726, %v3131
        %v3133 = vpop.f32.mrb[0].mxu0
        %v3134 = vadd.f32 %v2730, %v3133
        %3135 = vmatprep.mubr.bf16.mxu0 %v2666
        %3136 = vmatmul.mubr.bf16.gmra.mrb[0].mxu0 %v2665
        %v3137 = vpop.f32.mrb[0].mxu0
        %v3138 = vadd.f32 %v2726, %v3137
        %v3139 = vpop.f32.mrb[0].mxu0
        %v3140 = vadd.f32 %v2730, %v3139
        %v3141 = vpop.f32.mrb[0].mxu0
        %v3142 = vadd.f32 %v2726, %v3141
        %v3143 = vpop.f32.mrb[0].mxu0
        %v3144 = vadd.f32 %v2730, %v3143
        %3145 = vmatprep.mubr.bf16.mxu0 %v2668
        %3146 = vmatmul.mubr.bf16.gmra.mrb[0].mxu0 %v2667
        %v3147 = vpop.f32.mrb[0].mxu0
        %v3148 = vadd.f32 %v2726, %v3147
        %v3149 = vpop.f32.mrb[0].mxu0
        %v3150 = vadd.f32 %v2730, %v3149
        %v3151 = vpop.f32.mrb[0].mxu0
        %v3152 = vadd.f32 %v2726, %v3151
        %v3153 = vpop.f32.mrb[0].mxu0
        %v3154 = vadd.f32 %v2730, %v3153
        %3155 = vmatprep.mubr.bf16.mxu0 %v2670
        %3156 = vmatmul.mubr.bf16.gmra.mrb[0].mxu0 %v2669
        %v3157 = vpop.f32.mrb[0].mxu0
        %v3158 = vadd.f32 %v2726, %v3157
        %v3159 = vpop.f32.mrb[0].mxu0
        %v3160 = vadd.f32 %v2730, %v3159
        %v3161 = vpop.f32.mrb[0].mxu0
        %v3162 = vadd.f32 %v2726, %v3161
        %v3163 = vpop.f32.mrb[0].mxu0
        %v3164 = vadd.f32 %v2730, %v3163
        %3165 = vmatprep.mubr.bf16.mxu0 %v2672
        %3166 = vmatmul.mubr.bf16.gmra.mrb[0].mxu0 %v2671
        %v3167 = vpop.f32.mrb[0].mxu0
        %v3168 = vadd.f32 %v2726, %v3167
        %v3169 = vpop.f32.mrb[0].mxu0
        %v3170 = vadd.f32 %v2730, %v3169
        %v3171 = vpop.f32.mrb[0].mxu0
        %v3172 = vadd.f32 %v2726, %v3171
        %v3173 = vpop.f32.mrb[0].mxu0
        %v3174 = vadd.f32 %v2730, %v3173
        %3175 = vmatprep.mubr.bf16.mxu0 %v2674
        %3176 = vmatmul.mubr.bf16.gmra.mrb[0].mxu0 %v2673
        %v3177 = vpop.f32.mrb[0].mxu0
        %v3178 = vadd.f32 %v2726, %v3177
        %v3179 = vpop.f32.mrb[0].mxu0
        %v3180 = vadd.f32 %v2730, %v3179
        %v3181 = vpop.f32.mrb[0].mxu0
        %v3182 = vadd.f32 %v2726, %v3181
        %v3183 = vpop.f32.mrb[0].mxu0
        %v3184 = vadd.f32 %v2730, %v3183
        %3185 = vmatprep.mubr.bf16.mxu0 %v2676
        %3186 = vmatmul.mubr.bf16.gmra.mrb[0].mxu0 %v2675
        %v3187 = vpop.f32.mrb[0].mxu0
        %v3188 = vadd.f32 %v2726, %v3187
        %v3189 = vpop.f32.mrb[0].mxu0
        %v3190 = vadd.f32 %v2730, %v3189
        %v3191 = vpop.f32.mrb[0].mxu0
        %v3192 = vadd.f32 %v2726, %v3191
        %v3193 = vpop.f32.mrb[0].mxu0
        %v3194 = vadd.f32 %v2730, %v3193
        %3195 = vmatprep.mubr.bf16.mxu0 %v2678
        %3196 = vmatmul.mubr.bf16.gmra.mrb[0].mxu0 %v2677
        %v3197 = vpop.f32.mrb[0].mxu0
        %v3198 = vadd.f32 %v2726, %v3197
        %v3199 = vpop.f32.mrb[0].mxu0
        %v3200 = vadd.f32 %v2730, %v3199
        %v3201 = vpop.f32.mrb[0].mxu0
        %v3202 = vadd.f32 %v2726, %v3201
        %v3203 = vpop.f32.mrb[0].mxu0
        %v3204 = vadd.f32 %v2730, %v3203
        %3205 = vmatprep.mubr.bf16.mxu0 %v2680
        %3206 = vmatmul.mubr.bf16.gmra.mrb[0].mxu0 %v2679
        %v3207 = vpop.f32.mrb[0].mxu0
        %v3208 = vadd.f32 %v2726, %v3207
        %v3209 = vpop.f32.mrb[0].mxu0
        %v3210 = vadd.f32 %v2730, %v3209
        %v3211 = vpop.f32.mrb[0].mxu0
        %v3212 = vadd.f32 %v2726, %v3211
        %v3213 = vpop.f32.mrb[0].mxu0
        %v3214 = vadd.f32 %v2730, %v3213
        %3215 = vmatprep.mubr.bf16.mxu0 %v2682
        %3216 = vmatmul.mubr.bf16.gmra.mrb[0].mxu0 %v2681
        %v3217 = vpop.f32.mrb[0].mxu0
        %v3218 = vadd.f32 %v2726, %v3217
        %v3219 = vpop.f32.mrb[0].mxu0
        %v3220 = vadd.f32 %v2730, %v3219
        %v3221 = vpop.f32.mrb[0].mxu0
        %v3222 = vadd.f32 %v2726, %v3221
        %v3223 = vpop.f32.mrb[0].mxu0
        %v3224 = vadd.f32 %v2730, %v3223
        %3225 = vmatprep.mubr.bf16.mxu0 %v2684
        %3226 = vmatmul.mubr.bf16.gmra.mrb[0].mxu0 %v2683
        %v3227 = vpop.f32.mrb[0].mxu0
        %v3228 = vadd.f32 %v2726, %v3227
        %v3229 = vpop.f32.mrb[0].mxu0
        %v3230 = vadd.f32 %v2730, %v3229
        %v3231 = vpop.f32.mrb[0].mxu0
        %v3232 = vadd.f32 %v2726, %v3231
        %v3233 = vpop.f32.mrb[0].mxu0
        %v3234 = vadd.f32 %v2730, %v3233
        %3235 = vmatprep.mubr.bf16.mxu0 %v2686
        %3236 = vmatmul.mubr.bf16.gmra.mrb[0].mxu0 %v2685
        %v3237 = vpop.f32.mrb[0].mxu0
        %v3238 = vadd.f32 %v2726, %v3237
        %v3239 = vpop.f32.mrb[0].mxu0
        %v3240 = vadd.f32 %v2730, %v3239
        %v3241 = vpop.f32.mrb[0].mxu0
        %v3242 = vadd.f32 %v2726, %v3241
        %v3243 = vpop.f32.mrb[0].mxu0
        %v3244 = vadd.f32 %v2730, %v3243
        %3245 = vdwg.mxu0
        %v3246 = vmax.f32 %v2928, 0.0
        %v3247 = vmax.f32 %v2930, 0.0
        %v3248 = vmax.f32 %v2932, 0.0
        %v3249 = vmax.f32 %v2934, 0.0
        %v3250 = vmax.f32 %v2938, 0.0
        %v3251 = vmax.f32 %v2940, 0.0
        %v3252 = vmax.f32 %v2942, 0.0
        %v3253 = vmax.f32 %v2944, 0.0
        %v3254 = vmax.f32 %v2948, 0.0
        %v3255 = vmax.f32 %v2950, 0.0
        %v3256 = vmax.f32 %v2952, 0.0
        %v3257 = vmax.f32 %v2954, 0.0
        %v3258 = vmax.f32 %v2958, 0.0
        %v3259 = vmax.f32 %v2960, 0.0
        %v3260 = vmax.f32 %v2962, 0.0
        %v3261 = vmax.f32 %v2964, 0.0
        %v3262 = vmax.f32 %v2968, 0.0
        %v3263 = vmax.f32 %v2970, 0.0
        %v3264 = vmax.f32 %v2972, 0.0
        %v3265 = vmax.f32 %v2974, 0.0
        %v3266 = vmax.f32 %v2978, 0.0
        %v3267 = vmax.f32 %v2980, 0.0
        %v3268 = vmax.f32 %v2982, 0.0
        %v3269 = vmax.f32 %v2984, 0.0
        %v3270 = vmax.f32 %v2988, 0.0
        %v3271 = vmax.f32 %v2990, 0.0
        %v3272 = vmax.f32 %v2992, 0.0
        %v3273 = vmax.f32 %v2994, 0.0
        %v3274 = vmax.f32 %v2998, 0.0
        %v3275 = vmax.f32 %v3000, 0.0
        %v3276 = vmax.f32 %v3002, 0.0
        %v3277 = vmax.f32 %v3004, 0.0
        %v3278 = vmax.f32 %v3008, 0.0
        %v3279 = vmax.f32 %v3010, 0.0
        %v3280 = vmax.f32 %v3012, 0.0
        %v3281 = vmax.f32 %v3014, 0.0
        %v3282 = vmax.f32 %v3018, 0.0
        %v3283 = vmax.f32 %v3020, 0.0
        %v3284 = vmax.f32 %v3022, 0.0
        %v3285 = vmax.f32 %v3024, 0.0
        %v3286 = vmax.f32 %v3028, 0.0
        %v3287 = vmax.f32 %v3030, 0.0
        %v3288 = vmax.f32 %v3032, 0.0
        %v3289 = vmax.f32 %v3034, 0.0
        %v3290 = vmax.f32 %v3038, 0.0
        %v3291 = vmax.f32 %v3040, 0.0
        %v3292 = vmax.f32 %v3042, 0.0
        %v3293 = vmax.f32 %v3044, 0.0
        %v3294 = vmax.f32 %v3048, 0.0
        %v3295 = vmax.f32 %v3050, 0.0
        %v3296 = vmax.f32 %v3052, 0.0
        %v3297 = vmax.f32 %v3054, 0.0
        %v3298 = vmax.f32 %v3058, 0.0
        %v3299 = vmax.f32 %v3060, 0.0
        %v3300 = vmax.f32 %v3062, 0.0
        %v3301 = vmax.f32 %v3064, 0.0
        %v3302 = vmax.f32 %v3068, 0.0
        %v3303 = vmax.f32 %v3070, 0.0
        %v3304 = vmax.f32 %v3072, 0.0
        %v3305 = vmax.f32 %v3074, 0.0
        %v3306 = vmax.f32 %v3078, 0.0
        %v3307 = vmax.f32 %v3080, 0.0
        %v3308 = vmax.f32 %v3082, 0.0
        %v3309 = vmax.f32 %v3084, 0.0
        %v3310 = vmax.f32 %v3088, 0.0
        %v3311 = vmax.f32 %v3090, 0.0
        %v3312 = vmax.f32 %v3092, 0.0
        %v3313 = vmax.f32 %v3094, 0.0
        %v3314 = vmax.f32 %v3098, 0.0
        %v3315 = vmax.f32 %v3100, 0.0
        %v3316 = vmax.f32 %v3102, 0.0
        %v3317 = vmax.f32 %v3104, 0.0
        %v3318 = vmax.f32 %v3108, 0.0
        %v3319 = vmax.f32 %v3110, 0.0
        %v3320 = vmax.f32 %v3112, 0.0
        %v3321 = vmax.f32 %v3114, 0.0
        %v3322 = vmax.f32 %v3118, 0.0
        %v3323 = vmax.f32 %v3120, 0.0
        %v3324 = vmax.f32 %v3122, 0.0
        %v3325 = vmax.f32 %v3124, 0.0
        %v3326 = vmax.f32 %v3128, 0.0
        %v3327 = vmax.f32 %v3130, 0.0
        %v3328 = vmax.f32 %v3132, 0.0
        %v3329 = vmax.f32 %v3134, 0.0
        %v3330 = vmax.f32 %v3138, 0.0
        %v3331 = vmax.f32 %v3140, 0.0
        %v3332 = vmax.f32 %v3142, 0.0
        %v3333 = vmax.f32 %v3144, 0.0
        %v3334 = vmax.f32 %v3148, 0.0
        %v3335 = vmax.f32 %v3150, 0.0
        %v3336 = vmax.f32 %v3152, 0.0
        %v3337 = vmax.f32 %v3154, 0.0
        %v3338 = vmax.f32 %v3158, 0.0
        %v3339 = vmax.f32 %v3160, 0.0
        %v3340 = vmax.f32 %v3162, 0.0
        %v3341 = vmax.f32 %v3164, 0.0
        %v3342 = vmax.f32 %v3168, 0.0
        %v3343 = vmax.f32 %v3170, 0.0
        %v3344 = vmax.f32 %v3172, 0.0
        %v3345 = vmax.f32 %v3174, 0.0
        %v3346 = vmax.f32 %v3178, 0.0
        %v3347 = vmax.f32 %v3180, 0.0
        %v3348 = vmax.f32 %v3182, 0.0
        %v3349 = vmax.f32 %v3184, 0.0
        %v3350 = vmax.f32 %v3188, 0.0
        %v3351 = vmax.f32 %v3190, 0.0
        %v3352 = vmax.f32 %v3192, 0.0
        %v3353 = vmax.f32 %v3194, 0.0
        %v3354 = vmax.f32 %v3198, 0.0
        %v3355 = vmax.f32 %v3200, 0.0
        %v3356 = vmax.f32 %v3202, 0.0
        %v3357 = vmax.f32 %v3204, 0.0
        %v3358 = vmax.f32 %v3208, 0.0
        %v3359 = vmax.f32 %v3210, 0.0
        %v3360 = vmax.f32 %v3212, 0.0
        %v3361 = vmax.f32 %v3214, 0.0
        %v3362 = vmax.f32 %v3218, 0.0
        %v3363 = vmax.f32 %v3220, 0.0
        %v3364 = vmax.f32 %v3222, 0.0
        %v3365 = vmax.f32 %v3224, 0.0
        %v3366 = vmax.f32 %v3228, 0.0
        %v3367 = vmax.f32 %v3230, 0.0
        %v3368 = vmax.f32 %v3232, 0.0
        %v3369 = vmax.f32 %v3234, 0.0
        %v3370 = vmax.f32 %v3238, 0.0
        %v3371 = vmax.f32 %v3240, 0.0
        %v3372 = vmax.f32 %v3242, 0.0
        %v3373 = vmax.f32 %v3244, 0.0
        %v3374 = vpack.c.bf16 %v3248, %v3246
        %v3375 = vpack.c.bf16 %v3249, %v3247
        %v3376 = vpack.c.bf16 %v3252, %v3250
        %v3377 = vpack.c.bf16 %v3253, %v3251
        %v3378 = vpack.c.bf16 %v3256, %v3254
        %v3379 = vpack.c.bf16 %v3257, %v3255
        %v3380 = vpack.c.bf16 %v3260, %v3258
        %v3381 = vpack.c.bf16 %v3261, %v3259
        %v3382 = vpack.c.bf16 %v3264, %v3262
        %v3383 = vpack.c.bf16 %v3265, %v3263
        %v3384 = vpack.c.bf16 %v3268, %v3266
        %v3385 = vpack.c.bf16 %v3269, %v3267
        %v3386 = vpack.c.bf16 %v3272, %v3270
        %v3387 = vpack.c.bf16 %v3273, %v3271
        %v3388 = vpack.c.bf16 %v3276, %v3274
        %v3389 = vpack.c.bf16 %v3277, %v3275
        %v3390 = vpack.c.bf16 %v3280, %v3278
        %v3391 = vpack.c.bf16 %v3281, %v3279
        %v3392 = vpack.c.bf16 %v3284, %v3282
        %v3393 = vpack.c.bf16 %v3285, %v3283
        %v3394 = vpack.c.bf16 %v3288, %v3286
        %v3395 = vpack.c.bf16 %v3289, %v3287
        %v3396 = vpack.c.bf16 %v3292, %v3290
        %v3397 = vpack.c.bf16 %v3293, %v3291
        %v3398 = vpack.c.bf16 %v3296, %v3294
        %v3399 = vpack.c.bf16 %v3297, %v3295
        %v3400 = vpack.c.bf16 %v3300, %v3298
        %v3401 = vpack.c.bf16 %v3301, %v3299
        %v3402 = vpack.c.bf16 %v3304, %v3302
        %v3403 = vpack.c.bf16 %v3305, %v3303
        %v3404 = vpack.c.bf16 %v3308, %v3306
        %v3405 = vpack.c.bf16 %v3309, %v3307
        %v3406 = vpack.c.bf16 %v3312, %v3310
        %v3407 = vpack.c.bf16 %v3313, %v3311
        %v3408 = vpack.c.bf16 %v3316, %v3314
        %v3409 = vpack.c.bf16 %v3317, %v3315
        %v3410 = vpack.c.bf16 %v3320, %v3318
        %v3411 = vpack.c.bf16 %v3321, %v3319
        %v3412 = vpack.c.bf16 %v3324, %v3322
        %v3413 = vpack.c.bf16 %v3325, %v3323
        %v3414 = vpack.c.bf16 %v3328, %v3326
        %v3415 = vpack.c.bf16 %v3329, %v3327
        %v3416 = vpack.c.bf16 %v3332, %v3330
        %v3417 = vpack.c.bf16 %v3333, %v3331
        %v3418 = vpack.c.bf16 %v3336, %v3334
        %v3419 = vpack.c.bf16 %v3337, %v3335
        %v3420 = vpack.c.bf16 %v3340, %v3338
        %v3421 = vpack.c.bf16 %v3341, %v3339
        %v3422 = vpack.c.bf16 %v3344, %v3342
        %v3423 = vpack.c.bf16 %v3345, %v3343
        %v3424 = vpack.c.bf16 %v3348, %v3346
        %v3425 = vpack.c.bf16 %v3349, %v3347
        %v3426 = vpack.c.bf16 %v3352, %v3350
        %v3427 = vpack.c.bf16 %v3353, %v3351
        %v3428 = vpack.c.bf16 %v3356, %v3354
        %v3429 = vpack.c.bf16 %v3357, %v3355
        %v3430 = vpack.c.bf16 %v3360, %v3358
        %v3431 = vpack.c.bf16 %v3361, %v3359
        %v3432 = vpack.c.bf16 %v3364, %v3362
        %v3433 = vpack.c.bf16 %v3365, %v3363
        %v3434 = vpack.c.bf16 %v3368, %v3366
        %v3435 = vpack.c.bf16 %v3369, %v3367
        %v3436 = vpack.c.bf16 %v3372, %v3370
        %v3437 = vpack.c.bf16 %v3373, %v3371
        %s3438 = scalar_lea.vmem [#allocation2], 768
        %v3439 = vld [vmem:[%s3438] sm:$0xff]
        %v3440 = vld [vmem:[%s3438 + $0x8] sm:$0xff]
        %v3441 = vld [vmem:[%s3438 + $0x10] sm:$0xff]
        %v3442 = vld [vmem:[%s3438 + $0x18] sm:$0xff]
        %v3443 = vld [vmem:[%s3438 + $0x20] sm:$0xff]
        %v3444 = vld [vmem:[%s3438 + $0x28] sm:$0xff]
        %v3445 = vld [vmem:[%s3438 + $0x30] sm:$0xff]
        %v3446 = vld [vmem:[%s3438 + $0x38] sm:$0xff]
        %v3447 = vld [vmem:[%s3438 + $0x40] sm:$0xff]
        %v3448 = vld [vmem:[%s3438 + $0x48] sm:$0xff]
        %v3449 = vld [vmem:[%s3438 + $0x50] sm:$0xff]
        %v3450 = vld [vmem:[%s3438 + $0x58] sm:$0xff]
        %v3451 = vld [vmem:[%s3438 + $0x60] sm:$0xff]
        %v3452 = vld [vmem:[%s3438 + $0x68] sm:$0xff]
        %v3453 = vld [vmem:[%s3438 + $0x70] sm:$0xff]
        %v3454 = vld [vmem:[%s3438 + $0x78] sm:$0xff]
        %v3455 = vld [vmem:[%s3438 + $0x80] sm:$0xff]
        %v3456 = vld [vmem:[%s3438 + $0x88] sm:$0xff]
        %v3457 = vld [vmem:[%s3438 + $0x90] sm:$0xff]
        %v3458 = vld [vmem:[%s3438 + $0x98] sm:$0xff]
        %v3459 = vld [vmem:[%s3438 + $0xa0] sm:$0xff]
        %v3460 = vld [vmem:[%s3438 + $0xa8] sm:$0xff]
        %v3461 = vld [vmem:[%s3438 + $0xb0] sm:$0xff]
        %v3462 = vld [vmem:[%s3438 + $0xb8] sm:$0xff]
        %v3463 = vld [vmem:[%s3438 + $0xc0] sm:$0xff]
        %v3464 = vld [vmem:[%s3438 + $0xc8] sm:$0xff]
        %v3465 = vld [vmem:[%s3438 + $0xd0] sm:$0xff]
        %v3466 = vld [vmem:[%s3438 + $0xd8] sm:$0xff]
        %v3467 = vld [vmem:[%s3438 + $0xe0] sm:$0xff]
        %v3468 = vld [vmem:[%s3438 + $0xe8] sm:$0xff]
        %v3469 = vld [vmem:[%s3438 + $0xf0] sm:$0xff]
        %v3470 = vld [vmem:[%s3438 + $0xf8] sm:$0xff]
        %s3471 = scalar_lea.vmem %s4, 4
        %v3472 = vld [vmem:[%s3471] ss:$8 sm:$0x3]
        %v3474 = vlaneseq
        %v3475 = vshrl.u32 %v3474, 7
        %v3476 = vsub.s32 0, %v3475
        %v3477 = vrot.slane %v3472, %v3476
        %v3478 = vlaneseq
        %v3479 = vshrl.u32 %v3478, 7
        %v3480 = vsub.s32 1, %v3479
        %v3481 = vrot.slane %v3472, %v3480
        %v3516 = vunpack.c.l.b16 %v3439
        %v3517 = vunpack.c.h.b16 %v3439
        %v3518 = vunpack.c.l.b16 %v3440
        %v3519 = vunpack.c.h.b16 %v3440
        %v3520 = vunpack.c.l.b16 %v3441
        %v3521 = vunpack.c.h.b16 %v3441
        %v3522 = vunpack.c.l.b16 %v3442
        %v3523 = vunpack.c.h.b16 %v3442
        %v3524 = vunpack.c.l.b16 %v3443
        %v3525 = vunpack.c.h.b16 %v3443
        %v3526 = vunpack.c.l.b16 %v3444
        %v3527 = vunpack.c.h.b16 %v3444
        %v3528 = vunpack.c.l.b16 %v3445
        %v3529 = vunpack.c.h.b16 %v3445
        %v3530 = vunpack.c.l.b16 %v3446
        %v3531 = vunpack.c.h.b16 %v3446
        %v3532 = vunpack.c.l.b16 %v3447
        %v3533 = vunpack.c.h.b16 %v3447
        %v3534 = vunpack.c.l.b16 %v3448
        %v3535 = vunpack.c.h.b16 %v3448
        %v3536 = vunpack.c.l.b16 %v3449
        %v3537 = vunpack.c.h.b16 %v3449
        %v3538 = vunpack.c.l.b16 %v3450
        %v3539 = vunpack.c.h.b16 %v3450
        %v3540 = vunpack.c.l.b16 %v3451
        %v3541 = vunpack.c.h.b16 %v3451
        %v3542 = vunpack.c.l.b16 %v3452
        %v3543 = vunpack.c.h.b16 %v3452
        %v3544 = vunpack.c.l.b16 %v3453
        %v3545 = vunpack.c.h.b16 %v3453
        %v3546 = vunpack.c.l.b16 %v3454
        %v3547 = vunpack.c.h.b16 %v3454
        %v3548 = vunpack.c.l.b16 %v3455
        %v3549 = vunpack.c.h.b16 %v3455
        %v3550 = vunpack.c.l.b16 %v3456
        %v3551 = vunpack.c.h.b16 %v3456
        %v3552 = vunpack.c.l.b16 %v3457
        %v3553 = vunpack.c.h.b16 %v3457
        %v3554 = vunpack.c.l.b16 %v3458
        %v3555 = vunpack.c.h.b16 %v3458
        %v3556 = vunpack.c.l.b16 %v3459
        %v3557 = vunpack.c.h.b16 %v3459
        %v3558 = vunpack.c.l.b16 %v3460
        %v3559 = vunpack.c.h.b16 %v3460
        %v3560 = vunpack.c.l.b16 %v3461
        %v3561 = vunpack.c.h.b16 %v3461
        %v3562 = vunpack.c.l.b16 %v3462
        %v3563 = vunpack.c.h.b16 %v3462
        %v3564 = vunpack.c.l.b16 %v3463
        %v3565 = vunpack.c.h.b16 %v3463
        %v3566 = vunpack.c.l.b16 %v3464
        %v3567 = vunpack.c.h.b16 %v3464
        %v3568 = vunpack.c.l.b16 %v3465
        %v3569 = vunpack.c.h.b16 %v3465
        %v3570 = vunpack.c.l.b16 %v3466
        %v3571 = vunpack.c.h.b16 %v3466
        %v3572 = vunpack.c.l.b16 %v3467
        %v3573 = vunpack.c.h.b16 %v3467
        %v3574 = vunpack.c.l.b16 %v3468
        %v3575 = vunpack.c.h.b16 %v3468
        %v3576 = vunpack.c.l.b16 %v3469
        %v3577 = vunpack.c.h.b16 %v3469
        %v3578 = vunpack.c.l.b16 %v3470
        %v3579 = vunpack.c.h.b16 %v3470
        %v3580 = vpack.c.b16 %v3518, %v3516
        %v3581 = vpack.c.b16 %v3519, %v3517
        %v3582 = vpack.c.b16 %v3522, %v3520
        %v3583 = vpack.c.b16 %v3523, %v3521
        %v3584 = vpack.c.b16 %v3526, %v3524
        %v3585 = vpack.c.b16 %v3527, %v3525
        %v3586 = vpack.c.b16 %v3530, %v3528
        %v3587 = vpack.c.b16 %v3531, %v3529
        %v3588 = vpack.c.b16 %v3534, %v3532
        %v3589 = vpack.c.b16 %v3535, %v3533
        %v3590 = vpack.c.b16 %v3538, %v3536
        %v3591 = vpack.c.b16 %v3539, %v3537
        %v3592 = vpack.c.b16 %v3542, %v3540
        %v3593 = vpack.c.b16 %v3543, %v3541
        %v3594 = vpack.c.b16 %v3546, %v3544
        %v3595 = vpack.c.b16 %v3547, %v3545
        %v3596 = vpack.c.b16 %v3550, %v3548
        %v3597 = vpack.c.b16 %v3551, %v3549
        %v3598 = vpack.c.b16 %v3554, %v3552
        %v3599 = vpack.c.b16 %v3555, %v3553
        %v3600 = vpack.c.b16 %v3558, %v3556
        %v3601 = vpack.c.b16 %v3559, %v3557
        %v3602 = vpack.c.b16 %v3562, %v3560
        %v3603 = vpack.c.b16 %v3563, %v3561
        %v3604 = vpack.c.b16 %v3566, %v3564
        %v3605 = vpack.c.b16 %v3567, %v3565
        %v3606 = vpack.c.b16 %v3570, %v3568
        %v3607 = vpack.c.b16 %v3571, %v3569
        %v3608 = vpack.c.b16 %v3574, %v3572
        %v3609 = vpack.c.b16 %v3575, %v3573
        %v3610 = vpack.c.b16 %v3578, %v3576
        %v3611 = vpack.c.b16 %v3579, %v3577
        %3644 = vmatprep.subr.bf16.mxu0 %v3581
        %3645 = vmatpush1.bf16.msra.mxu0 %v3580
        %3646 = vmatprep.subr.bf16.mxu0 %v3583
        %3647 = vmatpush1.bf16.msra.mxu0 %v3582
        %3648 = vmatprep.subr.bf16.mxu0 %v3585
        %3649 = vmatpush1.bf16.msra.mxu0 %v3584
        %3650 = vmatprep.subr.bf16.mxu0 %v3587
        %3651 = vmatpush1.bf16.msra.mxu0 %v3586
        %3652 = vmatprep.subr.bf16.mxu0 %v3589
        %3653 = vmatpush1.bf16.msra.mxu0 %v3588
        %3654 = vmatprep.subr.bf16.mxu0 %v3591
        %3655 = vmatpush1.bf16.msra.mxu0 %v3590
        %3656 = vmatprep.subr.bf16.mxu0 %v3593
        %3657 = vmatpush1.bf16.msra.mxu0 %v3592
        %3658 = vmatprep.subr.bf16.mxu0 %v3595
        %3659 = vmatpush1.bf16.msra.mxu0 %v3594
        %3660 = vmatprep.subr.bf16.mxu0 %v3597
        %3661 = vmatpush1.bf16.msra.mxu0 %v3596
        %3662 = vmatprep.subr.bf16.mxu0 %v3599
        %3663 = vmatpush1.bf16.msra.mxu0 %v3598
        %3664 = vmatprep.subr.bf16.mxu0 %v3601
        %3665 = vmatpush1.bf16.msra.mxu0 %v3600
        %3666 = vmatprep.subr.bf16.mxu0 %v3603
        %3667 = vmatpush1.bf16.msra.mxu0 %v3602
        %3668 = vmatprep.subr.bf16.mxu0 %v3605
        %3669 = vmatpush1.bf16.msra.mxu0 %v3604
        %3670 = vmatprep.subr.bf16.mxu0 %v3607
        %3671 = vmatpush1.bf16.msra.mxu0 %v3606
        %3672 = vmatprep.subr.bf16.mxu0 %v3609
        %3673 = vmatpush1.bf16.msra.mxu0 %v3608
        %3674 = vmatprep.subr.bf16.mxu0 %v3611
        %3675 = vmatpush1.bf16.msra.mxu0 %v3610
        %3676 = vmatprep.mubr.bf16.mxu0 %v3375
        %3677 = vmatmul.mubr.bf16.gmra.mrb[0].mxu0 %v3374
        %v3678 = vpop.f32.mrb[0].mxu0
        %v3679 = vadd.f32 %v3477, %v3678
        %v3680 = vpop.f32.mrb[0].mxu0
        %v3681 = vadd.f32 %v3481, %v3680
        %v3682 = vpop.f32.mrb[0].mxu0
        %v3683 = vadd.f32 %v3477, %v3682
        %v3684 = vpop.f32.mrb[0].mxu0
        %v3685 = vadd.f32 %v3481, %v3684
        %3686 = vmatprep.mubr.bf16.mxu0 %v3377
        %3687 = vmatmul.mubr.bf16.gmra.mrb[0].mxu0 %v3376
        %v3688 = vpop.f32.mrb[0].mxu0
        %v3689 = vadd.f32 %v3477, %v3688
        %v3690 = vpop.f32.mrb[0].mxu0
        %v3691 = vadd.f32 %v3481, %v3690
        %v3692 = vpop.f32.mrb[0].mxu0
        %v3693 = vadd.f32 %v3477, %v3692
        %v3694 = vpop.f32.mrb[0].mxu0
        %v3695 = vadd.f32 %v3481, %v3694
        %3696 = vmatprep.mubr.bf16.mxu0 %v3379
        %3697 = vmatmul.mubr.bf16.gmra.mrb[0].mxu0 %v3378
        %v3698 = vpop.f32.mrb[0].mxu0
        %v3699 = vadd.f32 %v3477, %v3698
        %v3700 = vpop.f32.mrb[0].mxu0
        %v3701 = vadd.f32 %v3481, %v3700
        %v3702 = vpop.f32.mrb[0].mxu0
        %v3703 = vadd.f32 %v3477, %v3702
        %v3704 = vpop.f32.mrb[0].mxu0
        %v3705 = vadd.f32 %v3481, %v3704
        %3706 = vmatprep.mubr.bf16.mxu0 %v3381
        %3707 = vmatmul.mubr.bf16.gmra.mrb[0].mxu0 %v3380
        %v3708 = vpop.f32.mrb[0].mxu0
        %v3709 = vadd.f32 %v3477, %v3708
        %v3710 = vpop.f32.mrb[0].mxu0
        %v3711 = vadd.f32 %v3481, %v3710
        %v3712 = vpop.f32.mrb[0].mxu0
        %v3713 = vadd.f32 %v3477, %v3712
        %v3714 = vpop.f32.mrb[0].mxu0
        %v3715 = vadd.f32 %v3481, %v3714
        %3716 = vmatprep.mubr.bf16.mxu0 %v3383
        %3717 = vmatmul.mubr.bf16.gmra.mrb[0].mxu0 %v3382
        %v3718 = vpop.f32.mrb[0].mxu0
        %v3719 = vadd.f32 %v3477, %v3718
        %v3720 = vpop.f32.mrb[0].mxu0
        %v3721 = vadd.f32 %v3481, %v3720
        %v3722 = vpop.f32.mrb[0].mxu0
        %v3723 = vadd.f32 %v3477, %v3722
        %v3724 = vpop.f32.mrb[0].mxu0
        %v3725 = vadd.f32 %v3481, %v3724
        %3726 = vmatprep.mubr.bf16.mxu0 %v3385
        %3727 = vmatmul.mubr.bf16.gmra.mrb[0].mxu0 %v3384
        %v3728 = vpop.f32.mrb[0].mxu0
        %v3729 = vadd.f32 %v3477, %v3728
        %v3730 = vpop.f32.mrb[0].mxu0
        %v3731 = vadd.f32 %v3481, %v3730
        %v3732 = vpop.f32.mrb[0].mxu0
        %v3733 = vadd.f32 %v3477, %v3732
        %v3734 = vpop.f32.mrb[0].mxu0
        %v3735 = vadd.f32 %v3481, %v3734
        %3736 = vmatprep.mubr.bf16.mxu0 %v3387
        %3737 = vmatmul.mubr.bf16.gmra.mrb[0].mxu0 %v3386
        %v3738 = vpop.f32.mrb[0].mxu0
        %v3739 = vadd.f32 %v3477, %v3738
        %v3740 = vpop.f32.mrb[0].mxu0
        %v3741 = vadd.f32 %v3481, %v3740
        %v3742 = vpop.f32.mrb[0].mxu0
        %v3743 = vadd.f32 %v3477, %v3742
        %v3744 = vpop.f32.mrb[0].mxu0
        %v3745 = vadd.f32 %v3481, %v3744
        %3746 = vmatprep.mubr.bf16.mxu0 %v3389
        %3747 = vmatmul.mubr.bf16.gmra.mrb[0].mxu0 %v3388
        %v3748 = vpop.f32.mrb[0].mxu0
        %v3749 = vadd.f32 %v3477, %v3748
        %v3750 = vpop.f32.mrb[0].mxu0
        %v3751 = vadd.f32 %v3481, %v3750
        %v3752 = vpop.f32.mrb[0].mxu0
        %v3753 = vadd.f32 %v3477, %v3752
        %v3754 = vpop.f32.mrb[0].mxu0
        %v3755 = vadd.f32 %v3481, %v3754
        %3756 = vmatprep.mubr.bf16.mxu0 %v3391
        %3757 = vmatmul.mubr.bf16.gmra.mrb[0].mxu0 %v3390
        %v3758 = vpop.f32.mrb[0].mxu0
        %v3759 = vadd.f32 %v3477, %v3758
        %v3760 = vpop.f32.mrb[0].mxu0
        %v3761 = vadd.f32 %v3481, %v3760
        %v3762 = vpop.f32.mrb[0].mxu0
        %v3763 = vadd.f32 %v3477, %v3762
        %v3764 = vpop.f32.mrb[0].mxu0
        %v3765 = vadd.f32 %v3481, %v3764
        %3766 = vmatprep.mubr.bf16.mxu0 %v3393
        %3767 = vmatmul.mubr.bf16.gmra.mrb[0].mxu0 %v3392
        %v3768 = vpop.f32.mrb[0].mxu0
        %v3769 = vadd.f32 %v3477, %v3768
        %v3770 = vpop.f32.mrb[0].mxu0
        %v3771 = vadd.f32 %v3481, %v3770
        %v3772 = vpop.f32.mrb[0].mxu0
        %v3773 = vadd.f32 %v3477, %v3772
        %v3774 = vpop.f32.mrb[0].mxu0
        %v3775 = vadd.f32 %v3481, %v3774
        %3776 = vmatprep.mubr.bf16.mxu0 %v3395
        %3777 = vmatmul.mubr.bf16.gmra.mrb[0].mxu0 %v3394
        %v3778 = vpop.f32.mrb[0].mxu0
        %v3779 = vadd.f32 %v3477, %v3778
        %v3780 = vpop.f32.mrb[0].mxu0
        %v3781 = vadd.f32 %v3481, %v3780
        %v3782 = vpop.f32.mrb[0].mxu0
        %v3783 = vadd.f32 %v3477, %v3782
        %v3784 = vpop.f32.mrb[0].mxu0
        %v3785 = vadd.f32 %v3481, %v3784
        %3786 = vmatprep.mubr.bf16.mxu0 %v3397
        %3787 = vmatmul.mubr.bf16.gmra.mrb[0].mxu0 %v3396
        %v3788 = vpop.f32.mrb[0].mxu0
        %v3789 = vadd.f32 %v3477, %v3788
        %v3790 = vpop.f32.mrb[0].mxu0
        %v3791 = vadd.f32 %v3481, %v3790
        %v3792 = vpop.f32.mrb[0].mxu0
        %v3793 = vadd.f32 %v3477, %v3792
        %v3794 = vpop.f32.mrb[0].mxu0
        %v3795 = vadd.f32 %v3481, %v3794
        %3796 = vmatprep.mubr.bf16.mxu0 %v3399
        %3797 = vmatmul.mubr.bf16.gmra.mrb[0].mxu0 %v3398
        %v3798 = vpop.f32.mrb[0].mxu0
        %v3799 = vadd.f32 %v3477, %v3798
        %v3800 = vpop.f32.mrb[0].mxu0
        %v3801 = vadd.f32 %v3481, %v3800
        %v3802 = vpop.f32.mrb[0].mxu0
        %v3803 = vadd.f32 %v3477, %v3802
        %v3804 = vpop.f32.mrb[0].mxu0
        %v3805 = vadd.f32 %v3481, %v3804
        %3806 = vmatprep.mubr.bf16.mxu0 %v3401
        %3807 = vmatmul.mubr.bf16.gmra.mrb[0].mxu0 %v3400
        %v3808 = vpop.f32.mrb[0].mxu0
        %v3809 = vadd.f32 %v3477, %v3808
        %v3810 = vpop.f32.mrb[0].mxu0
        %v3811 = vadd.f32 %v3481, %v3810
        %v3812 = vpop.f32.mrb[0].mxu0
        %v3813 = vadd.f32 %v3477, %v3812
        %v3814 = vpop.f32.mrb[0].mxu0
        %v3815 = vadd.f32 %v3481, %v3814
        %3816 = vmatprep.mubr.bf16.mxu0 %v3403
        %3817 = vmatmul.mubr.bf16.gmra.mrb[0].mxu0 %v3402
        %v3818 = vpop.f32.mrb[0].mxu0
        %v3819 = vadd.f32 %v3477, %v3818
        %v3820 = vpop.f32.mrb[0].mxu0
        %v3821 = vadd.f32 %v3481, %v3820
        %v3822 = vpop.f32.mrb[0].mxu0
        %v3823 = vadd.f32 %v3477, %v3822
        %v3824 = vpop.f32.mrb[0].mxu0
        %v3825 = vadd.f32 %v3481, %v3824
        %3826 = vmatprep.mubr.bf16.mxu0 %v3405
        %3827 = vmatmul.mubr.bf16.gmra.mrb[0].mxu0 %v3404
        %v3828 = vpop.f32.mrb[0].mxu0
        %v3829 = vadd.f32 %v3477, %v3828
        %v3830 = vpop.f32.mrb[0].mxu0
        %v3831 = vadd.f32 %v3481, %v3830
        %v3832 = vpop.f32.mrb[0].mxu0
        %v3833 = vadd.f32 %v3477, %v3832
        %v3834 = vpop.f32.mrb[0].mxu0
        %v3835 = vadd.f32 %v3481, %v3834
        %3836 = vmatprep.mubr.bf16.mxu0 %v3407
        %3837 = vmatmul.mubr.bf16.gmra.mrb[0].mxu0 %v3406
        %v3838 = vpop.f32.mrb[0].mxu0
        %v3839 = vadd.f32 %v3477, %v3838
        %v3840 = vpop.f32.mrb[0].mxu0
        %v3841 = vadd.f32 %v3481, %v3840
        %v3842 = vpop.f32.mrb[0].mxu0
        %v3843 = vadd.f32 %v3477, %v3842
        %v3844 = vpop.f32.mrb[0].mxu0
        %v3845 = vadd.f32 %v3481, %v3844
        %3846 = vmatprep.mubr.bf16.mxu0 %v3409
        %3847 = vmatmul.mubr.bf16.gmra.mrb[0].mxu0 %v3408
        %v3848 = vpop.f32.mrb[0].mxu0
        %v3849 = vadd.f32 %v3477, %v3848
        %v3850 = vpop.f32.mrb[0].mxu0
        %v3851 = vadd.f32 %v3481, %v3850
        %v3852 = vpop.f32.mrb[0].mxu0
        %v3853 = vadd.f32 %v3477, %v3852
        %v3854 = vpop.f32.mrb[0].mxu0
        %v3855 = vadd.f32 %v3481, %v3854
        %3856 = vmatprep.mubr.bf16.mxu0 %v3411
        %3857 = vmatmul.mubr.bf16.gmra.mrb[0].mxu0 %v3410
        %v3858 = vpop.f32.mrb[0].mxu0
        %v3859 = vadd.f32 %v3477, %v3858
        %v3860 = vpop.f32.mrb[0].mxu0
        %v3861 = vadd.f32 %v3481, %v3860
        %v3862 = vpop.f32.mrb[0].mxu0
        %v3863 = vadd.f32 %v3477, %v3862
        %v3864 = vpop.f32.mrb[0].mxu0
        %v3865 = vadd.f32 %v3481, %v3864
        %3866 = vmatprep.mubr.bf16.mxu0 %v3413
        %3867 = vmatmul.mubr.bf16.gmra.mrb[0].mxu0 %v3412
        %v3868 = vpop.f32.mrb[0].mxu0
        %v3869 = vadd.f32 %v3477, %v3868
        %v3870 = vpop.f32.mrb[0].mxu0
        %v3871 = vadd.f32 %v3481, %v3870
        %v3872 = vpop.f32.mrb[0].mxu0
        %v3873 = vadd.f32 %v3477, %v3872
        %v3874 = vpop.f32.mrb[0].mxu0
        %v3875 = vadd.f32 %v3481, %v3874
        %3876 = vmatprep.mubr.bf16.mxu0 %v3415
        %3877 = vmatmul.mubr.bf16.gmra.mrb[0].mxu0 %v3414
        %v3878 = vpop.f32.mrb[0].mxu0
        %v3879 = vadd.f32 %v3477, %v3878
        %v3880 = vpop.f32.mrb[0].mxu0
        %v3881 = vadd.f32 %v3481, %v3880
        %v3882 = vpop.f32.mrb[0].mxu0
        %v3883 = vadd.f32 %v3477, %v3882
        %v3884 = vpop.f32.mrb[0].mxu0
        %v3885 = vadd.f32 %v3481, %v3884
        %3886 = vmatprep.mubr.bf16.mxu0 %v3417
        %3887 = vmatmul.mubr.bf16.gmra.mrb[0].mxu0 %v3416
        %v3888 = vpop.f32.mrb[0].mxu0
        %v3889 = vadd.f32 %v3477, %v3888
        %v3890 = vpop.f32.mrb[0].mxu0
        %v3891 = vadd.f32 %v3481, %v3890
        %v3892 = vpop.f32.mrb[0].mxu0
        %v3893 = vadd.f32 %v3477, %v3892
        %v3894 = vpop.f32.mrb[0].mxu0
        %v3895 = vadd.f32 %v3481, %v3894
        %3896 = vmatprep.mubr.bf16.mxu0 %v3419
        %3897 = vmatmul.mubr.bf16.gmra.mrb[0].mxu0 %v3418
        %v3898 = vpop.f32.mrb[0].mxu0
        %v3899 = vadd.f32 %v3477, %v3898
        %v3900 = vpop.f32.mrb[0].mxu0
        %v3901 = vadd.f32 %v3481, %v3900
        %v3902 = vpop.f32.mrb[0].mxu0
        %v3903 = vadd.f32 %v3477, %v3902
        %v3904 = vpop.f32.mrb[0].mxu0
        %v3905 = vadd.f32 %v3481, %v3904
        %3906 = vmatprep.mubr.bf16.mxu0 %v3421
        %3907 = vmatmul.mubr.bf16.gmra.mrb[0].mxu0 %v3420
        %v3908 = vpop.f32.mrb[0].mxu0
        %v3909 = vadd.f32 %v3477, %v3908
        %v3910 = vpop.f32.mrb[0].mxu0
        %v3911 = vadd.f32 %v3481, %v3910
        %v3912 = vpop.f32.mrb[0].mxu0
        %v3913 = vadd.f32 %v3477, %v3912
        %v3914 = vpop.f32.mrb[0].mxu0
        %v3915 = vadd.f32 %v3481, %v3914
        %3916 = vmatprep.mubr.bf16.mxu0 %v3423
        %3917 = vmatmul.mubr.bf16.gmra.mrb[0].mxu0 %v3422
        %v3918 = vpop.f32.mrb[0].mxu0
        %v3919 = vadd.f32 %v3477, %v3918
        %v3920 = vpop.f32.mrb[0].mxu0
        %v3921 = vadd.f32 %v3481, %v3920
        %v3922 = vpop.f32.mrb[0].mxu0
        %v3923 = vadd.f32 %v3477, %v3922
        %v3924 = vpop.f32.mrb[0].mxu0
        %v3925 = vadd.f32 %v3481, %v3924
        %3926 = vmatprep.mubr.bf16.mxu0 %v3425
        %3927 = vmatmul.mubr.bf16.gmra.mrb[0].mxu0 %v3424
        %v3928 = vpop.f32.mrb[0].mxu0
        %v3929 = vadd.f32 %v3477, %v3928
        %v3930 = vpop.f32.mrb[0].mxu0
        %v3931 = vadd.f32 %v3481, %v3930
        %v3932 = vpop.f32.mrb[0].mxu0
        %v3933 = vadd.f32 %v3477, %v3932
        %v3934 = vpop.f32.mrb[0].mxu0
        %v3935 = vadd.f32 %v3481, %v3934
        %3936 = vmatprep.mubr.bf16.mxu0 %v3427
        %3937 = vmatmul.mubr.bf16.gmra.mrb[0].mxu0 %v3426
        %v3938 = vpop.f32.mrb[0].mxu0
        %v3939 = vadd.f32 %v3477, %v3938
        %v3940 = vpop.f32.mrb[0].mxu0
        %v3941 = vadd.f32 %v3481, %v3940
        %v3942 = vpop.f32.mrb[0].mxu0
        %v3943 = vadd.f32 %v3477, %v3942
        %v3944 = vpop.f32.mrb[0].mxu0
        %v3945 = vadd.f32 %v3481, %v3944
        %3946 = vmatprep.mubr.bf16.mxu0 %v3429
        %3947 = vmatmul.mubr.bf16.gmra.mrb[0].mxu0 %v3428
        %v3948 = vpop.f32.mrb[0].mxu0
        %v3949 = vadd.f32 %v3477, %v3948
        %v3950 = vpop.f32.mrb[0].mxu0
        %v3951 = vadd.f32 %v3481, %v3950
        %v3952 = vpop.f32.mrb[0].mxu0
        %v3953 = vadd.f32 %v3477, %v3952
        %v3954 = vpop.f32.mrb[0].mxu0
        %v3955 = vadd.f32 %v3481, %v3954
        %3956 = vmatprep.mubr.bf16.mxu0 %v3431
        %3957 = vmatmul.mubr.bf16.gmra.mrb[0].mxu0 %v3430
        %v3958 = vpop.f32.mrb[0].mxu0
        %v3959 = vadd.f32 %v3477, %v3958
        %v3960 = vpop.f32.mrb[0].mxu0
        %v3961 = vadd.f32 %v3481, %v3960
        %v3962 = vpop.f32.mrb[0].mxu0
        %v3963 = vadd.f32 %v3477, %v3962
        %v3964 = vpop.f32.mrb[0].mxu0
        %v3965 = vadd.f32 %v3481, %v3964
        %3966 = vmatprep.mubr.bf16.mxu0 %v3433
        %3967 = vmatmul.mubr.bf16.gmra.mrb[0].mxu0 %v3432
        %v3968 = vpop.f32.mrb[0].mxu0
        %v3969 = vadd.f32 %v3477, %v3968
        %v3970 = vpop.f32.mrb[0].mxu0
        %v3971 = vadd.f32 %v3481, %v3970
        %v3972 = vpop.f32.mrb[0].mxu0
        %v3973 = vadd.f32 %v3477, %v3972
        %v3974 = vpop.f32.mrb[0].mxu0
        %v3975 = vadd.f32 %v3481, %v3974
        %3976 = vmatprep.mubr.bf16.mxu0 %v3435
        %3977 = vmatmul.mubr.bf16.gmra.mrb[0].mxu0 %v3434
        %v3978 = vpop.f32.mrb[0].mxu0
        %v3979 = vadd.f32 %v3477, %v3978
        %v3980 = vpop.f32.mrb[0].mxu0
        %v3981 = vadd.f32 %v3481, %v3980
        %v3982 = vpop.f32.mrb[0].mxu0
        %v3983 = vadd.f32 %v3477, %v3982
        %v3984 = vpop.f32.mrb[0].mxu0
        %v3985 = vadd.f32 %v3481, %v3984
        %3986 = vmatprep.mubr.bf16.mxu0 %v3437
        %3987 = vmatmul.mubr.bf16.gmra.mrb[0].mxu0 %v3436
        %v3988 = vpop.f32.mrb[0].mxu0
        %v3989 = vadd.f32 %v3477, %v3988
        %v3990 = vpop.f32.mrb[0].mxu0
        %v3991 = vadd.f32 %v3481, %v3990
        %v3992 = vpop.f32.mrb[0].mxu0
        %v3993 = vadd.f32 %v3477, %v3992
        %v3994 = vpop.f32.mrb[0].mxu0
        %v3995 = vadd.f32 %v3481, %v3994
        %3996 = vdwg.mxu0
        %v3997 = vmax.f32 %v3679, 0.0
        %v3998 = vmax.f32 %v3681, 0.0
        %v3999 = vmax.f32 %v3683, 0.0
        %v4000 = vmax.f32 %v3685, 0.0
        %v4001 = vmax.f32 %v3689, 0.0
        %v4002 = vmax.f32 %v3691, 0.0
        %v4003 = vmax.f32 %v3693, 0.0
        %v4004 = vmax.f32 %v3695, 0.0
        %v4005 = vmax.f32 %v3699, 0.0
        %v4006 = vmax.f32 %v3701, 0.0
        %v4007 = vmax.f32 %v3703, 0.0
        %v4008 = vmax.f32 %v3705, 0.0
        %v4009 = vmax.f32 %v3709, 0.0
        %v4010 = vmax.f32 %v3711, 0.0
        %v4011 = vmax.f32 %v3713, 0.0
        %v4012 = vmax.f32 %v3715, 0.0
        %v4013 = vmax.f32 %v3719, 0.0
        %v4014 = vmax.f32 %v3721, 0.0
        %v4015 = vmax.f32 %v3723, 0.0
        %v4016 = vmax.f32 %v3725, 0.0
        %v4017 = vmax.f32 %v3729, 0.0
        %v4018 = vmax.f32 %v3731, 0.0
        %v4019 = vmax.f32 %v3733, 0.0
        %v4020 = vmax.f32 %v3735, 0.0
        %v4021 = vmax.f32 %v3739, 0.0
        %v4022 = vmax.f32 %v3741, 0.0
        %v4023 = vmax.f32 %v3743, 0.0
        %v4024 = vmax.f32 %v3745, 0.0
        %v4025 = vmax.f32 %v3749, 0.0
        %v4026 = vmax.f32 %v3751, 0.0
        %v4027 = vmax.f32 %v3753, 0.0
        %v4028 = vmax.f32 %v3755, 0.0
        %v4029 = vmax.f32 %v3759, 0.0
        %v4030 = vmax.f32 %v3761, 0.0
        %v4031 = vmax.f32 %v3763, 0.0
        %v4032 = vmax.f32 %v3765, 0.0
        %v4033 = vmax.f32 %v3769, 0.0
        %v4034 = vmax.f32 %v3771, 0.0
        %v4035 = vmax.f32 %v3773, 0.0
        %v4036 = vmax.f32 %v3775, 0.0
        %v4037 = vmax.f32 %v3779, 0.0
        %v4038 = vmax.f32 %v3781, 0.0
        %v4039 = vmax.f32 %v3783, 0.0
        %v4040 = vmax.f32 %v3785, 0.0
        %v4041 = vmax.f32 %v3789, 0.0
        %v4042 = vmax.f32 %v3791, 0.0
        %v4043 = vmax.f32 %v3793, 0.0
        %v4044 = vmax.f32 %v3795, 0.0
        %v4045 = vmax.f32 %v3799, 0.0
        %v4046 = vmax.f32 %v3801, 0.0
        %v4047 = vmax.f32 %v3803, 0.0
        %v4048 = vmax.f32 %v3805, 0.0
        %v4049 = vmax.f32 %v3809, 0.0
        %v4050 = vmax.f32 %v3811, 0.0
        %v4051 = vmax.f32 %v3813, 0.0
        %v4052 = vmax.f32 %v3815, 0.0
        %v4053 = vmax.f32 %v3819, 0.0
        %v4054 = vmax.f32 %v3821, 0.0
        %v4055 = vmax.f32 %v3823, 0.0
        %v4056 = vmax.f32 %v3825, 0.0
        %v4057 = vmax.f32 %v3829, 0.0
        %v4058 = vmax.f32 %v3831, 0.0
        %v4059 = vmax.f32 %v3833, 0.0
        %v4060 = vmax.f32 %v3835, 0.0
        %v4061 = vmax.f32 %v3839, 0.0
        %v4062 = vmax.f32 %v3841, 0.0
        %v4063 = vmax.f32 %v3843, 0.0
        %v4064 = vmax.f32 %v3845, 0.0
        %v4065 = vmax.f32 %v3849, 0.0
        %v4066 = vmax.f32 %v3851, 0.0
        %v4067 = vmax.f32 %v3853, 0.0
        %v4068 = vmax.f32 %v3855, 0.0
        %v4069 = vmax.f32 %v3859, 0.0
        %v4070 = vmax.f32 %v3861, 0.0
        %v4071 = vmax.f32 %v3863, 0.0
        %v4072 = vmax.f32 %v3865, 0.0
        %v4073 = vmax.f32 %v3869, 0.0
        %v4074 = vmax.f32 %v3871, 0.0
        %v4075 = vmax.f32 %v3873, 0.0
        %v4076 = vmax.f32 %v3875, 0.0
        %v4077 = vmax.f32 %v3879, 0.0
        %v4078 = vmax.f32 %v3881, 0.0
        %v4079 = vmax.f32 %v3883, 0.0
        %v4080 = vmax.f32 %v3885, 0.0
        %v4081 = vmax.f32 %v3889, 0.0
        %v4082 = vmax.f32 %v3891, 0.0
        %v4083 = vmax.f32 %v3893, 0.0
        %v4084 = vmax.f32 %v3895, 0.0
        %v4085 = vmax.f32 %v3899, 0.0
        %v4086 = vmax.f32 %v3901, 0.0
        %v4087 = vmax.f32 %v3903, 0.0
        %v4088 = vmax.f32 %v3905, 0.0
        %v4089 = vmax.f32 %v3909, 0.0
        %v4090 = vmax.f32 %v3911, 0.0
        %v4091 = vmax.f32 %v3913, 0.0
        %v4092 = vmax.f32 %v3915, 0.0
        %v4093 = vmax.f32 %v3919, 0.0
        %v4094 = vmax.f32 %v3921, 0.0
        %v4095 = vmax.f32 %v3923, 0.0
        %v4096 = vmax.f32 %v3925, 0.0
        %v4097 = vmax.f32 %v3929, 0.0
        %v4098 = vmax.f32 %v3931, 0.0
        %v4099 = vmax.f32 %v3933, 0.0
        %v4100 = vmax.f32 %v3935, 0.0
        %v4101 = vmax.f32 %v3939, 0.0
        %v4102 = vmax.f32 %v3941, 0.0
        %v4103 = vmax.f32 %v3943, 0.0
        %v4104 = vmax.f32 %v3945, 0.0
        %v4105 = vmax.f32 %v3949, 0.0
        %v4106 = vmax.f32 %v3951, 0.0
        %v4107 = vmax.f32 %v3953, 0.0
        %v4108 = vmax.f32 %v3955, 0.0
        %v4109 = vmax.f32 %v3959, 0.0
        %v4110 = vmax.f32 %v3961, 0.0
        %v4111 = vmax.f32 %v3963, 0.0
        %v4112 = vmax.f32 %v3965, 0.0
        %v4113 = vmax.f32 %v3969, 0.0
        %v4114 = vmax.f32 %v3971, 0.0
        %v4115 = vmax.f32 %v3973, 0.0
        %v4116 = vmax.f32 %v3975, 0.0
        %v4117 = vmax.f32 %v3979, 0.0
        %v4118 = vmax.f32 %v3981, 0.0
        %v4119 = vmax.f32 %v3983, 0.0
        %v4120 = vmax.f32 %v3985, 0.0
        %v4121 = vmax.f32 %v3989, 0.0
        %v4122 = vmax.f32 %v3991, 0.0
        %v4123 = vmax.f32 %v3993, 0.0
        %v4124 = vmax.f32 %v3995, 0.0
        %v4125 = vpack.c.bf16 %v3999, %v3997
        %v4126 = vpack.c.bf16 %v4000, %v3998
        %v4127 = vpack.c.bf16 %v4003, %v4001
        %v4128 = vpack.c.bf16 %v4004, %v4002
        %v4129 = vpack.c.bf16 %v4007, %v4005
        %v4130 = vpack.c.bf16 %v4008, %v4006
        %v4131 = vpack.c.bf16 %v4011, %v4009
        %v4132 = vpack.c.bf16 %v4012, %v4010
        %v4133 = vpack.c.bf16 %v4015, %v4013
        %v4134 = vpack.c.bf16 %v4016, %v4014
        %v4135 = vpack.c.bf16 %v4019, %v4017
        %v4136 = vpack.c.bf16 %v4020, %v4018
        %v4137 = vpack.c.bf16 %v4023, %v4021
        %v4138 = vpack.c.bf16 %v4024, %v4022
        %v4139 = vpack.c.bf16 %v4027, %v4025
        %v4140 = vpack.c.bf16 %v4028, %v4026
        %v4141 = vpack.c.bf16 %v4031, %v4029
        %v4142 = vpack.c.bf16 %v4032, %v4030
        %v4143 = vpack.c.bf16 %v4035, %v4033
        %v4144 = vpack.c.bf16 %v4036, %v4034
        %v4145 = vpack.c.bf16 %v4039, %v4037
        %v4146 = vpack.c.bf16 %v4040, %v4038
        %v4147 = vpack.c.bf16 %v4043, %v4041
        %v4148 = vpack.c.bf16 %v4044, %v4042
        %v4149 = vpack.c.bf16 %v4047, %v4045
        %v4150 = vpack.c.bf16 %v4048, %v4046
        %v4151 = vpack.c.bf16 %v4051, %v4049
        %v4152 = vpack.c.bf16 %v4052, %v4050
        %v4153 = vpack.c.bf16 %v4055, %v4053
        %v4154 = vpack.c.bf16 %v4056, %v4054
        %v4155 = vpack.c.bf16 %v4059, %v4057
        %v4156 = vpack.c.bf16 %v4060, %v4058
        %v4157 = vpack.c.bf16 %v4063, %v4061
        %v4158 = vpack.c.bf16 %v4064, %v4062
        %v4159 = vpack.c.bf16 %v4067, %v4065
        %v4160 = vpack.c.bf16 %v4068, %v4066
        %v4161 = vpack.c.bf16 %v4071, %v4069
        %v4162 = vpack.c.bf16 %v4072, %v4070
        %v4163 = vpack.c.bf16 %v4075, %v4073
        %v4164 = vpack.c.bf16 %v4076, %v4074
        %v4165 = vpack.c.bf16 %v4079, %v4077
        %v4166 = vpack.c.bf16 %v4080, %v4078
        %v4167 = vpack.c.bf16 %v4083, %v4081
        %v4168 = vpack.c.bf16 %v4084, %v4082
        %v4169 = vpack.c.bf16 %v4087, %v4085
        %v4170 = vpack.c.bf16 %v4088, %v4086
        %v4171 = vpack.c.bf16 %v4091, %v4089
        %v4172 = vpack.c.bf16 %v4092, %v4090
        %v4173 = vpack.c.bf16 %v4095, %v4093
        %v4174 = vpack.c.bf16 %v4096, %v4094
        %v4175 = vpack.c.bf16 %v4099, %v4097
        %v4176 = vpack.c.bf16 %v4100, %v4098
        %v4177 = vpack.c.bf16 %v4103, %v4101
        %v4178 = vpack.c.bf16 %v4104, %v4102
        %v4179 = vpack.c.bf16 %v4107, %v4105
        %v4180 = vpack.c.bf16 %v4108, %v4106
        %v4181 = vpack.c.bf16 %v4111, %v4109
        %v4182 = vpack.c.bf16 %v4112, %v4110
        %v4183 = vpack.c.bf16 %v4115, %v4113
        %v4184 = vpack.c.bf16 %v4116, %v4114
        %v4185 = vpack.c.bf16 %v4119, %v4117
        %v4186 = vpack.c.bf16 %v4120, %v4118
        %v4187 = vpack.c.bf16 %v4123, %v4121
        %v4188 = vpack.c.bf16 %v4124, %v4122
        %s4189 = scalar_lea.vmem [#allocation2], 1024
        %v4190 = vld [vmem:[%s4189] sm:$0xff]
        %v4191 = vld [vmem:[%s4189 + $0x8] sm:$0xff]
        %v4192 = vld [vmem:[%s4189 + $0x10] sm:$0xff]
        %v4193 = vld [vmem:[%s4189 + $0x18] sm:$0xff]
        %v4194 = vld [vmem:[%s4189 + $0x20] sm:$0xff]
        %v4195 = vld [vmem:[%s4189 + $0x28] sm:$0xff]
        %v4196 = vld [vmem:[%s4189 + $0x30] sm:$0xff]
        %v4197 = vld [vmem:[%s4189 + $0x38] sm:$0xff]
        %v4198 = vld [vmem:[%s4189 + $0x40] sm:$0xff]
        %v4199 = vld [vmem:[%s4189 + $0x48] sm:$0xff]
        %v4200 = vld [vmem:[%s4189 + $0x50] sm:$0xff]
        %v4201 = vld [vmem:[%s4189 + $0x58] sm:$0xff]
        %v4202 = vld [vmem:[%s4189 + $0x60] sm:$0xff]
        %v4203 = vld [vmem:[%s4189 + $0x68] sm:$0xff]
        %v4204 = vld [vmem:[%s4189 + $0x70] sm:$0xff]
        %v4205 = vld [vmem:[%s4189 + $0x78] sm:$0xff]
        %v4206 = vld [vmem:[%s4189 + $0x80] sm:$0xff]
        %v4207 = vld [vmem:[%s4189 + $0x88] sm:$0xff]
        %v4208 = vld [vmem:[%s4189 + $0x90] sm:$0xff]
        %v4209 = vld [vmem:[%s4189 + $0x98] sm:$0xff]
        %v4210 = vld [vmem:[%s4189 + $0xa0] sm:$0xff]
        %v4211 = vld [vmem:[%s4189 + $0xa8] sm:$0xff]
        %v4212 = vld [vmem:[%s4189 + $0xb0] sm:$0xff]
        %v4213 = vld [vmem:[%s4189 + $0xb8] sm:$0xff]
        %v4214 = vld [vmem:[%s4189 + $0xc0] sm:$0xff]
        %v4215 = vld [vmem:[%s4189 + $0xc8] sm:$0xff]
        %v4216 = vld [vmem:[%s4189 + $0xd0] sm:$0xff]
        %v4217 = vld [vmem:[%s4189 + $0xd8] sm:$0xff]
        %v4218 = vld [vmem:[%s4189 + $0xe0] sm:$0xff]
        %v4219 = vld [vmem:[%s4189 + $0xe8] sm:$0xff]
        %v4220 = vld [vmem:[%s4189 + $0xf0] sm:$0xff]
        %v4221 = vld [vmem:[%s4189 + $0xf8] sm:$0xff]
        %s4222 = scalar_lea.vmem %s4, 5
        %v4223 = vld [vmem:[%s4222] ss:$8 sm:$0x3]
        %v4225 = vlaneseq
        %v4226 = vshrl.u32 %v4225, 7
        %v4227 = vsub.s32 0, %v4226
        %v4228 = vrot.slane %v4223, %v4227
        %v4229 = vlaneseq
        %v4230 = vshrl.u32 %v4229, 7
        %v4231 = vsub.s32 1, %v4230
        %v4232 = vrot.slane %v4223, %v4231
        %v4267 = vunpack.c.l.b16 %v4190
        %v4268 = vunpack.c.h.b16 %v4190
        %v4269 = vunpack.c.l.b16 %v4191
        %v4270 = vunpack.c.h.b16 %v4191
        %v4271 = vunpack.c.l.b16 %v4192
        %v4272 = vunpack.c.h.b16 %v4192
        %v4273 = vunpack.c.l.b16 %v4193
        %v4274 = vunpack.c.h.b16 %v4193
        %v4275 = vunpack.c.l.b16 %v4194
        %v4276 = vunpack.c.h.b16 %v4194
        %v4277 = vunpack.c.l.b16 %v4195
        %v4278 = vunpack.c.h.b16 %v4195
        %v4279 = vunpack.c.l.b16 %v4196
        %v4280 = vunpack.c.h.b16 %v4196
        %v4281 = vunpack.c.l.b16 %v4197
        %v4282 = vunpack.c.h.b16 %v4197
        %v4283 = vunpack.c.l.b16 %v4198
        %v4284 = vunpack.c.h.b16 %v4198
        %v4285 = vunpack.c.l.b16 %v4199
        %v4286 = vunpack.c.h.b16 %v4199
        %v4287 = vunpack.c.l.b16 %v4200
        %v4288 = vunpack.c.h.b16 %v4200
        %v4289 = vunpack.c.l.b16 %v4201
        %v4290 = vunpack.c.h.b16 %v4201
        %v4291 = vunpack.c.l.b16 %v4202
        %v4292 = vunpack.c.h.b16 %v4202
        %v4293 = vunpack.c.l.b16 %v4203
        %v4294 = vunpack.c.h.b16 %v4203
        %v4295 = vunpack.c.l.b16 %v4204
        %v4296 = vunpack.c.h.b16 %v4204
        %v4297 = vunpack.c.l.b16 %v4205
        %v4298 = vunpack.c.h.b16 %v4205
        %v4299 = vunpack.c.l.b16 %v4206
        %v4300 = vunpack.c.h.b16 %v4206
        %v4301 = vunpack.c.l.b16 %v4207
        %v4302 = vunpack.c.h.b16 %v4207
        %v4303 = vunpack.c.l.b16 %v4208
        %v4304 = vunpack.c.h.b16 %v4208
        %v4305 = vunpack.c.l.b16 %v4209
        %v4306 = vunpack.c.h.b16 %v4209
        %v4307 = vunpack.c.l.b16 %v4210
        %v4308 = vunpack.c.h.b16 %v4210
        %v4309 = vunpack.c.l.b16 %v4211
        %v4310 = vunpack.c.h.b16 %v4211
        %v4311 = vunpack.c.l.b16 %v4212
        %v4312 = vunpack.c.h.b16 %v4212
        %v4313 = vunpack.c.l.b16 %v4213
        %v4314 = vunpack.c.h.b16 %v4213
        %v4315 = vunpack.c.l.b16 %v4214
        %v4316 = vunpack.c.h.b16 %v4214
        %v4317 = vunpack.c.l.b16 %v4215
        %v4318 = vunpack.c.h.b16 %v4215
        %v4319 = vunpack.c.l.b16 %v4216
        %v4320 = vunpack.c.h.b16 %v4216
        %v4321 = vunpack.c.l.b16 %v4217
        %v4322 = vunpack.c.h.b16 %v4217
        %v4323 = vunpack.c.l.b16 %v4218
        %v4324 = vunpack.c.h.b16 %v4218
        %v4325 = vunpack.c.l.b16 %v4219
        %v4326 = vunpack.c.h.b16 %v4219
        %v4327 = vunpack.c.l.b16 %v4220
        %v4328 = vunpack.c.h.b16 %v4220
        %v4329 = vunpack.c.l.b16 %v4221
        %v4330 = vunpack.c.h.b16 %v4221
        %v4331 = vpack.c.b16 %v4269, %v4267
        %v4332 = vpack.c.b16 %v4270, %v4268
        %v4333 = vpack.c.b16 %v4273, %v4271
        %v4334 = vpack.c.b16 %v4274, %v4272
        %v4335 = vpack.c.b16 %v4277, %v4275
        %v4336 = vpack.c.b16 %v4278, %v4276
        %v4337 = vpack.c.b16 %v4281, %v4279
        %v4338 = vpack.c.b16 %v4282, %v4280
        %v4339 = vpack.c.b16 %v4285, %v4283
        %v4340 = vpack.c.b16 %v4286, %v4284
        %v4341 = vpack.c.b16 %v4289, %v4287
        %v4342 = vpack.c.b16 %v4290, %v4288
        %v4343 = vpack.c.b16 %v4293, %v4291
        %v4344 = vpack.c.b16 %v4294, %v4292
        %v4345 = vpack.c.b16 %v4297, %v4295
        %v4346 = vpack.c.b16 %v4298, %v4296
        %v4347 = vpack.c.b16 %v4301, %v4299
        %v4348 = vpack.c.b16 %v4302, %v4300
        %v4349 = vpack.c.b16 %v4305, %v4303
        %v4350 = vpack.c.b16 %v4306, %v4304
        %v4351 = vpack.c.b16 %v4309, %v4307
        %v4352 = vpack.c.b16 %v4310, %v4308
        %v4353 = vpack.c.b16 %v4313, %v4311
        %v4354 = vpack.c.b16 %v4314, %v4312
        %v4355 = vpack.c.b16 %v4317, %v4315
        %v4356 = vpack.c.b16 %v4318, %v4316
        %v4357 = vpack.c.b16 %v4321, %v4319
        %v4358 = vpack.c.b16 %v4322, %v4320
        %v4359 = vpack.c.b16 %v4325, %v4323
        %v4360 = vpack.c.b16 %v4326, %v4324
        %v4361 = vpack.c.b16 %v4329, %v4327
        %v4362 = vpack.c.b16 %v4330, %v4328
        %4395 = vmatprep.subr.bf16.mxu0 %v4332
        %4396 = vmatpush1.bf16.msra.mxu0 %v4331
        %4397 = vmatprep.subr.bf16.mxu0 %v4334
        %4398 = vmatpush1.bf16.msra.mxu0 %v4333
        %4399 = vmatprep.subr.bf16.mxu0 %v4336
        %4400 = vmatpush1.bf16.msra.mxu0 %v4335
        %4401 = vmatprep.subr.bf16.mxu0 %v4338
        %4402 = vmatpush1.bf16.msra.mxu0 %v4337
        %4403 = vmatprep.subr.bf16.mxu0 %v4340
        %4404 = vmatpush1.bf16.msra.mxu0 %v4339
        %4405 = vmatprep.subr.bf16.mxu0 %v4342
        %4406 = vmatpush1.bf16.msra.mxu0 %v4341
        %4407 = vmatprep.subr.bf16.mxu0 %v4344
        %4408 = vmatpush1.bf16.msra.mxu0 %v4343
        %4409 = vmatprep.subr.bf16.mxu0 %v4346
        %4410 = vmatpush1.bf16.msra.mxu0 %v4345
        %4411 = vmatprep.subr.bf16.mxu0 %v4348
        %4412 = vmatpush1.bf16.msra.mxu0 %v4347
        %4413 = vmatprep.subr.bf16.mxu0 %v4350
        %4414 = vmatpush1.bf16.msra.mxu0 %v4349
        %4415 = vmatprep.subr.bf16.mxu0 %v4352
        %4416 = vmatpush1.bf16.msra.mxu0 %v4351
        %4417 = vmatprep.subr.bf16.mxu0 %v4354
        %4418 = vmatpush1.bf16.msra.mxu0 %v4353
        %4419 = vmatprep.subr.bf16.mxu0 %v4356
        %4420 = vmatpush1.bf16.msra.mxu0 %v4355
        %4421 = vmatprep.subr.bf16.mxu0 %v4358
        %4422 = vmatpush1.bf16.msra.mxu0 %v4357
        %4423 = vmatprep.subr.bf16.mxu0 %v4360
        %4424 = vmatpush1.bf16.msra.mxu0 %v4359
        %4425 = vmatprep.subr.bf16.mxu0 %v4362
        %4426 = vmatpush1.bf16.msra.mxu0 %v4361
        %4427 = vmatprep.mubr.bf16.mxu0 %v4126
        %4428 = vmatmul.mubr.bf16.gmra.mrb[0].mxu0 %v4125
        %v4429 = vpop.f32.mrb[0].mxu0
        %v4430 = vadd.f32 %v4228, %v4429
        %v4431 = vpop.f32.mrb[0].mxu0
        %v4432 = vadd.f32 %v4232, %v4431
        %v4433 = vpop.f32.mrb[0].mxu0
        %v4434 = vadd.f32 %v4228, %v4433
        %v4435 = vpop.f32.mrb[0].mxu0
        %v4436 = vadd.f32 %v4232, %v4435
        %4437 = vmatprep.mubr.bf16.mxu0 %v4128
        %4438 = vmatmul.mubr.bf16.gmra.mrb[0].mxu0 %v4127
        %v4439 = vpop.f32.mrb[0].mxu0
        %v4440 = vadd.f32 %v4228, %v4439
        %v4441 = vpop.f32.mrb[0].mxu0
        %v4442 = vadd.f32 %v4232, %v4441
        %v4443 = vpop.f32.mrb[0].mxu0
        %v4444 = vadd.f32 %v4228, %v4443
        %v4445 = vpop.f32.mrb[0].mxu0
        %v4446 = vadd.f32 %v4232, %v4445
        %4447 = vmatprep.mubr.bf16.mxu0 %v4130
        %4448 = vmatmul.mubr.bf16.gmra.mrb[0].mxu0 %v4129
        %v4449 = vpop.f32.mrb[0].mxu0
        %v4450 = vadd.f32 %v4228, %v4449
        %v4451 = vpop.f32.mrb[0].mxu0
        %v4452 = vadd.f32 %v4232, %v4451
        %v4453 = vpop.f32.mrb[0].mxu0
        %v4454 = vadd.f32 %v4228, %v4453
        %v4455 = vpop.f32.mrb[0].mxu0
        %v4456 = vadd.f32 %v4232, %v4455
        %4457 = vmatprep.mubr.bf16.mxu0 %v4132
        %4458 = vmatmul.mubr.bf16.gmra.mrb[0].mxu0 %v4131
        %v4459 = vpop.f32.mrb[0].mxu0
        %v4460 = vadd.f32 %v4228, %v4459
        %v4461 = vpop.f32.mrb[0].mxu0
        %v4462 = vadd.f32 %v4232, %v4461
        %v4463 = vpop.f32.mrb[0].mxu0
        %v4464 = vadd.f32 %v4228, %v4463
        %v4465 = vpop.f32.mrb[0].mxu0
        %v4466 = vadd.f32 %v4232, %v4465
        %4467 = vmatprep.mubr.bf16.mxu0 %v4134
        %4468 = vmatmul.mubr.bf16.gmra.mrb[0].mxu0 %v4133
        %v4469 = vpop.f32.mrb[0].mxu0
        %v4470 = vadd.f32 %v4228, %v4469
        %v4471 = vpop.f32.mrb[0].mxu0
        %v4472 = vadd.f32 %v4232, %v4471
        %v4473 = vpop.f32.mrb[0].mxu0
        %v4474 = vadd.f32 %v4228, %v4473
        %v4475 = vpop.f32.mrb[0].mxu0
        %v4476 = vadd.f32 %v4232, %v4475
        %4477 = vmatprep.mubr.bf16.mxu0 %v4136
        %4478 = vmatmul.mubr.bf16.gmra.mrb[0].mxu0 %v4135
        %v4479 = vpop.f32.mrb[0].mxu0
        %v4480 = vadd.f32 %v4228, %v4479
        %v4481 = vpop.f32.mrb[0].mxu0
        %v4482 = vadd.f32 %v4232, %v4481
        %v4483 = vpop.f32.mrb[0].mxu0
        %v4484 = vadd.f32 %v4228, %v4483
        %v4485 = vpop.f32.mrb[0].mxu0
        %v4486 = vadd.f32 %v4232, %v4485
        %4487 = vmatprep.mubr.bf16.mxu0 %v4138
        %4488 = vmatmul.mubr.bf16.gmra.mrb[0].mxu0 %v4137
        %v4489 = vpop.f32.mrb[0].mxu0
        %v4490 = vadd.f32 %v4228, %v4489
        %v4491 = vpop.f32.mrb[0].mxu0
        %v4492 = vadd.f32 %v4232, %v4491
        %v4493 = vpop.f32.mrb[0].mxu0
        %v4494 = vadd.f32 %v4228, %v4493
        %v4495 = vpop.f32.mrb[0].mxu0
        %v4496 = vadd.f32 %v4232, %v4495
        %4497 = vmatprep.mubr.bf16.mxu0 %v4140
        %4498 = vmatmul.mubr.bf16.gmra.mrb[0].mxu0 %v4139
        %v4499 = vpop.f32.mrb[0].mxu0
        %v4500 = vadd.f32 %v4228, %v4499
        %v4501 = vpop.f32.mrb[0].mxu0
        %v4502 = vadd.f32 %v4232, %v4501
        %v4503 = vpop.f32.mrb[0].mxu0
        %v4504 = vadd.f32 %v4228, %v4503
        %v4505 = vpop.f32.mrb[0].mxu0
        %v4506 = vadd.f32 %v4232, %v4505
        %4507 = vmatprep.mubr.bf16.mxu0 %v4142
        %4508 = vmatmul.mubr.bf16.gmra.mrb[0].mxu0 %v4141
        %v4509 = vpop.f32.mrb[0].mxu0
        %v4510 = vadd.f32 %v4228, %v4509
        %v4511 = vpop.f32.mrb[0].mxu0
        %v4512 = vadd.f32 %v4232, %v4511
        %v4513 = vpop.f32.mrb[0].mxu0
        %v4514 = vadd.f32 %v4228, %v4513
        %v4515 = vpop.f32.mrb[0].mxu0
        %v4516 = vadd.f32 %v4232, %v4515
        %4517 = vmatprep.mubr.bf16.mxu0 %v4144
        %4518 = vmatmul.mubr.bf16.gmra.mrb[0].mxu0 %v4143
        %v4519 = vpop.f32.mrb[0].mxu0
        %v4520 = vadd.f32 %v4228, %v4519
        %v4521 = vpop.f32.mrb[0].mxu0
        %v4522 = vadd.f32 %v4232, %v4521
        %v4523 = vpop.f32.mrb[0].mxu0
        %v4524 = vadd.f32 %v4228, %v4523
        %v4525 = vpop.f32.mrb[0].mxu0
        %v4526 = vadd.f32 %v4232, %v4525
        %4527 = vmatprep.mubr.bf16.mxu0 %v4146
        %4528 = vmatmul.mubr.bf16.gmra.mrb[0].mxu0 %v4145
        %v4529 = vpop.f32.mrb[0].mxu0
        %v4530 = vadd.f32 %v4228, %v4529
        %v4531 = vpop.f32.mrb[0].mxu0
        %v4532 = vadd.f32 %v4232, %v4531
        %v4533 = vpop.f32.mrb[0].mxu0
        %v4534 = vadd.f32 %v4228, %v4533
        %v4535 = vpop.f32.mrb[0].mxu0
        %v4536 = vadd.f32 %v4232, %v4535
        %4537 = vmatprep.mubr.bf16.mxu0 %v4148
        %4538 = vmatmul.mubr.bf16.gmra.mrb[0].mxu0 %v4147
        %v4539 = vpop.f32.mrb[0].mxu0
        %v4540 = vadd.f32 %v4228, %v4539
        %v4541 = vpop.f32.mrb[0].mxu0
        %v4542 = vadd.f32 %v4232, %v4541
        %v4543 = vpop.f32.mrb[0].mxu0
        %v4544 = vadd.f32 %v4228, %v4543
        %v4545 = vpop.f32.mrb[0].mxu0
        %v4546 = vadd.f32 %v4232, %v4545
        %4547 = vmatprep.mubr.bf16.mxu0 %v4150
        %4548 = vmatmul.mubr.bf16.gmra.mrb[0].mxu0 %v4149
        %v4549 = vpop.f32.mrb[0].mxu0
        %v4550 = vadd.f32 %v4228, %v4549
        %v4551 = vpop.f32.mrb[0].mxu0
        %v4552 = vadd.f32 %v4232, %v4551
        %v4553 = vpop.f32.mrb[0].mxu0
        %v4554 = vadd.f32 %v4228, %v4553
        %v4555 = vpop.f32.mrb[0].mxu0
        %v4556 = vadd.f32 %v4232, %v4555
        %4557 = vmatprep.mubr.bf16.mxu0 %v4152
        %4558 = vmatmul.mubr.bf16.gmra.mrb[0].mxu0 %v4151
        %v4559 = vpop.f32.mrb[0].mxu0
        %v4560 = vadd.f32 %v4228, %v4559
        %v4561 = vpop.f32.mrb[0].mxu0
        %v4562 = vadd.f32 %v4232, %v4561
        %v4563 = vpop.f32.mrb[0].mxu0
        %v4564 = vadd.f32 %v4228, %v4563
        %v4565 = vpop.f32.mrb[0].mxu0
        %v4566 = vadd.f32 %v4232, %v4565
        %4567 = vmatprep.mubr.bf16.mxu0 %v4154
        %4568 = vmatmul.mubr.bf16.gmra.mrb[0].mxu0 %v4153
        %v4569 = vpop.f32.mrb[0].mxu0
        %v4570 = vadd.f32 %v4228, %v4569
        %v4571 = vpop.f32.mrb[0].mxu0
        %v4572 = vadd.f32 %v4232, %v4571
        %v4573 = vpop.f32.mrb[0].mxu0
        %v4574 = vadd.f32 %v4228, %v4573
        %v4575 = vpop.f32.mrb[0].mxu0
        %v4576 = vadd.f32 %v4232, %v4575
        %4577 = vmatprep.mubr.bf16.mxu0 %v4156
        %4578 = vmatmul.mubr.bf16.gmra.mrb[0].mxu0 %v4155
        %v4579 = vpop.f32.mrb[0].mxu0
        %v4580 = vadd.f32 %v4228, %v4579
        %v4581 = vpop.f32.mrb[0].mxu0
        %v4582 = vadd.f32 %v4232, %v4581
        %v4583 = vpop.f32.mrb[0].mxu0
        %v4584 = vadd.f32 %v4228, %v4583
        %v4585 = vpop.f32.mrb[0].mxu0
        %v4586 = vadd.f32 %v4232, %v4585
        %4587 = vmatprep.mubr.bf16.mxu0 %v4158
        %4588 = vmatmul.mubr.bf16.gmra.mrb[0].mxu0 %v4157
        %v4589 = vpop.f32.mrb[0].mxu0
        %v4590 = vadd.f32 %v4228, %v4589
        %v4591 = vpop.f32.mrb[0].mxu0
        %v4592 = vadd.f32 %v4232, %v4591
        %v4593 = vpop.f32.mrb[0].mxu0
        %v4594 = vadd.f32 %v4228, %v4593
        %v4595 = vpop.f32.mrb[0].mxu0
        %v4596 = vadd.f32 %v4232, %v4595
        %4597 = vmatprep.mubr.bf16.mxu0 %v4160
        %4598 = vmatmul.mubr.bf16.gmra.mrb[0].mxu0 %v4159
        %v4599 = vpop.f32.mrb[0].mxu0
        %v4600 = vadd.f32 %v4228, %v4599
        %v4601 = vpop.f32.mrb[0].mxu0
        %v4602 = vadd.f32 %v4232, %v4601
        %v4603 = vpop.f32.mrb[0].mxu0
        %v4604 = vadd.f32 %v4228, %v4603
        %v4605 = vpop.f32.mrb[0].mxu0
        %v4606 = vadd.f32 %v4232, %v4605
        %4607 = vmatprep.mubr.bf16.mxu0 %v4162
        %4608 = vmatmul.mubr.bf16.gmra.mrb[0].mxu0 %v4161
        %v4609 = vpop.f32.mrb[0].mxu0
        %v4610 = vadd.f32 %v4228, %v4609
        %v4611 = vpop.f32.mrb[0].mxu0
        %v4612 = vadd.f32 %v4232, %v4611
        %v4613 = vpop.f32.mrb[0].mxu0
        %v4614 = vadd.f32 %v4228, %v4613
        %v4615 = vpop.f32.mrb[0].mxu0
        %v4616 = vadd.f32 %v4232, %v4615
        %4617 = vmatprep.mubr.bf16.mxu0 %v4164
        %4618 = vmatmul.mubr.bf16.gmra.mrb[0].mxu0 %v4163
        %v4619 = vpop.f32.mrb[0].mxu0
        %v4620 = vadd.f32 %v4228, %v4619
        %v4621 = vpop.f32.mrb[0].mxu0
        %v4622 = vadd.f32 %v4232, %v4621
        %v4623 = vpop.f32.mrb[0].mxu0
        %v4624 = vadd.f32 %v4228, %v4623
        %v4625 = vpop.f32.mrb[0].mxu0
        %v4626 = vadd.f32 %v4232, %v4625
        %4627 = vmatprep.mubr.bf16.mxu0 %v4166
        %4628 = vmatmul.mubr.bf16.gmra.mrb[0].mxu0 %v4165
        %v4629 = vpop.f32.mrb[0].mxu0
        %v4630 = vadd.f32 %v4228, %v4629
        %v4631 = vpop.f32.mrb[0].mxu0
        %v4632 = vadd.f32 %v4232, %v4631
        %v4633 = vpop.f32.mrb[0].mxu0
        %v4634 = vadd.f32 %v4228, %v4633
        %v4635 = vpop.f32.mrb[0].mxu0
        %v4636 = vadd.f32 %v4232, %v4635
        %4637 = vmatprep.mubr.bf16.mxu0 %v4168
        %4638 = vmatmul.mubr.bf16.gmra.mrb[0].mxu0 %v4167
        %v4639 = vpop.f32.mrb[0].mxu0
        %v4640 = vadd.f32 %v4228, %v4639
        %v4641 = vpop.f32.mrb[0].mxu0
        %v4642 = vadd.f32 %v4232, %v4641
        %v4643 = vpop.f32.mrb[0].mxu0
        %v4644 = vadd.f32 %v4228, %v4643
        %v4645 = vpop.f32.mrb[0].mxu0
        %v4646 = vadd.f32 %v4232, %v4645
        %4647 = vmatprep.mubr.bf16.mxu0 %v4170
        %4648 = vmatmul.mubr.bf16.gmra.mrb[0].mxu0 %v4169
        %v4649 = vpop.f32.mrb[0].mxu0
        %v4650 = vadd.f32 %v4228, %v4649
        %v4651 = vpop.f32.mrb[0].mxu0
        %v4652 = vadd.f32 %v4232, %v4651
        %v4653 = vpop.f32.mrb[0].mxu0
        %v4654 = vadd.f32 %v4228, %v4653
        %v4655 = vpop.f32.mrb[0].mxu0
        %v4656 = vadd.f32 %v4232, %v4655
        %4657 = vmatprep.mubr.bf16.mxu0 %v4172
        %4658 = vmatmul.mubr.bf16.gmra.mrb[0].mxu0 %v4171
        %v4659 = vpop.f32.mrb[0].mxu0
        %v4660 = vadd.f32 %v4228, %v4659
        %v4661 = vpop.f32.mrb[0].mxu0
        %v4662 = vadd.f32 %v4232, %v4661
        %v4663 = vpop.f32.mrb[0].mxu0
        %v4664 = vadd.f32 %v4228, %v4663
        %v4665 = vpop.f32.mrb[0].mxu0
        %v4666 = vadd.f32 %v4232, %v4665
        %4667 = vmatprep.mubr.bf16.mxu0 %v4174
        %4668 = vmatmul.mubr.bf16.gmra.mrb[0].mxu0 %v4173
        %v4669 = vpop.f32.mrb[0].mxu0
        %v4670 = vadd.f32 %v4228, %v4669
        %v4671 = vpop.f32.mrb[0].mxu0
        %v4672 = vadd.f32 %v4232, %v4671
        %v4673 = vpop.f32.mrb[0].mxu0
        %v4674 = vadd.f32 %v4228, %v4673
        %v4675 = vpop.f32.mrb[0].mxu0
        %v4676 = vadd.f32 %v4232, %v4675
        %4677 = vmatprep.mubr.bf16.mxu0 %v4176
        %4678 = vmatmul.mubr.bf16.gmra.mrb[0].mxu0 %v4175
        %v4679 = vpop.f32.mrb[0].mxu0
        %v4680 = vadd.f32 %v4228, %v4679
        %v4681 = vpop.f32.mrb[0].mxu0
        %v4682 = vadd.f32 %v4232, %v4681
        %v4683 = vpop.f32.mrb[0].mxu0
        %v4684 = vadd.f32 %v4228, %v4683
        %v4685 = vpop.f32.mrb[0].mxu0
        %v4686 = vadd.f32 %v4232, %v4685
        %4687 = vmatprep.mubr.bf16.mxu0 %v4178
        %4688 = vmatmul.mubr.bf16.gmra.mrb[0].mxu0 %v4177
        %v4689 = vpop.f32.mrb[0].mxu0
        %v4690 = vadd.f32 %v4228, %v4689
        %v4691 = vpop.f32.mrb[0].mxu0
        %v4692 = vadd.f32 %v4232, %v4691
        %v4693 = vpop.f32.mrb[0].mxu0
        %v4694 = vadd.f32 %v4228, %v4693
        %v4695 = vpop.f32.mrb[0].mxu0
        %v4696 = vadd.f32 %v4232, %v4695
        %4697 = vmatprep.mubr.bf16.mxu0 %v4180
        %4698 = vmatmul.mubr.bf16.gmra.mrb[0].mxu0 %v4179
        %v4699 = vpop.f32.mrb[0].mxu0
        %v4700 = vadd.f32 %v4228, %v4699
        %v4701 = vpop.f32.mrb[0].mxu0
        %v4702 = vadd.f32 %v4232, %v4701
        %v4703 = vpop.f32.mrb[0].mxu0
        %v4704 = vadd.f32 %v4228, %v4703
        %v4705 = vpop.f32.mrb[0].mxu0
        %v4706 = vadd.f32 %v4232, %v4705
        %4707 = vmatprep.mubr.bf16.mxu0 %v4182
        %4708 = vmatmul.mubr.bf16.gmra.mrb[0].mxu0 %v4181
        %v4709 = vpop.f32.mrb[0].mxu0
        %v4710 = vadd.f32 %v4228, %v4709
        %v4711 = vpop.f32.mrb[0].mxu0
        %v4712 = vadd.f32 %v4232, %v4711
        %v4713 = vpop.f32.mrb[0].mxu0
        %v4714 = vadd.f32 %v4228, %v4713
        %v4715 = vpop.f32.mrb[0].mxu0
        %v4716 = vadd.f32 %v4232, %v4715
        %4717 = vmatprep.mubr.bf16.mxu0 %v4184
        %4718 = vmatmul.mubr.bf16.gmra.mrb[0].mxu0 %v4183
        %v4719 = vpop.f32.mrb[0].mxu0
        %v4720 = vadd.f32 %v4228, %v4719
        %v4721 = vpop.f32.mrb[0].mxu0
        %v4722 = vadd.f32 %v4232, %v4721
        %v4723 = vpop.f32.mrb[0].mxu0
        %v4724 = vadd.f32 %v4228, %v4723
        %v4725 = vpop.f32.mrb[0].mxu0
        %v4726 = vadd.f32 %v4232, %v4725
        %4727 = vmatprep.mubr.bf16.mxu0 %v4186
        %4728 = vmatmul.mubr.bf16.gmra.mrb[0].mxu0 %v4185
        %v4729 = vpop.f32.mrb[0].mxu0
        %v4730 = vadd.f32 %v4228, %v4729
        %v4731 = vpop.f32.mrb[0].mxu0
        %v4732 = vadd.f32 %v4232, %v4731
        %v4733 = vpop.f32.mrb[0].mxu0
        %v4734 = vadd.f32 %v4228, %v4733
        %v4735 = vpop.f32.mrb[0].mxu0
        %v4736 = vadd.f32 %v4232, %v4735
        %4737 = vmatprep.mubr.bf16.mxu0 %v4188
        %4738 = vmatmul.mubr.bf16.gmra.mrb[0].mxu0 %v4187
        %v4739 = vpop.f32.mrb[0].mxu0
        %v4740 = vadd.f32 %v4228, %v4739
        %v4741 = vpop.f32.mrb[0].mxu0
        %v4742 = vadd.f32 %v4232, %v4741
        %v4743 = vpop.f32.mrb[0].mxu0
        %v4744 = vadd.f32 %v4228, %v4743
        %v4745 = vpop.f32.mrb[0].mxu0
        %v4746 = vadd.f32 %v4232, %v4745
        %4747 = vdwg.mxu0
        %v4748 = vld [vmem:[%s2] sm:$0xff]
        %v4749 = vld [vmem:[%s2 + $0x8] sm:$0xff]
        %v4752 = vunpack.c.l.b16 %v4748
        %v4753 = vunpack.c.h.b16 %v4748
        %v4754 = vunpack.c.l.b16 %v4749
        %v4755 = vunpack.c.h.b16 %v4749
        %v4756 = vpack.c.b16 %v4754, %v4752
        %v4757 = vpack.c.b16 %v4755, %v4753
        %4760 = vmatprep.subr.bf16.mxu0 %v4757
        %4761 = vmatpush1.bf16.msra.mxu0 %v4756
        %4762 = vmatprep.subr.bf16.mxu0 0
        %4763 = vmatpush1.bf16.msra.mxu0 0
        %4764 = vmatprep.subr.bf16.mxu0 0
        %4765 = vmatpush1.bf16.msra.mxu0 0
        %4766 = vmatprep.subr.bf16.mxu0 0
        %4767 = vmatpush1.bf16.msra.mxu0 0
        %4768 = vmatprep.subr.bf16.mxu0 0
        %4769 = vmatpush1.bf16.msra.mxu0 0
        %4770 = vmatprep.subr.bf16.mxu0 0
        %4771 = vmatpush1.bf16.msra.mxu0 0
        %4772 = vmatprep.subr.bf16.mxu0 0
        %4773 = vmatpush1.bf16.msra.mxu0 0
        %4774 = vmatprep.subr.bf16.mxu0 0
        %4775 = vmatpush1.bf16.msra.mxu0 0
        %4776 = vmatprep.subr.bf16.mxu0 0
        %4777 = vmatpush1.bf16.msra.mxu0 0
        %4778 = vmatprep.subr.bf16.mxu0 0
        %4779 = vmatpush1.bf16.msra.mxu0 0
        %4780 = vmatprep.subr.bf16.mxu0 0
        %4781 = vmatpush1.bf16.msra.mxu0 0
        %4782 = vmatprep.subr.bf16.mxu0 0
        %4783 = vmatpush1.bf16.msra.mxu0 0
        %4784 = vmatprep.subr.bf16.mxu0 0
        %4785 = vmatpush1.bf16.msra.mxu0 0
        %4786 = vmatprep.subr.bf16.mxu0 0
        %4787 = vmatpush1.bf16.msra.mxu0 0
        %4788 = vmatprep.subr.bf16.mxu0 0
        %4789 = vmatpush1.bf16.msra.mxu0 0
        %4790 = vmatprep.subr.bf16.mxu0 0
        %4791 = vmatpush1.bf16.msra.mxu0 0
        %4792 = vmatprep.mubr.bf16.mxu0 0
        %4793 = vmatmul.mubr.bf16.gmra.mrb[0].mxu0 %v546
        %v4794 = vpop.f32.mrb[0].mxu0
        %v4795 = vadd.f32 0.0, %v4794
        %v4796 = vpop.f32.mrb[0].mxu0
        %v4797 = vadd.f32 0.0, %v4796
        %v4798 = vpop.f32.mrb[0].mxu0
        %v4799 = vadd.f32 0.0, %v4798
        %v4800 = vpop.f32.mrb[0].mxu0
        %v4801 = vadd.f32 0.0, %v4800
        %4802 = vmatprep.mubr.bf16.mxu0 0
        %4803 = vmatmul.mubr.bf16.gmra.mrb[0].mxu0 %v549
        %v4804 = vpop.f32.mrb[0].mxu0
        %v4805 = vadd.f32 0.0, %v4804
        %v4806 = vpop.f32.mrb[0].mxu0
        %v4807 = vadd.f32 0.0, %v4806
        %v4808 = vpop.f32.mrb[0].mxu0
        %v4809 = vadd.f32 0.0, %v4808
        %v4810 = vpop.f32.mrb[0].mxu0
        %v4811 = vadd.f32 0.0, %v4810
        %4812 = vmatprep.mubr.bf16.mxu0 0
        %4813 = vmatmul.mubr.bf16.gmra.mrb[0].mxu0 %v552
        %v4814 = vpop.f32.mrb[0].mxu0
        %v4815 = vadd.f32 0.0, %v4814
        %v4816 = vpop.f32.mrb[0].mxu0
        %v4817 = vadd.f32 0.0, %v4816
        %v4818 = vpop.f32.mrb[0].mxu0
        %v4819 = vadd.f32 0.0, %v4818
        %v4820 = vpop.f32.mrb[0].mxu0
        %v4821 = vadd.f32 0.0, %v4820
        %4822 = vmatprep.mubr.bf16.mxu0 0
        %4823 = vmatmul.mubr.bf16.gmra.mrb[0].mxu0 %v555
        %v4824 = vpop.f32.mrb[0].mxu0
        %v4825 = vadd.f32 0.0, %v4824
        %v4826 = vpop.f32.mrb[0].mxu0
        %v4827 = vadd.f32 0.0, %v4826
        %v4828 = vpop.f32.mrb[0].mxu0
        %v4829 = vadd.f32 0.0, %v4828
        %v4830 = vpop.f32.mrb[0].mxu0
        %v4831 = vadd.f32 0.0, %v4830
        %4832 = vmatprep.mubr.bf16.mxu0 0
        %4833 = vmatmul.mubr.bf16.gmra.mrb[0].mxu0 %v558
        %v4834 = vpop.f32.mrb[0].mxu0
        %v4835 = vadd.f32 0.0, %v4834
        %v4836 = vpop.f32.mrb[0].mxu0
        %v4837 = vadd.f32 0.0, %v4836
        %v4838 = vpop.f32.mrb[0].mxu0
        %v4839 = vadd.f32 0.0, %v4838
        %v4840 = vpop.f32.mrb[0].mxu0
        %v4841 = vadd.f32 0.0, %v4840
        %4842 = vmatprep.mubr.bf16.mxu0 0
        %4843 = vmatmul.mubr.bf16.gmra.mrb[0].mxu0 %v561
        %v4844 = vpop.f32.mrb[0].mxu0
        %v4845 = vadd.f32 0.0, %v4844
        %v4846 = vpop.f32.mrb[0].mxu0
        %v4847 = vadd.f32 0.0, %v4846
        %v4848 = vpop.f32.mrb[0].mxu0
        %v4849 = vadd.f32 0.0, %v4848
        %v4850 = vpop.f32.mrb[0].mxu0
        %v4851 = vadd.f32 0.0, %v4850
        %4852 = vmatprep.mubr.bf16.mxu0 0
        %4853 = vmatmul.mubr.bf16.gmra.mrb[0].mxu0 %v564
        %v4854 = vpop.f32.mrb[0].mxu0
        %v4855 = vadd.f32 0.0, %v4854
        %v4856 = vpop.f32.mrb[0].mxu0
        %v4857 = vadd.f32 0.0, %v4856
        %v4858 = vpop.f32.mrb[0].mxu0
        %v4859 = vadd.f32 0.0, %v4858
        %v4860 = vpop.f32.mrb[0].mxu0
        %v4861 = vadd.f32 0.0, %v4860
        %4862 = vmatprep.mubr.bf16.mxu0 0
        %4863 = vmatmul.mubr.bf16.gmra.mrb[0].mxu0 %v567
        %v4864 = vpop.f32.mrb[0].mxu0
        %v4865 = vadd.f32 0.0, %v4864
        %v4866 = vpop.f32.mrb[0].mxu0
        %v4867 = vadd.f32 0.0, %v4866
        %v4868 = vpop.f32.mrb[0].mxu0
        %v4869 = vadd.f32 0.0, %v4868
        %v4870 = vpop.f32.mrb[0].mxu0
        %v4871 = vadd.f32 0.0, %v4870
        %4872 = vmatprep.mubr.bf16.mxu0 0
        %4873 = vmatmul.mubr.bf16.gmra.mrb[0].mxu0 %v570
        %v4874 = vpop.f32.mrb[0].mxu0
        %v4875 = vadd.f32 0.0, %v4874
        %v4876 = vpop.f32.mrb[0].mxu0
        %v4877 = vadd.f32 0.0, %v4876
        %v4878 = vpop.f32.mrb[0].mxu0
        %v4879 = vadd.f32 0.0, %v4878
        %v4880 = vpop.f32.mrb[0].mxu0
        %v4881 = vadd.f32 0.0, %v4880
        %4882 = vmatprep.mubr.bf16.mxu0 0
        %4883 = vmatmul.mubr.bf16.gmra.mrb[0].mxu0 %v573
        %v4884 = vpop.f32.mrb[0].mxu0
        %v4885 = vadd.f32 0.0, %v4884
        %v4886 = vpop.f32.mrb[0].mxu0
        %v4887 = vadd.f32 0.0, %v4886
        %v4888 = vpop.f32.mrb[0].mxu0
        %v4889 = vadd.f32 0.0, %v4888
        %v4890 = vpop.f32.mrb[0].mxu0
        %v4891 = vadd.f32 0.0, %v4890
        %4892 = vmatprep.mubr.bf16.mxu0 0
        %4893 = vmatmul.mubr.bf16.gmra.mrb[0].mxu0 %v576
        %v4894 = vpop.f32.mrb[0].mxu0
        %v4895 = vadd.f32 0.0, %v4894
        %v4896 = vpop.f32.mrb[0].mxu0
        %v4897 = vadd.f32 0.0, %v4896
        %v4898 = vpop.f32.mrb[0].mxu0
        %v4899 = vadd.f32 0.0, %v4898
        %v4900 = vpop.f32.mrb[0].mxu0
        %v4901 = vadd.f32 0.0, %v4900
        %4902 = vmatprep.mubr.bf16.mxu0 0
        %4903 = vmatmul.mubr.bf16.gmra.mrb[0].mxu0 %v579
        %v4904 = vpop.f32.mrb[0].mxu0
        %v4905 = vadd.f32 0.0, %v4904
        %v4906 = vpop.f32.mrb[0].mxu0
        %v4907 = vadd.f32 0.0, %v4906
        %v4908 = vpop.f32.mrb[0].mxu0
        %v4909 = vadd.f32 0.0, %v4908
        %v4910 = vpop.f32.mrb[0].mxu0
        %v4911 = vadd.f32 0.0, %v4910
        %4912 = vmatprep.mubr.bf16.mxu0 0
        %4913 = vmatmul.mubr.bf16.gmra.mrb[0].mxu0 %v582
        %v4914 = vpop.f32.mrb[0].mxu0
        %v4915 = vadd.f32 0.0, %v4914
        %v4916 = vpop.f32.mrb[0].mxu0
        %v4917 = vadd.f32 0.0, %v4916
        %v4918 = vpop.f32.mrb[0].mxu0
        %v4919 = vadd.f32 0.0, %v4918
        %v4920 = vpop.f32.mrb[0].mxu0
        %v4921 = vadd.f32 0.0, %v4920
        %4922 = vmatprep.mubr.bf16.mxu0 0
        %4923 = vmatmul.mubr.bf16.gmra.mrb[0].mxu0 %v585
        %v4924 = vpop.f32.mrb[0].mxu0
        %v4925 = vadd.f32 0.0, %v4924
        %v4926 = vpop.f32.mrb[0].mxu0
        %v4927 = vadd.f32 0.0, %v4926
        %v4928 = vpop.f32.mrb[0].mxu0
        %v4929 = vadd.f32 0.0, %v4928
        %v4930 = vpop.f32.mrb[0].mxu0
        %v4931 = vadd.f32 0.0, %v4930
        %4932 = vmatprep.mubr.bf16.mxu0 0
        %4933 = vmatmul.mubr.bf16.gmra.mrb[0].mxu0 %v588
        %v4934 = vpop.f32.mrb[0].mxu0
        %v4935 = vadd.f32 0.0, %v4934
        %v4936 = vpop.f32.mrb[0].mxu0
        %v4937 = vadd.f32 0.0, %v4936
        %v4938 = vpop.f32.mrb[0].mxu0
        %v4939 = vadd.f32 0.0, %v4938
        %v4940 = vpop.f32.mrb[0].mxu0
        %v4941 = vadd.f32 0.0, %v4940
        %4942 = vmatprep.mubr.bf16.mxu0 0
        %4943 = vmatmul.mubr.bf16.gmra.mrb[0].mxu0 %v591
        %v4944 = vpop.f32.mrb[0].mxu0
        %v4945 = vadd.f32 0.0, %v4944
        %v4946 = vpop.f32.mrb[0].mxu0
        %v4947 = vadd.f32 0.0, %v4946
        %v4948 = vpop.f32.mrb[0].mxu0
        %v4949 = vadd.f32 0.0, %v4948
        %v4950 = vpop.f32.mrb[0].mxu0
        %v4951 = vadd.f32 0.0, %v4950
        %4952 = vmatprep.mubr.bf16.mxu0 0
        %4953 = vmatmul.mubr.bf16.gmra.mrb[0].mxu0 %v594
        %v4954 = vpop.f32.mrb[0].mxu0
        %v4955 = vadd.f32 0.0, %v4954
        %v4956 = vpop.f32.mrb[0].mxu0
        %v4957 = vadd.f32 0.0, %v4956
        %v4958 = vpop.f32.mrb[0].mxu0
        %v4959 = vadd.f32 0.0, %v4958
        %v4960 = vpop.f32.mrb[0].mxu0
        %v4961 = vadd.f32 0.0, %v4960
        %4962 = vmatprep.mubr.bf16.mxu0 0
        %4963 = vmatmul.mubr.bf16.gmra.mrb[0].mxu0 %v597
        %v4964 = vpop.f32.mrb[0].mxu0
        %v4965 = vadd.f32 0.0, %v4964
        %v4966 = vpop.f32.mrb[0].mxu0
        %v4967 = vadd.f32 0.0, %v4966
        %v4968 = vpop.f32.mrb[0].mxu0
        %v4969 = vadd.f32 0.0, %v4968
        %v4970 = vpop.f32.mrb[0].mxu0
        %v4971 = vadd.f32 0.0, %v4970
        %4972 = vmatprep.mubr.bf16.mxu0 0
        %4973 = vmatmul.mubr.bf16.gmra.mrb[0].mxu0 %v600
        %v4974 = vpop.f32.mrb[0].mxu0
        %v4975 = vadd.f32 0.0, %v4974
        %v4976 = vpop.f32.mrb[0].mxu0
        %v4977 = vadd.f32 0.0, %v4976
        %v4978 = vpop.f32.mrb[0].mxu0
        %v4979 = vadd.f32 0.0, %v4978
        %v4980 = vpop.f32.mrb[0].mxu0
        %v4981 = vadd.f32 0.0, %v4980
        %4982 = vmatprep.mubr.bf16.mxu0 0
        %4983 = vmatmul.mubr.bf16.gmra.mrb[0].mxu0 %v603
        %v4984 = vpop.f32.mrb[0].mxu0
        %v4985 = vadd.f32 0.0, %v4984
        %v4986 = vpop.f32.mrb[0].mxu0
        %v4987 = vadd.f32 0.0, %v4986
        %v4988 = vpop.f32.mrb[0].mxu0
        %v4989 = vadd.f32 0.0, %v4988
        %v4990 = vpop.f32.mrb[0].mxu0
        %v4991 = vadd.f32 0.0, %v4990
        %4992 = vmatprep.mubr.bf16.mxu0 0
        %4993 = vmatmul.mubr.bf16.gmra.mrb[0].mxu0 %v606
        %v4994 = vpop.f32.mrb[0].mxu0
        %v4995 = vadd.f32 0.0, %v4994
        %v4996 = vpop.f32.mrb[0].mxu0
        %v4997 = vadd.f32 0.0, %v4996
        %v4998 = vpop.f32.mrb[0].mxu0
        %v4999 = vadd.f32 0.0, %v4998
        %v5000 = vpop.f32.mrb[0].mxu0
        %v5001 = vadd.f32 0.0, %v5000
        %5002 = vmatprep.mubr.bf16.mxu0 0
        %5003 = vmatmul.mubr.bf16.gmra.mrb[0].mxu0 %v609
        %v5004 = vpop.f32.mrb[0].mxu0
        %v5005 = vadd.f32 0.0, %v5004
        %v5006 = vpop.f32.mrb[0].mxu0
        %v5007 = vadd.f32 0.0, %v5006
        %v5008 = vpop.f32.mrb[0].mxu0
        %v5009 = vadd.f32 0.0, %v5008
        %v5010 = vpop.f32.mrb[0].mxu0
        %v5011 = vadd.f32 0.0, %v5010
        %5012 = vmatprep.mubr.bf16.mxu0 0
        %5013 = vmatmul.mubr.bf16.gmra.mrb[0].mxu0 %v612
        %v5014 = vpop.f32.mrb[0].mxu0
        %v5015 = vadd.f32 0.0, %v5014
        %v5016 = vpop.f32.mrb[0].mxu0
        %v5017 = vadd.f32 0.0, %v5016
        %v5018 = vpop.f32.mrb[0].mxu0
        %v5019 = vadd.f32 0.0, %v5018
        %v5020 = vpop.f32.mrb[0].mxu0
        %v5021 = vadd.f32 0.0, %v5020
        %5022 = vmatprep.mubr.bf16.mxu0 0
        %5023 = vmatmul.mubr.bf16.gmra.mrb[0].mxu0 %v615
        %v5024 = vpop.f32.mrb[0].mxu0
        %v5025 = vadd.f32 0.0, %v5024
        %v5026 = vpop.f32.mrb[0].mxu0
        %v5027 = vadd.f32 0.0, %v5026
        %v5028 = vpop.f32.mrb[0].mxu0
        %v5029 = vadd.f32 0.0, %v5028
        %v5030 = vpop.f32.mrb[0].mxu0
        %v5031 = vadd.f32 0.0, %v5030
        %5032 = vmatprep.mubr.bf16.mxu0 0
        %5033 = vmatmul.mubr.bf16.gmra.mrb[0].mxu0 %v618
        %v5034 = vpop.f32.mrb[0].mxu0
        %v5035 = vadd.f32 0.0, %v5034
        %v5036 = vpop.f32.mrb[0].mxu0
        %v5037 = vadd.f32 0.0, %v5036
        %v5038 = vpop.f32.mrb[0].mxu0
        %v5039 = vadd.f32 0.0, %v5038
        %v5040 = vpop.f32.mrb[0].mxu0
        %v5041 = vadd.f32 0.0, %v5040
        %5042 = vmatprep.mubr.bf16.mxu0 0
        %5043 = vmatmul.mubr.bf16.gmra.mrb[0].mxu0 %v621
        %v5044 = vpop.f32.mrb[0].mxu0
        %v5045 = vadd.f32 0.0, %v5044
        %v5046 = vpop.f32.mrb[0].mxu0
        %v5047 = vadd.f32 0.0, %v5046
        %v5048 = vpop.f32.mrb[0].mxu0
        %v5049 = vadd.f32 0.0, %v5048
        %v5050 = vpop.f32.mrb[0].mxu0
        %v5051 = vadd.f32 0.0, %v5050
        %5052 = vmatprep.mubr.bf16.mxu0 0
        %5053 = vmatmul.mubr.bf16.gmra.mrb[0].mxu0 %v624
        %v5054 = vpop.f32.mrb[0].mxu0
        %v5055 = vadd.f32 0.0, %v5054
        %v5056 = vpop.f32.mrb[0].mxu0
        %v5057 = vadd.f32 0.0, %v5056
        %v5058 = vpop.f32.mrb[0].mxu0
        %v5059 = vadd.f32 0.0, %v5058
        %v5060 = vpop.f32.mrb[0].mxu0
        %v5061 = vadd.f32 0.0, %v5060
        %5062 = vmatprep.mubr.bf16.mxu0 0
        %5063 = vmatmul.mubr.bf16.gmra.mrb[0].mxu0 %v627
        %v5064 = vpop.f32.mrb[0].mxu0
        %v5065 = vadd.f32 0.0, %v5064
        %v5066 = vpop.f32.mrb[0].mxu0
        %v5067 = vadd.f32 0.0, %v5066
        %v5068 = vpop.f32.mrb[0].mxu0
        %v5069 = vadd.f32 0.0, %v5068
        %v5070 = vpop.f32.mrb[0].mxu0
        %v5071 = vadd.f32 0.0, %v5070
        %5072 = vmatprep.mubr.bf16.mxu0 0
        %5073 = vmatmul.mubr.bf16.gmra.mrb[0].mxu0 %v630
        %v5074 = vpop.f32.mrb[0].mxu0
        %v5075 = vadd.f32 0.0, %v5074
        %v5076 = vpop.f32.mrb[0].mxu0
        %v5077 = vadd.f32 0.0, %v5076
        %v5078 = vpop.f32.mrb[0].mxu0
        %v5079 = vadd.f32 0.0, %v5078
        %v5080 = vpop.f32.mrb[0].mxu0
        %v5081 = vadd.f32 0.0, %v5080
        %5082 = vmatprep.mubr.bf16.mxu0 0
        %5083 = vmatmul.mubr.bf16.gmra.mrb[0].mxu0 %v633
        %v5084 = vpop.f32.mrb[0].mxu0
        %v5085 = vadd.f32 0.0, %v5084
        %v5086 = vpop.f32.mrb[0].mxu0
        %v5087 = vadd.f32 0.0, %v5086
        %v5088 = vpop.f32.mrb[0].mxu0
        %v5089 = vadd.f32 0.0, %v5088
        %v5090 = vpop.f32.mrb[0].mxu0
        %v5091 = vadd.f32 0.0, %v5090
        %5092 = vmatprep.mubr.bf16.mxu0 0
        %5093 = vmatmul.mubr.bf16.gmra.mrb[0].mxu0 %v636
        %v5094 = vpop.f32.mrb[0].mxu0
        %v5095 = vadd.f32 0.0, %v5094
        %v5096 = vpop.f32.mrb[0].mxu0
        %v5097 = vadd.f32 0.0, %v5096
        %v5098 = vpop.f32.mrb[0].mxu0
        %v5099 = vadd.f32 0.0, %v5098
        %v5100 = vpop.f32.mrb[0].mxu0
        %v5101 = vadd.f32 0.0, %v5100
        %5102 = vmatprep.mubr.bf16.mxu0 0
        %5103 = vmatmul.mubr.bf16.gmra.mrb[0].mxu0 %v639
        %v5104 = vpop.f32.mrb[0].mxu0
        %v5105 = vadd.f32 0.0, %v5104
        %v5106 = vpop.f32.mrb[0].mxu0
        %v5107 = vadd.f32 0.0, %v5106
        %v5108 = vpop.f32.mrb[0].mxu0
        %v5109 = vadd.f32 0.0, %v5108
        %v5110 = vpop.f32.mrb[0].mxu0
        %v5111 = vadd.f32 0.0, %v5110
        %5112 = vdwg.mxu0
        %v5113 = vadd.f32 %v4430, %v4795
        %v5114 = vadd.f32 %v4432, %v4797
        %v5115 = vadd.f32 %v4434, %v4799
        %v5116 = vadd.f32 %v4436, %v4801
        %v5117 = vadd.f32 %v4440, %v4805
        %v5118 = vadd.f32 %v4442, %v4807
        %v5119 = vadd.f32 %v4444, %v4809
        %v5120 = vadd.f32 %v4446, %v4811
        %v5121 = vadd.f32 %v4450, %v4815
        %v5122 = vadd.f32 %v4452, %v4817
        %v5123 = vadd.f32 %v4454, %v4819
        %v5124 = vadd.f32 %v4456, %v4821
        %v5125 = vadd.f32 %v4460, %v4825
        %v5126 = vadd.f32 %v4462, %v4827
        %v5127 = vadd.f32 %v4464, %v4829
        %v5128 = vadd.f32 %v4466, %v4831
        %v5129 = vadd.f32 %v4470, %v4835
        %v5130 = vadd.f32 %v4472, %v4837
        %v5131 = vadd.f32 %v4474, %v4839
        %v5132 = vadd.f32 %v4476, %v4841
        %v5133 = vadd.f32 %v4480, %v4845
        %v5134 = vadd.f32 %v4482, %v4847
        %v5135 = vadd.f32 %v4484, %v4849
        %v5136 = vadd.f32 %v4486, %v4851
        %v5137 = vadd.f32 %v4490, %v4855
        %v5138 = vadd.f32 %v4492, %v4857
        %v5139 = vadd.f32 %v4494, %v4859
        %v5140 = vadd.f32 %v4496, %v4861
        %v5141 = vadd.f32 %v4500, %v4865
        %v5142 = vadd.f32 %v4502, %v4867
        %v5143 = vadd.f32 %v4504, %v4869
        %v5144 = vadd.f32 %v4506, %v4871
        %v5145 = vadd.f32 %v4510, %v4875
        %v5146 = vadd.f32 %v4512, %v4877
        %v5147 = vadd.f32 %v4514, %v4879
        %v5148 = vadd.f32 %v4516, %v4881
        %v5149 = vadd.f32 %v4520, %v4885
        %v5150 = vadd.f32 %v4522, %v4887
        %v5151 = vadd.f32 %v4524, %v4889
        %v5152 = vadd.f32 %v4526, %v4891
        %v5153 = vadd.f32 %v4530, %v4895
        %v5154 = vadd.f32 %v4532, %v4897
        %v5155 = vadd.f32 %v4534, %v4899
        %v5156 = vadd.f32 %v4536, %v4901
        %v5157 = vadd.f32 %v4540, %v4905
        %v5158 = vadd.f32 %v4542, %v4907
        %v5159 = vadd.f32 %v4544, %v4909
        %v5160 = vadd.f32 %v4546, %v4911
        %v5161 = vadd.f32 %v4550, %v4915
        %v5162 = vadd.f32 %v4552, %v4917
        %v5163 = vadd.f32 %v4554, %v4919
        %v5164 = vadd.f32 %v4556, %v4921
        %v5165 = vadd.f32 %v4560, %v4925
        %v5166 = vadd.f32 %v4562, %v4927
        %v5167 = vadd.f32 %v4564, %v4929
        %v5168 = vadd.f32 %v4566, %v4931
        %v5169 = vadd.f32 %v4570, %v4935
        %v5170 = vadd.f32 %v4572, %v4937
        %v5171 = vadd.f32 %v4574, %v4939
        %v5172 = vadd.f32 %v4576, %v4941
        %v5173 = vadd.f32 %v4580, %v4945
        %v5174 = vadd.f32 %v4582, %v4947
        %v5175 = vadd.f32 %v4584, %v4949
        %v5176 = vadd.f32 %v4586, %v4951
        %v5177 = vadd.f32 %v4590, %v4955
        %v5178 = vadd.f32 %v4592, %v4957
        %v5179 = vadd.f32 %v4594, %v4959
        %v5180 = vadd.f32 %v4596, %v4961
        %v5181 = vadd.f32 %v4600, %v4965
        %v5182 = vadd.f32 %v4602, %v4967
        %v5183 = vadd.f32 %v4604, %v4969
        %v5184 = vadd.f32 %v4606, %v4971
        %v5185 = vadd.f32 %v4610, %v4975
        %v5186 = vadd.f32 %v4612, %v4977
        %v5187 = vadd.f32 %v4614, %v4979
        %v5188 = vadd.f32 %v4616, %v4981
        %v5189 = vadd.f32 %v4620, %v4985
        %v5190 = vadd.f32 %v4622, %v4987
        %v5191 = vadd.f32 %v4624, %v4989
        %v5192 = vadd.f32 %v4626, %v4991
        %v5193 = vadd.f32 %v4630, %v4995
        %v5194 = vadd.f32 %v4632, %v4997
        %v5195 = vadd.f32 %v4634, %v4999
        %v5196 = vadd.f32 %v4636, %v5001
        %v5197 = vadd.f32 %v4640, %v5005
        %v5198 = vadd.f32 %v4642, %v5007
        %v5199 = vadd.f32 %v4644, %v5009
        %v5200 = vadd.f32 %v4646, %v5011
        %v5201 = vadd.f32 %v4650, %v5015
        %v5202 = vadd.f32 %v4652, %v5017
        %v5203 = vadd.f32 %v4654, %v5019
        %v5204 = vadd.f32 %v4656, %v5021
        %v5205 = vadd.f32 %v4660, %v5025
        %v5206 = vadd.f32 %v4662, %v5027
        %v5207 = vadd.f32 %v4664, %v5029
        %v5208 = vadd.f32 %v4666, %v5031
        %v5209 = vadd.f32 %v4670, %v5035
        %v5210 = vadd.f32 %v4672, %v5037
        %v5211 = vadd.f32 %v4674, %v5039
        %v5212 = vadd.f32 %v4676, %v5041
        %v5213 = vadd.f32 %v4680, %v5045
        %v5214 = vadd.f32 %v4682, %v5047
        %v5215 = vadd.f32 %v4684, %v5049
        %v5216 = vadd.f32 %v4686, %v5051
        %v5217 = vadd.f32 %v4690, %v5055
        %v5218 = vadd.f32 %v4692, %v5057
        %v5219 = vadd.f32 %v4694, %v5059
        %v5220 = vadd.f32 %v4696, %v5061
        %v5221 = vadd.f32 %v4700, %v5065
        %v5222 = vadd.f32 %v4702, %v5067
        %v5223 = vadd.f32 %v4704, %v5069
        %v5224 = vadd.f32 %v4706, %v5071
        %v5225 = vadd.f32 %v4710, %v5075
        %v5226 = vadd.f32 %v4712, %v5077
        %v5227 = vadd.f32 %v4714, %v5079
        %v5228 = vadd.f32 %v4716, %v5081
        %v5229 = vadd.f32 %v4720, %v5085
        %v5230 = vadd.f32 %v4722, %v5087
        %v5231 = vadd.f32 %v4724, %v5089
        %v5232 = vadd.f32 %v4726, %v5091
        %v5233 = vadd.f32 %v4730, %v5095
        %v5234 = vadd.f32 %v4732, %v5097
        %v5235 = vadd.f32 %v4734, %v5099
        %v5236 = vadd.f32 %v4736, %v5101
        %v5237 = vadd.f32 %v4740, %v5105
        %v5238 = vadd.f32 %v4742, %v5107
        %v5239 = vadd.f32 %v4744, %v5109
        %v5240 = vadd.f32 %v4746, %v5111
        %v5241 = vmax.f32 %v5113, 0.0
        %v5242 = vmax.f32 %v5114, 0.0
        %v5243 = vmax.f32 %v5115, 0.0
        %v5244 = vmax.f32 %v5116, 0.0
        %v5245 = vmax.f32 %v5117, 0.0
        %v5246 = vmax.f32 %v5118, 0.0
        %v5247 = vmax.f32 %v5119, 0.0
        %v5248 = vmax.f32 %v5120, 0.0
        %v5249 = vmax.f32 %v5121, 0.0
        %v5250 = vmax.f32 %v5122, 0.0
        %v5251 = vmax.f32 %v5123, 0.0
        %v5252 = vmax.f32 %v5124, 0.0
        %v5253 = vmax.f32 %v5125, 0.0
        %v5254 = vmax.f32 %v5126, 0.0
        %v5255 = vmax.f32 %v5127, 0.0
        %v5256 = vmax.f32 %v5128, 0.0
        %v5257 = vmax.f32 %v5129, 0.0
        %v5258 = vmax.f32 %v5130, 0.0
        %v5259 = vmax.f32 %v5131, 0.0
        %v5260 = vmax.f32 %v5132, 0.0
        %v5261 = vmax.f32 %v5133, 0.0
        %v5262 = vmax.f32 %v5134, 0.0
        %v5263 = vmax.f32 %v5135, 0.0
        %v5264 = vmax.f32 %v5136, 0.0
        %v5265 = vmax.f32 %v5137, 0.0
        %v5266 = vmax.f32 %v5138, 0.0
        %v5267 = vmax.f32 %v5139, 0.0
        %v5268 = vmax.f32 %v5140, 0.0
        %v5269 = vmax.f32 %v5141, 0.0
        %v5270 = vmax.f32 %v5142, 0.0
        %v5271 = vmax.f32 %v5143, 0.0
        %v5272 = vmax.f32 %v5144, 0.0
        %v5273 = vmax.f32 %v5145, 0.0
        %v5274 = vmax.f32 %v5146, 0.0
        %v5275 = vmax.f32 %v5147, 0.0
        %v5276 = vmax.f32 %v5148, 0.0
        %v5277 = vmax.f32 %v5149, 0.0
        %v5278 = vmax.f32 %v5150, 0.0
        %v5279 = vmax.f32 %v5151, 0.0
        %v5280 = vmax.f32 %v5152, 0.0
        %v5281 = vmax.f32 %v5153, 0.0
        %v5282 = vmax.f32 %v5154, 0.0
        %v5283 = vmax.f32 %v5155, 0.0
        %v5284 = vmax.f32 %v5156, 0.0
        %v5285 = vmax.f32 %v5157, 0.0
        %v5286 = vmax.f32 %v5158, 0.0
        %v5287 = vmax.f32 %v5159, 0.0
        %v5288 = vmax.f32 %v5160, 0.0
        %v5289 = vmax.f32 %v5161, 0.0
        %v5290 = vmax.f32 %v5162, 0.0
        %v5291 = vmax.f32 %v5163, 0.0
        %v5292 = vmax.f32 %v5164, 0.0
        %v5293 = vmax.f32 %v5165, 0.0
        %v5294 = vmax.f32 %v5166, 0.0
        %v5295 = vmax.f32 %v5167, 0.0
        %v5296 = vmax.f32 %v5168, 0.0
        %v5297 = vmax.f32 %v5169, 0.0
        %v5298 = vmax.f32 %v5170, 0.0
        %v5299 = vmax.f32 %v5171, 0.0
        %v5300 = vmax.f32 %v5172, 0.0
        %v5301 = vmax.f32 %v5173, 0.0
        %v5302 = vmax.f32 %v5174, 0.0
        %v5303 = vmax.f32 %v5175, 0.0
        %v5304 = vmax.f32 %v5176, 0.0
        %v5305 = vmax.f32 %v5177, 0.0
        %v5306 = vmax.f32 %v5178, 0.0
        %v5307 = vmax.f32 %v5179, 0.0
        %v5308 = vmax.f32 %v5180, 0.0
        %v5309 = vmax.f32 %v5181, 0.0
        %v5310 = vmax.f32 %v5182, 0.0
        %v5311 = vmax.f32 %v5183, 0.0
        %v5312 = vmax.f32 %v5184, 0.0
        %v5313 = vmax.f32 %v5185, 0.0
        %v5314 = vmax.f32 %v5186, 0.0
        %v5315 = vmax.f32 %v5187, 0.0
        %v5316 = vmax.f32 %v5188, 0.0
        %v5317 = vmax.f32 %v5189, 0.0
        %v5318 = vmax.f32 %v5190, 0.0
        %v5319 = vmax.f32 %v5191, 0.0
        %v5320 = vmax.f32 %v5192, 0.0
        %v5321 = vmax.f32 %v5193, 0.0
        %v5322 = vmax.f32 %v5194, 0.0
        %v5323 = vmax.f32 %v5195, 0.0
        %v5324 = vmax.f32 %v5196, 0.0
        %v5325 = vmax.f32 %v5197, 0.0
        %v5326 = vmax.f32 %v5198, 0.0
        %v5327 = vmax.f32 %v5199, 0.0
        %v5328 = vmax.f32 %v5200, 0.0
        %v5329 = vmax.f32 %v5201, 0.0
        %v5330 = vmax.f32 %v5202, 0.0
        %v5331 = vmax.f32 %v5203, 0.0
        %v5332 = vmax.f32 %v5204, 0.0
        %v5333 = vmax.f32 %v5205, 0.0
        %v5334 = vmax.f32 %v5206, 0.0
        %v5335 = vmax.f32 %v5207, 0.0
        %v5336 = vmax.f32 %v5208, 0.0
        %v5337 = vmax.f32 %v5209, 0.0
        %v5338 = vmax.f32 %v5210, 0.0
        %v5339 = vmax.f32 %v5211, 0.0
        %v5340 = vmax.f32 %v5212, 0.0
        %v5341 = vmax.f32 %v5213, 0.0
        %v5342 = vmax.f32 %v5214, 0.0
        %v5343 = vmax.f32 %v5215, 0.0
        %v5344 = vmax.f32 %v5216, 0.0
        %v5345 = vmax.f32 %v5217, 0.0
        %v5346 = vmax.f32 %v5218, 0.0
        %v5347 = vmax.f32 %v5219, 0.0
        %v5348 = vmax.f32 %v5220, 0.0
        %v5349 = vmax.f32 %v5221, 0.0
        %v5350 = vmax.f32 %v5222, 0.0
        %v5351 = vmax.f32 %v5223, 0.0
        %v5352 = vmax.f32 %v5224, 0.0
        %v5353 = vmax.f32 %v5225, 0.0
        %v5354 = vmax.f32 %v5226, 0.0
        %v5355 = vmax.f32 %v5227, 0.0
        %v5356 = vmax.f32 %v5228, 0.0
        %v5357 = vmax.f32 %v5229, 0.0
        %v5358 = vmax.f32 %v5230, 0.0
        %v5359 = vmax.f32 %v5231, 0.0
        %v5360 = vmax.f32 %v5232, 0.0
        %v5361 = vmax.f32 %v5233, 0.0
        %v5362 = vmax.f32 %v5234, 0.0
        %v5363 = vmax.f32 %v5235, 0.0
        %v5364 = vmax.f32 %v5236, 0.0
        %v5365 = vmax.f32 %v5237, 0.0
        %v5366 = vmax.f32 %v5238, 0.0
        %v5367 = vmax.f32 %v5239, 0.0
        %v5368 = vmax.f32 %v5240, 0.0
        %v5369 = vpack.c.bf16 %v5243, %v5241
        %v5370 = vpack.c.bf16 %v5244, %v5242
        %v5371 = vpack.c.bf16 %v5247, %v5245
        %v5372 = vpack.c.bf16 %v5248, %v5246
        %v5373 = vpack.c.bf16 %v5251, %v5249
        %v5374 = vpack.c.bf16 %v5252, %v5250
        %v5375 = vpack.c.bf16 %v5255, %v5253
        %v5376 = vpack.c.bf16 %v5256, %v5254
        %v5377 = vpack.c.bf16 %v5259, %v5257
        %v5378 = vpack.c.bf16 %v5260, %v5258
        %v5379 = vpack.c.bf16 %v5263, %v5261
        %v5380 = vpack.c.bf16 %v5264, %v5262
        %v5381 = vpack.c.bf16 %v5267, %v5265
        %v5382 = vpack.c.bf16 %v5268, %v5266
        %v5383 = vpack.c.bf16 %v5271, %v5269
        %v5384 = vpack.c.bf16 %v5272, %v5270
        %v5385 = vpack.c.bf16 %v5275, %v5273
        %v5386 = vpack.c.bf16 %v5276, %v5274
        %v5387 = vpack.c.bf16 %v5279, %v5277
        %v5388 = vpack.c.bf16 %v5280, %v5278
        %v5389 = vpack.c.bf16 %v5283, %v5281
        %v5390 = vpack.c.bf16 %v5284, %v5282
        %v5391 = vpack.c.bf16 %v5287, %v5285
        %v5392 = vpack.c.bf16 %v5288, %v5286
        %v5393 = vpack.c.bf16 %v5291, %v5289
        %v5394 = vpack.c.bf16 %v5292, %v5290
        %v5395 = vpack.c.bf16 %v5295, %v5293
        %v5396 = vpack.c.bf16 %v5296, %v5294
        %v5397 = vpack.c.bf16 %v5299, %v5297
        %v5398 = vpack.c.bf16 %v5300, %v5298
        %v5399 = vpack.c.bf16 %v5303, %v5301
        %v5400 = vpack.c.bf16 %v5304, %v5302
        %v5401 = vpack.c.bf16 %v5307, %v5305
        %v5402 = vpack.c.bf16 %v5308, %v5306
        %v5403 = vpack.c.bf16 %v5311, %v5309
        %v5404 = vpack.c.bf16 %v5312, %v5310
        %v5405 = vpack.c.bf16 %v5315, %v5313
        %v5406 = vpack.c.bf16 %v5316, %v5314
        %v5407 = vpack.c.bf16 %v5319, %v5317
        %v5408 = vpack.c.bf16 %v5320, %v5318
        %v5409 = vpack.c.bf16 %v5323, %v5321
        %v5410 = vpack.c.bf16 %v5324, %v5322
        %v5411 = vpack.c.bf16 %v5327, %v5325
        %v5412 = vpack.c.bf16 %v5328, %v5326
        %v5413 = vpack.c.bf16 %v5331, %v5329
        %v5414 = vpack.c.bf16 %v5332, %v5330
        %v5415 = vpack.c.bf16 %v5335, %v5333
        %v5416 = vpack.c.bf16 %v5336, %v5334
        %v5417 = vpack.c.bf16 %v5339, %v5337
        %v5418 = vpack.c.bf16 %v5340, %v5338
        %v5419 = vpack.c.bf16 %v5343, %v5341
        %v5420 = vpack.c.bf16 %v5344, %v5342
        %v5421 = vpack.c.bf16 %v5347, %v5345
        %v5422 = vpack.c.bf16 %v5348, %v5346
        %v5423 = vpack.c.bf16 %v5351, %v5349
        %v5424 = vpack.c.bf16 %v5352, %v5350
        %v5425 = vpack.c.bf16 %v5355, %v5353
        %v5426 = vpack.c.bf16 %v5356, %v5354
        %v5427 = vpack.c.bf16 %v5359, %v5357
        %v5428 = vpack.c.bf16 %v5360, %v5358
        %v5429 = vpack.c.bf16 %v5363, %v5361
        %v5430 = vpack.c.bf16 %v5364, %v5362
        %v5431 = vpack.c.bf16 %v5367, %v5365
        %v5432 = vpack.c.bf16 %v5368, %v5366
        %s5433 = scalar_lea.vmem [#allocation2], 1280
        %v5434 = vld [vmem:[%s5433] sm:$0xff]
        %v5435 = vld [vmem:[%s5433 + $0x8] sm:$0xff]
        %v5436 = vld [vmem:[%s5433 + $0x10] sm:$0xff]
        %v5437 = vld [vmem:[%s5433 + $0x18] sm:$0xff]
        %v5438 = vld [vmem:[%s5433 + $0x20] sm:$0xff]
        %v5439 = vld [vmem:[%s5433 + $0x28] sm:$0xff]
        %v5440 = vld [vmem:[%s5433 + $0x30] sm:$0xff]
        %v5441 = vld [vmem:[%s5433 + $0x38] sm:$0xff]
        %v5442 = vld [vmem:[%s5433 + $0x40] sm:$0xff]
        %v5443 = vld [vmem:[%s5433 + $0x48] sm:$0xff]
        %v5444 = vld [vmem:[%s5433 + $0x50] sm:$0xff]
        %v5445 = vld [vmem:[%s5433 + $0x58] sm:$0xff]
        %v5446 = vld [vmem:[%s5433 + $0x60] sm:$0xff]
        %v5447 = vld [vmem:[%s5433 + $0x68] sm:$0xff]
        %v5448 = vld [vmem:[%s5433 + $0x70] sm:$0xff]
        %v5449 = vld [vmem:[%s5433 + $0x78] sm:$0xff]
        %v5450 = vld [vmem:[%s5433 + $0x80] sm:$0xff]
        %v5451 = vld [vmem:[%s5433 + $0x88] sm:$0xff]
        %v5452 = vld [vmem:[%s5433 + $0x90] sm:$0xff]
        %v5453 = vld [vmem:[%s5433 + $0x98] sm:$0xff]
        %v5454 = vld [vmem:[%s5433 + $0xa0] sm:$0xff]
        %v5455 = vld [vmem:[%s5433 + $0xa8] sm:$0xff]
        %v5456 = vld [vmem:[%s5433 + $0xb0] sm:$0xff]
        %v5457 = vld [vmem:[%s5433 + $0xb8] sm:$0xff]
        %v5458 = vld [vmem:[%s5433 + $0xc0] sm:$0xff]
        %v5459 = vld [vmem:[%s5433 + $0xc8] sm:$0xff]
        %v5460 = vld [vmem:[%s5433 + $0xd0] sm:$0xff]
        %v5461 = vld [vmem:[%s5433 + $0xd8] sm:$0xff]
        %v5462 = vld [vmem:[%s5433 + $0xe0] sm:$0xff]
        %v5463 = vld [vmem:[%s5433 + $0xe8] sm:$0xff]
        %v5464 = vld [vmem:[%s5433 + $0xf0] sm:$0xff]
        %v5465 = vld [vmem:[%s5433 + $0xf8] sm:$0xff]
        %s5466 = scalar_lea.vmem %s4, 6
        %v5467 = vld [vmem:[%s5466] ss:$8 sm:$0x3]
        %v5469 = vlaneseq
        %v5470 = vshrl.u32 %v5469, 7
        %v5471 = vsub.s32 0, %v5470
        %v5472 = vrot.slane %v5467, %v5471
        %v5473 = vlaneseq
        %v5474 = vshrl.u32 %v5473, 7
        %v5475 = vsub.s32 1, %v5474
        %v5476 = vrot.slane %v5467, %v5475
        %v5511 = vunpack.c.l.b16 %v5434
        %v5512 = vunpack.c.h.b16 %v5434
        %v5513 = vunpack.c.l.b16 %v5435
        %v5514 = vunpack.c.h.b16 %v5435
        %v5515 = vunpack.c.l.b16 %v5436
        %v5516 = vunpack.c.h.b16 %v5436
        %v5517 = vunpack.c.l.b16 %v5437
        %v5518 = vunpack.c.h.b16 %v5437
        %v5519 = vunpack.c.l.b16 %v5438
        %v5520 = vunpack.c.h.b16 %v5438
        %v5521 = vunpack.c.l.b16 %v5439
        %v5522 = vunpack.c.h.b16 %v5439
        %v5523 = vunpack.c.l.b16 %v5440
        %v5524 = vunpack.c.h.b16 %v5440
        %v5525 = vunpack.c.l.b16 %v5441
        %v5526 = vunpack.c.h.b16 %v5441
        %v5527 = vunpack.c.l.b16 %v5442
        %v5528 = vunpack.c.h.b16 %v5442
        %v5529 = vunpack.c.l.b16 %v5443
        %v5530 = vunpack.c.h.b16 %v5443
        %v5531 = vunpack.c.l.b16 %v5444
        %v5532 = vunpack.c.h.b16 %v5444
        %v5533 = vunpack.c.l.b16 %v5445
        %v5534 = vunpack.c.h.b16 %v5445
        %v5535 = vunpack.c.l.b16 %v5446
        %v5536 = vunpack.c.h.b16 %v5446
        %v5537 = vunpack.c.l.b16 %v5447
        %v5538 = vunpack.c.h.b16 %v5447
        %v5539 = vunpack.c.l.b16 %v5448
        %v5540 = vunpack.c.h.b16 %v5448
        %v5541 = vunpack.c.l.b16 %v5449
        %v5542 = vunpack.c.h.b16 %v5449
        %v5543 = vunpack.c.l.b16 %v5450
        %v5544 = vunpack.c.h.b16 %v5450
        %v5545 = vunpack.c.l.b16 %v5451
        %v5546 = vunpack.c.h.b16 %v5451
        %v5547 = vunpack.c.l.b16 %v5452
        %v5548 = vunpack.c.h.b16 %v5452
        %v5549 = vunpack.c.l.b16 %v5453
        %v5550 = vunpack.c.h.b16 %v5453
        %v5551 = vunpack.c.l.b16 %v5454
        %v5552 = vunpack.c.h.b16 %v5454
        %v5553 = vunpack.c.l.b16 %v5455
        %v5554 = vunpack.c.h.b16 %v5455
        %v5555 = vunpack.c.l.b16 %v5456
        %v5556 = vunpack.c.h.b16 %v5456
        %v5557 = vunpack.c.l.b16 %v5457
        %v5558 = vunpack.c.h.b16 %v5457
        %v5559 = vunpack.c.l.b16 %v5458
        %v5560 = vunpack.c.h.b16 %v5458
        %v5561 = vunpack.c.l.b16 %v5459
        %v5562 = vunpack.c.h.b16 %v5459
        %v5563 = vunpack.c.l.b16 %v5460
        %v5564 = vunpack.c.h.b16 %v5460
        %v5565 = vunpack.c.l.b16 %v5461
        %v5566 = vunpack.c.h.b16 %v5461
        %v5567 = vunpack.c.l.b16 %v5462
        %v5568 = vunpack.c.h.b16 %v5462
        %v5569 = vunpack.c.l.b16 %v5463
        %v5570 = vunpack.c.h.b16 %v5463
        %v5571 = vunpack.c.l.b16 %v5464
        %v5572 = vunpack.c.h.b16 %v5464
        %v5573 = vunpack.c.l.b16 %v5465
        %v5574 = vunpack.c.h.b16 %v5465
        %v5575 = vpack.c.b16 %v5513, %v5511
        %v5576 = vpack.c.b16 %v5514, %v5512
        %v5577 = vpack.c.b16 %v5517, %v5515
        %v5578 = vpack.c.b16 %v5518, %v5516
        %v5579 = vpack.c.b16 %v5521, %v5519
        %v5580 = vpack.c.b16 %v5522, %v5520
        %v5581 = vpack.c.b16 %v5525, %v5523
        %v5582 = vpack.c.b16 %v5526, %v5524
        %v5583 = vpack.c.b16 %v5529, %v5527
        %v5584 = vpack.c.b16 %v5530, %v5528
        %v5585 = vpack.c.b16 %v5533, %v5531
        %v5586 = vpack.c.b16 %v5534, %v5532
        %v5587 = vpack.c.b16 %v5537, %v5535
        %v5588 = vpack.c.b16 %v5538, %v5536
        %v5589 = vpack.c.b16 %v5541, %v5539
        %v5590 = vpack.c.b16 %v5542, %v5540
        %v5591 = vpack.c.b16 %v5545, %v5543
        %v5592 = vpack.c.b16 %v5546, %v5544
        %v5593 = vpack.c.b16 %v5549, %v5547
        %v5594 = vpack.c.b16 %v5550, %v5548
        %v5595 = vpack.c.b16 %v5553, %v5551
        %v5596 = vpack.c.b16 %v5554, %v5552
        %v5597 = vpack.c.b16 %v5557, %v5555
        %v5598 = vpack.c.b16 %v5558, %v5556
        %v5599 = vpack.c.b16 %v5561, %v5559
        %v5600 = vpack.c.b16 %v5562, %v5560
        %v5601 = vpack.c.b16 %v5565, %v5563
        %v5602 = vpack.c.b16 %v5566, %v5564
        %v5603 = vpack.c.b16 %v5569, %v5567
        %v5604 = vpack.c.b16 %v5570, %v5568
        %v5605 = vpack.c.b16 %v5573, %v5571
        %v5606 = vpack.c.b16 %v5574, %v5572
        %5639 = vmatprep.subr.bf16.mxu0 %v5576
        %5640 = vmatpush1.bf16.msra.mxu0 %v5575
        %5641 = vmatprep.subr.bf16.mxu0 %v5578
        %5642 = vmatpush1.bf16.msra.mxu0 %v5577
        %5643 = vmatprep.subr.bf16.mxu0 %v5580
        %5644 = vmatpush1.bf16.msra.mxu0 %v5579
        %5645 = vmatprep.subr.bf16.mxu0 %v5582
        %5646 = vmatpush1.bf16.msra.mxu0 %v5581
        %5647 = vmatprep.subr.bf16.mxu0 %v5584
        %5648 = vmatpush1.bf16.msra.mxu0 %v5583
        %5649 = vmatprep.subr.bf16.mxu0 %v5586
        %5650 = vmatpush1.bf16.msra.mxu0 %v5585
        %5651 = vmatprep.subr.bf16.mxu0 %v5588
        %5652 = vmatpush1.bf16.msra.mxu0 %v5587
        %5653 = vmatprep.subr.bf16.mxu0 %v5590
        %5654 = vmatpush1.bf16.msra.mxu0 %v5589
        %5655 = vmatprep.subr.bf16.mxu0 %v5592
        %5656 = vmatpush1.bf16.msra.mxu0 %v5591
        %5657 = vmatprep.subr.bf16.mxu0 %v5594
        %5658 = vmatpush1.bf16.msra.mxu0 %v5593
        %5659 = vmatprep.subr.bf16.mxu0 %v5596
        %5660 = vmatpush1.bf16.msra.mxu0 %v5595
        %5661 = vmatprep.subr.bf16.mxu0 %v5598
        %5662 = vmatpush1.bf16.msra.mxu0 %v5597
        %5663 = vmatprep.subr.bf16.mxu0 %v5600
        %5664 = vmatpush1.bf16.msra.mxu0 %v5599
        %5665 = vmatprep.subr.bf16.mxu0 %v5602
        %5666 = vmatpush1.bf16.msra.mxu0 %v5601
        %5667 = vmatprep.subr.bf16.mxu0 %v5604
        %5668 = vmatpush1.bf16.msra.mxu0 %v5603
        %5669 = vmatprep.subr.bf16.mxu0 %v5606
        %5670 = vmatpush1.bf16.msra.mxu0 %v5605
        %5671 = vmatprep.mubr.bf16.mxu0 %v5370
        %5672 = vmatmul.mubr.bf16.gmra.mrb[0].mxu0 %v5369
        %v5673 = vpop.f32.mrb[0].mxu0
        %v5674 = vadd.f32 %v5472, %v5673
        %v5675 = vpop.f32.mrb[0].mxu0
        %v5676 = vadd.f32 %v5476, %v5675
        %v5677 = vpop.f32.mrb[0].mxu0
        %v5678 = vadd.f32 %v5472, %v5677
        %v5679 = vpop.f32.mrb[0].mxu0
        %v5680 = vadd.f32 %v5476, %v5679
        %5681 = vmatprep.mubr.bf16.mxu0 %v5372
        %5682 = vmatmul.mubr.bf16.gmra.mrb[0].mxu0 %v5371
        %v5683 = vpop.f32.mrb[0].mxu0
        %v5684 = vadd.f32 %v5472, %v5683
        %v5685 = vpop.f32.mrb[0].mxu0
        %v5686 = vadd.f32 %v5476, %v5685
        %v5687 = vpop.f32.mrb[0].mxu0
        %v5688 = vadd.f32 %v5472, %v5687
        %v5689 = vpop.f32.mrb[0].mxu0
        %v5690 = vadd.f32 %v5476, %v5689
        %5691 = vmatprep.mubr.bf16.mxu0 %v5374
        %5692 = vmatmul.mubr.bf16.gmra.mrb[0].mxu0 %v5373
        %v5693 = vpop.f32.mrb[0].mxu0
        %v5694 = vadd.f32 %v5472, %v5693
        %v5695 = vpop.f32.mrb[0].mxu0
        %v5696 = vadd.f32 %v5476, %v5695
        %v5697 = vpop.f32.mrb[0].mxu0
        %v5698 = vadd.f32 %v5472, %v5697
        %v5699 = vpop.f32.mrb[0].mxu0
        %v5700 = vadd.f32 %v5476, %v5699
        %5701 = vmatprep.mubr.bf16.mxu0 %v5376
        %5702 = vmatmul.mubr.bf16.gmra.mrb[0].mxu0 %v5375
        %v5703 = vpop.f32.mrb[0].mxu0
        %v5704 = vadd.f32 %v5472, %v5703
        %v5705 = vpop.f32.mrb[0].mxu0
        %v5706 = vadd.f32 %v5476, %v5705
        %v5707 = vpop.f32.mrb[0].mxu0
        %v5708 = vadd.f32 %v5472, %v5707
        %v5709 = vpop.f32.mrb[0].mxu0
        %v5710 = vadd.f32 %v5476, %v5709
        %5711 = vmatprep.mubr.bf16.mxu0 %v5378
        %5712 = vmatmul.mubr.bf16.gmra.mrb[0].mxu0 %v5377
        %v5713 = vpop.f32.mrb[0].mxu0
        %v5714 = vadd.f32 %v5472, %v5713
        %v5715 = vpop.f32.mrb[0].mxu0
        %v5716 = vadd.f32 %v5476, %v5715
        %v5717 = vpop.f32.mrb[0].mxu0
        %v5718 = vadd.f32 %v5472, %v5717
        %v5719 = vpop.f32.mrb[0].mxu0
        %v5720 = vadd.f32 %v5476, %v5719
        %5721 = vmatprep.mubr.bf16.mxu0 %v5380
        %5722 = vmatmul.mubr.bf16.gmra.mrb[0].mxu0 %v5379
        %v5723 = vpop.f32.mrb[0].mxu0
        %v5724 = vadd.f32 %v5472, %v5723
        %v5725 = vpop.f32.mrb[0].mxu0
        %v5726 = vadd.f32 %v5476, %v5725
        %v5727 = vpop.f32.mrb[0].mxu0
        %v5728 = vadd.f32 %v5472, %v5727
        %v5729 = vpop.f32.mrb[0].mxu0
        %v5730 = vadd.f32 %v5476, %v5729
        %5731 = vmatprep.mubr.bf16.mxu0 %v5382
        %5732 = vmatmul.mubr.bf16.gmra.mrb[0].mxu0 %v5381
        %v5733 = vpop.f32.mrb[0].mxu0
        %v5734 = vadd.f32 %v5472, %v5733
        %v5735 = vpop.f32.mrb[0].mxu0
        %v5736 = vadd.f32 %v5476, %v5735
        %v5737 = vpop.f32.mrb[0].mxu0
        %v5738 = vadd.f32 %v5472, %v5737
        %v5739 = vpop.f32.mrb[0].mxu0
        %v5740 = vadd.f32 %v5476, %v5739
        %5741 = vmatprep.mubr.bf16.mxu0 %v5384
        %5742 = vmatmul.mubr.bf16.gmra.mrb[0].mxu0 %v5383
        %v5743 = vpop.f32.mrb[0].mxu0
        %v5744 = vadd.f32 %v5472, %v5743
        %v5745 = vpop.f32.mrb[0].mxu0
        %v5746 = vadd.f32 %v5476, %v5745
        %v5747 = vpop.f32.mrb[0].mxu0
        %v5748 = vadd.f32 %v5472, %v5747
        %v5749 = vpop.f32.mrb[0].mxu0
        %v5750 = vadd.f32 %v5476, %v5749
        %5751 = vmatprep.mubr.bf16.mxu0 %v5386
        %5752 = vmatmul.mubr.bf16.gmra.mrb[0].mxu0 %v5385
        %v5753 = vpop.f32.mrb[0].mxu0
        %v5754 = vadd.f32 %v5472, %v5753
        %v5755 = vpop.f32.mrb[0].mxu0
        %v5756 = vadd.f32 %v5476, %v5755
        %v5757 = vpop.f32.mrb[0].mxu0
        %v5758 = vadd.f32 %v5472, %v5757
        %v5759 = vpop.f32.mrb[0].mxu0
        %v5760 = vadd.f32 %v5476, %v5759
        %5761 = vmatprep.mubr.bf16.mxu0 %v5388
        %5762 = vmatmul.mubr.bf16.gmra.mrb[0].mxu0 %v5387
        %v5763 = vpop.f32.mrb[0].mxu0
        %v5764 = vadd.f32 %v5472, %v5763
        %v5765 = vpop.f32.mrb[0].mxu0
        %v5766 = vadd.f32 %v5476, %v5765
        %v5767 = vpop.f32.mrb[0].mxu0
        %v5768 = vadd.f32 %v5472, %v5767
        %v5769 = vpop.f32.mrb[0].mxu0
        %v5770 = vadd.f32 %v5476, %v5769
        %5771 = vmatprep.mubr.bf16.mxu0 %v5390
        %5772 = vmatmul.mubr.bf16.gmra.mrb[0].mxu0 %v5389
        %v5773 = vpop.f32.mrb[0].mxu0
        %v5774 = vadd.f32 %v5472, %v5773
        %v5775 = vpop.f32.mrb[0].mxu0
        %v5776 = vadd.f32 %v5476, %v5775
        %v5777 = vpop.f32.mrb[0].mxu0
        %v5778 = vadd.f32 %v5472, %v5777
        %v5779 = vpop.f32.mrb[0].mxu0
        %v5780 = vadd.f32 %v5476, %v5779
        %5781 = vmatprep.mubr.bf16.mxu0 %v5392
        %5782 = vmatmul.mubr.bf16.gmra.mrb[0].mxu0 %v5391
        %v5783 = vpop.f32.mrb[0].mxu0
        %v5784 = vadd.f32 %v5472, %v5783
        %v5785 = vpop.f32.mrb[0].mxu0
        %v5786 = vadd.f32 %v5476, %v5785
        %v5787 = vpop.f32.mrb[0].mxu0
        %v5788 = vadd.f32 %v5472, %v5787
        %v5789 = vpop.f32.mrb[0].mxu0
        %v5790 = vadd.f32 %v5476, %v5789
        %5791 = vmatprep.mubr.bf16.mxu0 %v5394
        %5792 = vmatmul.mubr.bf16.gmra.mrb[0].mxu0 %v5393
        %v5793 = vpop.f32.mrb[0].mxu0
        %v5794 = vadd.f32 %v5472, %v5793
        %v5795 = vpop.f32.mrb[0].mxu0
        %v5796 = vadd.f32 %v5476, %v5795
        %v5797 = vpop.f32.mrb[0].mxu0
        %v5798 = vadd.f32 %v5472, %v5797
        %v5799 = vpop.f32.mrb[0].mxu0
        %v5800 = vadd.f32 %v5476, %v5799
        %5801 = vmatprep.mubr.bf16.mxu0 %v5396
        %5802 = vmatmul.mubr.bf16.gmra.mrb[0].mxu0 %v5395
        %v5803 = vpop.f32.mrb[0].mxu0
        %v5804 = vadd.f32 %v5472, %v5803
        %v5805 = vpop.f32.mrb[0].mxu0
        %v5806 = vadd.f32 %v5476, %v5805
        %v5807 = vpop.f32.mrb[0].mxu0
        %v5808 = vadd.f32 %v5472, %v5807
        %v5809 = vpop.f32.mrb[0].mxu0
        %v5810 = vadd.f32 %v5476, %v5809
        %5811 = vmatprep.mubr.bf16.mxu0 %v5398
        %5812 = vmatmul.mubr.bf16.gmra.mrb[0].mxu0 %v5397
        %v5813 = vpop.f32.mrb[0].mxu0
        %v5814 = vadd.f32 %v5472, %v5813
        %v5815 = vpop.f32.mrb[0].mxu0
        %v5816 = vadd.f32 %v5476, %v5815
        %v5817 = vpop.f32.mrb[0].mxu0
        %v5818 = vadd.f32 %v5472, %v5817
        %v5819 = vpop.f32.mrb[0].mxu0
        %v5820 = vadd.f32 %v5476, %v5819
        %5821 = vmatprep.mubr.bf16.mxu0 %v5400
        %5822 = vmatmul.mubr.bf16.gmra.mrb[0].mxu0 %v5399
        %v5823 = vpop.f32.mrb[0].mxu0
        %v5824 = vadd.f32 %v5472, %v5823
        %v5825 = vpop.f32.mrb[0].mxu0
        %v5826 = vadd.f32 %v5476, %v5825
        %v5827 = vpop.f32.mrb[0].mxu0
        %v5828 = vadd.f32 %v5472, %v5827
        %v5829 = vpop.f32.mrb[0].mxu0
        %v5830 = vadd.f32 %v5476, %v5829
        %5831 = vmatprep.mubr.bf16.mxu0 %v5402
        %5832 = vmatmul.mubr.bf16.gmra.mrb[0].mxu0 %v5401
        %v5833 = vpop.f32.mrb[0].mxu0
        %v5834 = vadd.f32 %v5472, %v5833
        %v5835 = vpop.f32.mrb[0].mxu0
        %v5836 = vadd.f32 %v5476, %v5835
        %v5837 = vpop.f32.mrb[0].mxu0
        %v5838 = vadd.f32 %v5472, %v5837
        %v5839 = vpop.f32.mrb[0].mxu0
        %v5840 = vadd.f32 %v5476, %v5839
        %5841 = vmatprep.mubr.bf16.mxu0 %v5404
        %5842 = vmatmul.mubr.bf16.gmra.mrb[0].mxu0 %v5403
        %v5843 = vpop.f32.mrb[0].mxu0
        %v5844 = vadd.f32 %v5472, %v5843
        %v5845 = vpop.f32.mrb[0].mxu0
        %v5846 = vadd.f32 %v5476, %v5845
        %v5847 = vpop.f32.mrb[0].mxu0
        %v5848 = vadd.f32 %v5472, %v5847
        %v5849 = vpop.f32.mrb[0].mxu0
        %v5850 = vadd.f32 %v5476, %v5849
        %5851 = vmatprep.mubr.bf16.mxu0 %v5406
        %5852 = vmatmul.mubr.bf16.gmra.mrb[0].mxu0 %v5405
        %v5853 = vpop.f32.mrb[0].mxu0
        %v5854 = vadd.f32 %v5472, %v5853
        %v5855 = vpop.f32.mrb[0].mxu0
        %v5856 = vadd.f32 %v5476, %v5855
        %v5857 = vpop.f32.mrb[0].mxu0
        %v5858 = vadd.f32 %v5472, %v5857
        %v5859 = vpop.f32.mrb[0].mxu0
        %v5860 = vadd.f32 %v5476, %v5859
        %5861 = vmatprep.mubr.bf16.mxu0 %v5408
        %5862 = vmatmul.mubr.bf16.gmra.mrb[0].mxu0 %v5407
        %v5863 = vpop.f32.mrb[0].mxu0
        %v5864 = vadd.f32 %v5472, %v5863
        %v5865 = vpop.f32.mrb[0].mxu0
        %v5866 = vadd.f32 %v5476, %v5865
        %v5867 = vpop.f32.mrb[0].mxu0
        %v5868 = vadd.f32 %v5472, %v5867
        %v5869 = vpop.f32.mrb[0].mxu0
        %v5870 = vadd.f32 %v5476, %v5869
        %5871 = vmatprep.mubr.bf16.mxu0 %v5410
        %5872 = vmatmul.mubr.bf16.gmra.mrb[0].mxu0 %v5409
        %v5873 = vpop.f32.mrb[0].mxu0
        %v5874 = vadd.f32 %v5472, %v5873
        %v5875 = vpop.f32.mrb[0].mxu0
        %v5876 = vadd.f32 %v5476, %v5875
        %v5877 = vpop.f32.mrb[0].mxu0
        %v5878 = vadd.f32 %v5472, %v5877
        %v5879 = vpop.f32.mrb[0].mxu0
        %v5880 = vadd.f32 %v5476, %v5879
        %5881 = vmatprep.mubr.bf16.mxu0 %v5412
        %5882 = vmatmul.mubr.bf16.gmra.mrb[0].mxu0 %v5411
        %v5883 = vpop.f32.mrb[0].mxu0
        %v5884 = vadd.f32 %v5472, %v5883
        %v5885 = vpop.f32.mrb[0].mxu0
        %v5886 = vadd.f32 %v5476, %v5885
        %v5887 = vpop.f32.mrb[0].mxu0
        %v5888 = vadd.f32 %v5472, %v5887
        %v5889 = vpop.f32.mrb[0].mxu0
        %v5890 = vadd.f32 %v5476, %v5889
        %5891 = vmatprep.mubr.bf16.mxu0 %v5414
        %5892 = vmatmul.mubr.bf16.gmra.mrb[0].mxu0 %v5413
        %v5893 = vpop.f32.mrb[0].mxu0
        %v5894 = vadd.f32 %v5472, %v5893
        %v5895 = vpop.f32.mrb[0].mxu0
        %v5896 = vadd.f32 %v5476, %v5895
        %v5897 = vpop.f32.mrb[0].mxu0
        %v5898 = vadd.f32 %v5472, %v5897
        %v5899 = vpop.f32.mrb[0].mxu0
        %v5900 = vadd.f32 %v5476, %v5899
        %5901 = vmatprep.mubr.bf16.mxu0 %v5416
        %5902 = vmatmul.mubr.bf16.gmra.mrb[0].mxu0 %v5415
        %v5903 = vpop.f32.mrb[0].mxu0
        %v5904 = vadd.f32 %v5472, %v5903
        %v5905 = vpop.f32.mrb[0].mxu0
        %v5906 = vadd.f32 %v5476, %v5905
        %v5907 = vpop.f32.mrb[0].mxu0
        %v5908 = vadd.f32 %v5472, %v5907
        %v5909 = vpop.f32.mrb[0].mxu0
        %v5910 = vadd.f32 %v5476, %v5909
        %5911 = vmatprep.mubr.bf16.mxu0 %v5418
        %5912 = vmatmul.mubr.bf16.gmra.mrb[0].mxu0 %v5417
        %v5913 = vpop.f32.mrb[0].mxu0
        %v5914 = vadd.f32 %v5472, %v5913
        %v5915 = vpop.f32.mrb[0].mxu0
        %v5916 = vadd.f32 %v5476, %v5915
        %v5917 = vpop.f32.mrb[0].mxu0
        %v5918 = vadd.f32 %v5472, %v5917
        %v5919 = vpop.f32.mrb[0].mxu0
        %v5920 = vadd.f32 %v5476, %v5919
        %5921 = vmatprep.mubr.bf16.mxu0 %v5420
        %5922 = vmatmul.mubr.bf16.gmra.mrb[0].mxu0 %v5419
        %v5923 = vpop.f32.mrb[0].mxu0
        %v5924 = vadd.f32 %v5472, %v5923
        %v5925 = vpop.f32.mrb[0].mxu0
        %v5926 = vadd.f32 %v5476, %v5925
        %v5927 = vpop.f32.mrb[0].mxu0
        %v5928 = vadd.f32 %v5472, %v5927
        %v5929 = vpop.f32.mrb[0].mxu0
        %v5930 = vadd.f32 %v5476, %v5929
        %5931 = vmatprep.mubr.bf16.mxu0 %v5422
        %5932 = vmatmul.mubr.bf16.gmra.mrb[0].mxu0 %v5421
        %v5933 = vpop.f32.mrb[0].mxu0
        %v5934 = vadd.f32 %v5472, %v5933
        %v5935 = vpop.f32.mrb[0].mxu0
        %v5936 = vadd.f32 %v5476, %v5935
        %v5937 = vpop.f32.mrb[0].mxu0
        %v5938 = vadd.f32 %v5472, %v5937
        %v5939 = vpop.f32.mrb[0].mxu0
        %v5940 = vadd.f32 %v5476, %v5939
        %5941 = vmatprep.mubr.bf16.mxu0 %v5424
        %5942 = vmatmul.mubr.bf16.gmra.mrb[0].mxu0 %v5423
        %v5943 = vpop.f32.mrb[0].mxu0
        %v5944 = vadd.f32 %v5472, %v5943
        %v5945 = vpop.f32.mrb[0].mxu0
        %v5946 = vadd.f32 %v5476, %v5945
        %v5947 = vpop.f32.mrb[0].mxu0
        %v5948 = vadd.f32 %v5472, %v5947
        %v5949 = vpop.f32.mrb[0].mxu0
        %v5950 = vadd.f32 %v5476, %v5949
        %5951 = vmatprep.mubr.bf16.mxu0 %v5426
        %5952 = vmatmul.mubr.bf16.gmra.mrb[0].mxu0 %v5425
        %v5953 = vpop.f32.mrb[0].mxu0
        %v5954 = vadd.f32 %v5472, %v5953
        %v5955 = vpop.f32.mrb[0].mxu0
        %v5956 = vadd.f32 %v5476, %v5955
        %v5957 = vpop.f32.mrb[0].mxu0
        %v5958 = vadd.f32 %v5472, %v5957
        %v5959 = vpop.f32.mrb[0].mxu0
        %v5960 = vadd.f32 %v5476, %v5959
        %5961 = vmatprep.mubr.bf16.mxu0 %v5428
        %5962 = vmatmul.mubr.bf16.gmra.mrb[0].mxu0 %v5427
        %v5963 = vpop.f32.mrb[0].mxu0
        %v5964 = vadd.f32 %v5472, %v5963
        %v5965 = vpop.f32.mrb[0].mxu0
        %v5966 = vadd.f32 %v5476, %v5965
        %v5967 = vpop.f32.mrb[0].mxu0
        %v5968 = vadd.f32 %v5472, %v5967
        %v5969 = vpop.f32.mrb[0].mxu0
        %v5970 = vadd.f32 %v5476, %v5969
        %5971 = vmatprep.mubr.bf16.mxu0 %v5430
        %5972 = vmatmul.mubr.bf16.gmra.mrb[0].mxu0 %v5429
        %v5973 = vpop.f32.mrb[0].mxu0
        %v5974 = vadd.f32 %v5472, %v5973
        %v5975 = vpop.f32.mrb[0].mxu0
        %v5976 = vadd.f32 %v5476, %v5975
        %v5977 = vpop.f32.mrb[0].mxu0
        %v5978 = vadd.f32 %v5472, %v5977
        %v5979 = vpop.f32.mrb[0].mxu0
        %v5980 = vadd.f32 %v5476, %v5979
        %5981 = vmatprep.mubr.bf16.mxu0 %v5432
        %5982 = vmatmul.mubr.bf16.gmra.mrb[0].mxu0 %v5431
        %v5983 = vpop.f32.mrb[0].mxu0
        %v5984 = vadd.f32 %v5472, %v5983
        %v5985 = vpop.f32.mrb[0].mxu0
        %v5986 = vadd.f32 %v5476, %v5985
        %v5987 = vpop.f32.mrb[0].mxu0
        %v5988 = vadd.f32 %v5472, %v5987
        %v5989 = vpop.f32.mrb[0].mxu0
        %v5990 = vadd.f32 %v5476, %v5989
        %5991 = vdwg.mxu0
        %v5992 = vmax.f32 %v5674, 0.0
        %v5993 = vmax.f32 %v5676, 0.0
        %v5994 = vmax.f32 %v5678, 0.0
        %v5995 = vmax.f32 %v5680, 0.0
        %v5996 = vmax.f32 %v5684, 0.0
        %v5997 = vmax.f32 %v5686, 0.0
        %v5998 = vmax.f32 %v5688, 0.0
        %v5999 = vmax.f32 %v5690, 0.0
        %v6000 = vmax.f32 %v5694, 0.0
        %v6001 = vmax.f32 %v5696, 0.0
        %v6002 = vmax.f32 %v5698, 0.0
        %v6003 = vmax.f32 %v5700, 0.0
        %v6004 = vmax.f32 %v5704, 0.0
        %v6005 = vmax.f32 %v5706, 0.0
        %v6006 = vmax.f32 %v5708, 0.0
        %v6007 = vmax.f32 %v5710, 0.0
        %v6008 = vmax.f32 %v5714, 0.0
        %v6009 = vmax.f32 %v5716, 0.0
        %v6010 = vmax.f32 %v5718, 0.0
        %v6011 = vmax.f32 %v5720, 0.0
        %v6012 = vmax.f32 %v5724, 0.0
        %v6013 = vmax.f32 %v5726, 0.0
        %v6014 = vmax.f32 %v5728, 0.0
        %v6015 = vmax.f32 %v5730, 0.0
        %v6016 = vmax.f32 %v5734, 0.0
        %v6017 = vmax.f32 %v5736, 0.0
        %v6018 = vmax.f32 %v5738, 0.0
        %v6019 = vmax.f32 %v5740, 0.0
        %v6020 = vmax.f32 %v5744, 0.0
        %v6021 = vmax.f32 %v5746, 0.0
        %v6022 = vmax.f32 %v5748, 0.0
        %v6023 = vmax.f32 %v5750, 0.0
        %v6024 = vmax.f32 %v5754, 0.0
        %v6025 = vmax.f32 %v5756, 0.0
        %v6026 = vmax.f32 %v5758, 0.0
        %v6027 = vmax.f32 %v5760, 0.0
        %v6028 = vmax.f32 %v5764, 0.0
        %v6029 = vmax.f32 %v5766, 0.0
        %v6030 = vmax.f32 %v5768, 0.0
        %v6031 = vmax.f32 %v5770, 0.0
        %v6032 = vmax.f32 %v5774, 0.0
        %v6033 = vmax.f32 %v5776, 0.0
        %v6034 = vmax.f32 %v5778, 0.0
        %v6035 = vmax.f32 %v5780, 0.0
        %v6036 = vmax.f32 %v5784, 0.0
        %v6037 = vmax.f32 %v5786, 0.0
        %v6038 = vmax.f32 %v5788, 0.0
        %v6039 = vmax.f32 %v5790, 0.0
        %v6040 = vmax.f32 %v5794, 0.0
        %v6041 = vmax.f32 %v5796, 0.0
        %v6042 = vmax.f32 %v5798, 0.0
        %v6043 = vmax.f32 %v5800, 0.0
        %v6044 = vmax.f32 %v5804, 0.0
        %v6045 = vmax.f32 %v5806, 0.0
        %v6046 = vmax.f32 %v5808, 0.0
        %v6047 = vmax.f32 %v5810, 0.0
        %v6048 = vmax.f32 %v5814, 0.0
        %v6049 = vmax.f32 %v5816, 0.0
        %v6050 = vmax.f32 %v5818, 0.0
        %v6051 = vmax.f32 %v5820, 0.0
        %v6052 = vmax.f32 %v5824, 0.0
        %v6053 = vmax.f32 %v5826, 0.0
        %v6054 = vmax.f32 %v5828, 0.0
        %v6055 = vmax.f32 %v5830, 0.0
        %v6056 = vmax.f32 %v5834, 0.0
        %v6057 = vmax.f32 %v5836, 0.0
        %v6058 = vmax.f32 %v5838, 0.0
        %v6059 = vmax.f32 %v5840, 0.0
        %v6060 = vmax.f32 %v5844, 0.0
        %v6061 = vmax.f32 %v5846, 0.0
        %v6062 = vmax.f32 %v5848, 0.0
        %v6063 = vmax.f32 %v5850, 0.0
        %v6064 = vmax.f32 %v5854, 0.0
        %v6065 = vmax.f32 %v5856, 0.0
        %v6066 = vmax.f32 %v5858, 0.0
        %v6067 = vmax.f32 %v5860, 0.0
        %v6068 = vmax.f32 %v5864, 0.0
        %v6069 = vmax.f32 %v5866, 0.0
        %v6070 = vmax.f32 %v5868, 0.0
        %v6071 = vmax.f32 %v5870, 0.0
        %v6072 = vmax.f32 %v5874, 0.0
        %v6073 = vmax.f32 %v5876, 0.0
        %v6074 = vmax.f32 %v5878, 0.0
        %v6075 = vmax.f32 %v5880, 0.0
        %v6076 = vmax.f32 %v5884, 0.0
        %v6077 = vmax.f32 %v5886, 0.0
        %v6078 = vmax.f32 %v5888, 0.0
        %v6079 = vmax.f32 %v5890, 0.0
        %v6080 = vmax.f32 %v5894, 0.0
        %v6081 = vmax.f32 %v5896, 0.0
        %v6082 = vmax.f32 %v5898, 0.0
        %v6083 = vmax.f32 %v5900, 0.0
        %v6084 = vmax.f32 %v5904, 0.0
        %v6085 = vmax.f32 %v5906, 0.0
        %v6086 = vmax.f32 %v5908, 0.0
        %v6087 = vmax.f32 %v5910, 0.0
        %v6088 = vmax.f32 %v5914, 0.0
        %v6089 = vmax.f32 %v5916, 0.0
        %v6090 = vmax.f32 %v5918, 0.0
        %v6091 = vmax.f32 %v5920, 0.0
        %v6092 = vmax.f32 %v5924, 0.0
        %v6093 = vmax.f32 %v5926, 0.0
        %v6094 = vmax.f32 %v5928, 0.0
        %v6095 = vmax.f32 %v5930, 0.0
        %v6096 = vmax.f32 %v5934, 0.0
        %v6097 = vmax.f32 %v5936, 0.0
        %v6098 = vmax.f32 %v5938, 0.0
        %v6099 = vmax.f32 %v5940, 0.0
        %v6100 = vmax.f32 %v5944, 0.0
        %v6101 = vmax.f32 %v5946, 0.0
        %v6102 = vmax.f32 %v5948, 0.0
        %v6103 = vmax.f32 %v5950, 0.0
        %v6104 = vmax.f32 %v5954, 0.0
        %v6105 = vmax.f32 %v5956, 0.0
        %v6106 = vmax.f32 %v5958, 0.0
        %v6107 = vmax.f32 %v5960, 0.0
        %v6108 = vmax.f32 %v5964, 0.0
        %v6109 = vmax.f32 %v5966, 0.0
        %v6110 = vmax.f32 %v5968, 0.0
        %v6111 = vmax.f32 %v5970, 0.0
        %v6112 = vmax.f32 %v5974, 0.0
        %v6113 = vmax.f32 %v5976, 0.0
        %v6114 = vmax.f32 %v5978, 0.0
        %v6115 = vmax.f32 %v5980, 0.0
        %v6116 = vmax.f32 %v5984, 0.0
        %v6117 = vmax.f32 %v5986, 0.0
        %v6118 = vmax.f32 %v5988, 0.0
        %v6119 = vmax.f32 %v5990, 0.0
        %v6120 = vpack.c.bf16 %v5994, %v5992
        %v6121 = vpack.c.bf16 %v5995, %v5993
        %v6122 = vpack.c.bf16 %v5998, %v5996
        %v6123 = vpack.c.bf16 %v5999, %v5997
        %v6124 = vpack.c.bf16 %v6002, %v6000
        %v6125 = vpack.c.bf16 %v6003, %v6001
        %v6126 = vpack.c.bf16 %v6006, %v6004
        %v6127 = vpack.c.bf16 %v6007, %v6005
        %v6128 = vpack.c.bf16 %v6010, %v6008
        %v6129 = vpack.c.bf16 %v6011, %v6009
        %v6130 = vpack.c.bf16 %v6014, %v6012
        %v6131 = vpack.c.bf16 %v6015, %v6013
        %v6132 = vpack.c.bf16 %v6018, %v6016
        %v6133 = vpack.c.bf16 %v6019, %v6017
        %v6134 = vpack.c.bf16 %v6022, %v6020
        %v6135 = vpack.c.bf16 %v6023, %v6021
        %v6136 = vpack.c.bf16 %v6026, %v6024
        %v6137 = vpack.c.bf16 %v6027, %v6025
        %v6138 = vpack.c.bf16 %v6030, %v6028
        %v6139 = vpack.c.bf16 %v6031, %v6029
        %v6140 = vpack.c.bf16 %v6034, %v6032
        %v6141 = vpack.c.bf16 %v6035, %v6033
        %v6142 = vpack.c.bf16 %v6038, %v6036
        %v6143 = vpack.c.bf16 %v6039, %v6037
        %v6144 = vpack.c.bf16 %v6042, %v6040
        %v6145 = vpack.c.bf16 %v6043, %v6041
        %v6146 = vpack.c.bf16 %v6046, %v6044
        %v6147 = vpack.c.bf16 %v6047, %v6045
        %v6148 = vpack.c.bf16 %v6050, %v6048
        %v6149 = vpack.c.bf16 %v6051, %v6049
        %v6150 = vpack.c.bf16 %v6054, %v6052
        %v6151 = vpack.c.bf16 %v6055, %v6053
        %v6152 = vpack.c.bf16 %v6058, %v6056
        %v6153 = vpack.c.bf16 %v6059, %v6057
        %v6154 = vpack.c.bf16 %v6062, %v6060
        %v6155 = vpack.c.bf16 %v6063, %v6061
        %v6156 = vpack.c.bf16 %v6066, %v6064
        %v6157 = vpack.c.bf16 %v6067, %v6065
        %v6158 = vpack.c.bf16 %v6070, %v6068
        %v6159 = vpack.c.bf16 %v6071, %v6069
        %v6160 = vpack.c.bf16 %v6074, %v6072
        %v6161 = vpack.c.bf16 %v6075, %v6073
        %v6162 = vpack.c.bf16 %v6078, %v6076
        %v6163 = vpack.c.bf16 %v6079, %v6077
        %v6164 = vpack.c.bf16 %v6082, %v6080
        %v6165 = vpack.c.bf16 %v6083, %v6081
        %v6166 = vpack.c.bf16 %v6086, %v6084
        %v6167 = vpack.c.bf16 %v6087, %v6085
        %v6168 = vpack.c.bf16 %v6090, %v6088
        %v6169 = vpack.c.bf16 %v6091, %v6089
        %v6170 = vpack.c.bf16 %v6094, %v6092
        %v6171 = vpack.c.bf16 %v6095, %v6093
        %v6172 = vpack.c.bf16 %v6098, %v6096
        %v6173 = vpack.c.bf16 %v6099, %v6097
        %v6174 = vpack.c.bf16 %v6102, %v6100
        %v6175 = vpack.c.bf16 %v6103, %v6101
        %v6176 = vpack.c.bf16 %v6106, %v6104
        %v6177 = vpack.c.bf16 %v6107, %v6105
        %v6178 = vpack.c.bf16 %v6110, %v6108
        %v6179 = vpack.c.bf16 %v6111, %v6109
        %v6180 = vpack.c.bf16 %v6114, %v6112
        %v6181 = vpack.c.bf16 %v6115, %v6113
        %v6182 = vpack.c.bf16 %v6118, %v6116
        %v6183 = vpack.c.bf16 %v6119, %v6117
        %s6184 = scalar_lea.vmem [#allocation2], 1536
        %v6185 = vld [vmem:[%s6184] sm:$0xff]
        %v6186 = vld [vmem:[%s6184 + $0x8] sm:$0xff]
        %v6187 = vld [vmem:[%s6184 + $0x10] sm:$0xff]
        %v6188 = vld [vmem:[%s6184 + $0x18] sm:$0xff]
        %v6189 = vld [vmem:[%s6184 + $0x20] sm:$0xff]
        %v6190 = vld [vmem:[%s6184 + $0x28] sm:$0xff]
        %v6191 = vld [vmem:[%s6184 + $0x30] sm:$0xff]
        %v6192 = vld [vmem:[%s6184 + $0x38] sm:$0xff]
        %v6193 = vld [vmem:[%s6184 + $0x40] sm:$0xff]
        %v6194 = vld [vmem:[%s6184 + $0x48] sm:$0xff]
        %v6195 = vld [vmem:[%s6184 + $0x50] sm:$0xff]
        %v6196 = vld [vmem:[%s6184 + $0x58] sm:$0xff]
        %v6197 = vld [vmem:[%s6184 + $0x60] sm:$0xff]
        %v6198 = vld [vmem:[%s6184 + $0x68] sm:$0xff]
        %v6199 = vld [vmem:[%s6184 + $0x70] sm:$0xff]
        %v6200 = vld [vmem:[%s6184 + $0x78] sm:$0xff]
        %v6201 = vld [vmem:[%s6184 + $0x80] sm:$0xff]
        %v6202 = vld [vmem:[%s6184 + $0x88] sm:$0xff]
        %v6203 = vld [vmem:[%s6184 + $0x90] sm:$0xff]
        %v6204 = vld [vmem:[%s6184 + $0x98] sm:$0xff]
        %v6205 = vld [vmem:[%s6184 + $0xa0] sm:$0xff]
        %v6206 = vld [vmem:[%s6184 + $0xa8] sm:$0xff]
        %v6207 = vld [vmem:[%s6184 + $0xb0] sm:$0xff]
        %v6208 = vld [vmem:[%s6184 + $0xb8] sm:$0xff]
        %v6209 = vld [vmem:[%s6184 + $0xc0] sm:$0xff]
        %v6210 = vld [vmem:[%s6184 + $0xc8] sm:$0xff]
        %v6211 = vld [vmem:[%s6184 + $0xd0] sm:$0xff]
        %v6212 = vld [vmem:[%s6184 + $0xd8] sm:$0xff]
        %v6213 = vld [vmem:[%s6184 + $0xe0] sm:$0xff]
        %v6214 = vld [vmem:[%s6184 + $0xe8] sm:$0xff]
        %v6215 = vld [vmem:[%s6184 + $0xf0] sm:$0xff]
        %v6216 = vld [vmem:[%s6184 + $0xf8] sm:$0xff]
        %s6217 = scalar_lea.vmem %s4, 7
        %v6218 = vld [vmem:[%s6217] ss:$8 sm:$0x3]
        %v6220 = vlaneseq
        %v6221 = vshrl.u32 %v6220, 7
        %v6222 = vsub.s32 0, %v6221
        %v6223 = vrot.slane %v6218, %v6222
        %v6224 = vlaneseq
        %v6225 = vshrl.u32 %v6224, 7
        %v6226 = vsub.s32 1, %v6225
        %v6227 = vrot.slane %v6218, %v6226
        %v6262 = vunpack.c.l.b16 %v6185
        %v6263 = vunpack.c.h.b16 %v6185
        %v6264 = vunpack.c.l.b16 %v6186
        %v6265 = vunpack.c.h.b16 %v6186
        %v6266 = vunpack.c.l.b16 %v6187
        %v6267 = vunpack.c.h.b16 %v6187
        %v6268 = vunpack.c.l.b16 %v6188
        %v6269 = vunpack.c.h.b16 %v6188
        %v6270 = vunpack.c.l.b16 %v6189
        %v6271 = vunpack.c.h.b16 %v6189
        %v6272 = vunpack.c.l.b16 %v6190
        %v6273 = vunpack.c.h.b16 %v6190
        %v6274 = vunpack.c.l.b16 %v6191
        %v6275 = vunpack.c.h.b16 %v6191
        %v6276 = vunpack.c.l.b16 %v6192
        %v6277 = vunpack.c.h.b16 %v6192
        %v6278 = vunpack.c.l.b16 %v6193
        %v6279 = vunpack.c.h.b16 %v6193
        %v6280 = vunpack.c.l.b16 %v6194
        %v6281 = vunpack.c.h.b16 %v6194
        %v6282 = vunpack.c.l.b16 %v6195
        %v6283 = vunpack.c.h.b16 %v6195
        %v6284 = vunpack.c.l.b16 %v6196
        %v6285 = vunpack.c.h.b16 %v6196
        %v6286 = vunpack.c.l.b16 %v6197
        %v6287 = vunpack.c.h.b16 %v6197
        %v6288 = vunpack.c.l.b16 %v6198
        %v6289 = vunpack.c.h.b16 %v6198
        %v6290 = vunpack.c.l.b16 %v6199
        %v6291 = vunpack.c.h.b16 %v6199
        %v6292 = vunpack.c.l.b16 %v6200
        %v6293 = vunpack.c.h.b16 %v6200
        %v6294 = vunpack.c.l.b16 %v6201
        %v6295 = vunpack.c.h.b16 %v6201
        %v6296 = vunpack.c.l.b16 %v6202
        %v6297 = vunpack.c.h.b16 %v6202
        %v6298 = vunpack.c.l.b16 %v6203
        %v6299 = vunpack.c.h.b16 %v6203
        %v6300 = vunpack.c.l.b16 %v6204
        %v6301 = vunpack.c.h.b16 %v6204
        %v6302 = vunpack.c.l.b16 %v6205
        %v6303 = vunpack.c.h.b16 %v6205
        %v6304 = vunpack.c.l.b16 %v6206
        %v6305 = vunpack.c.h.b16 %v6206
        %v6306 = vunpack.c.l.b16 %v6207
        %v6307 = vunpack.c.h.b16 %v6207
        %v6308 = vunpack.c.l.b16 %v6208
        %v6309 = vunpack.c.h.b16 %v6208
        %v6310 = vunpack.c.l.b16 %v6209
        %v6311 = vunpack.c.h.b16 %v6209
        %v6312 = vunpack.c.l.b16 %v6210
        %v6313 = vunpack.c.h.b16 %v6210
        %v6314 = vunpack.c.l.b16 %v6211
        %v6315 = vunpack.c.h.b16 %v6211
        %v6316 = vunpack.c.l.b16 %v6212
        %v6317 = vunpack.c.h.b16 %v6212
        %v6318 = vunpack.c.l.b16 %v6213
        %v6319 = vunpack.c.h.b16 %v6213
        %v6320 = vunpack.c.l.b16 %v6214
        %v6321 = vunpack.c.h.b16 %v6214
        %v6322 = vunpack.c.l.b16 %v6215
        %v6323 = vunpack.c.h.b16 %v6215
        %v6324 = vunpack.c.l.b16 %v6216
        %v6325 = vunpack.c.h.b16 %v6216
        %v6326 = vpack.c.b16 %v6264, %v6262
        %v6327 = vpack.c.b16 %v6265, %v6263
        %v6328 = vpack.c.b16 %v6268, %v6266
        %v6329 = vpack.c.b16 %v6269, %v6267
        %v6330 = vpack.c.b16 %v6272, %v6270
        %v6331 = vpack.c.b16 %v6273, %v6271
        %v6332 = vpack.c.b16 %v6276, %v6274
        %v6333 = vpack.c.b16 %v6277, %v6275
        %v6334 = vpack.c.b16 %v6280, %v6278
        %v6335 = vpack.c.b16 %v6281, %v6279
        %v6336 = vpack.c.b16 %v6284, %v6282
        %v6337 = vpack.c.b16 %v6285, %v6283
        %v6338 = vpack.c.b16 %v6288, %v6286
        %v6339 = vpack.c.b16 %v6289, %v6287
        %v6340 = vpack.c.b16 %v6292, %v6290
        %v6341 = vpack.c.b16 %v6293, %v6291
        %v6342 = vpack.c.b16 %v6296, %v6294
        %v6343 = vpack.c.b16 %v6297, %v6295
        %v6344 = vpack.c.b16 %v6300, %v6298
        %v6345 = vpack.c.b16 %v6301, %v6299
        %v6346 = vpack.c.b16 %v6304, %v6302
        %v6347 = vpack.c.b16 %v6305, %v6303
        %v6348 = vpack.c.b16 %v6308, %v6306
        %v6349 = vpack.c.b16 %v6309, %v6307
        %v6350 = vpack.c.b16 %v6312, %v6310
        %v6351 = vpack.c.b16 %v6313, %v6311
        %v6352 = vpack.c.b16 %v6316, %v6314
        %v6353 = vpack.c.b16 %v6317, %v6315
        %v6354 = vpack.c.b16 %v6320, %v6318
        %v6355 = vpack.c.b16 %v6321, %v6319
        %v6356 = vpack.c.b16 %v6324, %v6322
        %v6357 = vpack.c.b16 %v6325, %v6323
        %6390 = vmatprep.subr.bf16.mxu0 %v6327
        %6391 = vmatpush1.bf16.msra.mxu0 %v6326
        %6392 = vmatprep.subr.bf16.mxu0 %v6329
        %6393 = vmatpush1.bf16.msra.mxu0 %v6328
        %6394 = vmatprep.subr.bf16.mxu0 %v6331
        %6395 = vmatpush1.bf16.msra.mxu0 %v6330
        %6396 = vmatprep.subr.bf16.mxu0 %v6333
        %6397 = vmatpush1.bf16.msra.mxu0 %v6332
        %6398 = vmatprep.subr.bf16.mxu0 %v6335
        %6399 = vmatpush1.bf16.msra.mxu0 %v6334
        %6400 = vmatprep.subr.bf16.mxu0 %v6337
        %6401 = vmatpush1.bf16.msra.mxu0 %v6336
        %6402 = vmatprep.subr.bf16.mxu0 %v6339
        %6403 = vmatpush1.bf16.msra.mxu0 %v6338
        %6404 = vmatprep.subr.bf16.mxu0 %v6341
        %6405 = vmatpush1.bf16.msra.mxu0 %v6340
        %6406 = vmatprep.subr.bf16.mxu0 %v6343
        %6407 = vmatpush1.bf16.msra.mxu0 %v6342
        %6408 = vmatprep.subr.bf16.mxu0 %v6345
        %6409 = vmatpush1.bf16.msra.mxu0 %v6344
        %6410 = vmatprep.subr.bf16.mxu0 %v6347
        %6411 = vmatpush1.bf16.msra.mxu0 %v6346
        %6412 = vmatprep.subr.bf16.mxu0 %v6349
        %6413 = vmatpush1.bf16.msra.mxu0 %v6348
        %6414 = vmatprep.subr.bf16.mxu0 %v6351
        %6415 = vmatpush1.bf16.msra.mxu0 %v6350
        %6416 = vmatprep.subr.bf16.mxu0 %v6353
        %6417 = vmatpush1.bf16.msra.mxu0 %v6352
        %6418 = vmatprep.subr.bf16.mxu0 %v6355
        %6419 = vmatpush1.bf16.msra.mxu0 %v6354
        %6420 = vmatprep.subr.bf16.mxu0 %v6357
        %6421 = vmatpush1.bf16.msra.mxu0 %v6356
        %6422 = vmatprep.mubr.bf16.mxu0 %v6121
        %6423 = vmatmul.mubr.bf16.gmra.mrb[0].mxu0 %v6120
        %v6424 = vpop.f32.mrb[0].mxu0
        %v6425 = vadd.f32 %v6223, %v6424
        %v6426 = vpop.f32.mrb[0].mxu0
        %v6427 = vadd.f32 %v6227, %v6426
        %v6428 = vpop.f32.mrb[0].mxu0
        %v6429 = vadd.f32 %v6223, %v6428
        %v6430 = vpop.f32.mrb[0].mxu0
        %v6431 = vadd.f32 %v6227, %v6430
        %6432 = vmatprep.mubr.bf16.mxu0 %v6123
        %6433 = vmatmul.mubr.bf16.gmra.mrb[0].mxu0 %v6122
        %v6434 = vpop.f32.mrb[0].mxu0
        %v6435 = vadd.f32 %v6223, %v6434
        %v6436 = vpop.f32.mrb[0].mxu0
        %v6437 = vadd.f32 %v6227, %v6436
        %v6438 = vpop.f32.mrb[0].mxu0
        %v6439 = vadd.f32 %v6223, %v6438
        %v6440 = vpop.f32.mrb[0].mxu0
        %v6441 = vadd.f32 %v6227, %v6440
        %6442 = vmatprep.mubr.bf16.mxu0 %v6125
        %6443 = vmatmul.mubr.bf16.gmra.mrb[0].mxu0 %v6124
        %v6444 = vpop.f32.mrb[0].mxu0
        %v6445 = vadd.f32 %v6223, %v6444
        %v6446 = vpop.f32.mrb[0].mxu0
        %v6447 = vadd.f32 %v6227, %v6446
        %v6448 = vpop.f32.mrb[0].mxu0
        %v6449 = vadd.f32 %v6223, %v6448
        %v6450 = vpop.f32.mrb[0].mxu0
        %v6451 = vadd.f32 %v6227, %v6450
        %6452 = vmatprep.mubr.bf16.mxu0 %v6127
        %6453 = vmatmul.mubr.bf16.gmra.mrb[0].mxu0 %v6126
        %v6454 = vpop.f32.mrb[0].mxu0
        %v6455 = vadd.f32 %v6223, %v6454
        %v6456 = vpop.f32.mrb[0].mxu0
        %v6457 = vadd.f32 %v6227, %v6456
        %v6458 = vpop.f32.mrb[0].mxu0
        %v6459 = vadd.f32 %v6223, %v6458
        %v6460 = vpop.f32.mrb[0].mxu0
        %v6461 = vadd.f32 %v6227, %v6460
        %6462 = vmatprep.mubr.bf16.mxu0 %v6129
        %6463 = vmatmul.mubr.bf16.gmra.mrb[0].mxu0 %v6128
        %v6464 = vpop.f32.mrb[0].mxu0
        %v6465 = vadd.f32 %v6223, %v6464
        %v6466 = vpop.f32.mrb[0].mxu0
        %v6467 = vadd.f32 %v6227, %v6466
        %v6468 = vpop.f32.mrb[0].mxu0
        %v6469 = vadd.f32 %v6223, %v6468
        %v6470 = vpop.f32.mrb[0].mxu0
        %v6471 = vadd.f32 %v6227, %v6470
        %6472 = vmatprep.mubr.bf16.mxu0 %v6131
        %6473 = vmatmul.mubr.bf16.gmra.mrb[0].mxu0 %v6130
        %v6474 = vpop.f32.mrb[0].mxu0
        %v6475 = vadd.f32 %v6223, %v6474
        %v6476 = vpop.f32.mrb[0].mxu0
        %v6477 = vadd.f32 %v6227, %v6476
        %v6478 = vpop.f32.mrb[0].mxu0
        %v6479 = vadd.f32 %v6223, %v6478
        %v6480 = vpop.f32.mrb[0].mxu0
        %v6481 = vadd.f32 %v6227, %v6480
        %6482 = vmatprep.mubr.bf16.mxu0 %v6133
        %6483 = vmatmul.mubr.bf16.gmra.mrb[0].mxu0 %v6132
        %v6484 = vpop.f32.mrb[0].mxu0
        %v6485 = vadd.f32 %v6223, %v6484
        %v6486 = vpop.f32.mrb[0].mxu0
        %v6487 = vadd.f32 %v6227, %v6486
        %v6488 = vpop.f32.mrb[0].mxu0
        %v6489 = vadd.f32 %v6223, %v6488
        %v6490 = vpop.f32.mrb[0].mxu0
        %v6491 = vadd.f32 %v6227, %v6490
        %6492 = vmatprep.mubr.bf16.mxu0 %v6135
        %6493 = vmatmul.mubr.bf16.gmra.mrb[0].mxu0 %v6134
        %v6494 = vpop.f32.mrb[0].mxu0
        %v6495 = vadd.f32 %v6223, %v6494
        %v6496 = vpop.f32.mrb[0].mxu0
        %v6497 = vadd.f32 %v6227, %v6496
        %v6498 = vpop.f32.mrb[0].mxu0
        %v6499 = vadd.f32 %v6223, %v6498
        %v6500 = vpop.f32.mrb[0].mxu0
        %v6501 = vadd.f32 %v6227, %v6500
        %6502 = vmatprep.mubr.bf16.mxu0 %v6137
        %6503 = vmatmul.mubr.bf16.gmra.mrb[0].mxu0 %v6136
        %v6504 = vpop.f32.mrb[0].mxu0
        %v6505 = vadd.f32 %v6223, %v6504
        %v6506 = vpop.f32.mrb[0].mxu0
        %v6507 = vadd.f32 %v6227, %v6506
        %v6508 = vpop.f32.mrb[0].mxu0
        %v6509 = vadd.f32 %v6223, %v6508
        %v6510 = vpop.f32.mrb[0].mxu0
        %v6511 = vadd.f32 %v6227, %v6510
        %6512 = vmatprep.mubr.bf16.mxu0 %v6139
        %6513 = vmatmul.mubr.bf16.gmra.mrb[0].mxu0 %v6138
        %v6514 = vpop.f32.mrb[0].mxu0
        %v6515 = vadd.f32 %v6223, %v6514
        %v6516 = vpop.f32.mrb[0].mxu0
        %v6517 = vadd.f32 %v6227, %v6516
        %v6518 = vpop.f32.mrb[0].mxu0
        %v6519 = vadd.f32 %v6223, %v6518
        %v6520 = vpop.f32.mrb[0].mxu0
        %v6521 = vadd.f32 %v6227, %v6520
        %6522 = vmatprep.mubr.bf16.mxu0 %v6141
        %6523 = vmatmul.mubr.bf16.gmra.mrb[0].mxu0 %v6140
        %v6524 = vpop.f32.mrb[0].mxu0
        %v6525 = vadd.f32 %v6223, %v6524
        %v6526 = vpop.f32.mrb[0].mxu0
        %v6527 = vadd.f32 %v6227, %v6526
        %v6528 = vpop.f32.mrb[0].mxu0
        %v6529 = vadd.f32 %v6223, %v6528
        %v6530 = vpop.f32.mrb[0].mxu0
        %v6531 = vadd.f32 %v6227, %v6530
        %6532 = vmatprep.mubr.bf16.mxu0 %v6143
        %6533 = vmatmul.mubr.bf16.gmra.mrb[0].mxu0 %v6142
        %v6534 = vpop.f32.mrb[0].mxu0
        %v6535 = vadd.f32 %v6223, %v6534
        %v6536 = vpop.f32.mrb[0].mxu0
        %v6537 = vadd.f32 %v6227, %v6536
        %v6538 = vpop.f32.mrb[0].mxu0
        %v6539 = vadd.f32 %v6223, %v6538
        %v6540 = vpop.f32.mrb[0].mxu0
        %v6541 = vadd.f32 %v6227, %v6540
        %6542 = vmatprep.mubr.bf16.mxu0 %v6145
        %6543 = vmatmul.mubr.bf16.gmra.mrb[0].mxu0 %v6144
        %v6544 = vpop.f32.mrb[0].mxu0
        %v6545 = vadd.f32 %v6223, %v6544
        %v6546 = vpop.f32.mrb[0].mxu0
        %v6547 = vadd.f32 %v6227, %v6546
        %v6548 = vpop.f32.mrb[0].mxu0
        %v6549 = vadd.f32 %v6223, %v6548
        %v6550 = vpop.f32.mrb[0].mxu0
        %v6551 = vadd.f32 %v6227, %v6550
        %6552 = vmatprep.mubr.bf16.mxu0 %v6147
        %6553 = vmatmul.mubr.bf16.gmra.mrb[0].mxu0 %v6146
        %v6554 = vpop.f32.mrb[0].mxu0
        %v6555 = vadd.f32 %v6223, %v6554
        %v6556 = vpop.f32.mrb[0].mxu0
        %v6557 = vadd.f32 %v6227, %v6556
        %v6558 = vpop.f32.mrb[0].mxu0
        %v6559 = vadd.f32 %v6223, %v6558
        %v6560 = vpop.f32.mrb[0].mxu0
        %v6561 = vadd.f32 %v6227, %v6560
        %6562 = vmatprep.mubr.bf16.mxu0 %v6149
        %6563 = vmatmul.mubr.bf16.gmra.mrb[0].mxu0 %v6148
        %v6564 = vpop.f32.mrb[0].mxu0
        %v6565 = vadd.f32 %v6223, %v6564
        %v6566 = vpop.f32.mrb[0].mxu0
        %v6567 = vadd.f32 %v6227, %v6566
        %v6568 = vpop.f32.mrb[0].mxu0
        %v6569 = vadd.f32 %v6223, %v6568
        %v6570 = vpop.f32.mrb[0].mxu0
        %v6571 = vadd.f32 %v6227, %v6570
        %6572 = vmatprep.mubr.bf16.mxu0 %v6151
        %6573 = vmatmul.mubr.bf16.gmra.mrb[0].mxu0 %v6150
        %v6574 = vpop.f32.mrb[0].mxu0
        %v6575 = vadd.f32 %v6223, %v6574
        %v6576 = vpop.f32.mrb[0].mxu0
        %v6577 = vadd.f32 %v6227, %v6576
        %v6578 = vpop.f32.mrb[0].mxu0
        %v6579 = vadd.f32 %v6223, %v6578
        %v6580 = vpop.f32.mrb[0].mxu0
        %v6581 = vadd.f32 %v6227, %v6580
        %6582 = vmatprep.mubr.bf16.mxu0 %v6153
        %6583 = vmatmul.mubr.bf16.gmra.mrb[0].mxu0 %v6152
        %v6584 = vpop.f32.mrb[0].mxu0
        %v6585 = vadd.f32 %v6223, %v6584
        %v6586 = vpop.f32.mrb[0].mxu0
        %v6587 = vadd.f32 %v6227, %v6586
        %v6588 = vpop.f32.mrb[0].mxu0
        %v6589 = vadd.f32 %v6223, %v6588
        %v6590 = vpop.f32.mrb[0].mxu0
        %v6591 = vadd.f32 %v6227, %v6590
        %6592 = vmatprep.mubr.bf16.mxu0 %v6155
        %6593 = vmatmul.mubr.bf16.gmra.mrb[0].mxu0 %v6154
        %v6594 = vpop.f32.mrb[0].mxu0
        %v6595 = vadd.f32 %v6223, %v6594
        %v6596 = vpop.f32.mrb[0].mxu0
        %v6597 = vadd.f32 %v6227, %v6596
        %v6598 = vpop.f32.mrb[0].mxu0
        %v6599 = vadd.f32 %v6223, %v6598
        %v6600 = vpop.f32.mrb[0].mxu0
        %v6601 = vadd.f32 %v6227, %v6600
        %6602 = vmatprep.mubr.bf16.mxu0 %v6157
        %6603 = vmatmul.mubr.bf16.gmra.mrb[0].mxu0 %v6156
        %v6604 = vpop.f32.mrb[0].mxu0
        %v6605 = vadd.f32 %v6223, %v6604
        %v6606 = vpop.f32.mrb[0].mxu0
        %v6607 = vadd.f32 %v6227, %v6606
        %v6608 = vpop.f32.mrb[0].mxu0
        %v6609 = vadd.f32 %v6223, %v6608
        %v6610 = vpop.f32.mrb[0].mxu0
        %v6611 = vadd.f32 %v6227, %v6610
        %6612 = vmatprep.mubr.bf16.mxu0 %v6159
        %6613 = vmatmul.mubr.bf16.gmra.mrb[0].mxu0 %v6158
        %v6614 = vpop.f32.mrb[0].mxu0
        %v6615 = vadd.f32 %v6223, %v6614
        %v6616 = vpop.f32.mrb[0].mxu0
        %v6617 = vadd.f32 %v6227, %v6616
        %v6618 = vpop.f32.mrb[0].mxu0
        %v6619 = vadd.f32 %v6223, %v6618
        %v6620 = vpop.f32.mrb[0].mxu0
        %v6621 = vadd.f32 %v6227, %v6620
        %6622 = vmatprep.mubr.bf16.mxu0 %v6161
        %6623 = vmatmul.mubr.bf16.gmra.mrb[0].mxu0 %v6160
        %v6624 = vpop.f32.mrb[0].mxu0
        %v6625 = vadd.f32 %v6223, %v6624
        %v6626 = vpop.f32.mrb[0].mxu0
        %v6627 = vadd.f32 %v6227, %v6626
        %v6628 = vpop.f32.mrb[0].mxu0
        %v6629 = vadd.f32 %v6223, %v6628
        %v6630 = vpop.f32.mrb[0].mxu0
        %v6631 = vadd.f32 %v6227, %v6630
        %6632 = vmatprep.mubr.bf16.mxu0 %v6163
        %6633 = vmatmul.mubr.bf16.gmra.mrb[0].mxu0 %v6162
        %v6634 = vpop.f32.mrb[0].mxu0
        %v6635 = vadd.f32 %v6223, %v6634
        %v6636 = vpop.f32.mrb[0].mxu0
        %v6637 = vadd.f32 %v6227, %v6636
        %v6638 = vpop.f32.mrb[0].mxu0
        %v6639 = vadd.f32 %v6223, %v6638
        %v6640 = vpop.f32.mrb[0].mxu0
        %v6641 = vadd.f32 %v6227, %v6640
        %6642 = vmatprep.mubr.bf16.mxu0 %v6165
        %6643 = vmatmul.mubr.bf16.gmra.mrb[0].mxu0 %v6164
        %v6644 = vpop.f32.mrb[0].mxu0
        %v6645 = vadd.f32 %v6223, %v6644
        %v6646 = vpop.f32.mrb[0].mxu0
        %v6647 = vadd.f32 %v6227, %v6646
        %v6648 = vpop.f32.mrb[0].mxu0
        %v6649 = vadd.f32 %v6223, %v6648
        %v6650 = vpop.f32.mrb[0].mxu0
        %v6651 = vadd.f32 %v6227, %v6650
        %6652 = vmatprep.mubr.bf16.mxu0 %v6167
        %6653 = vmatmul.mubr.bf16.gmra.mrb[0].mxu0 %v6166
        %v6654 = vpop.f32.mrb[0].mxu0
        %v6655 = vadd.f32 %v6223, %v6654
        %v6656 = vpop.f32.mrb[0].mxu0
        %v6657 = vadd.f32 %v6227, %v6656
        %v6658 = vpop.f32.mrb[0].mxu0
        %v6659 = vadd.f32 %v6223, %v6658
        %v6660 = vpop.f32.mrb[0].mxu0
        %v6661 = vadd.f32 %v6227, %v6660
        %6662 = vmatprep.mubr.bf16.mxu0 %v6169
        %6663 = vmatmul.mubr.bf16.gmra.mrb[0].mxu0 %v6168
        %v6664 = vpop.f32.mrb[0].mxu0
        %v6665 = vadd.f32 %v6223, %v6664
        %v6666 = vpop.f32.mrb[0].mxu0
        %v6667 = vadd.f32 %v6227, %v6666
        %v6668 = vpop.f32.mrb[0].mxu0
        %v6669 = vadd.f32 %v6223, %v6668
        %v6670 = vpop.f32.mrb[0].mxu0
        %v6671 = vadd.f32 %v6227, %v6670
        %6672 = vmatprep.mubr.bf16.mxu0 %v6171
        %6673 = vmatmul.mubr.bf16.gmra.mrb[0].mxu0 %v6170
        %v6674 = vpop.f32.mrb[0].mxu0
        %v6675 = vadd.f32 %v6223, %v6674
        %v6676 = vpop.f32.mrb[0].mxu0
        %v6677 = vadd.f32 %v6227, %v6676
        %v6678 = vpop.f32.mrb[0].mxu0
        %v6679 = vadd.f32 %v6223, %v6678
        %v6680 = vpop.f32.mrb[0].mxu0
        %v6681 = vadd.f32 %v6227, %v6680
        %6682 = vmatprep.mubr.bf16.mxu0 %v6173
        %6683 = vmatmul.mubr.bf16.gmra.mrb[0].mxu0 %v6172
        %v6684 = vpop.f32.mrb[0].mxu0
        %v6685 = vadd.f32 %v6223, %v6684
        %v6686 = vpop.f32.mrb[0].mxu0
        %v6687 = vadd.f32 %v6227, %v6686
        %v6688 = vpop.f32.mrb[0].mxu0
        %v6689 = vadd.f32 %v6223, %v6688
        %v6690 = vpop.f32.mrb[0].mxu0
        %v6691 = vadd.f32 %v6227, %v6690
        %6692 = vmatprep.mubr.bf16.mxu0 %v6175
        %6693 = vmatmul.mubr.bf16.gmra.mrb[0].mxu0 %v6174
        %v6694 = vpop.f32.mrb[0].mxu0
        %v6695 = vadd.f32 %v6223, %v6694
        %v6696 = vpop.f32.mrb[0].mxu0
        %v6697 = vadd.f32 %v6227, %v6696
        %v6698 = vpop.f32.mrb[0].mxu0
        %v6699 = vadd.f32 %v6223, %v6698
        %v6700 = vpop.f32.mrb[0].mxu0
        %v6701 = vadd.f32 %v6227, %v6700
        %6702 = vmatprep.mubr.bf16.mxu0 %v6177
        %6703 = vmatmul.mubr.bf16.gmra.mrb[0].mxu0 %v6176
        %v6704 = vpop.f32.mrb[0].mxu0
        %v6705 = vadd.f32 %v6223, %v6704
        %v6706 = vpop.f32.mrb[0].mxu0
        %v6707 = vadd.f32 %v6227, %v6706
        %v6708 = vpop.f32.mrb[0].mxu0
        %v6709 = vadd.f32 %v6223, %v6708
        %v6710 = vpop.f32.mrb[0].mxu0
        %v6711 = vadd.f32 %v6227, %v6710
        %6712 = vmatprep.mubr.bf16.mxu0 %v6179
        %6713 = vmatmul.mubr.bf16.gmra.mrb[0].mxu0 %v6178
        %v6714 = vpop.f32.mrb[0].mxu0
        %v6715 = vadd.f32 %v6223, %v6714
        %v6716 = vpop.f32.mrb[0].mxu0
        %v6717 = vadd.f32 %v6227, %v6716
        %v6718 = vpop.f32.mrb[0].mxu0
        %v6719 = vadd.f32 %v6223, %v6718
        %v6720 = vpop.f32.mrb[0].mxu0
        %v6721 = vadd.f32 %v6227, %v6720
        %6722 = vmatprep.mubr.bf16.mxu0 %v6181
        %6723 = vmatmul.mubr.bf16.gmra.mrb[0].mxu0 %v6180
        %v6724 = vpop.f32.mrb[0].mxu0
        %v6725 = vadd.f32 %v6223, %v6724
        %v6726 = vpop.f32.mrb[0].mxu0
        %v6727 = vadd.f32 %v6227, %v6726
        %v6728 = vpop.f32.mrb[0].mxu0
        %v6729 = vadd.f32 %v6223, %v6728
        %v6730 = vpop.f32.mrb[0].mxu0
        %v6731 = vadd.f32 %v6227, %v6730
        %6732 = vmatprep.mubr.bf16.mxu0 %v6183
        %6733 = vmatmul.mubr.bf16.gmra.mrb[0].mxu0 %v6182
        %v6734 = vpop.f32.mrb[0].mxu0
        %v6735 = vadd.f32 %v6223, %v6734
        %v6736 = vpop.f32.mrb[0].mxu0
        %v6737 = vadd.f32 %v6227, %v6736
        %v6738 = vpop.f32.mrb[0].mxu0
        %v6739 = vadd.f32 %v6223, %v6738
        %v6740 = vpop.f32.mrb[0].mxu0
        %v6741 = vadd.f32 %v6227, %v6740
        %6742 = vdwg.mxu0
        %v6743 = vmax.f32 %v6425, 0.0
        %v6744 = vmax.f32 %v6427, 0.0
        %v6745 = vmax.f32 %v6429, 0.0
        %v6746 = vmax.f32 %v6431, 0.0
        %v6747 = vmax.f32 %v6435, 0.0
        %v6748 = vmax.f32 %v6437, 0.0
        %v6749 = vmax.f32 %v6439, 0.0
        %v6750 = vmax.f32 %v6441, 0.0
        %v6751 = vmax.f32 %v6445, 0.0
        %v6752 = vmax.f32 %v6447, 0.0
        %v6753 = vmax.f32 %v6449, 0.0
        %v6754 = vmax.f32 %v6451, 0.0
        %v6755 = vmax.f32 %v6455, 0.0
        %v6756 = vmax.f32 %v6457, 0.0
        %v6757 = vmax.f32 %v6459, 0.0
        %v6758 = vmax.f32 %v6461, 0.0
        %v6759 = vmax.f32 %v6465, 0.0
        %v6760 = vmax.f32 %v6467, 0.0
        %v6761 = vmax.f32 %v6469, 0.0
        %v6762 = vmax.f32 %v6471, 0.0
        %v6763 = vmax.f32 %v6475, 0.0
        %v6764 = vmax.f32 %v6477, 0.0
        %v6765 = vmax.f32 %v6479, 0.0
        %v6766 = vmax.f32 %v6481, 0.0
        %v6767 = vmax.f32 %v6485, 0.0
        %v6768 = vmax.f32 %v6487, 0.0
        %v6769 = vmax.f32 %v6489, 0.0
        %v6770 = vmax.f32 %v6491, 0.0
        %v6771 = vmax.f32 %v6495, 0.0
        %v6772 = vmax.f32 %v6497, 0.0
        %v6773 = vmax.f32 %v6499, 0.0
        %v6774 = vmax.f32 %v6501, 0.0
        %v6775 = vmax.f32 %v6505, 0.0
        %v6776 = vmax.f32 %v6507, 0.0
        %v6777 = vmax.f32 %v6509, 0.0
        %v6778 = vmax.f32 %v6511, 0.0
        %v6779 = vmax.f32 %v6515, 0.0
        %v6780 = vmax.f32 %v6517, 0.0
        %v6781 = vmax.f32 %v6519, 0.0
        %v6782 = vmax.f32 %v6521, 0.0
        %v6783 = vmax.f32 %v6525, 0.0
        %v6784 = vmax.f32 %v6527, 0.0
        %v6785 = vmax.f32 %v6529, 0.0
        %v6786 = vmax.f32 %v6531, 0.0
        %v6787 = vmax.f32 %v6535, 0.0
        %v6788 = vmax.f32 %v6537, 0.0
        %v6789 = vmax.f32 %v6539, 0.0
        %v6790 = vmax.f32 %v6541, 0.0
        %v6791 = vmax.f32 %v6545, 0.0
        %v6792 = vmax.f32 %v6547, 0.0
        %v6793 = vmax.f32 %v6549, 0.0
        %v6794 = vmax.f32 %v6551, 0.0
        %v6795 = vmax.f32 %v6555, 0.0
        %v6796 = vmax.f32 %v6557, 0.0
        %v6797 = vmax.f32 %v6559, 0.0
        %v6798 = vmax.f32 %v6561, 0.0
        %v6799 = vmax.f32 %v6565, 0.0
        %v6800 = vmax.f32 %v6567, 0.0
        %v6801 = vmax.f32 %v6569, 0.0
        %v6802 = vmax.f32 %v6571, 0.0
        %v6803 = vmax.f32 %v6575, 0.0
        %v6804 = vmax.f32 %v6577, 0.0
        %v6805 = vmax.f32 %v6579, 0.0
        %v6806 = vmax.f32 %v6581, 0.0
        %v6807 = vmax.f32 %v6585, 0.0
        %v6808 = vmax.f32 %v6587, 0.0
        %v6809 = vmax.f32 %v6589, 0.0
        %v6810 = vmax.f32 %v6591, 0.0
        %v6811 = vmax.f32 %v6595, 0.0
        %v6812 = vmax.f32 %v6597, 0.0
        %v6813 = vmax.f32 %v6599, 0.0
        %v6814 = vmax.f32 %v6601, 0.0
        %v6815 = vmax.f32 %v6605, 0.0
        %v6816 = vmax.f32 %v6607, 0.0
        %v6817 = vmax.f32 %v6609, 0.0
        %v6818 = vmax.f32 %v6611, 0.0
        %v6819 = vmax.f32 %v6615, 0.0
        %v6820 = vmax.f32 %v6617, 0.0
        %v6821 = vmax.f32 %v6619, 0.0
        %v6822 = vmax.f32 %v6621, 0.0
        %v6823 = vmax.f32 %v6625, 0.0
        %v6824 = vmax.f32 %v6627, 0.0
        %v6825 = vmax.f32 %v6629, 0.0
        %v6826 = vmax.f32 %v6631, 0.0
        %v6827 = vmax.f32 %v6635, 0.0
        %v6828 = vmax.f32 %v6637, 0.0
        %v6829 = vmax.f32 %v6639, 0.0
        %v6830 = vmax.f32 %v6641, 0.0
        %v6831 = vmax.f32 %v6645, 0.0
        %v6832 = vmax.f32 %v6647, 0.0
        %v6833 = vmax.f32 %v6649, 0.0
        %v6834 = vmax.f32 %v6651, 0.0
        %v6835 = vmax.f32 %v6655, 0.0
        %v6836 = vmax.f32 %v6657, 0.0
        %v6837 = vmax.f32 %v6659, 0.0
        %v6838 = vmax.f32 %v6661, 0.0
        %v6839 = vmax.f32 %v6665, 0.0
        %v6840 = vmax.f32 %v6667, 0.0
        %v6841 = vmax.f32 %v6669, 0.0
        %v6842 = vmax.f32 %v6671, 0.0
        %v6843 = vmax.f32 %v6675, 0.0
        %v6844 = vmax.f32 %v6677, 0.0
        %v6845 = vmax.f32 %v6679, 0.0
        %v6846 = vmax.f32 %v6681, 0.0
        %v6847 = vmax.f32 %v6685, 0.0
        %v6848 = vmax.f32 %v6687, 0.0
        %v6849 = vmax.f32 %v6689, 0.0
        %v6850 = vmax.f32 %v6691, 0.0
        %v6851 = vmax.f32 %v6695, 0.0
        %v6852 = vmax.f32 %v6697, 0.0
        %v6853 = vmax.f32 %v6699, 0.0
        %v6854 = vmax.f32 %v6701, 0.0
        %v6855 = vmax.f32 %v6705, 0.0
        %v6856 = vmax.f32 %v6707, 0.0
        %v6857 = vmax.f32 %v6709, 0.0
        %v6858 = vmax.f32 %v6711, 0.0
        %v6859 = vmax.f32 %v6715, 0.0
        %v6860 = vmax.f32 %v6717, 0.0
        %v6861 = vmax.f32 %v6719, 0.0
        %v6862 = vmax.f32 %v6721, 0.0
        %v6863 = vmax.f32 %v6725, 0.0
        %v6864 = vmax.f32 %v6727, 0.0
        %v6865 = vmax.f32 %v6729, 0.0
        %v6866 = vmax.f32 %v6731, 0.0
        %v6867 = vmax.f32 %v6735, 0.0
        %v6868 = vmax.f32 %v6737, 0.0
        %v6869 = vmax.f32 %v6739, 0.0
        %v6870 = vmax.f32 %v6741, 0.0
        %v6871 = vpack.c.bf16 %v6745, %v6743
        %v6872 = vpack.c.bf16 %v6746, %v6744
        %v6873 = vpack.c.bf16 %v6749, %v6747
        %v6874 = vpack.c.bf16 %v6750, %v6748
        %v6875 = vpack.c.bf16 %v6753, %v6751
        %v6876 = vpack.c.bf16 %v6754, %v6752
        %v6877 = vpack.c.bf16 %v6757, %v6755
        %v6878 = vpack.c.bf16 %v6758, %v6756
        %v6879 = vpack.c.bf16 %v6761, %v6759
        %v6880 = vpack.c.bf16 %v6762, %v6760
        %v6881 = vpack.c.bf16 %v6765, %v6763
        %v6882 = vpack.c.bf16 %v6766, %v6764
        %v6883 = vpack.c.bf16 %v6769, %v6767
        %v6884 = vpack.c.bf16 %v6770, %v6768
        %v6885 = vpack.c.bf16 %v6773, %v6771
        %v6886 = vpack.c.bf16 %v6774, %v6772
        %v6887 = vpack.c.bf16 %v6777, %v6775
        %v6888 = vpack.c.bf16 %v6778, %v6776
        %v6889 = vpack.c.bf16 %v6781, %v6779
        %v6890 = vpack.c.bf16 %v6782, %v6780
        %v6891 = vpack.c.bf16 %v6785, %v6783
        %v6892 = vpack.c.bf16 %v6786, %v6784
        %v6893 = vpack.c.bf16 %v6789, %v6787
        %v6894 = vpack.c.bf16 %v6790, %v6788
        %v6895 = vpack.c.bf16 %v6793, %v6791
        %v6896 = vpack.c.bf16 %v6794, %v6792
        %v6897 = vpack.c.bf16 %v6797, %v6795
        %v6898 = vpack.c.bf16 %v6798, %v6796
        %v6899 = vpack.c.bf16 %v6801, %v6799
        %v6900 = vpack.c.bf16 %v6802, %v6800
        %v6901 = vpack.c.bf16 %v6805, %v6803
        %v6902 = vpack.c.bf16 %v6806, %v6804
        %v6903 = vpack.c.bf16 %v6809, %v6807
        %v6904 = vpack.c.bf16 %v6810, %v6808
        %v6905 = vpack.c.bf16 %v6813, %v6811
        %v6906 = vpack.c.bf16 %v6814, %v6812
        %v6907 = vpack.c.bf16 %v6817, %v6815
        %v6908 = vpack.c.bf16 %v6818, %v6816
        %v6909 = vpack.c.bf16 %v6821, %v6819
        %v6910 = vpack.c.bf16 %v6822, %v6820
        %v6911 = vpack.c.bf16 %v6825, %v6823
        %v6912 = vpack.c.bf16 %v6826, %v6824
        %v6913 = vpack.c.bf16 %v6829, %v6827
        %v6914 = vpack.c.bf16 %v6830, %v6828
        %v6915 = vpack.c.bf16 %v6833, %v6831
        %v6916 = vpack.c.bf16 %v6834, %v6832
        %v6917 = vpack.c.bf16 %v6837, %v6835
        %v6918 = vpack.c.bf16 %v6838, %v6836
        %v6919 = vpack.c.bf16 %v6841, %v6839
        %v6920 = vpack.c.bf16 %v6842, %v6840
        %v6921 = vpack.c.bf16 %v6845, %v6843
        %v6922 = vpack.c.bf16 %v6846, %v6844
        %v6923 = vpack.c.bf16 %v6849, %v6847
        %v6924 = vpack.c.bf16 %v6850, %v6848
        %v6925 = vpack.c.bf16 %v6853, %v6851
        %v6926 = vpack.c.bf16 %v6854, %v6852
        %v6927 = vpack.c.bf16 %v6857, %v6855
        %v6928 = vpack.c.bf16 %v6858, %v6856
        %v6929 = vpack.c.bf16 %v6861, %v6859
        %v6930 = vpack.c.bf16 %v6862, %v6860
        %v6931 = vpack.c.bf16 %v6865, %v6863
        %v6932 = vpack.c.bf16 %v6866, %v6864
        %v6933 = vpack.c.bf16 %v6869, %v6867
        %v6934 = vpack.c.bf16 %v6870, %v6868
        %v6935 = vld [vmem:[%s5] sm:$0xf]
        %v6936 = vld [vmem:[%s5 + $0x4] sm:$0xf]
        %v6937 = vld [vmem:[%s5 + $0x8] sm:$0xf]
        %v6938 = vld [vmem:[%s5 + $0xc] sm:$0xf]
        %v6939 = vld [vmem:[%s5 + $0x10] sm:$0xf]
        %v6940 = vld [vmem:[%s5 + $0x14] sm:$0xf]
        %v6941 = vld [vmem:[%s5 + $0x18] sm:$0xf]
        %v6942 = vld [vmem:[%s5 + $0x1c] sm:$0xf]
        %v6943 = vld [vmem:[%s5 + $0x20] sm:$0xf]
        %v6944 = vld [vmem:[%s5 + $0x24] sm:$0xf]
        %v6945 = vld [vmem:[%s5 + $0x28] sm:$0xf]
        %v6946 = vld [vmem:[%s5 + $0x2c] sm:$0xf]
        %v6947 = vld [vmem:[%s5 + $0x30] sm:$0xf]
        %v6948 = vld [vmem:[%s5 + $0x34] sm:$0xf]
        %v6949 = vld [vmem:[%s5 + $0x38] sm:$0xf]
        %v6950 = vld [vmem:[%s5 + $0x3c] sm:$0xf]
        %v6951 = vld [vmem:[%s5 + $0x40] sm:$0xf]
        %v6952 = vld [vmem:[%s5 + $0x44] sm:$0xf]
        %v6953 = vld [vmem:[%s5 + $0x48] sm:$0xf]
        %v6954 = vld [vmem:[%s5 + $0x4c] sm:$0xf]
        %v6955 = vld [vmem:[%s5 + $0x50] sm:$0xf]
        %v6956 = vld [vmem:[%s5 + $0x54] sm:$0xf]
        %v6957 = vld [vmem:[%s5 + $0x58] sm:$0xf]
        %v6958 = vld [vmem:[%s5 + $0x5c] sm:$0xf]
        %v6959 = vld [vmem:[%s5 + $0x60] sm:$0xf]
        %v6960 = vld [vmem:[%s5 + $0x64] sm:$0xf]
        %v6961 = vld [vmem:[%s5 + $0x68] sm:$0xf]
        %v6962 = vld [vmem:[%s5 + $0x6c] sm:$0xf]
        %v6963 = vld [vmem:[%s5 + $0x70] sm:$0xf]
        %v6964 = vld [vmem:[%s5 + $0x74] sm:$0xf]
        %v6965 = vld [vmem:[%s5 + $0x78] sm:$0xf]
        %v6966 = vld [vmem:[%s5 + $0x7c] sm:$0xf]
        %v6967 = vld [vmem:[%s6] sm:$0x1]
        %v6969 = vlaneseq
        %v6970 = vshrl.u32 %v6969, 7
        %v6971 = vsub.s32 0, %v6970
        %v6972 = vrot.slane %v6967, %v6971
        %v7006 = vunpack.c.l.b16 %v6935
        %v7007 = vunpack.c.l.b16 %v6936
        %v7008 = vunpack.c.l.b16 %v6937
        %v7009 = vunpack.c.l.b16 %v6938
        %v7010 = vunpack.c.l.b16 %v6939
        %v7011 = vunpack.c.l.b16 %v6940
        %v7012 = vunpack.c.l.b16 %v6941
        %v7013 = vunpack.c.l.b16 %v6942
        %v7014 = vunpack.c.l.b16 %v6943
        %v7015 = vunpack.c.l.b16 %v6944
        %v7016 = vunpack.c.l.b16 %v6945
        %v7017 = vunpack.c.l.b16 %v6946
        %v7018 = vunpack.c.l.b16 %v6947
        %v7019 = vunpack.c.l.b16 %v6948
        %v7020 = vunpack.c.l.b16 %v6949
        %v7021 = vunpack.c.l.b16 %v6950
        %v7022 = vunpack.c.l.b16 %v6951
        %v7023 = vunpack.c.l.b16 %v6952
        %v7024 = vunpack.c.l.b16 %v6953
        %v7025 = vunpack.c.l.b16 %v6954
        %v7026 = vunpack.c.l.b16 %v6955
        %v7027 = vunpack.c.l.b16 %v6956
        %v7028 = vunpack.c.l.b16 %v6957
        %v7029 = vunpack.c.l.b16 %v6958
        %v7030 = vunpack.c.l.b16 %v6959
        %v7031 = vunpack.c.l.b16 %v6960
        %v7032 = vunpack.c.l.b16 %v6961
        %v7033 = vunpack.c.l.b16 %v6962
        %v7034 = vunpack.c.l.b16 %v6963
        %v7035 = vunpack.c.l.b16 %v6964
        %v7036 = vunpack.c.l.b16 %v6965
        %v7037 = vunpack.c.l.b16 %v6966
        %v7038 = vpack.c.b16 %v7007, %v7006
        %v7039 = vpack.c.b16 %v7009, %v7008
        %v7040 = vpack.c.b16 %v7011, %v7010
        %v7041 = vpack.c.b16 %v7013, %v7012
        %v7042 = vpack.c.b16 %v7015, %v7014
        %v7043 = vpack.c.b16 %v7017, %v7016
        %v7044 = vpack.c.b16 %v7019, %v7018
        %v7045 = vpack.c.b16 %v7021, %v7020
        %v7046 = vpack.c.b16 %v7023, %v7022
        %v7047 = vpack.c.b16 %v7025, %v7024
        %v7048 = vpack.c.b16 %v7027, %v7026
        %v7049 = vpack.c.b16 %v7029, %v7028
        %v7050 = vpack.c.b16 %v7031, %v7030
        %v7051 = vpack.c.b16 %v7033, %v7032
        %v7052 = vpack.c.b16 %v7035, %v7034
        %v7053 = vpack.c.b16 %v7037, %v7036
        %7070 = vmatprep.subr.bf16.mxu0 0
        %7071 = vmatpush1.bf16.msra.mxu0 %v7038
        %7072 = vmatprep.subr.bf16.mxu0 0
        %7073 = vmatpush1.bf16.msra.mxu0 %v7039
        %7074 = vmatprep.subr.bf16.mxu0 0
        %7075 = vmatpush1.bf16.msra.mxu0 %v7040
        %7076 = vmatprep.subr.bf16.mxu0 0
        %7077 = vmatpush1.bf16.msra.mxu0 %v7041
        %7078 = vmatprep.subr.bf16.mxu0 0
        %7079 = vmatpush1.bf16.msra.mxu0 %v7042
        %7080 = vmatprep.subr.bf16.mxu0 0
        %7081 = vmatpush1.bf16.msra.mxu0 %v7043
        %7082 = vmatprep.subr.bf16.mxu0 0
        %7083 = vmatpush1.bf16.msra.mxu0 %v7044
        %7084 = vmatprep.subr.bf16.mxu0 0
        %7085 = vmatpush1.bf16.msra.mxu0 %v7045
        %7086 = vmatprep.subr.bf16.mxu0 0
        %7087 = vmatpush1.bf16.msra.mxu0 %v7046
        %7088 = vmatprep.subr.bf16.mxu0 0
        %7089 = vmatpush1.bf16.msra.mxu0 %v7047
        %7090 = vmatprep.subr.bf16.mxu0 0
        %7091 = vmatpush1.bf16.msra.mxu0 %v7048
        %7092 = vmatprep.subr.bf16.mxu0 0
        %7093 = vmatpush1.bf16.msra.mxu0 %v7049
        %7094 = vmatprep.subr.bf16.mxu0 0
        %7095 = vmatpush1.bf16.msra.mxu0 %v7050
        %7096 = vmatprep.subr.bf16.mxu0 0
        %7097 = vmatpush1.bf16.msra.mxu0 %v7051
        %7098 = vmatprep.subr.bf16.mxu0 0
        %7099 = vmatpush1.bf16.msra.mxu0 %v7052
        %7100 = vmatprep.subr.bf16.mxu0 0
        %7101 = vmatpush1.bf16.msra.mxu0 %v7053
        %7102 = vmatprep.mubr.bf16.mxu0 %v6872
        %7103 = vmatmul.mubr.bf16.gmra.mrb[0].mxu0 %v6871
        %v7104 = vpop.f32.mrb[0].mxu0
        %v7105 = vadd.f32 %v6972, %v7104
        %v7106 = vpop.f32.mrb[0].mxu0
        %v7107 = vpop.f32.mrb[0].mxu0
        %v7108 = vadd.f32 %v6972, %v7107
        %v7109 = vpop.f32.mrb[0].mxu0
        %7110 = vmatprep.mubr.bf16.mxu0 %v6874
        %7111 = vmatmul.mubr.bf16.gmra.mrb[0].mxu0 %v6873
        %v7112 = vpop.f32.mrb[0].mxu0
        %v7113 = vadd.f32 %v6972, %v7112
        %v7114 = vpop.f32.mrb[0].mxu0
        %v7115 = vpop.f32.mrb[0].mxu0
        %v7116 = vadd.f32 %v6972, %v7115
        %v7117 = vpop.f32.mrb[0].mxu0
        %7118 = vmatprep.mubr.bf16.mxu0 %v6876
        %7119 = vmatmul.mubr.bf16.gmra.mrb[0].mxu0 %v6875
        %v7120 = vpop.f32.mrb[0].mxu0
        %v7121 = vadd.f32 %v6972, %v7120
        %v7122 = vpop.f32.mrb[0].mxu0
        %v7123 = vpop.f32.mrb[0].mxu0
        %v7124 = vadd.f32 %v6972, %v7123
        %v7125 = vpop.f32.mrb[0].mxu0
        %7126 = vmatprep.mubr.bf16.mxu0 %v6878
        %7127 = vmatmul.mubr.bf16.gmra.mrb[0].mxu0 %v6877
        %v7128 = vpop.f32.mrb[0].mxu0
        %v7129 = vadd.f32 %v6972, %v7128
        %v7130 = vpop.f32.mrb[0].mxu0
        %v7131 = vpop.f32.mrb[0].mxu0
        %v7132 = vadd.f32 %v6972, %v7131
        %v7133 = vpop.f32.mrb[0].mxu0
        %7134 = vmatprep.mubr.bf16.mxu0 %v6880
        %7135 = vmatmul.mubr.bf16.gmra.mrb[0].mxu0 %v6879
        %v7136 = vpop.f32.mrb[0].mxu0
        %v7137 = vadd.f32 %v6972, %v7136
        %v7138 = vpop.f32.mrb[0].mxu0
        %v7139 = vpop.f32.mrb[0].mxu0
        %v7140 = vadd.f32 %v6972, %v7139
        %v7141 = vpop.f32.mrb[0].mxu0
        %7142 = vmatprep.mubr.bf16.mxu0 %v6882
        %7143 = vmatmul.mubr.bf16.gmra.mrb[0].mxu0 %v6881
        %v7144 = vpop.f32.mrb[0].mxu0
        %v7145 = vadd.f32 %v6972, %v7144
        %v7146 = vpop.f32.mrb[0].mxu0
        %v7147 = vpop.f32.mrb[0].mxu0
        %v7148 = vadd.f32 %v6972, %v7147
        %v7149 = vpop.f32.mrb[0].mxu0
        %7150 = vmatprep.mubr.bf16.mxu0 %v6884
        %7151 = vmatmul.mubr.bf16.gmra.mrb[0].mxu0 %v6883
        %v7152 = vpop.f32.mrb[0].mxu0
        %v7153 = vadd.f32 %v6972, %v7152
        %v7154 = vpop.f32.mrb[0].mxu0
        %v7155 = vpop.f32.mrb[0].mxu0
        %v7156 = vadd.f32 %v6972, %v7155
        %v7157 = vpop.f32.mrb[0].mxu0
        %7158 = vmatprep.mubr.bf16.mxu0 %v6886
        %7159 = vmatmul.mubr.bf16.gmra.mrb[0].mxu0 %v6885
        %v7160 = vpop.f32.mrb[0].mxu0
        %v7161 = vadd.f32 %v6972, %v7160
        %v7162 = vpop.f32.mrb[0].mxu0
        %v7163 = vpop.f32.mrb[0].mxu0
        %v7164 = vadd.f32 %v6972, %v7163
        %v7165 = vpop.f32.mrb[0].mxu0
        %7166 = vmatprep.mubr.bf16.mxu0 %v6888
        %7167 = vmatmul.mubr.bf16.gmra.mrb[0].mxu0 %v6887
        %v7168 = vpop.f32.mrb[0].mxu0
        %v7169 = vadd.f32 %v6972, %v7168
        %v7170 = vpop.f32.mrb[0].mxu0
        %v7171 = vpop.f32.mrb[0].mxu0
        %v7172 = vadd.f32 %v6972, %v7171
        %v7173 = vpop.f32.mrb[0].mxu0
        %7174 = vmatprep.mubr.bf16.mxu0 %v6890
        %7175 = vmatmul.mubr.bf16.gmra.mrb[0].mxu0 %v6889
        %v7176 = vpop.f32.mrb[0].mxu0
        %v7177 = vadd.f32 %v6972, %v7176
        %v7178 = vpop.f32.mrb[0].mxu0
        %v7179 = vpop.f32.mrb[0].mxu0
        %v7180 = vadd.f32 %v6972, %v7179
        %v7181 = vpop.f32.mrb[0].mxu0
        %7182 = vmatprep.mubr.bf16.mxu0 %v6892
        %7183 = vmatmul.mubr.bf16.gmra.mrb[0].mxu0 %v6891
        %v7184 = vpop.f32.mrb[0].mxu0
        %v7185 = vadd.f32 %v6972, %v7184
        %v7186 = vpop.f32.mrb[0].mxu0
        %v7187 = vpop.f32.mrb[0].mxu0
        %v7188 = vadd.f32 %v6972, %v7187
        %v7189 = vpop.f32.mrb[0].mxu0
        %7190 = vmatprep.mubr.bf16.mxu0 %v6894
        %7191 = vmatmul.mubr.bf16.gmra.mrb[0].mxu0 %v6893
        %v7192 = vpop.f32.mrb[0].mxu0
        %v7193 = vadd.f32 %v6972, %v7192
        %v7194 = vpop.f32.mrb[0].mxu0
        %v7195 = vpop.f32.mrb[0].mxu0
        %v7196 = vadd.f32 %v6972, %v7195
        %v7197 = vpop.f32.mrb[0].mxu0
        %7198 = vmatprep.mubr.bf16.mxu0 %v6896
        %7199 = vmatmul.mubr.bf16.gmra.mrb[0].mxu0 %v6895
        %v7200 = vpop.f32.mrb[0].mxu0
        %v7201 = vadd.f32 %v6972, %v7200
        %v7202 = vpop.f32.mrb[0].mxu0
        %v7203 = vpop.f32.mrb[0].mxu0
        %v7204 = vadd.f32 %v6972, %v7203
        %v7205 = vpop.f32.mrb[0].mxu0
        %7206 = vmatprep.mubr.bf16.mxu0 %v6898
        %7207 = vmatmul.mubr.bf16.gmra.mrb[0].mxu0 %v6897
        %v7208 = vpop.f32.mrb[0].mxu0
        %v7209 = vadd.f32 %v6972, %v7208
        %v7210 = vpop.f32.mrb[0].mxu0
        %v7211 = vpop.f32.mrb[0].mxu0
        %v7212 = vadd.f32 %v6972, %v7211
        %v7213 = vpop.f32.mrb[0].mxu0
        %7214 = vmatprep.mubr.bf16.mxu0 %v6900
        %7215 = vmatmul.mubr.bf16.gmra.mrb[0].mxu0 %v6899
        %v7216 = vpop.f32.mrb[0].mxu0
        %v7217 = vadd.f32 %v6972, %v7216
        %v7218 = vpop.f32.mrb[0].mxu0
        %v7219 = vpop.f32.mrb[0].mxu0
        %v7220 = vadd.f32 %v6972, %v7219
        %v7221 = vpop.f32.mrb[0].mxu0
        %7222 = vmatprep.mubr.bf16.mxu0 %v6902
        %7223 = vmatmul.mubr.bf16.gmra.mrb[0].mxu0 %v6901
        %v7224 = vpop.f32.mrb[0].mxu0
        %v7225 = vadd.f32 %v6972, %v7224
        %v7226 = vpop.f32.mrb[0].mxu0
        %v7227 = vpop.f32.mrb[0].mxu0
        %v7228 = vadd.f32 %v6972, %v7227
        %v7229 = vpop.f32.mrb[0].mxu0
        %7230 = vmatprep.mubr.bf16.mxu0 %v6904
        %7231 = vmatmul.mubr.bf16.gmra.mrb[0].mxu0 %v6903
        %v7232 = vpop.f32.mrb[0].mxu0
        %v7233 = vadd.f32 %v6972, %v7232
        %v7234 = vpop.f32.mrb[0].mxu0
        %v7235 = vpop.f32.mrb[0].mxu0
        %v7236 = vadd.f32 %v6972, %v7235
        %v7237 = vpop.f32.mrb[0].mxu0
        %7238 = vmatprep.mubr.bf16.mxu0 %v6906
        %7239 = vmatmul.mubr.bf16.gmra.mrb[0].mxu0 %v6905
        %v7240 = vpop.f32.mrb[0].mxu0
        %v7241 = vadd.f32 %v6972, %v7240
        %v7242 = vpop.f32.mrb[0].mxu0
        %v7243 = vpop.f32.mrb[0].mxu0
        %v7244 = vadd.f32 %v6972, %v7243
        %v7245 = vpop.f32.mrb[0].mxu0
        %7246 = vmatprep.mubr.bf16.mxu0 %v6908
        %7247 = vmatmul.mubr.bf16.gmra.mrb[0].mxu0 %v6907
        %v7248 = vpop.f32.mrb[0].mxu0
        %v7249 = vadd.f32 %v6972, %v7248
        %v7250 = vpop.f32.mrb[0].mxu0
        %v7251 = vpop.f32.mrb[0].mxu0
        %v7252 = vadd.f32 %v6972, %v7251
        %v7253 = vpop.f32.mrb[0].mxu0
        %7254 = vmatprep.mubr.bf16.mxu0 %v6910
        %7255 = vmatmul.mubr.bf16.gmra.mrb[0].mxu0 %v6909
        %v7256 = vpop.f32.mrb[0].mxu0
        %v7257 = vadd.f32 %v6972, %v7256
        %v7258 = vpop.f32.mrb[0].mxu0
        %v7259 = vpop.f32.mrb[0].mxu0
        %v7260 = vadd.f32 %v6972, %v7259
        %v7261 = vpop.f32.mrb[0].mxu0
        %7262 = vmatprep.mubr.bf16.mxu0 %v6912
        %7263 = vmatmul.mubr.bf16.gmra.mrb[0].mxu0 %v6911
        %v7264 = vpop.f32.mrb[0].mxu0
        %v7265 = vadd.f32 %v6972, %v7264
        %v7266 = vpop.f32.mrb[0].mxu0
        %v7267 = vpop.f32.mrb[0].mxu0
        %v7268 = vadd.f32 %v6972, %v7267
        %v7269 = vpop.f32.mrb[0].mxu0
        %7270 = vmatprep.mubr.bf16.mxu0 %v6914
        %7271 = vmatmul.mubr.bf16.gmra.mrb[0].mxu0 %v6913
        %v7272 = vpop.f32.mrb[0].mxu0
        %v7273 = vadd.f32 %v6972, %v7272
        %v7274 = vpop.f32.mrb[0].mxu0
        %v7275 = vpop.f32.mrb[0].mxu0
        %v7276 = vadd.f32 %v6972, %v7275
        %v7277 = vpop.f32.mrb[0].mxu0
        %7278 = vmatprep.mubr.bf16.mxu0 %v6916
        %7279 = vmatmul.mubr.bf16.gmra.mrb[0].mxu0 %v6915
        %v7280 = vpop.f32.mrb[0].mxu0
        %v7281 = vadd.f32 %v6972, %v7280
        %v7282 = vpop.f32.mrb[0].mxu0
        %v7283 = vpop.f32.mrb[0].mxu0
        %v7284 = vadd.f32 %v6972, %v7283
        %v7285 = vpop.f32.mrb[0].mxu0
        %7286 = vmatprep.mubr.bf16.mxu0 %v6918
        %7287 = vmatmul.mubr.bf16.gmra.mrb[0].mxu0 %v6917
        %v7288 = vpop.f32.mrb[0].mxu0
        %v7289 = vadd.f32 %v6972, %v7288
        %v7290 = vpop.f32.mrb[0].mxu0
        %v7291 = vpop.f32.mrb[0].mxu0
        %v7292 = vadd.f32 %v6972, %v7291
        %v7293 = vpop.f32.mrb[0].mxu0
        %7294 = vmatprep.mubr.bf16.mxu0 %v6920
        %7295 = vmatmul.mubr.bf16.gmra.mrb[0].mxu0 %v6919
        %v7296 = vpop.f32.mrb[0].mxu0
        %v7297 = vadd.f32 %v6972, %v7296
        %v7298 = vpop.f32.mrb[0].mxu0
        %v7299 = vpop.f32.mrb[0].mxu0
        %v7300 = vadd.f32 %v6972, %v7299
        %v7301 = vpop.f32.mrb[0].mxu0
        %7302 = vmatprep.mubr.bf16.mxu0 %v6922
        %7303 = vmatmul.mubr.bf16.gmra.mrb[0].mxu0 %v6921
        %v7304 = vpop.f32.mrb[0].mxu0
        %v7305 = vadd.f32 %v6972, %v7304
        %v7306 = vpop.f32.mrb[0].mxu0
        %v7307 = vpop.f32.mrb[0].mxu0
        %v7308 = vadd.f32 %v6972, %v7307
        %v7309 = vpop.f32.mrb[0].mxu0
        %7310 = vmatprep.mubr.bf16.mxu0 %v6924
        %7311 = vmatmul.mubr.bf16.gmra.mrb[0].mxu0 %v6923
        %v7312 = vpop.f32.mrb[0].mxu0
        %v7313 = vadd.f32 %v6972, %v7312
        %v7314 = vpop.f32.mrb[0].mxu0
        %v7315 = vpop.f32.mrb[0].mxu0
        %v7316 = vadd.f32 %v6972, %v7315
        %v7317 = vpop.f32.mrb[0].mxu0
        %7318 = vmatprep.mubr.bf16.mxu0 %v6926
        %7319 = vmatmul.mubr.bf16.gmra.mrb[0].mxu0 %v6925
        %v7320 = vpop.f32.mrb[0].mxu0
        %v7321 = vadd.f32 %v6972, %v7320
        %v7322 = vpop.f32.mrb[0].mxu0
        %v7323 = vpop.f32.mrb[0].mxu0
        %v7324 = vadd.f32 %v6972, %v7323
        %v7325 = vpop.f32.mrb[0].mxu0
        %7326 = vmatprep.mubr.bf16.mxu0 %v6928
        %7327 = vmatmul.mubr.bf16.gmra.mrb[0].mxu0 %v6927
        %v7328 = vpop.f32.mrb[0].mxu0
        %v7329 = vadd.f32 %v6972, %v7328
        %v7330 = vpop.f32.mrb[0].mxu0
        %v7331 = vpop.f32.mrb[0].mxu0
        %v7332 = vadd.f32 %v6972, %v7331
        %v7333 = vpop.f32.mrb[0].mxu0
        %7334 = vmatprep.mubr.bf16.mxu0 %v6930
        %7335 = vmatmul.mubr.bf16.gmra.mrb[0].mxu0 %v6929
        %v7336 = vpop.f32.mrb[0].mxu0
        %v7337 = vadd.f32 %v6972, %v7336
        %v7338 = vpop.f32.mrb[0].mxu0
        %v7339 = vpop.f32.mrb[0].mxu0
        %v7340 = vadd.f32 %v6972, %v7339
        %v7341 = vpop.f32.mrb[0].mxu0
        %7342 = vmatprep.mubr.bf16.mxu0 %v6932
        %7343 = vmatmul.mubr.bf16.gmra.mrb[0].mxu0 %v6931
        %v7344 = vpop.f32.mrb[0].mxu0
        %v7345 = vadd.f32 %v6972, %v7344
        %v7346 = vpop.f32.mrb[0].mxu0
        %v7347 = vpop.f32.mrb[0].mxu0
        %v7348 = vadd.f32 %v6972, %v7347
        %v7349 = vpop.f32.mrb[0].mxu0
        %7350 = vmatprep.mubr.bf16.mxu0 %v6934
        %7351 = vmatmul.mubr.bf16.gmra.mrb[0].mxu0 %v6933
        %v7352 = vpop.f32.mrb[0].mxu0
        %v7353 = vadd.f32 %v6972, %v7352
        %v7354 = vpop.f32.mrb[0].mxu0
        %v7355 = vpop.f32.mrb[0].mxu0
        %v7356 = vadd.f32 %v6972, %v7355
        %v7357 = vpop.f32.mrb[0].mxu0
        %7358 = vdwg.mxu0
        %v7359 = vpack.c.bf16 %v7108, %v7105
        %v7360 = vpack.c.bf16 %v7116, %v7113
        %v7361 = vpack.c.bf16 %v7124, %v7121
        %v7362 = vpack.c.bf16 %v7132, %v7129
        %v7363 = vpack.c.bf16 %v7140, %v7137
        %v7364 = vpack.c.bf16 %v7148, %v7145
        %v7365 = vpack.c.bf16 %v7156, %v7153
        %v7366 = vpack.c.bf16 %v7164, %v7161
        %v7367 = vpack.c.bf16 %v7172, %v7169
        %v7368 = vpack.c.bf16 %v7180, %v7177
        %v7369 = vpack.c.bf16 %v7188, %v7185
        %v7370 = vpack.c.bf16 %v7196, %v7193
        %v7371 = vpack.c.bf16 %v7204, %v7201
        %v7372 = vpack.c.bf16 %v7212, %v7209
        %v7373 = vpack.c.bf16 %v7220, %v7217
        %v7374 = vpack.c.bf16 %v7228, %v7225
        %v7375 = vpack.c.bf16 %v7236, %v7233
        %v7376 = vpack.c.bf16 %v7244, %v7241
        %v7377 = vpack.c.bf16 %v7252, %v7249
        %v7378 = vpack.c.bf16 %v7260, %v7257
        %v7379 = vpack.c.bf16 %v7268, %v7265
        %v7380 = vpack.c.bf16 %v7276, %v7273
        %v7381 = vpack.c.bf16 %v7284, %v7281
        %v7382 = vpack.c.bf16 %v7292, %v7289
        %v7383 = vpack.c.bf16 %v7300, %v7297
        %v7384 = vpack.c.bf16 %v7308, %v7305
        %v7385 = vpack.c.bf16 %v7316, %v7313
        %v7386 = vpack.c.bf16 %v7324, %v7321
        %v7387 = vpack.c.bf16 %v7332, %v7329
        %v7388 = vpack.c.bf16 %v7340, %v7337
        %v7389 = vpack.c.bf16 %v7348, %v7345
        %v7390 = vpack.c.bf16 %v7356, %v7353
        %v7423 = vunpack.c.l.b16 %v7359
        %v7424 = vunpack.c.h.b16 %v7359
        %v7425 = vunpack.c.l.b16 %v7360
        %v7426 = vunpack.c.h.b16 %v7360
        %v7427 = vunpack.c.l.b16 %v7361
        %v7428 = vunpack.c.h.b16 %v7361
        %v7429 = vunpack.c.l.b16 %v7362
        %v7430 = vunpack.c.h.b16 %v7362
        %v7431 = vunpack.c.l.b16 %v7363
        %v7432 = vunpack.c.h.b16 %v7363
        %v7433 = vunpack.c.l.b16 %v7364
        %v7434 = vunpack.c.h.b16 %v7364
        %v7435 = vunpack.c.l.b16 %v7365
        %v7436 = vunpack.c.h.b16 %v7365
        %v7437 = vunpack.c.l.b16 %v7366
        %v7438 = vunpack.c.h.b16 %v7366
        %v7439 = vunpack.c.l.b16 %v7367
        %v7440 = vunpack.c.h.b16 %v7367
        %v7441 = vunpack.c.l.b16 %v7368
        %v7442 = vunpack.c.h.b16 %v7368
        %v7443 = vunpack.c.l.b16 %v7369
        %v7444 = vunpack.c.h.b16 %v7369
        %v7445 = vunpack.c.l.b16 %v7370
        %v7446 = vunpack.c.h.b16 %v7370
        %v7447 = vunpack.c.l.b16 %v7371
        %v7448 = vunpack.c.h.b16 %v7371
        %v7449 = vunpack.c.l.b16 %v7372
        %v7450 = vunpack.c.h.b16 %v7372
        %v7451 = vunpack.c.l.b16 %v7373
        %v7452 = vunpack.c.h.b16 %v7373
        %v7453 = vunpack.c.l.b16 %v7374
        %v7454 = vunpack.c.h.b16 %v7374
        %v7455 = vunpack.c.l.b16 %v7375
        %v7456 = vunpack.c.h.b16 %v7375
        %v7457 = vunpack.c.l.b16 %v7376
        %v7458 = vunpack.c.h.b16 %v7376
        %v7459 = vunpack.c.l.b16 %v7377
        %v7460 = vunpack.c.h.b16 %v7377
        %v7461 = vunpack.c.l.b16 %v7378
        %v7462 = vunpack.c.h.b16 %v7378
        %v7463 = vunpack.c.l.b16 %v7379
        %v7464 = vunpack.c.h.b16 %v7379
        %v7465 = vunpack.c.l.b16 %v7380
        %v7466 = vunpack.c.h.b16 %v7380
        %v7467 = vunpack.c.l.b16 %v7381
        %v7468 = vunpack.c.h.b16 %v7381
        %v7469 = vunpack.c.l.b16 %v7382
        %v7470 = vunpack.c.h.b16 %v7382
        %v7471 = vunpack.c.l.b16 %v7383
        %v7472 = vunpack.c.h.b16 %v7383
        %v7473 = vunpack.c.l.b16 %v7384
        %v7474 = vunpack.c.h.b16 %v7384
        %v7475 = vunpack.c.l.b16 %v7385
        %v7476 = vunpack.c.h.b16 %v7385
        %v7477 = vunpack.c.l.b16 %v7386
        %v7478 = vunpack.c.h.b16 %v7386
        %v7479 = vunpack.c.l.b16 %v7387
        %v7480 = vunpack.c.h.b16 %v7387
        %v7481 = vunpack.c.l.b16 %v7388
        %v7482 = vunpack.c.h.b16 %v7388
        %v7483 = vunpack.c.l.b16 %v7389
        %v7484 = vunpack.c.h.b16 %v7389
        %v7485 = vunpack.c.l.b16 %v7390
        %v7486 = vunpack.c.h.b16 %v7390
        %v7487 = vpack.c.b16 %v7423, %v7423
        %v7488 = vpack.c.b16 %v7424, %v7424
        %v7489 = vpack.c.b16 %v7425, %v7425
        %v7490 = vpack.c.b16 %v7426, %v7426
        %v7491 = vpack.c.b16 %v7427, %v7427
        %v7492 = vpack.c.b16 %v7428, %v7428
        %v7493 = vpack.c.b16 %v7429, %v7429
        %v7494 = vpack.c.b16 %v7430, %v7430
        %v7495 = vpack.c.b16 %v7431, %v7431
        %v7496 = vpack.c.b16 %v7432, %v7432
        %v7497 = vpack.c.b16 %v7433, %v7433
        %v7498 = vpack.c.b16 %v7434, %v7434
        %v7499 = vpack.c.b16 %v7435, %v7435
        %v7500 = vpack.c.b16 %v7436, %v7436
        %v7501 = vpack.c.b16 %v7437, %v7437
        %v7502 = vpack.c.b16 %v7438, %v7438
        %v7503 = vpack.c.b16 %v7439, %v7439
        %v7504 = vpack.c.b16 %v7440, %v7440
        %v7505 = vpack.c.b16 %v7441, %v7441
        %v7506 = vpack.c.b16 %v7442, %v7442
        %v7507 = vpack.c.b16 %v7443, %v7443
        %v7508 = vpack.c.b16 %v7444, %v7444
        %v7509 = vpack.c.b16 %v7445, %v7445
        %v7510 = vpack.c.b16 %v7446, %v7446
        %v7511 = vpack.c.b16 %v7447, %v7447
        %v7512 = vpack.c.b16 %v7448, %v7448
        %v7513 = vpack.c.b16 %v7449, %v7449
        %v7514 = vpack.c.b16 %v7450, %v7450
        %v7515 = vpack.c.b16 %v7451, %v7451
        %v7516 = vpack.c.b16 %v7452, %v7452
        %v7517 = vpack.c.b16 %v7453, %v7453
        %v7518 = vpack.c.b16 %v7454, %v7454
        %v7519 = vpack.c.b16 %v7455, %v7455
        %v7520 = vpack.c.b16 %v7456, %v7456
        %v7521 = vpack.c.b16 %v7457, %v7457
        %v7522 = vpack.c.b16 %v7458, %v7458
        %v7523 = vpack.c.b16 %v7459, %v7459
        %v7524 = vpack.c.b16 %v7460, %v7460
        %v7525 = vpack.c.b16 %v7461, %v7461
        %v7526 = vpack.c.b16 %v7462, %v7462
        %v7527 = vpack.c.b16 %v7463, %v7463
        %v7528 = vpack.c.b16 %v7464, %v7464
        %v7529 = vpack.c.b16 %v7465, %v7465
        %v7530 = vpack.c.b16 %v7466, %v7466
        %v7531 = vpack.c.b16 %v7467, %v7467
        %v7532 = vpack.c.b16 %v7468, %v7468
        %v7533 = vpack.c.b16 %v7469, %v7469
        %v7534 = vpack.c.b16 %v7470, %v7470
        %v7535 = vpack.c.b16 %v7471, %v7471
        %v7536 = vpack.c.b16 %v7472, %v7472
        %v7537 = vpack.c.b16 %v7473, %v7473
        %v7538 = vpack.c.b16 %v7474, %v7474
        %v7539 = vpack.c.b16 %v7475, %v7475
        %v7540 = vpack.c.b16 %v7476, %v7476
        %v7541 = vpack.c.b16 %v7477, %v7477
        %v7542 = vpack.c.b16 %v7478, %v7478
        %v7543 = vpack.c.b16 %v7479, %v7479
        %v7544 = vpack.c.b16 %v7480, %v7480
        %v7545 = vpack.c.b16 %v7481, %v7481
        %v7546 = vpack.c.b16 %v7482, %v7482
        %v7547 = vpack.c.b16 %v7483, %v7483
        %v7548 = vpack.c.b16 %v7484, %v7484
        %v7549 = vpack.c.b16 %v7485, %v7485
        %v7550 = vpack.c.b16 %v7486, %v7486
        %7615 = vst [vmem:[%s287] sm:$0xf] %v7487
        %7616 = vst [vmem:[%s287 + $0x4] sm:$0xf] %v7488
        %7617 = vst [vmem:[%s287 + $0x8] sm:$0xf] %v7489
        %7618 = vst [vmem:[%s287 + $0xc] sm:$0xf] %v7490
        %7619 = vst [vmem:[%s287 + $0x10] sm:$0xf] %v7491
        %7620 = vst [vmem:[%s287 + $0x14] sm:$0xf] %v7492
        %7621 = vst [vmem:[%s287 + $0x18] sm:$0xf] %v7493
        %7622 = vst [vmem:[%s287 + $0x1c] sm:$0xf] %v7494
        %7623 = vst [vmem:[%s287 + $0x20] sm:$0xf] %v7495
        %7624 = vst [vmem:[%s287 + $0x24] sm:$0xf] %v7496
        %7625 = vst [vmem:[%s287 + $0x28] sm:$0xf] %v7497
        %7626 = vst [vmem:[%s287 + $0x2c] sm:$0xf] %v7498
        %7627 = vst [vmem:[%s287 + $0x30] sm:$0xf] %v7499
        %7628 = vst [vmem:[%s287 + $0x34] sm:$0xf] %v7500
        %7629 = vst [vmem:[%s287 + $0x38] sm:$0xf] %v7501
        %7630 = vst [vmem:[%s287 + $0x3c] sm:$0xf] %v7502
        %7631 = vst [vmem:[%s287 + $0x40] sm:$0xf] %v7503
        %7632 = vst [vmem:[%s287 + $0x44] sm:$0xf] %v7504
        %7633 = vst [vmem:[%s287 + $0x48] sm:$0xf] %v7505
        %7634 = vst [vmem:[%s287 + $0x4c] sm:$0xf] %v7506
        %7635 = vst [vmem:[%s287 + $0x50] sm:$0xf] %v7507
        %7636 = vst [vmem:[%s287 + $0x54] sm:$0xf] %v7508
        %7637 = vst [vmem:[%s287 + $0x58] sm:$0xf] %v7509
        %7638 = vst [vmem:[%s287 + $0x5c] sm:$0xf] %v7510
        %7639 = vst [vmem:[%s287 + $0x60] sm:$0xf] %v7511
        %7640 = vst [vmem:[%s287 + $0x64] sm:$0xf] %v7512
        %7641 = vst [vmem:[%s287 + $0x68] sm:$0xf] %v7513
        %7642 = vst [vmem:[%s287 + $0x6c] sm:$0xf] %v7514
        %7643 = vst [vmem:[%s287 + $0x70] sm:$0xf] %v7515
        %7644 = vst [vmem:[%s287 + $0x74] sm:$0xf] %v7516
        %7645 = vst [vmem:[%s287 + $0x78] sm:$0xf] %v7517
        %7646 = vst [vmem:[%s287 + $0x7c] sm:$0xf] %v7518
        %7647 = vst [vmem:[%s287 + $0x80] sm:$0xf] %v7519
        %7648 = vst [vmem:[%s287 + $0x84] sm:$0xf] %v7520
        %7649 = vst [vmem:[%s287 + $0x88] sm:$0xf] %v7521
        %7650 = vst [vmem:[%s287 + $0x8c] sm:$0xf] %v7522
        %7651 = vst [vmem:[%s287 + $0x90] sm:$0xf] %v7523
        %7652 = vst [vmem:[%s287 + $0x94] sm:$0xf] %v7524
        %7653 = vst [vmem:[%s287 + $0x98] sm:$0xf] %v7525
        %7654 = vst [vmem:[%s287 + $0x9c] sm:$0xf] %v7526
        %7655 = vst [vmem:[%s287 + $0xa0] sm:$0xf] %v7527
        %7656 = vst [vmem:[%s287 + $0xa4] sm:$0xf] %v7528
        %7657 = vst [vmem:[%s287 + $0xa8] sm:$0xf] %v7529
        %7658 = vst [vmem:[%s287 + $0xac] sm:$0xf] %v7530
        %7659 = vst [vmem:[%s287 + $0xb0] sm:$0xf] %v7531
        %7660 = vst [vmem:[%s287 + $0xb4] sm:$0xf] %v7532
        %7661 = vst [vmem:[%s287 + $0xb8] sm:$0xf] %v7533
        %7662 = vst [vmem:[%s287 + $0xbc] sm:$0xf] %v7534
        %7663 = vst [vmem:[%s287 + $0xc0] sm:$0xf] %v7535
        %7664 = vst [vmem:[%s287 + $0xc4] sm:$0xf] %v7536
        %7665 = vst [vmem:[%s287 + $0xc8] sm:$0xf] %v7537
        %7666 = vst [vmem:[%s287 + $0xcc] sm:$0xf] %v7538
        %7667 = vst [vmem:[%s287 + $0xd0] sm:$0xf] %v7539
        %7668 = vst [vmem:[%s287 + $0xd4] sm:$0xf] %v7540
        %7669 = vst [vmem:[%s287 + $0xd8] sm:$0xf] %v7541
        %7670 = vst [vmem:[%s287 + $0xdc] sm:$0xf] %v7542
        %7671 = vst [vmem:[%s287 + $0xe0] sm:$0xf] %v7543
        %7672 = vst [vmem:[%s287 + $0xe4] sm:$0xf] %v7544
        %7673 = vst [vmem:[%s287 + $0xe8] sm:$0xf] %v7545
        %7674 = vst [vmem:[%s287 + $0xec] sm:$0xf] %v7546
        %7675 = vst [vmem:[%s287 + $0xf0] sm:$0xf] %v7547
        %7676 = vst [vmem:[%s287 + $0xf4] sm:$0xf] %v7548
        %7677 = vst [vmem:[%s287 + $0xf8] sm:$0xf] %v7549
        %7678 = vst [vmem:[%s287 + $0xfc] sm:$0xf] %v7550
        %s7679 = sand.u32 %s182, 1
        %s7680 = scalar_lea.sflag [#allocation4], %s7679
        %s7681 = sand.u32 %s182, 1
        %s7682 = smul.addr %s7681, 256
        %s7683 = scalar_lea.vmem [#allocation5], %s7682
        // Predicated region
        $region53: #{tpu_custom_call.1} parent=47 // pred_check
          %p7684 = pneg %p192
        $region54: #{tpu_custom_call.1} parent=47 // pred_check_branch
          %7686 = sbr.rel (%p7684) target = $region56
        $region55: #{tpu_custom_call.1} parent=47 // pred_region
          %s7687 = smul.u32 64, %s22
          %s7689 = ssub.s32 4096, 4096
          %7690 = vsyncadd %s7680, %s7689
          %s7691 = smul.addr %s7687, 64
          %s7692 = scalar_lea.hbm %s7, %s7691
          %s7693 = sshll.u32 %s7683, 4
          %s7694 = int_to_ptr.vmem [resolvable:$true] %s7693
          %7699 = dma.vmem_to_hbm [thread:$0]  %s7694, 4096, %s7692, %s7680, 64, 64, 4
        $region56: #{tpu_custom_call.1} parent=47 // pred_fallthru
          _
      $region48: #{tpu_custom_call.1} parent=5 // pred_fallthru
        _
      %p7700 = scmp.le.s32.totalorder 2, %s17
      // Predicated region
      $region57: #{tpu_custom_call.1} parent=5 // pred_check
        %p7701 = pneg %p7700
      $region58: #{tpu_custom_call.1} parent=5 // pred_check_branch
        %7703 = sbr.rel (%p7701) target = $region60
      $region59: #{tpu_custom_call.1} parent=5 // pred_region
        %s7704 = ssub.s32 %s17, 2
        // Predicated region
        $region61: #{tpu_custom_call.1} parent=59 // pred_check
          %p7705 = pneg %p198
        $region62: #{tpu_custom_call.1} parent=59 // pred_check_branch
          %7707 = sbr.rel (%p7705) target = $region64
        $region63: #{tpu_custom_call.1} parent=59 // pred_region
          %s7708 = sand.u32 %s183, 1
          %s7709 = scalar_lea.sflag [#allocation4], %s7708
          %s7710 = sand.u32 %s183, 1
          %s7711 = smul.addr %s7710, 256
          %s7712 = scalar_lea.vmem [#allocation5], %s7711
          %7713 = dma.done %s7709, 4096
        $region64: #{tpu_custom_call.1} parent=59 // pred_fallthru
          _
      $region60: #{tpu_custom_call.1} parent=5 // pred_fallthru
        _
    $region6: #{tpu_custom_call.1} parent=1 // loop_footer
      %s21 = sadd.s32 1, %s17
    $region7: #{tpu_custom_call.1} parent=1 // loop_footer_branch
      %16 = sbr.rel target = $region3
    $region8: #{tpu_custom_call.1} parent=1 // loop_exit
      _
    %7714 = vsyncpa [#allocation3], 1
    %s7715 = scalar_lea.sflag [#allocation3], 1
    %7716 = vsyncpa %s7715, 1
    %7717 = vsyncpa [#allocation4], 1
    %s7718 = scalar_lea.sflag [#allocation4], 1
    %7719 = vsyncpa %s7718, 1

</llo_original>
